<compile_context>
chip_gen: v7x
topology: tpu7x:2x2x1
jax: 0.10.0
libtpu: 0.0.40
codegen_flags: <defaults>
</compile_context>

<pallas_src>
import math

import jax
import jax.numpy as jnp
from jax import lax
from jax.experimental import pallas as pl
from jax.experimental.pallas import tpu as pltpu

_SQRT2 = math.sqrt(2.0)

# ----------------------------------------------------------------------------
# Packed-parameter layout (static row / slab indices)
# ----------------------------------------------------------------------------
# W_IN16  : (8, 16, 32)   (16-wide input matrices)
_W16_AA_L0_L, _W16_AA_L0_R, _W16_AA_DEC_X, _W16_AA_DEC_ZA = 0, 1, 2, 3
_W16_G_L0_L, _W16_G_L0_R, _W16_CON_ZI, _W16_CON_ZJ = 4, 5, 6, 7
# W_POS   : (4, 256, 32)  (256-wide "positions" matrices)
_WP_AA_L0_L, _WP_AA_L0_R, _WP_AA_DEC_P, _WP_AA_DEC_ZB = 0, 1, 2, 3
# W_H32   : (18, 32, 32)  (all hidden 32x32 matrices, both decoders)
_WH_AA_L1_L, _WH_AA_L1_R, _WH_AA_L2_L, _WH_AA_L2_R = 0, 1, 2, 3
_WH_AA_JK1, _WH_AA_JK2, _WH_AA_JK3, _WH_AA_LIN2, _WH_AA_DEC2 = 4, 5, 6, 7, 8
_WH_G_L1_L, _WH_G_L1_R, _WH_G_L2_L, _WH_G_L2_R = 9, 10, 11, 12
_WH_G_JK1, _WH_G_JK2, _WH_G_JK3, _WH_G_LIN2, _WH_G_CON2 = 13, 14, 15, 16, 17
# W_3216  : (2, 32, 16)
_W3216_AA_LIN3A, _W3216_G_LIN3 = 0, 1
# ROWS32  : (39, 32)  (all 32-wide row params: SAGE biases, GraphNorm, DyT1, MLP biases)
_R_AA_BL0, _R_AA_GN0 = 0, 1
_R_AA_BL1, _R_AA_GN1 = 4, 5
_R_AA_BL2, _R_AA_GN2 = 8, 9
_R_AA_LB1, _R_AA_LB2, _R_AA_AB1, _R_AA_AB2 = 12, 13, 14, 15
_R_G_BL0, _R_G_GN0 = 16, 17
_R_G_BL1, _R_G_GN1 = 20, 21
_R_G_BL2, _R_G_GN2 = 24, 25
_R_G_DYT1_A, _R_G_DYT1_W, _R_G_DYT1_B = 28, 29, 32
_R_G_LB1, _R_G_LB2, _R_G_CB1, _R_G_CB2 = 35, 36, 37, 38
# ROWS16  : (6, 16)
_R16_AA_LB3A, _R16_G_LB3, _R16_DYT2_A, _R16_DYT2_W, _R16_DYT2_B, _R16_CB3 = 0, 1, 2, 3, 4, 5


# ----------------------------------------------------------------------------
# In-kernel helpers
# ----------------------------------------------------------------------------
def _gelu(x):
    # torch.nn.GELU() / F.gelu default (erf formulation).
    return 0.5 * x * (1.0 + lax.erf(x * (1.0 / _SQRT2)))


def _dot(a, b):
    return jnp.dot(a, b, preferred_element_type=jnp.float32)


def _sage(adj, x, wl, bl, wr):
    """SAGEConv(mean aggr): lin_l(mean_j x_j) + bias + lin_r(x_i).  adj is row-normalized."""
    return _dot(_dot(adj, x), wl) + bl + _dot(x, wr)


def _graphnorm(h, gn):
    """PyG GraphNorm, single graph. gn rows: [weight; bias; mean_scale]."""
    mean = jnp.mean(h, axis=0, keepdims=True)
    cen = h - mean * gn[2:3, :]
    var = jnp.mean(cen * cen, axis=0, keepdims=True)
    return gn[0:1, :] * cen * lax.rsqrt(var + 1e-5) + gn[1:2, :]


# ----------------------------------------------------------------------------
# ONE fused kernel: both mono decoders, one graph per grid step
# ----------------------------------------------------------------------------
def _fused_kernel(adj_ref, xr_ref, xp_ref, ci_ref, cj_ref,
                  w16_ref, wp_ref, wh_ref, w3216_ref,
                  lw3b_ref, aw3_ref, cw3_ref,
                  r32_ref, r16_ref, lb3b_ref, ab3_ref,
                  aa_ref, prob_ref):
    adj = adj_ref[...]          # (N, N) mean-aggregation adjacency
    xr = xr_ref[...]            # (N, CRES)   x_res
    xp = xp_ref[...]            # (N, POS)    positions

    def r32(i, n=1):
        return r32_ref[i:i + n, :]

    def r16(i, n=1):
        return r16_ref[i:i + n, :]

    # ==================== sequence : HeteroGAE_AA_Decoder ====================
    # SAGE layer 0 on inz = [x_res | positions]  (concat folded into split dots)
    agg_r = _dot(adj, xr)
    agg_p = _dot(adj, xp)
    h0 = (_dot(agg_r, w16_ref[_W16_AA_L0_L]) + _dot(agg_p, wp_ref[_WP_AA_L0_L])
          + _dot(xr, w16_ref[_W16_AA_L0_R]) + _dot(xp, wp_ref[_WP_AA_L0_R])
          + r32(_R_AA_BL0))
    h1 = _graphnorm(_gelu(h0), r32(_R_AA_GN0, 3))
    h2 = _graphnorm(_gelu(_sage(adj, h1, wh_ref[_WH_AA_L1_L], r32(_R_AA_BL1),
                                wh_ref[_WH_AA_L1_R])), r32(_R_AA_GN1, 3)) + h1
    h3 = _graphnorm(_gelu(_sage(adj, h2, wh_ref[_WH_AA_L2_L], r32(_R_AA_BL2),
                                wh_ref[_WH_AA_L2_R])), r32(_R_AA_GN2, 3)) + h2

    # self.lin on JumpingKnowledge('cat')([h1,h2,h3])  (concat folded into split dots)
    t = _gelu(_dot(h1, wh_ref[_WH_AA_JK1]) + _dot(h2, wh_ref[_WH_AA_JK2])
              + _dot(h3, wh_ref[_WH_AA_JK3]) + r32(_R_AA_LB1))
    t = _gelu(_dot(t, wh_ref[_WH_AA_LIN2]) + r32(_R_AA_LB2))
    za = jnp.tanh(_dot(t, w3216_ref[_W3216_AA_LIN3A]) + r16(_R16_AA_LB3A))  # z[:, :16]
    zb = jnp.tanh(_dot(t, lw3b_ref[...]) + lb3b_ref[...])                   # z[:, 16:]

    # residual (z + inz) then L2 normalize across the full 272-wide row
    za = za + xr
    zb = zb + xp
    inv = pl.reciprocal(
        jnp.sqrt(jnp.sum(za * za, axis=-1, keepdims=True)
                 + jnp.sum(zb * zb, axis=-1, keepdims=True)) + 1e-10,
        approx=True)
    za = za * inv
    zb = zb * inv

    # self.aadecoder on cat([inz, z])  (4-way split-weight dots)
    t = _gelu(_dot(xr, w16_ref[_W16_AA_DEC_X]) + _dot(xp, wp_ref[_WP_AA_DEC_P])
              + _dot(za, w16_ref[_W16_AA_DEC_ZA]) + _dot(zb, wp_ref[_WP_AA_DEC_ZB])
              + r32(_R_AA_AB1))
    t = _gelu(_dot(t, wh_ref[_WH_AA_DEC2]) + r32(_R_AA_AB2))
    logits = _dot(t, aw3_ref[...]) + ab3_ref[...]
    m = jnp.max(logits, axis=-1, keepdims=True)
    s = logits - m
    aa_ref[...] = s - jnp.log(jnp.sum(jnp.exp(s), axis=-1, keepdims=True))

    # ==================== contacts : HeteroGAE_geo_Decoder ===================
    g1 = _graphnorm(_gelu(_sage(adj, xr, w16_ref[_W16_G_L0_L], r32(_R_G_BL0),
                                w16_ref[_W16_G_L0_R])), r32(_R_G_GN0, 3))
    g2 = _graphnorm(_gelu(_sage(adj, g1, wh_ref[_WH_G_L1_L], r32(_R_G_BL1),
                                wh_ref[_WH_G_L1_R])), r32(_R_G_GN1, 3)) + g1
    g3 = _graphnorm(_gelu(_sage(adj, g2, wh_ref[_WH_G_L2_L], r32(_R_G_BL2),
                                wh_ref[_WH_G_L2_R])), r32(_R_G_GN2, 3)) + g2

    # DynamicTanh(96) per JK chunk, then self.lin (JK-concat folded into split dots)
    a1 = r32(_R_G_DYT1_A)
    d1 = jnp.tanh(a1 * g1) * r32(_R_G_DYT1_W) + r32(_R_G_DYT1_B)
    d2 = jnp.tanh(a1 * g2) * r32(_R_G_DYT1_W + 1) + r32(_R_G_DYT1_B + 1)
    d3 = jnp.tanh(a1 * g3) * r32(_R_G_DYT1_W + 2) + r32(_R_G_DYT1_B + 2)
    t = _gelu(_dot(d1, wh_ref[_WH_G_JK1]) + _dot(d2, wh_ref[_WH_G_JK2])
              + _dot(d3, wh_ref[_WH_G_JK3]) + r32(_R_G_LB1))
    t = _gelu(_dot(t, wh_ref[_WH_G_LIN2]) + r32(_R_G_LB2))
    zg = _dot(t, w3216_ref[_W3216_G_LIN3]) + r16(_R16_G_LB3)
    zg = jnp.tanh(r16(_R16_DYT2_A) * zg) * r16(_R16_DYT2_W) + r16(_R16_DYT2_B)  # DyT(16)

    zg = zg + xr                                          # residual (lastlin == CRES)
    zg = zg * pl.reciprocal(
        jnp.sqrt(jnp.sum(zg * zg, axis=-1, keepdims=True)) + 1e-10, approx=True)

    # contact-pair gather fully in-kernel: selectors built from int32 indices
    # (no E x N operands DMA'd), gather via MXU matmul while zg stays in VMEM.
    e = ci_ref.shape[0]
    n = adj_ref.shape[0]
    node_ids = lax.broadcasted_iota(jnp.int32, (e, n), 1)
    sel_i = (node_ids == ci_ref[...]).astype(jnp.float32)   # (E, N)
    sel_j = (node_ids == cj_ref[...]).astype(jnp.float32)
    zi = _dot(sel_i, zg)                                    # (E, 16) == z[contact_idx[0]]
    zj = _dot(sel_j, zg)                                    # (E, 16) == z[contact_idx[1]]

    # contact MLP on cat([z_i, z_j])  (split-weight dots)
    t = _gelu(_dot(zi, w16_ref[_W16_CON_ZI]) + _dot(zj, w16_ref[_W16_CON_ZJ])
              + r32(_R_G_CB1))
    t = _gelu(_dot(t, wh_ref[_WH_G_CON2]) + r32(_R_G_CB2))
    scores = _dot(t, cw3_ref[...]) + r16_ref[_R16_CB3:_R16_CB3 + 1, 0:1]
    prob_ref[...] = jax.nn.sigmoid(scores)                  # (E, 1)


# ----------------------------------------------------------------------------
# Wrapper: MultiMonoDecoder.forward for a batch of graphs (one graph / grid step)
# ----------------------------------------------------------------------------
def multi_mono_decoder_forward(params, data, contact_pred_index):
    adj = data["adj"]                 # (B, N, N)  mean-normalized adjacency
    x_res = data["res"]               # (B, N, CRES)
    pos = data["positions"]           # (B, N, POS)
    B, N, _ = adj.shape
    E = contact_pred_index.shape[-1]
    CRES = x_res.shape[-1]
    POS = pos.shape[-1]
    XDIM = params["aw3"].shape[-1]

    ci = contact_pred_index[:, 0, :, None].astype(jnp.int32)   # (B, E, 1)
    cj = contact_pred_index[:, 1, :, None].astype(jnp.int32)

    def g_spec(*tail):                # per-graph block (leading batch dim squeezed)
        return pl.BlockSpec((None,) + tail, lambda b: (b,) + (0,) * len(tail))

    def w_spec(a):                    # whole array, VMEM-resident across the grid
        nd = a.ndim
        return pl.BlockSpec(a.shape, lambda b: (0,) * nd)

    p = params
    weights = (p["w_in16"], p["w_pos"], p["w_h32"], p["w_3216"],
               p["lw3b"], p["aw3"], p["cw3"],
               p["rows32"], p["rows16"], p["lb3b"], p["ab3"])

    in_specs = [g_spec(N, N), g_spec(N, CRES), g_spec(N, POS),
                g_spec(E, 1), g_spec(E, 1)] + [w_spec(w) for w in weights]
    out_shape = (jax.ShapeDtypeStruct((B, N, XDIM), jnp.float32),
                 jax.ShapeDtypeStruct((B, E, 1), jnp.float32))
    out_specs = (g_spec(N, XDIM), g_spec(E, 1))

    aa, probs = pl.pallas_call(
        _fused_kernel,
        grid=(B,),
        in_specs=in_specs,
        out_specs=out_specs,
        out_shape=out_shape,
        compiler_params=pltpu.CompilerParams(dimension_semantics=("parallel",)),
    )(adj, x_res, pos, ci, cj, *weights)

    return {"aa": aa,
            "edge_probs": jnp.squeeze(probs, axis=-1),
            "zgodnode": None, "fft2pred": None, "rt_pred": None}


# ----------------------------------------------------------------------------
# Deterministic parameter initialization (already in the packed/split layout)
# ----------------------------------------------------------------------------
def init_params(key, cres=16, pos=256, hidden=32, xdim=20):
    assert hidden == 32 and cres == 16 and pos == 256, "packed layout assumes these sizes"
    ks = iter(jax.random.split(key, 64))

    def mat(shape, scale=0.1):
        return scale * jax.random.normal(next(ks), shape, jnp.float32)

    def row(width, scale=0.1):
        return scale * jax.random.normal(next(ks), (1, width), jnp.float32)

    w_in16 = jnp.stack([mat((cres, hidden)) for _ in range(8)])     # (8,16,32)
    w_pos = jnp.stack([mat((pos, hidden)) for _ in range(4)])       # (4,256,32)
    w_h32 = jnp.stack([mat((hidden, hidden)) for _ in range(18)])   # (18,32,32)
    w_3216 = jnp.stack([mat((hidden, cres)) for _ in range(2)])     # (2,32,16)
    lw3b = mat((hidden, pos))                                       # (32,256)
    aw3 = mat((hidden, xdim))                                       # (32,20)
    cw3 = mat((hidden, 1))                                          # (32,1)

    ones32 = jnp.ones((1, hidden), jnp.float32)
    zeros32 = jnp.zeros((1, hidden), jnp.float32)
    half32 = jnp.full((1, hidden), 0.5, jnp.float32)
    rows32 = jnp.concatenate([
        row(32), ones32, zeros32, ones32,     # 0 aa bl0 ; 1-3 aa GraphNorm0 (w,b,ms)
        row(32), ones32, zeros32, ones32,     # 4 ; 5-7
        row(32), ones32, zeros32, ones32,     # 8 ; 9-11
        row(32), row(32),                     # 12,13 aa lin b1,b2
        row(32), row(32),                     # 14,15 aa aadecoder b1,b2
        row(32), ones32, zeros32, ones32,     # 16 ; 17-19 geo layer 0
        row(32), ones32, zeros32, ones32,     # 20 ; 21-23
        row(32), ones32, zeros32, ones32,     # 24 ; 25-27
        half32,                               # 28 DyT1 alpha (scalar, broadcast row)
        ones32, ones32, ones32,               # 29-31 DyT1 weight per JK chunk
        zeros32, zeros32, zeros32,            # 32-34 DyT1 bias per JK chunk
        row(32), row(32),                     # 35,36 geo lin b1,b2
        row(32), row(32),                     # 37,38 contact b1,b2
    ], axis=0)                                # (39, 32)

    ones16 = jnp.ones((1, cres), jnp.float32)
    zeros16 = jnp.zeros((1, cres), jnp.float32)
    half16 = jnp.full((1, cres), 0.5, jnp.float32)
    cb3_row = jnp.zeros((1, cres), jnp.float32).at[0, 0].set(
        0.1 * jax.random.normal(next(ks), (), jnp.float32))
    rows16 = jnp.concatenate([
        row(16),          # 0 aa lin b3 (first 16 features -> z_a)
        row(16),          # 1 geo lin b3
        half16,           # 2 DyT2 alpha
        ones16,           # 3 DyT2 weight
        zeros16,          # 4 DyT2 bias
        cb3_row,          # 5 contact b3 (lane 0)
    ], axis=0)            # (6, 16)

    lb3b = row(256)       # aa lin b3 (last 256 features -> z_b)
    ab3 = row(20)         # aadecoder b3

    return dict(w_in16=w_in16, w_pos=w_pos, w_h32=w_h32, w_3216=w_3216,
                lw3b=lw3b, aw3=aw3, cw3=cw3,
                rows32=rows32, rows16=rows16, lb3b=lb3b, ab3=ab3)


# ----------------------------------------------------------------------------
# Example run
# ----------------------------------------------------------------------------
if __name__ == "__main__":
    B = 2            # graphs per batch (grid axis, "parallel")
    N = 16           # residue nodes per graph
    CRES = 16        # in_channels['res'] (before +256)
    POS = 256        # positional feature width (hard-coded +256 in the module)
    HIDDEN = 32      # hidden_channels[('res','backbone','res')] = [32, 32, 32]
    XDIM = 20        # amino-acid logits
    E = 24           # contact-prediction pairs per graph

    key = jax.random.PRNGKey(0)
    k_par, k_x, k_pos = jax.random.split(key, 3)

    x_res = jax.random.normal(k_x, (B, N, CRES), jnp.float32)
    positions = jax.random.normal(k_pos, (B, N, POS), jnp.float32)

    # backbone chain edges (both directions), dense mean-aggregation adjacency
    src = jnp.concatenate([jnp.arange(N - 1), jnp.arange(1, N)])
    dst = jnp.concatenate([jnp.arange(1, N), jnp.arange(N - 1)])
    A = jnp.zeros((N, N), jnp.float32).at[dst, src].add(1.0)
    deg = jnp.maximum(jnp.sum(A, axis=1, keepdims=True), 1.0)
    adj = jnp.broadcast_to(A / deg, (B, N, N))

    # contact prediction pairs (B, 2, E)
    idx = jnp.arange(E, dtype=jnp.int32)
    cpi = jnp.stack([idx % N, (idx * 3 + 1) % N])
    contact_pred_index = jnp.broadcast_to(cpi, (B, 2, E))

    params = init_params(k_par, CRES, POS, HIDDEN, XDIM)
    data = {"res": x_res, "positions": positions, "adj": adj}

    fwd = jax.jit(multi_mono_decoder_forward)
    out = fwd(params, data, contact_pred_index)
    jax.block_until_ready(out["aa"])
    jax.block_until_ready(out["edge_probs"])

    assert out["aa"].shape == (B, N, XDIM)
    assert out["edge_probs"].shape == (B, E)
    assert bool(jnp.all(jnp.isfinite(out["aa"])))
    assert bool(jnp.all(jnp.isfinite(out["edge_probs"])))
    # log-softmax rows sum to 1 in prob space; contact probs in (0,1)
    assert bool(jnp.allclose(jnp.sum(jnp.exp(out["aa"]), axis=-1), 1.0, atol=1e-3))
    assert bool(jnp.all((out["edge_probs"] > 0.0) & (out["edge_probs"] < 1.0)))
    assert out["zgodnode"] is None and out["fft2pred"] is None and out["rt_pred"] is None

    print("KERNEL_OK")
</pallas_src>

<mosaic_0001>
module attributes {stable_mosaic.version = 11 : i64} {
  func.func @_fused_kernel(%arg0: i32, %arg1: memref<1x16x16xf32, #tpu.memory_space<vmem>>, %arg2: memref<1x16x16xf32, #tpu.memory_space<vmem>>, %arg3: memref<1x16x256xf32, #tpu.memory_space<vmem>>, %arg4: memref<1x24x1xi32, #tpu.memory_space<vmem>>, %arg5: memref<1x24x1xi32, #tpu.memory_space<vmem>>, %arg6: memref<8x16x32xf32, #tpu.memory_space<vmem>>, %arg7: memref<4x256x32xf32, #tpu.memory_space<vmem>>, %arg8: memref<18x32x32xf32, #tpu.memory_space<vmem>>, %arg9: memref<2x32x16xf32, #tpu.memory_space<vmem>>, %arg10: memref<32x256xf32, #tpu.memory_space<vmem>>, %arg11: memref<32x20xf32, #tpu.memory_space<vmem>>, %arg12: memref<32x1xf32, #tpu.memory_space<vmem>>, %arg13: memref<39x32xf32, #tpu.memory_space<vmem>>, %arg14: memref<6x16xf32, #tpu.memory_space<vmem>>, %arg15: memref<1x256xf32, #tpu.memory_space<vmem>>, %arg16: memref<1x20xf32, #tpu.memory_space<vmem>>, %arg17: memref<1x16x20xf32, #tpu.memory_space<vmem>>, %arg18: memref<1x24x1xf32, #tpu.memory_space<vmem>>) attributes {dimension_semantics = [#tpu.dimension_semantics<parallel>], iteration_bounds = array<i64: 2>, scalar_prefetch = 0 : i64, scratch_operands = 0 : i64, tpu.core_type = #tpu.core_type<tc>, window_params = [{transform_indices = @transform_0, window_bounds = array<i64: 1, 16, 16>}, {transform_indices = @transform_1, window_bounds = array<i64: 1, 16, 16>}, {transform_indices = @transform_2, window_bounds = array<i64: 1, 16, 256>}, {transform_indices = @transform_3, window_bounds = array<i64: 1, 24, 1>}, {transform_indices = @transform_4, window_bounds = array<i64: 1, 24, 1>}, {pipeline_mode = #tpu.pipeline_mode<synchronous>, transform_indices = @transform_5, window_bounds = array<i64: 8, 16, 32>}, {pipeline_mode = #tpu.pipeline_mode<synchronous>, transform_indices = @transform_6, window_bounds = array<i64: 4, 256, 32>}, {pipeline_mode = #tpu.pipeline_mode<synchronous>, transform_indices = @transform_7, window_bounds = array<i64: 18, 32, 32>}, {pipeline_mode = #tpu.pipeline_mode<synchronous>, transform_indices = @transform_8, window_bounds = array<i64: 2, 32, 16>}, {pipeline_mode = #tpu.pipeline_mode<synchronous>, transform_indices = @transform_9, window_bounds = array<i64: 32, 256>}, {pipeline_mode = #tpu.pipeline_mode<synchronous>, transform_indices = @transform_10, window_bounds = array<i64: 32, 20>}, {pipeline_mode = #tpu.pipeline_mode<synchronous>, transform_indices = @transform_11, window_bounds = array<i64: 32, 1>}, {pipeline_mode = #tpu.pipeline_mode<synchronous>, transform_indices = @transform_12, window_bounds = array<i64: 39, 32>}, {pipeline_mode = #tpu.pipeline_mode<synchronous>, transform_indices = @transform_13, window_bounds = array<i64: 6, 16>}, {pipeline_mode = #tpu.pipeline_mode<synchronous>, transform_indices = @transform_14, window_bounds = array<i64: 1, 256>}, {pipeline_mode = #tpu.pipeline_mode<synchronous>, transform_indices = @transform_15, window_bounds = array<i64: 1, 20>}, {transform_indices = @transform_16, window_bounds = array<i64: 1, 16, 20>}, {transform_indices = @transform_17, window_bounds = array<i64: 1, 24, 1>}]} {
    %c0 = arith.constant 0 : index
    %c0_0 = arith.constant 0 : index
    %c0_1 = arith.constant 0 : index
    %0 = vector.load %arg1[%c0, %c0_0, %c0_1] : memref<1x16x16xf32, #tpu.memory_space<vmem>>, vector<1x16x16xf32>
    %1 = vector.shape_cast %0 : vector<1x16x16xf32> to vector<16x16xf32>
    %c0_2 = arith.constant 0 : index
    %c0_3 = arith.constant 0 : index
    %c0_4 = arith.constant 0 : index
    %2 = vector.load %arg2[%c0_2, %c0_3, %c0_4] : memref<1x16x16xf32, #tpu.memory_space<vmem>>, vector<1x16x16xf32>
    %3 = vector.shape_cast %2 : vector<1x16x16xf32> to vector<16x16xf32>
    %c0_5 = arith.constant 0 : index
    %c0_6 = arith.constant 0 : index
    %c0_7 = arith.constant 0 : index
    %4 = vector.load %arg3[%c0_5, %c0_6, %c0_7] : memref<1x16x256xf32, #tpu.memory_space<vmem>>, vector<1x16x256xf32>
    %5 = vector.shape_cast %4 : vector<1x16x256xf32> to vector<16x256xf32>
    %cst = arith.constant dense<0.000000e+00> : vector<16x16xf32>
    %6 = tpu.matmul %1, %3, %cst {dimension_numbers = #tpu.dot_dimension_numbers<[1], [0], [0], [1], [0, 0, 1, 1], [], []>} : vector<16x16xf32>, vector<16x16xf32>, vector<16x16xf32> -> vector<16x16xf32>
    %cst_8 = arith.constant dense<0.000000e+00> : vector<16x256xf32>
    %7 = tpu.matmul %1, %5, %cst_8 {dimension_numbers = #tpu.dot_dimension_numbers<[1], [0], [0], [1], [0, 0, 1, 1], [], []>} : vector<16x16xf32>, vector<16x256xf32>, vector<16x256xf32> -> vector<16x256xf32>
    %c0_9 = arith.constant 0 : index
    %c0_10 = arith.constant 0 : index
    %c0_11 = arith.constant 0 : index
    %8 = vector.load %arg6[%c0_9, %c0_10, %c0_11] : memref<8x16x32xf32, #tpu.memory_space<vmem>>, vector<1x16x32xf32>
    %9 = vector.shape_cast %8 : vector<1x16x32xf32> to vector<16x32xf32>
    %cst_12 = arith.constant dense<0.000000e+00> : vector<16x32xf32>
    %10 = tpu.matmul %6, %9, %cst_12 {dimension_numbers = #tpu.dot_dimension_numbers<[1], [0], [0], [1], [0, 0, 1, 1], [], []>} : vector<16x16xf32>, vector<16x32xf32>, vector<16x32xf32> -> vector<16x32xf32>
    %c0_13 = arith.constant 0 : index
    %c0_14 = arith.constant 0 : index
    %c0_15 = arith.constant 0 : index
    %11 = vector.load %arg7[%c0_13, %c0_14, %c0_15] : memref<4x256x32xf32, #tpu.memory_space<vmem>>, vector<1x256x32xf32>
    %12 = vector.shape_cast %11 : vector<1x256x32xf32> to vector<256x32xf32>
    %cst_16 = arith.constant dense<0.000000e+00> : vector<16x32xf32>
    %13 = tpu.matmul %7, %12, %cst_16 {dimension_numbers = #tpu.dot_dimension_numbers<[1], [0], [0], [1], [0, 0, 1, 1], [], []>} : vector<16x256xf32>, vector<256x32xf32>, vector<16x32xf32> -> vector<16x32xf32>
    %14 = arith.addf %10, %13 : vector<16x32xf32>
    %c1 = arith.constant 1 : index
    %c0_17 = arith.constant 0 : index
    %c0_18 = arith.constant 0 : index
    %15 = vector.load %arg6[%c1, %c0_17, %c0_18] : memref<8x16x32xf32, #tpu.memory_space<vmem>>, vector<1x16x32xf32>
    %16 = vector.shape_cast %15 : vector<1x16x32xf32> to vector<16x32xf32>
    %cst_19 = arith.constant dense<0.000000e+00> : vector<16x32xf32>
    %17 = tpu.matmul %3, %16, %cst_19 {dimension_numbers = #tpu.dot_dimension_numbers<[1], [0], [0], [1], [0, 0, 1, 1], [], []>} : vector<16x16xf32>, vector<16x32xf32>, vector<16x32xf32> -> vector<16x32xf32>
    %18 = arith.addf %14, %17 : vector<16x32xf32>
    %c1_20 = arith.constant 1 : index
    %c0_21 = arith.constant 0 : index
    %c0_22 = arith.constant 0 : index
    %19 = vector.load %arg7[%c1_20, %c0_21, %c0_22] : memref<4x256x32xf32, #tpu.memory_space<vmem>>, vector<1x256x32xf32>
    %20 = vector.shape_cast %19 : vector<1x256x32xf32> to vector<256x32xf32>
    %cst_23 = arith.constant dense<0.000000e+00> : vector<16x32xf32>
    %21 = tpu.matmul %5, %20, %cst_23 {dimension_numbers = #tpu.dot_dimension_numbers<[1], [0], [0], [1], [0, 0, 1, 1], [], []>} : vector<16x256xf32>, vector<256x32xf32>, vector<16x32xf32> -> vector<16x32xf32>
    %22 = arith.addf %18, %21 : vector<16x32xf32>
    %c0_24 = arith.constant 0 : index
    %c0_25 = arith.constant 0 : index
    %23 = vector.load %arg13[%c0_24, %c0_25] : memref<39x32xf32, #tpu.memory_space<vmem>>, vector<1x32xf32>
    %24 = vector.broadcast %23 : vector<1x32xf32> to vector<16x32xf32>
    %25 = arith.addf %22, %24 : vector<16x32xf32>
    %cst_26 = arith.constant 5.000000e-01 : f32
    %26 = vector.broadcast %cst_26 : f32 to vector<16x32xf32>
    %27 = arith.mulf %26, %25 : vector<16x32xf32>
    %cst_27 = arith.constant 0.707106769 : f32
    %28 = vector.broadcast %cst_27 : f32 to vector<16x32xf32>
    %29 = arith.mulf %25, %28 : vector<16x32xf32>
    %30 = math.erf %29 : vector<16x32xf32>
    %cst_28 = arith.constant 1.000000e+00 : f32
    %31 = vector.broadcast %cst_28 : f32 to vector<16x32xf32>
    %32 = arith.addf %31, %30 : vector<16x32xf32>
    %33 = arith.mulf %27, %32 : vector<16x32xf32>
    %c1_29 = arith.constant 1 : index
    %c0_30 = arith.constant 0 : index
    %34 = vector.load %arg13[%c1_29, %c0_30] : memref<39x32xf32, #tpu.memory_space<vmem>>, vector<3x32xf32>
    %cst_31 = arith.constant dense<0.000000e+00> : vector<32xf32>
    %35 = vector.multi_reduction <add>, %33, %cst_31 [0] : vector<16x32xf32> to vector<32xf32>
    %36 = vector.shape_cast %35 : vector<32xf32> to vector<1x32xf32>
    %cst_32 = arith.constant 1.600000e+01 : f32
    %37 = vector.broadcast %cst_32 : f32 to vector<1x32xf32>
    %38 = arith.divf %36, %37 : vector<1x32xf32>
    %39 = vector.extract_strided_slice %34 {offsets = [2, 0], sizes = [1, 32], strides = [1, 1]} : vector<3x32xf32> to vector<1x32xf32>
    %40 = arith.mulf %38, %39 : vector<1x32xf32>
    %41 = vector.broadcast %40 : vector<1x32xf32> to vector<16x32xf32>
    %42 = arith.subf %33, %41 : vector<16x32xf32>
    %43 = arith.mulf %42, %42 : vector<16x32xf32>
    %cst_33 = arith.constant dense<0.000000e+00> : vector<32xf32>
    %44 = vector.multi_reduction <add>, %43, %cst_33 [0] : vector<16x32xf32> to vector<32xf32>
    %45 = vector.shape_cast %44 : vector<32xf32> to vector<1x32xf32>
    %cst_34 = arith.constant 1.600000e+01 : f32
    %46 = vector.broadcast %cst_34 : f32 to vector<1x32xf32>
    %47 = arith.divf %45, %46 : vector<1x32xf32>
    %48 = vector.extract_strided_slice %34 {offsets = [0, 0], sizes = [1, 32], strides = [1, 1]} : vector<3x32xf32> to vector<1x32xf32>
    %49 = vector.broadcast %48 : vector<1x32xf32> to vector<16x32xf32>
    %50 = arith.mulf %49, %42 : vector<16x32xf32>
    %cst_35 = arith.constant 9.99999974E-6 : f32
    %51 = vector.broadcast %cst_35 : f32 to vector<1x32xf32>
    %52 = arith.addf %47, %51 : vector<1x32xf32>
    %53 = math.rsqrt %52 : vector<1x32xf32>
    %54 = vector.broadcast %53 : vector<1x32xf32> to vector<16x32xf32>
    %55 = arith.mulf %50, %54 : vector<16x32xf32>
    %56 = vector.extract_strided_slice %34 {offsets = [1, 0], sizes = [1, 32], strides = [1, 1]} : vector<3x32xf32> to vector<1x32xf32>
    %57 = vector.broadcast %56 : vector<1x32xf32> to vector<16x32xf32>
    %58 = arith.addf %55, %57 : vector<16x32xf32>
    %c0_36 = arith.constant 0 : index
    %c0_37 = arith.constant 0 : index
    %c0_38 = arith.constant 0 : index
    %59 = vector.load %arg8[%c0_36, %c0_37, %c0_38] : memref<18x32x32xf32, #tpu.memory_space<vmem>>, vector<1x32x32xf32>
    %60 = vector.shape_cast %59 : vector<1x32x32xf32> to vector<32x32xf32>
    %c4 = arith.constant 4 : index
    %c0_39 = arith.constant 0 : index
    %61 = vector.load %arg13[%c4, %c0_39] : memref<39x32xf32, #tpu.memory_space<vmem>>, vector<1x32xf32>
    %c1_40 = arith.constant 1 : index
    %c0_41 = arith.constant 0 : index
    %c0_42 = arith.constant 0 : index
    %62 = vector.load %arg8[%c1_40, %c0_41, %c0_42] : memref<18x32x32xf32, #tpu.memory_space<vmem>>, vector<1x32x32xf32>
    %63 = vector.shape_cast %62 : vector<1x32x32xf32> to vector<32x32xf32>
    %cst_43 = arith.constant dense<0.000000e+00> : vector<16x32xf32>
    %64 = tpu.matmul %1, %58, %cst_43 {dimension_numbers = #tpu.dot_dimension_numbers<[1], [0], [0], [1], [0, 0, 1, 1], [], []>} : vector<16x16xf32>, vector<16x32xf32>, vector<16x32xf32> -> vector<16x32xf32>
    %cst_44 = arith.constant dense<0.000000e+00> : vector<16x32xf32>
    %65 = tpu.matmul %64, %60, %cst_44 {dimension_numbers = #tpu.dot_dimension_numbers<[1], [0], [0], [1], [0, 0, 1, 1], [], []>} : vector<16x32xf32>, vector<32x32xf32>, vector<16x32xf32> -> vector<16x32xf32>
    %66 = vector.broadcast %61 : vector<1x32xf32> to vector<16x32xf32>
    %67 = arith.addf %65, %66 : vector<16x32xf32>
    %cst_45 = arith.constant dense<0.000000e+00> : vector<16x32xf32>
    %68 = tpu.matmul %58, %63, %cst_45 {dimension_numbers = #tpu.dot_dimension_numbers<[1], [0], [0], [1], [0, 0, 1, 1], [], []>} : vector<16x32xf32>, vector<32x32xf32>, vector<16x32xf32> -> vector<16x32xf32>
    %69 = arith.addf %67, %68 : vector<16x32xf32>
    %cst_46 = arith.constant 5.000000e-01 : f32
    %70 = vector.broadcast %cst_46 : f32 to vector<16x32xf32>
    %71 = arith.mulf %70, %69 : vector<16x32xf32>
    %cst_47 = arith.constant 0.707106769 : f32
    %72 = vector.broadcast %cst_47 : f32 to vector<16x32xf32>
    %73 = arith.mulf %69, %72 : vector<16x32xf32>
    %74 = math.erf %73 : vector<16x32xf32>
    %cst_48 = arith.constant 1.000000e+00 : f32
    %75 = vector.broadcast %cst_48 : f32 to vector<16x32xf32>
    %76 = arith.addf %75, %74 : vector<16x32xf32>
    %77 = arith.mulf %71, %76 : vector<16x32xf32>
    %c5 = arith.constant 5 : index
    %c0_49 = arith.constant 0 : index
    %78 = vector.load %arg13[%c5, %c0_49] : memref<39x32xf32, #tpu.memory_space<vmem>>, vector<3x32xf32>
    %cst_50 = arith.constant dense<0.000000e+00> : vector<32xf32>
    %79 = vector.multi_reduction <add>, %77, %cst_50 [0] : vector<16x32xf32> to vector<32xf32>
    %80 = vector.shape_cast %79 : vector<32xf32> to vector<1x32xf32>
    %cst_51 = arith.constant 1.600000e+01 : f32
    %81 = vector.broadcast %cst_51 : f32 to vector<1x32xf32>
    %82 = arith.divf %80, %81 : vector<1x32xf32>
    %83 = vector.extract_strided_slice %78 {offsets = [2, 0], sizes = [1, 32], strides = [1, 1]} : vector<3x32xf32> to vector<1x32xf32>
    %84 = arith.mulf %82, %83 : vector<1x32xf32>
    %85 = vector.broadcast %84 : vector<1x32xf32> to vector<16x32xf32>
    %86 = arith.subf %77, %85 : vector<16x32xf32>
    %87 = arith.mulf %86, %86 : vector<16x32xf32>
    %cst_52 = arith.constant dense<0.000000e+00> : vector<32xf32>
    %88 = vector.multi_reduction <add>, %87, %cst_52 [0] : vector<16x32xf32> to vector<32xf32>
    %89 = vector.shape_cast %88 : vector<32xf32> to vector<1x32xf32>
    %cst_53 = arith.constant 1.600000e+01 : f32
    %90 = vector.broadcast %cst_53 : f32 to vector<1x32xf32>
    %91 = arith.divf %89, %90 : vector<1x32xf32>
    %92 = vector.extract_strided_slice %78 {offsets = [0, 0], sizes = [1, 32], strides = [1, 1]} : vector<3x32xf32> to vector<1x32xf32>
    %93 = vector.broadcast %92 : vector<1x32xf32> to vector<16x32xf32>
    %94 = arith.mulf %93, %86 : vector<16x32xf32>
    %cst_54 = arith.constant 9.99999974E-6 : f32
    %95 = vector.broadcast %cst_54 : f32 to vector<1x32xf32>
    %96 = arith.addf %91, %95 : vector<1x32xf32>
    %97 = math.rsqrt %96 : vector<1x32xf32>
    %98 = vector.broadcast %97 : vector<1x32xf32> to vector<16x32xf32>
    %99 = arith.mulf %94, %98 : vector<16x32xf32>
    %100 = vector.extract_strided_slice %78 {offsets = [1, 0], sizes = [1, 32], strides = [1, 1]} : vector<3x32xf32> to vector<1x32xf32>
    %101 = vector.broadcast %100 : vector<1x32xf32> to vector<16x32xf32>
    %102 = arith.addf %99, %101 : vector<16x32xf32>
    %103 = arith.addf %102, %58 : vector<16x32xf32>
    %c2 = arith.constant 2 : index
    %c0_55 = arith.constant 0 : index
    %c0_56 = arith.constant 0 : index
    %104 = vector.load %arg8[%c2, %c0_55, %c0_56] : memref<18x32x32xf32, #tpu.memory_space<vmem>>, vector<1x32x32xf32>
    %105 = vector.shape_cast %104 : vector<1x32x32xf32> to vector<32x32xf32>
    %c8 = arith.constant 8 : index
    %c0_57 = arith.constant 0 : index
    %106 = vector.load %arg13[%c8, %c0_57] : memref<39x32xf32, #tpu.memory_space<vmem>>, vector<1x32xf32>
    %c3 = arith.constant 3 : index
    %c0_58 = arith.constant 0 : index
    %c0_59 = arith.constant 0 : index
    %107 = vector.load %arg8[%c3, %c0_58, %c0_59] : memref<18x32x32xf32, #tpu.memory_space<vmem>>, vector<1x32x32xf32>
    %108 = vector.shape_cast %107 : vector<1x32x32xf32> to vector<32x32xf32>
    %cst_60 = arith.constant dense<0.000000e+00> : vector<16x32xf32>
    %109 = tpu.matmul %1, %103, %cst_60 {dimension_numbers = #tpu.dot_dimension_numbers<[1], [0], [0], [1], [0, 0, 1, 1], [], []>} : vector<16x16xf32>, vector<16x32xf32>, vector<16x32xf32> -> vector<16x32xf32>
    %cst_61 = arith.constant dense<0.000000e+00> : vector<16x32xf32>
    %110 = tpu.matmul %109, %105, %cst_61 {dimension_numbers = #tpu.dot_dimension_numbers<[1], [0], [0], [1], [0, 0, 1, 1], [], []>} : vector<16x32xf32>, vector<32x32xf32>, vector<16x32xf32> -> vector<16x32xf32>
    %111 = vector.broadcast %106 : vector<1x32xf32> to vector<16x32xf32>
    %112 = arith.addf %110, %111 : vector<16x32xf32>
    %cst_62 = arith.constant dense<0.000000e+00> : vector<16x32xf32>
    %113 = tpu.matmul %103, %108, %cst_62 {dimension_numbers = #tpu.dot_dimension_numbers<[1], [0], [0], [1], [0, 0, 1, 1], [], []>} : vector<16x32xf32>, vector<32x32xf32>, vector<16x32xf32> -> vector<16x32xf32>
    %114 = arith.addf %112, %113 : vector<16x32xf32>
    %cst_63 = arith.constant 5.000000e-01 : f32
    %115 = vector.broadcast %cst_63 : f32 to vector<16x32xf32>
    %116 = arith.mulf %115, %114 : vector<16x32xf32>
    %cst_64 = arith.constant 0.707106769 : f32
    %117 = vector.broadcast %cst_64 : f32 to vector<16x32xf32>
    %118 = arith.mulf %114, %117 : vector<16x32xf32>
    %119 = math.erf %118 : vector<16x32xf32>
    %cst_65 = arith.constant 1.000000e+00 : f32
    %120 = vector.broadcast %cst_65 : f32 to vector<16x32xf32>
    %121 = arith.addf %120, %119 : vector<16x32xf32>
    %122 = arith.mulf %116, %121 : vector<16x32xf32>
    %c9 = arith.constant 9 : index
    %c0_66 = arith.constant 0 : index
    %123 = vector.load %arg13[%c9, %c0_66] : memref<39x32xf32, #tpu.memory_space<vmem>>, vector<3x32xf32>
    %cst_67 = arith.constant dense<0.000000e+00> : vector<32xf32>
    %124 = vector.multi_reduction <add>, %122, %cst_67 [0] : vector<16x32xf32> to vector<32xf32>
    %125 = vector.shape_cast %124 : vector<32xf32> to vector<1x32xf32>
    %cst_68 = arith.constant 1.600000e+01 : f32
    %126 = vector.broadcast %cst_68 : f32 to vector<1x32xf32>
    %127 = arith.divf %125, %126 : vector<1x32xf32>
    %128 = vector.extract_strided_slice %123 {offsets = [2, 0], sizes = [1, 32], strides = [1, 1]} : vector<3x32xf32> to vector<1x32xf32>
    %129 = arith.mulf %127, %128 : vector<1x32xf32>
    %130 = vector.broadcast %129 : vector<1x32xf32> to vector<16x32xf32>
    %131 = arith.subf %122, %130 : vector<16x32xf32>
    %132 = arith.mulf %131, %131 : vector<16x32xf32>
    %cst_69 = arith.constant dense<0.000000e+00> : vector<32xf32>
    %133 = vector.multi_reduction <add>, %132, %cst_69 [0] : vector<16x32xf32> to vector<32xf32>
    %134 = vector.shape_cast %133 : vector<32xf32> to vector<1x32xf32>
    %cst_70 = arith.constant 1.600000e+01 : f32
    %135 = vector.broadcast %cst_70 : f32 to vector<1x32xf32>
    %136 = arith.divf %134, %135 : vector<1x32xf32>
    %137 = vector.extract_strided_slice %123 {offsets = [0, 0], sizes = [1, 32], strides = [1, 1]} : vector<3x32xf32> to vector<1x32xf32>
    %138 = vector.broadcast %137 : vector<1x32xf32> to vector<16x32xf32>
    %139 = arith.mulf %138, %131 : vector<16x32xf32>
    %cst_71 = arith.constant 9.99999974E-6 : f32
    %140 = vector.broadcast %cst_71 : f32 to vector<1x32xf32>
    %141 = arith.addf %136, %140 : vector<1x32xf32>
    %142 = math.rsqrt %141 : vector<1x32xf32>
    %143 = vector.broadcast %142 : vector<1x32xf32> to vector<16x32xf32>
    %144 = arith.mulf %139, %143 : vector<16x32xf32>
    %145 = vector.extract_strided_slice %123 {offsets = [1, 0], sizes = [1, 32], strides = [1, 1]} : vector<3x32xf32> to vector<1x32xf32>
    %146 = vector.broadcast %145 : vector<1x32xf32> to vector<16x32xf32>
    %147 = arith.addf %144, %146 : vector<16x32xf32>
    %148 = arith.addf %147, %103 : vector<16x32xf32>
    %c4_72 = arith.constant 4 : index
    %c0_73 = arith.constant 0 : index
    %c0_74 = arith.constant 0 : index
    %149 = vector.load %arg8[%c4_72, %c0_73, %c0_74] : memref<18x32x32xf32, #tpu.memory_space<vmem>>, vector<1x32x32xf32>
    %150 = vector.shape_cast %149 : vector<1x32x32xf32> to vector<32x32xf32>
    %cst_75 = arith.constant dense<0.000000e+00> : vector<16x32xf32>
    %151 = tpu.matmul %58, %150, %cst_75 {dimension_numbers = #tpu.dot_dimension_numbers<[1], [0], [0], [1], [0, 0, 1, 1], [], []>} : vector<16x32xf32>, vector<32x32xf32>, vector<16x32xf32> -> vector<16x32xf32>
    %c5_76 = arith.constant 5 : index
    %c0_77 = arith.constant 0 : index
    %c0_78 = arith.constant 0 : index
    %152 = vector.load %arg8[%c5_76, %c0_77, %c0_78] : memref<18x32x32xf32, #tpu.memory_space<vmem>>, vector<1x32x32xf32>
    %153 = vector.shape_cast %152 : vector<1x32x32xf32> to vector<32x32xf32>
    %cst_79 = arith.constant dense<0.000000e+00> : vector<16x32xf32>
    %154 = tpu.matmul %103, %153, %cst_79 {dimension_numbers = #tpu.dot_dimension_numbers<[1], [0], [0], [1], [0, 0, 1, 1], [], []>} : vector<16x32xf32>, vector<32x32xf32>, vector<16x32xf32> -> vector<16x32xf32>
    %155 = arith.addf %151, %154 : vector<16x32xf32>
    %c6 = arith.constant 6 : index
    %c0_80 = arith.constant 0 : index
    %c0_81 = arith.constant 0 : index
    %156 = vector.load %arg8[%c6, %c0_80, %c0_81] : memref<18x32x32xf32, #tpu.memory_space<vmem>>, vector<1x32x32xf32>
    %157 = vector.shape_cast %156 : vector<1x32x32xf32> to vector<32x32xf32>
    %cst_82 = arith.constant dense<0.000000e+00> : vector<16x32xf32>
    %158 = tpu.matmul %148, %157, %cst_82 {dimension_numbers = #tpu.dot_dimension_numbers<[1], [0], [0], [1], [0, 0, 1, 1], [], []>} : vector<16x32xf32>, vector<32x32xf32>, vector<16x32xf32> -> vector<16x32xf32>
    %159 = arith.addf %155, %158 : vector<16x32xf32>
    %c12 = arith.constant 12 : index
    %c0_83 = arith.constant 0 : index
    %160 = vector.load %arg13[%c12, %c0_83] : memref<39x32xf32, #tpu.memory_space<vmem>>, vector<1x32xf32>
    %161 = vector.broadcast %160 : vector<1x32xf32> to vector<16x32xf32>
    %162 = arith.addf %159, %161 : vector<16x32xf32>
    %cst_84 = arith.constant 5.000000e-01 : f32
    %163 = vector.broadcast %cst_84 : f32 to vector<16x32xf32>
    %164 = arith.mulf %163, %162 : vector<16x32xf32>
    %cst_85 = arith.constant 0.707106769 : f32
    %165 = vector.broadcast %cst_85 : f32 to vector<16x32xf32>
    %166 = arith.mulf %162, %165 : vector<16x32xf32>
    %167 = math.erf %166 : vector<16x32xf32>
    %cst_86 = arith.constant 1.000000e+00 : f32
    %168 = vector.broadcast %cst_86 : f32 to vector<16x32xf32>
    %169 = arith.addf %168, %167 : vector<16x32xf32>
    %170 = arith.mulf %164, %169 : vector<16x32xf32>
    %c7 = arith.constant 7 : index
    %c0_87 = arith.constant 0 : index
    %c0_88 = arith.constant 0 : index
    %171 = vector.load %arg8[%c7, %c0_87, %c0_88] : memref<18x32x32xf32, #tpu.memory_space<vmem>>, vector<1x32x32xf32>
    %172 = vector.shape_cast %171 : vector<1x32x32xf32> to vector<32x32xf32>
    %cst_89 = arith.constant dense<0.000000e+00> : vector<16x32xf32>
    %173 = tpu.matmul %170, %172, %cst_89 {dimension_numbers = #tpu.dot_dimension_numbers<[1], [0], [0], [1], [0, 0, 1, 1], [], []>} : vector<16x32xf32>, vector<32x32xf32>, vector<16x32xf32> -> vector<16x32xf32>
    %c13 = arith.constant 13 : index
    %c0_90 = arith.constant 0 : index
    %174 = vector.load %arg13[%c13, %c0_90] : memref<39x32xf32, #tpu.memory_space<vmem>>, vector<1x32xf32>
    %175 = vector.broadcast %174 : vector<1x32xf32> to vector<16x32xf32>
    %176 = arith.addf %173, %175 : vector<16x32xf32>
    %cst_91 = arith.constant 5.000000e-01 : f32
    %177 = vector.broadcast %cst_91 : f32 to vector<16x32xf32>
    %178 = arith.mulf %177, %176 : vector<16x32xf32>
    %cst_92 = arith.constant 0.707106769 : f32
    %179 = vector.broadcast %cst_92 : f32 to vector<16x32xf32>
    %180 = arith.mulf %176, %179 : vector<16x32xf32>
    %181 = math.erf %180 : vector<16x32xf32>
    %cst_93 = arith.constant 1.000000e+00 : f32
    %182 = vector.broadcast %cst_93 : f32 to vector<16x32xf32>
    %183 = arith.addf %182, %181 : vector<16x32xf32>
    %184 = arith.mulf %178, %183 : vector<16x32xf32>
    %c0_94 = arith.constant 0 : index
    %c0_95 = arith.constant 0 : index
    %c0_96 = arith.constant 0 : index
    %185 = vector.load %arg9[%c0_94, %c0_95, %c0_96] : memref<2x32x16xf32, #tpu.memory_space<vmem>>, vector<1x32x16xf32>
    %186 = vector.shape_cast %185 : vector<1x32x16xf32> to vector<32x16xf32>
    %cst_97 = arith.constant dense<0.000000e+00> : vector<16x16xf32>
    %187 = tpu.matmul %184, %186, %cst_97 {dimension_numbers = #tpu.dot_dimension_numbers<[1], [0], [0], [1], [0, 0, 1, 1], [], []>} : vector<16x32xf32>, vector<32x16xf32>, vector<16x16xf32> -> vector<16x16xf32>
    %c0_98 = arith.constant 0 : index
    %c0_99 = arith.constant 0 : index
    %188 = vector.load %arg14[%c0_98, %c0_99] : memref<6x16xf32, #tpu.memory_space<vmem>>, vector<1x16xf32>
    %189 = vector.broadcast %188 : vector<1x16xf32> to vector<16x16xf32>
    %190 = arith.addf %187, %189 : vector<16x16xf32>
    %191 = math.tanh %190 : vector<16x16xf32>
    %c0_100 = arith.constant 0 : index
    %c0_101 = arith.constant 0 : index
    %192 = vector.load %arg10[%c0_100, %c0_101] : memref<32x256xf32, #tpu.memory_space<vmem>>, vector<32x256xf32>
    %cst_102 = arith.constant dense<0.000000e+00> : vector<16x256xf32>
    %193 = tpu.matmul %184, %192, %cst_102 {dimension_numbers = #tpu.dot_dimension_numbers<[1], [0], [0], [1], [0, 0, 1, 1], [], []>} : vector<16x32xf32>, vector<32x256xf32>, vector<16x256xf32> -> vector<16x256xf32>
    %c0_103 = arith.constant 0 : index
    %c0_104 = arith.constant 0 : index
    %194 = vector.load %arg15[%c0_103, %c0_104] : memref<1x256xf32, #tpu.memory_space<vmem>>, vector<1x256xf32>
    %195 = vector.broadcast %194 : vector<1x256xf32> to vector<16x256xf32>
    %196 = arith.addf %193, %195 : vector<16x256xf32>
    %197 = math.tanh %196 : vector<16x256xf32>
    %198 = arith.addf %191, %3 : vector<16x16xf32>
    %199 = arith.addf %197, %5 : vector<16x256xf32>
    %200 = arith.mulf %198, %198 : vector<16x16xf32>
    %cst_105 = arith.constant dense<0.000000e+00> : vector<16xf32>
    %201 = vector.multi_reduction <add>, %200, %cst_105 [1] : vector<16x16xf32> to vector<16xf32>
    %202 = vector.shape_cast %201 : vector<16xf32> to vector<16x1xf32>
    %203 = arith.mulf %199, %199 : vector<16x256xf32>
    %cst_106 = arith.constant dense<0.000000e+00> : vector<16xf32>
    %204 = vector.multi_reduction <add>, %203, %cst_106 [1] : vector<16x256xf32> to vector<16xf32>
    %205 = vector.shape_cast %204 : vector<16xf32> to vector<16x1xf32>
    %206 = arith.addf %202, %205 : vector<16x1xf32>
    %207 = math.sqrt %206 : vector<16x1xf32>
    %cst_107 = arith.constant 1.000000e-10 : f32
    %208 = vector.broadcast %cst_107 : f32 to vector<16x1xf32>
    %209 = arith.addf %207, %208 : vector<16x1xf32>
    %210 = tpu.reciprocal %209 {approx = true} : vector<16x1xf32> -> vector<16x1xf32>
    %211 = vector.broadcast %210 : vector<16x1xf32> to vector<16x16xf32>
    %212 = arith.mulf %198, %211 : vector<16x16xf32>
    %213 = vector.broadcast %210 : vector<16x1xf32> to vector<16x256xf32>
    %214 = arith.mulf %199, %213 : vector<16x256xf32>
    %c2_108 = arith.constant 2 : index
    %c0_109 = arith.constant 0 : index
    %c0_110 = arith.constant 0 : index
    %215 = vector.load %arg6[%c2_108, %c0_109, %c0_110] : memref<8x16x32xf32, #tpu.memory_space<vmem>>, vector<1x16x32xf32>
    %216 = vector.shape_cast %215 : vector<1x16x32xf32> to vector<16x32xf32>
    %cst_111 = arith.constant dense<0.000000e+00> : vector<16x32xf32>
    %217 = tpu.matmul %3, %216, %cst_111 {dimension_numbers = #tpu.dot_dimension_numbers<[1], [0], [0], [1], [0, 0, 1, 1], [], []>} : vector<16x16xf32>, vector<16x32xf32>, vector<16x32xf32> -> vector<16x32xf32>
    %c2_112 = arith.constant 2 : index
    %c0_113 = arith.constant 0 : index
    %c0_114 = arith.constant 0 : index
    %218 = vector.load %arg7[%c2_112, %c0_113, %c0_114] : memref<4x256x32xf32, #tpu.memory_space<vmem>>, vector<1x256x32xf32>
    %219 = vector.shape_cast %218 : vector<1x256x32xf32> to vector<256x32xf32>
    %cst_115 = arith.constant dense<0.000000e+00> : vector<16x32xf32>
    %220 = tpu.matmul %5, %219, %cst_115 {dimension_numbers = #tpu.dot_dimension_numbers<[1], [0], [0], [1], [0, 0, 1, 1], [], []>} : vector<16x256xf32>, vector<256x32xf32>, vector<16x32xf32> -> vector<16x32xf32>
    %221 = arith.addf %217, %220 : vector<16x32xf32>
    %c3_116 = arith.constant 3 : index
    %c0_117 = arith.constant 0 : index
    %c0_118 = arith.constant 0 : index
    %222 = vector.load %arg6[%c3_116, %c0_117, %c0_118] : memref<8x16x32xf32, #tpu.memory_space<vmem>>, vector<1x16x32xf32>
    %223 = vector.shape_cast %222 : vector<1x16x32xf32> to vector<16x32xf32>
    %cst_119 = arith.constant dense<0.000000e+00> : vector<16x32xf32>
    %224 = tpu.matmul %212, %223, %cst_119 {dimension_numbers = #tpu.dot_dimension_numbers<[1], [0], [0], [1], [0, 0, 1, 1], [], []>} : vector<16x16xf32>, vector<16x32xf32>, vector<16x32xf32> -> vector<16x32xf32>
    %225 = arith.addf %221, %224 : vector<16x32xf32>
    %c3_120 = arith.constant 3 : index
    %c0_121 = arith.constant 0 : index
    %c0_122 = arith.constant 0 : index
    %226 = vector.load %arg7[%c3_120, %c0_121, %c0_122] : memref<4x256x32xf32, #tpu.memory_space<vmem>>, vector<1x256x32xf32>
    %227 = vector.shape_cast %226 : vector<1x256x32xf32> to vector<256x32xf32>
    %cst_123 = arith.constant dense<0.000000e+00> : vector<16x32xf32>
    %228 = tpu.matmul %214, %227, %cst_123 {dimension_numbers = #tpu.dot_dimension_numbers<[1], [0], [0], [1], [0, 0, 1, 1], [], []>} : vector<16x256xf32>, vector<256x32xf32>, vector<16x32xf32> -> vector<16x32xf32>
    %229 = arith.addf %225, %228 : vector<16x32xf32>
    %c14 = arith.constant 14 : index
    %c0_124 = arith.constant 0 : index
    %230 = vector.load %arg13[%c14, %c0_124] : memref<39x32xf32, #tpu.memory_space<vmem>>, vector<1x32xf32>
    %231 = vector.broadcast %230 : vector<1x32xf32> to vector<16x32xf32>
    %232 = arith.addf %229, %231 : vector<16x32xf32>
    %cst_125 = arith.constant 5.000000e-01 : f32
    %233 = vector.broadcast %cst_125 : f32 to vector<16x32xf32>
    %234 = arith.mulf %233, %232 : vector<16x32xf32>
    %cst_126 = arith.constant 0.707106769 : f32
    %235 = vector.broadcast %cst_126 : f32 to vector<16x32xf32>
    %236 = arith.mulf %232, %235 : vector<16x32xf32>
    %237 = math.erf %236 : vector<16x32xf32>
    %cst_127 = arith.constant 1.000000e+00 : f32
    %238 = vector.broadcast %cst_127 : f32 to vector<16x32xf32>
    %239 = arith.addf %238, %237 : vector<16x32xf32>
    %240 = arith.mulf %234, %239 : vector<16x32xf32>
    %c8_128 = arith.constant 8 : index
    %c0_129 = arith.constant 0 : index
    %c0_130 = arith.constant 0 : index
    %241 = vector.load %arg8[%c8_128, %c0_129, %c0_130] : memref<18x32x32xf32, #tpu.memory_space<vmem>>, vector<1x32x32xf32>
    %242 = vector.shape_cast %241 : vector<1x32x32xf32> to vector<32x32xf32>
    %cst_131 = arith.constant dense<0.000000e+00> : vector<16x32xf32>
    %243 = tpu.matmul %240, %242, %cst_131 {dimension_numbers = #tpu.dot_dimension_numbers<[1], [0], [0], [1], [0, 0, 1, 1], [], []>} : vector<16x32xf32>, vector<32x32xf32>, vector<16x32xf32> -> vector<16x32xf32>
    %c15 = arith.constant 15 : index
    %c0_132 = arith.constant 0 : index
    %244 = vector.load %arg13[%c15, %c0_132] : memref<39x32xf32, #tpu.memory_space<vmem>>, vector<1x32xf32>
    %245 = vector.broadcast %244 : vector<1x32xf32> to vector<16x32xf32>
    %246 = arith.addf %243, %245 : vector<16x32xf32>
    %cst_133 = arith.constant 5.000000e-01 : f32
    %247 = vector.broadcast %cst_133 : f32 to vector<16x32xf32>
    %248 = arith.mulf %247, %246 : vector<16x32xf32>
    %cst_134 = arith.constant 0.707106769 : f32
    %249 = vector.broadcast %cst_134 : f32 to vector<16x32xf32>
    %250 = arith.mulf %246, %249 : vector<16x32xf32>
    %251 = math.erf %250 : vector<16x32xf32>
    %cst_135 = arith.constant 1.000000e+00 : f32
    %252 = vector.broadcast %cst_135 : f32 to vector<16x32xf32>
    %253 = arith.addf %252, %251 : vector<16x32xf32>
    %254 = arith.mulf %248, %253 : vector<16x32xf32>
    %c0_136 = arith.constant 0 : index
    %c0_137 = arith.constant 0 : index
    %255 = vector.load %arg11[%c0_136, %c0_137] : memref<32x20xf32, #tpu.memory_space<vmem>>, vector<32x20xf32>
    %cst_138 = arith.constant dense<0.000000e+00> : vector<16x20xf32>
    %256 = tpu.matmul %254, %255, %cst_138 {dimension_numbers = #tpu.dot_dimension_numbers<[1], [0], [0], [1], [0, 0, 1, 1], [], []>} : vector<16x32xf32>, vector<32x20xf32>, vector<16x20xf32> -> vector<16x20xf32>
    %c0_139 = arith.constant 0 : index
    %c0_140 = arith.constant 0 : index
    %257 = vector.load %arg16[%c0_139, %c0_140] : memref<1x20xf32, #tpu.memory_space<vmem>>, vector<1x20xf32>
    %258 = vector.broadcast %257 : vector<1x20xf32> to vector<16x20xf32>
    %259 = arith.addf %256, %258 : vector<16x20xf32>
    %cst_141 = arith.constant dense<0xFF800000> : vector<16xf32>
    %260 = vector.multi_reduction <maximumf>, %259, %cst_141 [1] : vector<16x20xf32> to vector<16xf32>
    %261 = vector.shape_cast %260 : vector<16xf32> to vector<16x1xf32>
    %262 = vector.broadcast %261 : vector<16x1xf32> to vector<16x20xf32>
    %263 = arith.subf %259, %262 : vector<16x20xf32>
    %264 = math.exp %263 : vector<16x20xf32>
    %cst_142 = arith.constant dense<0.000000e+00> : vector<16xf32>
    %265 = vector.multi_reduction <add>, %264, %cst_142 [1] : vector<16x20xf32> to vector<16xf32>
    %266 = vector.shape_cast %265 : vector<16xf32> to vector<16x1xf32>
    %267 = math.log %266 : vector<16x1xf32>
    %268 = vector.broadcast %267 : vector<16x1xf32> to vector<16x20xf32>
    %269 = arith.subf %263, %268 : vector<16x20xf32>
    %c0_143 = arith.constant 0 : index
    %c0_144 = arith.constant 0 : index
    %c0_145 = arith.constant 0 : index
    %270 = vector.load %arg17[%c0_143, %c0_144, %c0_145] : memref<1x16x20xf32, #tpu.memory_space<vmem>>, vector<1x16x20xf32>
    %271 = vector.shape_cast %270 : vector<1x16x20xf32> to vector<16x20xf32>
    %272 = vector.shape_cast %269 : vector<16x20xf32> to vector<1x16x20xf32>
    tpu.vector_store %arg17[%c0_143, %c0_144, %c0_145], %272 {strides = array<i32>} : memref<1x16x20xf32, #tpu.memory_space<vmem>>, vector<1x16x20xf32>,
    %c4_146 = arith.constant 4 : index
    %c0_147 = arith.constant 0 : index
    %c0_148 = arith.constant 0 : index
    %273 = vector.load %arg6[%c4_146, %c0_147, %c0_148] : memref<8x16x32xf32, #tpu.memory_space<vmem>>, vector<1x16x32xf32>
    %274 = vector.shape_cast %273 : vector<1x16x32xf32> to vector<16x32xf32>
    %c16 = arith.constant 16 : index
    %c0_149 = arith.constant 0 : index
    %275 = vector.load %arg13[%c16, %c0_149] : memref<39x32xf32, #tpu.memory_space<vmem>>, vector<1x32xf32>
    %c5_150 = arith.constant 5 : index
    %c0_151 = arith.constant 0 : index
    %c0_152 = arith.constant 0 : index
    %276 = vector.load %arg6[%c5_150, %c0_151, %c0_152] : memref<8x16x32xf32, #tpu.memory_space<vmem>>, vector<1x16x32xf32>
    %277 = vector.shape_cast %276 : vector<1x16x32xf32> to vector<16x32xf32>
    %cst_153 = arith.constant dense<0.000000e+00> : vector<16x16xf32>
    %278 = tpu.matmul %1, %3, %cst_153 {dimension_numbers = #tpu.dot_dimension_numbers<[1], [0], [0], [1], [0, 0, 1, 1], [], []>} : vector<16x16xf32>, vector<16x16xf32>, vector<16x16xf32> -> vector<16x16xf32>
    %cst_154 = arith.constant dense<0.000000e+00> : vector<16x32xf32>
    %279 = tpu.matmul %278, %274, %cst_154 {dimension_numbers = #tpu.dot_dimension_numbers<[1], [0], [0], [1], [0, 0, 1, 1], [], []>} : vector<16x16xf32>, vector<16x32xf32>, vector<16x32xf32> -> vector<16x32xf32>
    %280 = vector.broadcast %275 : vector<1x32xf32> to vector<16x32xf32>
    %281 = arith.addf %279, %280 : vector<16x32xf32>
    %cst_155 = arith.constant dense<0.000000e+00> : vector<16x32xf32>
    %282 = tpu.matmul %3, %277, %cst_155 {dimension_numbers = #tpu.dot_dimension_numbers<[1], [0], [0], [1], [0, 0, 1, 1], [], []>} : vector<16x16xf32>, vector<16x32xf32>, vector<16x32xf32> -> vector<16x32xf32>
    %283 = arith.addf %281, %282 : vector<16x32xf32>
    %cst_156 = arith.constant 5.000000e-01 : f32
    %284 = vector.broadcast %cst_156 : f32 to vector<16x32xf32>
    %285 = arith.mulf %284, %283 : vector<16x32xf32>
    %cst_157 = arith.constant 0.707106769 : f32
    %286 = vector.broadcast %cst_157 : f32 to vector<16x32xf32>
    %287 = arith.mulf %283, %286 : vector<16x32xf32>
    %288 = math.erf %287 : vector<16x32xf32>
    %cst_158 = arith.constant 1.000000e+00 : f32
    %289 = vector.broadcast %cst_158 : f32 to vector<16x32xf32>
    %290 = arith.addf %289, %288 : vector<16x32xf32>
    %291 = arith.mulf %285, %290 : vector<16x32xf32>
    %c17 = arith.constant 17 : index
    %c0_159 = arith.constant 0 : index
    %292 = vector.load %arg13[%c17, %c0_159] : memref<39x32xf32, #tpu.memory_space<vmem>>, vector<3x32xf32>
    %cst_160 = arith.constant dense<0.000000e+00> : vector<32xf32>
    %293 = vector.multi_reduction <add>, %291, %cst_160 [0] : vector<16x32xf32> to vector<32xf32>
    %294 = vector.shape_cast %293 : vector<32xf32> to vector<1x32xf32>
    %cst_161 = arith.constant 1.600000e+01 : f32
    %295 = vector.broadcast %cst_161 : f32 to vector<1x32xf32>
    %296 = arith.divf %294, %295 : vector<1x32xf32>
    %297 = vector.extract_strided_slice %292 {offsets = [2, 0], sizes = [1, 32], strides = [1, 1]} : vector<3x32xf32> to vector<1x32xf32>
    %298 = arith.mulf %296, %297 : vector<1x32xf32>
    %299 = vector.broadcast %298 : vector<1x32xf32> to vector<16x32xf32>
    %300 = arith.subf %291, %299 : vector<16x32xf32>
    %301 = arith.mulf %300, %300 : vector<16x32xf32>
    %cst_162 = arith.constant dense<0.000000e+00> : vector<32xf32>
    %302 = vector.multi_reduction <add>, %301, %cst_162 [0] : vector<16x32xf32> to vector<32xf32>
    %303 = vector.shape_cast %302 : vector<32xf32> to vector<1x32xf32>
    %cst_163 = arith.constant 1.600000e+01 : f32
    %304 = vector.broadcast %cst_163 : f32 to vector<1x32xf32>
    %305 = arith.divf %303, %304 : vector<1x32xf32>
    %306 = vector.extract_strided_slice %292 {offsets = [0, 0], sizes = [1, 32], strides = [1, 1]} : vector<3x32xf32> to vector<1x32xf32>
    %307 = vector.broadcast %306 : vector<1x32xf32> to vector<16x32xf32>
    %308 = arith.mulf %307, %300 : vector<16x32xf32>
    %cst_164 = arith.constant 9.99999974E-6 : f32
    %309 = vector.broadcast %cst_164 : f32 to vector<1x32xf32>
    %310 = arith.addf %305, %309 : vector<1x32xf32>
    %311 = math.rsqrt %310 : vector<1x32xf32>
    %312 = vector.broadcast %311 : vector<1x32xf32> to vector<16x32xf32>
    %313 = arith.mulf %308, %312 : vector<16x32xf32>
    %314 = vector.extract_strided_slice %292 {offsets = [1, 0], sizes = [1, 32], strides = [1, 1]} : vector<3x32xf32> to vector<1x32xf32>
    %315 = vector.broadcast %314 : vector<1x32xf32> to vector<16x32xf32>
    %316 = arith.addf %313, %315 : vector<16x32xf32>
    %c9_165 = arith.constant 9 : index
    %c0_166 = arith.constant 0 : index
    %c0_167 = arith.constant 0 : index
    %317 = vector.load %arg8[%c9_165, %c0_166, %c0_167] : memref<18x32x32xf32, #tpu.memory_space<vmem>>, vector<1x32x32xf32>
    %318 = vector.shape_cast %317 : vector<1x32x32xf32> to vector<32x32xf32>
    %c20 = arith.constant 20 : index
    %c0_168 = arith.constant 0 : index
    %319 = vector.load %arg13[%c20, %c0_168] : memref<39x32xf32, #tpu.memory_space<vmem>>, vector<1x32xf32>
    %c10 = arith.constant 10 : index
    %c0_169 = arith.constant 0 : index
    %c0_170 = arith.constant 0 : index
    %320 = vector.load %arg8[%c10, %c0_169, %c0_170] : memref<18x32x32xf32, #tpu.memory_space<vmem>>, vector<1x32x32xf32>
    %321 = vector.shape_cast %320 : vector<1x32x32xf32> to vector<32x32xf32>
    %cst_171 = arith.constant dense<0.000000e+00> : vector<16x32xf32>
    %322 = tpu.matmul %1, %316, %cst_171 {dimension_numbers = #tpu.dot_dimension_numbers<[1], [0], [0], [1], [0, 0, 1, 1], [], []>} : vector<16x16xf32>, vector<16x32xf32>, vector<16x32xf32> -> vector<16x32xf32>
    %cst_172 = arith.constant dense<0.000000e+00> : vector<16x32xf32>
    %323 = tpu.matmul %322, %318, %cst_172 {dimension_numbers = #tpu.dot_dimension_numbers<[1], [0], [0], [1], [0, 0, 1, 1], [], []>} : vector<16x32xf32>, vector<32x32xf32>, vector<16x32xf32> -> vector<16x32xf32>
    %324 = vector.broadcast %319 : vector<1x32xf32> to vector<16x32xf32>
    %325 = arith.addf %323, %324 : vector<16x32xf32>
    %cst_173 = arith.constant dense<0.000000e+00> : vector<16x32xf32>
    %326 = tpu.matmul %316, %321, %cst_173 {dimension_numbers = #tpu.dot_dimension_numbers<[1], [0], [0], [1], [0, 0, 1, 1], [], []>} : vector<16x32xf32>, vector<32x32xf32>, vector<16x32xf32> -> vector<16x32xf32>
    %327 = arith.addf %325, %326 : vector<16x32xf32>
    %cst_174 = arith.constant 5.000000e-01 : f32
    %328 = vector.broadcast %cst_174 : f32 to vector<16x32xf32>
    %329 = arith.mulf %328, %327 : vector<16x32xf32>
    %cst_175 = arith.constant 0.707106769 : f32
    %330 = vector.broadcast %cst_175 : f32 to vector<16x32xf32>
    %331 = arith.mulf %327, %330 : vector<16x32xf32>
    %332 = math.erf %331 : vector<16x32xf32>
    %cst_176 = arith.constant 1.000000e+00 : f32
    %333 = vector.broadcast %cst_176 : f32 to vector<16x32xf32>
    %334 = arith.addf %333, %332 : vector<16x32xf32>
    %335 = arith.mulf %329, %334 : vector<16x32xf32>
    %c21 = arith.constant 21 : index
    %c0_177 = arith.constant 0 : index
    %336 = vector.load %arg13[%c21, %c0_177] : memref<39x32xf32, #tpu.memory_space<vmem>>, vector<3x32xf32>
    %cst_178 = arith.constant dense<0.000000e+00> : vector<32xf32>
    %337 = vector.multi_reduction <add>, %335, %cst_178 [0] : vector<16x32xf32> to vector<32xf32>
    %338 = vector.shape_cast %337 : vector<32xf32> to vector<1x32xf32>
    %cst_179 = arith.constant 1.600000e+01 : f32
    %339 = vector.broadcast %cst_179 : f32 to vector<1x32xf32>
    %340 = arith.divf %338, %339 : vector<1x32xf32>
    %341 = vector.extract_strided_slice %336 {offsets = [2, 0], sizes = [1, 32], strides = [1, 1]} : vector<3x32xf32> to vector<1x32xf32>
    %342 = arith.mulf %340, %341 : vector<1x32xf32>
    %343 = vector.broadcast %342 : vector<1x32xf32> to vector<16x32xf32>
    %344 = arith.subf %335, %343 : vector<16x32xf32>
    %345 = arith.mulf %344, %344 : vector<16x32xf32>
    %cst_180 = arith.constant dense<0.000000e+00> : vector<32xf32>
    %346 = vector.multi_reduction <add>, %345, %cst_180 [0] : vector<16x32xf32> to vector<32xf32>
    %347 = vector.shape_cast %346 : vector<32xf32> to vector<1x32xf32>
    %cst_181 = arith.constant 1.600000e+01 : f32
    %348 = vector.broadcast %cst_181 : f32 to vector<1x32xf32>
    %349 = arith.divf %347, %348 : vector<1x32xf32>
    %350 = vector.extract_strided_slice %336 {offsets = [0, 0], sizes = [1, 32], strides = [1, 1]} : vector<3x32xf32> to vector<1x32xf32>
    %351 = vector.broadcast %350 : vector<1x32xf32> to vector<16x32xf32>
    %352 = arith.mulf %351, %344 : vector<16x32xf32>
    %cst_182 = arith.constant 9.99999974E-6 : f32
    %353 = vector.broadcast %cst_182 : f32 to vector<1x32xf32>
    %354 = arith.addf %349, %353 : vector<1x32xf32>
    %355 = math.rsqrt %354 : vector<1x32xf32>
    %356 = vector.broadcast %355 : vector<1x32xf32> to vector<16x32xf32>
    %357 = arith.mulf %352, %356 : vector<16x32xf32>
    %358 = vector.extract_strided_slice %336 {offsets = [1, 0], sizes = [1, 32], strides = [1, 1]} : vector<3x32xf32> to vector<1x32xf32>
    %359 = vector.broadcast %358 : vector<1x32xf32> to vector<16x32xf32>
    %360 = arith.addf %357, %359 : vector<16x32xf32>
    %361 = arith.addf %360, %316 : vector<16x32xf32>
    %c11 = arith.constant 11 : index
    %c0_183 = arith.constant 0 : index
    %c0_184 = arith.constant 0 : index
    %362 = vector.load %arg8[%c11, %c0_183, %c0_184] : memref<18x32x32xf32, #tpu.memory_space<vmem>>, vector<1x32x32xf32>
    %363 = vector.shape_cast %362 : vector<1x32x32xf32> to vector<32x32xf32>
    %c24 = arith.constant 24 : index
    %c0_185 = arith.constant 0 : index
    %364 = vector.load %arg13[%c24, %c0_185] : memref<39x32xf32, #tpu.memory_space<vmem>>, vector<1x32xf32>
    %c12_186 = arith.constant 12 : index
    %c0_187 = arith.constant 0 : index
    %c0_188 = arith.constant 0 : index
    %365 = vector.load %arg8[%c12_186, %c0_187, %c0_188] : memref<18x32x32xf32, #tpu.memory_space<vmem>>, vector<1x32x32xf32>
    %366 = vector.shape_cast %365 : vector<1x32x32xf32> to vector<32x32xf32>
    %cst_189 = arith.constant dense<0.000000e+00> : vector<16x32xf32>
    %367 = tpu.matmul %1, %361, %cst_189 {dimension_numbers = #tpu.dot_dimension_numbers<[1], [0], [0], [1], [0, 0, 1, 1], [], []>} : vector<16x16xf32>, vector<16x32xf32>, vector<16x32xf32> -> vector<16x32xf32>
    %cst_190 = arith.constant dense<0.000000e+00> : vector<16x32xf32>
    %368 = tpu.matmul %367, %363, %cst_190 {dimension_numbers = #tpu.dot_dimension_numbers<[1], [0], [0], [1], [0, 0, 1, 1], [], []>} : vector<16x32xf32>, vector<32x32xf32>, vector<16x32xf32> -> vector<16x32xf32>
    %369 = vector.broadcast %364 : vector<1x32xf32> to vector<16x32xf32>
    %370 = arith.addf %368, %369 : vector<16x32xf32>
    %cst_191 = arith.constant dense<0.000000e+00> : vector<16x32xf32>
    %371 = tpu.matmul %361, %366, %cst_191 {dimension_numbers = #tpu.dot_dimension_numbers<[1], [0], [0], [1], [0, 0, 1, 1], [], []>} : vector<16x32xf32>, vector<32x32xf32>, vector<16x32xf32> -> vector<16x32xf32>
    %372 = arith.addf %370, %371 : vector<16x32xf32>
    %cst_192 = arith.constant 5.000000e-01 : f32
    %373 = vector.broadcast %cst_192 : f32 to vector<16x32xf32>
    %374 = arith.mulf %373, %372 : vector<16x32xf32>
    %cst_193 = arith.constant 0.707106769 : f32
    %375 = vector.broadcast %cst_193 : f32 to vector<16x32xf32>
    %376 = arith.mulf %372, %375 : vector<16x32xf32>
    %377 = math.erf %376 : vector<16x32xf32>
    %cst_194 = arith.constant 1.000000e+00 : f32
    %378 = vector.broadcast %cst_194 : f32 to vector<16x32xf32>
    %379 = arith.addf %378, %377 : vector<16x32xf32>
    %380 = arith.mulf %374, %379 : vector<16x32xf32>
    %c25 = arith.constant 25 : index
    %c0_195 = arith.constant 0 : index
    %381 = vector.load %arg13[%c25, %c0_195] : memref<39x32xf32, #tpu.memory_space<vmem>>, vector<3x32xf32>
    %cst_196 = arith.constant dense<0.000000e+00> : vector<32xf32>
    %382 = vector.multi_reduction <add>, %380, %cst_196 [0] : vector<16x32xf32> to vector<32xf32>
    %383 = vector.shape_cast %382 : vector<32xf32> to vector<1x32xf32>
    %cst_197 = arith.constant 1.600000e+01 : f32
    %384 = vector.broadcast %cst_197 : f32 to vector<1x32xf32>
    %385 = arith.divf %383, %384 : vector<1x32xf32>
    %386 = vector.extract_strided_slice %381 {offsets = [2, 0], sizes = [1, 32], strides = [1, 1]} : vector<3x32xf32> to vector<1x32xf32>
    %387 = arith.mulf %385, %386 : vector<1x32xf32>
    %388 = vector.broadcast %387 : vector<1x32xf32> to vector<16x32xf32>
    %389 = arith.subf %380, %388 : vector<16x32xf32>
    %390 = arith.mulf %389, %389 : vector<16x32xf32>
    %cst_198 = arith.constant dense<0.000000e+00> : vector<32xf32>
    %391 = vector.multi_reduction <add>, %390, %cst_198 [0] : vector<16x32xf32> to vector<32xf32>
    %392 = vector.shape_cast %391 : vector<32xf32> to vector<1x32xf32>
    %cst_199 = arith.constant 1.600000e+01 : f32
    %393 = vector.broadcast %cst_199 : f32 to vector<1x32xf32>
    %394 = arith.divf %392, %393 : vector<1x32xf32>
    %395 = vector.extract_strided_slice %381 {offsets = [0, 0], sizes = [1, 32], strides = [1, 1]} : vector<3x32xf32> to vector<1x32xf32>
    %396 = vector.broadcast %395 : vector<1x32xf32> to vector<16x32xf32>
    %397 = arith.mulf %396, %389 : vector<16x32xf32>
    %cst_200 = arith.constant 9.99999974E-6 : f32
    %398 = vector.broadcast %cst_200 : f32 to vector<1x32xf32>
    %399 = arith.addf %394, %398 : vector<1x32xf32>
    %400 = math.rsqrt %399 : vector<1x32xf32>
    %401 = vector.broadcast %400 : vector<1x32xf32> to vector<16x32xf32>
    %402 = arith.mulf %397, %401 : vector<16x32xf32>
    %403 = vector.extract_strided_slice %381 {offsets = [1, 0], sizes = [1, 32], strides = [1, 1]} : vector<3x32xf32> to vector<1x32xf32>
    %404 = vector.broadcast %403 : vector<1x32xf32> to vector<16x32xf32>
    %405 = arith.addf %402, %404 : vector<16x32xf32>
    %406 = arith.addf %405, %361 : vector<16x32xf32>
    %c28 = arith.constant 28 : index
    %c0_201 = arith.constant 0 : index
    %407 = vector.load %arg13[%c28, %c0_201] : memref<39x32xf32, #tpu.memory_space<vmem>>, vector<1x32xf32>
    %408 = vector.broadcast %407 : vector<1x32xf32> to vector<16x32xf32>
    %409 = arith.mulf %408, %316 : vector<16x32xf32>
    %410 = math.tanh %409 : vector<16x32xf32>
    %c29 = arith.constant 29 : index
    %c0_202 = arith.constant 0 : index
    %411 = vector.load %arg13[%c29, %c0_202] : memref<39x32xf32, #tpu.memory_space<vmem>>, vector<1x32xf32>
    %412 = vector.broadcast %411 : vector<1x32xf32> to vector<16x32xf32>
    %413 = arith.mulf %410, %412 : vector<16x32xf32>
    %c32 = arith.constant 32 : index
    %c0_203 = arith.constant 0 : index
    %414 = vector.load %arg13[%c32, %c0_203] : memref<39x32xf32, #tpu.memory_space<vmem>>, vector<1x32xf32>
    %415 = vector.broadcast %414 : vector<1x32xf32> to vector<16x32xf32>
    %416 = arith.addf %413, %415 : vector<16x32xf32>
    %417 = vector.broadcast %407 : vector<1x32xf32> to vector<16x32xf32>
    %418 = arith.mulf %417, %361 : vector<16x32xf32>
    %419 = math.tanh %418 : vector<16x32xf32>
    %c30 = arith.constant 30 : index
    %c0_204 = arith.constant 0 : index
    %420 = vector.load %arg13[%c30, %c0_204] : memref<39x32xf32, #tpu.memory_space<vmem>>, vector<1x32xf32>
    %421 = vector.broadcast %420 : vector<1x32xf32> to vector<16x32xf32>
    %422 = arith.mulf %419, %421 : vector<16x32xf32>
    %c33 = arith.constant 33 : index
    %c0_205 = arith.constant 0 : index
    %423 = vector.load %arg13[%c33, %c0_205] : memref<39x32xf32, #tpu.memory_space<vmem>>, vector<1x32xf32>
    %424 = vector.broadcast %423 : vector<1x32xf32> to vector<16x32xf32>
    %425 = arith.addf %422, %424 : vector<16x32xf32>
    %426 = vector.broadcast %407 : vector<1x32xf32> to vector<16x32xf32>
    %427 = arith.mulf %426, %406 : vector<16x32xf32>
    %428 = math.tanh %427 : vector<16x32xf32>
    %c31 = arith.constant 31 : index
    %c0_206 = arith.constant 0 : index
    %429 = vector.load %arg13[%c31, %c0_206] : memref<39x32xf32, #tpu.memory_space<vmem>>, vector<1x32xf32>
    %430 = vector.broadcast %429 : vector<1x32xf32> to vector<16x32xf32>
    %431 = arith.mulf %428, %430 : vector<16x32xf32>
    %c34 = arith.constant 34 : index
    %c0_207 = arith.constant 0 : index
    %432 = vector.load %arg13[%c34, %c0_207] : memref<39x32xf32, #tpu.memory_space<vmem>>, vector<1x32xf32>
    %433 = vector.broadcast %432 : vector<1x32xf32> to vector<16x32xf32>
    %434 = arith.addf %431, %433 : vector<16x32xf32>
    %c13_208 = arith.constant 13 : index
    %c0_209 = arith.constant 0 : index
    %c0_210 = arith.constant 0 : index
    %435 = vector.load %arg8[%c13_208, %c0_209, %c0_210] : memref<18x32x32xf32, #tpu.memory_space<vmem>>, vector<1x32x32xf32>
    %436 = vector.shape_cast %435 : vector<1x32x32xf32> to vector<32x32xf32>
    %cst_211 = arith.constant dense<0.000000e+00> : vector<16x32xf32>
    %437 = tpu.matmul %416, %436, %cst_211 {dimension_numbers = #tpu.dot_dimension_numbers<[1], [0], [0], [1], [0, 0, 1, 1], [], []>} : vector<16x32xf32>, vector<32x32xf32>, vector<16x32xf32> -> vector<16x32xf32>
    %c14_212 = arith.constant 14 : index
    %c0_213 = arith.constant 0 : index
    %c0_214 = arith.constant 0 : index
    %438 = vector.load %arg8[%c14_212, %c0_213, %c0_214] : memref<18x32x32xf32, #tpu.memory_space<vmem>>, vector<1x32x32xf32>
    %439 = vector.shape_cast %438 : vector<1x32x32xf32> to vector<32x32xf32>
    %cst_215 = arith.constant dense<0.000000e+00> : vector<16x32xf32>
    %440 = tpu.matmul %425, %439, %cst_215 {dimension_numbers = #tpu.dot_dimension_numbers<[1], [0], [0], [1], [0, 0, 1, 1], [], []>} : vector<16x32xf32>, vector<32x32xf32>, vector<16x32xf32> -> vector<16x32xf32>
    %441 = arith.addf %437, %440 : vector<16x32xf32>
    %c15_216 = arith.constant 15 : index
    %c0_217 = arith.constant 0 : index
    %c0_218 = arith.constant 0 : index
    %442 = vector.load %arg8[%c15_216, %c0_217, %c0_218] : memref<18x32x32xf32, #tpu.memory_space<vmem>>, vector<1x32x32xf32>
    %443 = vector.shape_cast %442 : vector<1x32x32xf32> to vector<32x32xf32>
    %cst_219 = arith.constant dense<0.000000e+00> : vector<16x32xf32>
    %444 = tpu.matmul %434, %443, %cst_219 {dimension_numbers = #tpu.dot_dimension_numbers<[1], [0], [0], [1], [0, 0, 1, 1], [], []>} : vector<16x32xf32>, vector<32x32xf32>, vector<16x32xf32> -> vector<16x32xf32>
    %445 = arith.addf %441, %444 : vector<16x32xf32>
    %c35 = arith.constant 35 : index
    %c0_220 = arith.constant 0 : index
    %446 = vector.load %arg13[%c35, %c0_220] : memref<39x32xf32, #tpu.memory_space<vmem>>, vector<1x32xf32>
    %447 = vector.broadcast %446 : vector<1x32xf32> to vector<16x32xf32>
    %448 = arith.addf %445, %447 : vector<16x32xf32>
    %cst_221 = arith.constant 5.000000e-01 : f32
    %449 = vector.broadcast %cst_221 : f32 to vector<16x32xf32>
    %450 = arith.mulf %449, %448 : vector<16x32xf32>
    %cst_222 = arith.constant 0.707106769 : f32
    %451 = vector.broadcast %cst_222 : f32 to vector<16x32xf32>
    %452 = arith.mulf %448, %451 : vector<16x32xf32>
    %453 = math.erf %452 : vector<16x32xf32>
    %cst_223 = arith.constant 1.000000e+00 : f32
    %454 = vector.broadcast %cst_223 : f32 to vector<16x32xf32>
    %455 = arith.addf %454, %453 : vector<16x32xf32>
    %456 = arith.mulf %450, %455 : vector<16x32xf32>
    %c16_224 = arith.constant 16 : index
    %c0_225 = arith.constant 0 : index
    %c0_226 = arith.constant 0 : index
    %457 = vector.load %arg8[%c16_224, %c0_225, %c0_226] : memref<18x32x32xf32, #tpu.memory_space<vmem>>, vector<1x32x32xf32>
    %458 = vector.shape_cast %457 : vector<1x32x32xf32> to vector<32x32xf32>
    %cst_227 = arith.constant dense<0.000000e+00> : vector<16x32xf32>
    %459 = tpu.matmul %456, %458, %cst_227 {dimension_numbers = #tpu.dot_dimension_numbers<[1], [0], [0], [1], [0, 0, 1, 1], [], []>} : vector<16x32xf32>, vector<32x32xf32>, vector<16x32xf32> -> vector<16x32xf32>
    %c36 = arith.constant 36 : index
    %c0_228 = arith.constant 0 : index
    %460 = vector.load %arg13[%c36, %c0_228] : memref<39x32xf32, #tpu.memory_space<vmem>>, vector<1x32xf32>
    %461 = vector.broadcast %460 : vector<1x32xf32> to vector<16x32xf32>
    %462 = arith.addf %459, %461 : vector<16x32xf32>
    %cst_229 = arith.constant 5.000000e-01 : f32
    %463 = vector.broadcast %cst_229 : f32 to vector<16x32xf32>
    %464 = arith.mulf %463, %462 : vector<16x32xf32>
    %cst_230 = arith.constant 0.707106769 : f32
    %465 = vector.broadcast %cst_230 : f32 to vector<16x32xf32>
    %466 = arith.mulf %462, %465 : vector<16x32xf32>
    %467 = math.erf %466 : vector<16x32xf32>
    %cst_231 = arith.constant 1.000000e+00 : f32
    %468 = vector.broadcast %cst_231 : f32 to vector<16x32xf32>
    %469 = arith.addf %468, %467 : vector<16x32xf32>
    %470 = arith.mulf %464, %469 : vector<16x32xf32>
    %c1_232 = arith.constant 1 : index
    %c0_233 = arith.constant 0 : index
    %c0_234 = arith.constant 0 : index
    %471 = vector.load %arg9[%c1_232, %c0_233, %c0_234] : memref<2x32x16xf32, #tpu.memory_space<vmem>>, vector<1x32x16xf32>
    %472 = vector.shape_cast %471 : vector<1x32x16xf32> to vector<32x16xf32>
    %cst_235 = arith.constant dense<0.000000e+00> : vector<16x16xf32>
    %473 = tpu.matmul %470, %472, %cst_235 {dimension_numbers = #tpu.dot_dimension_numbers<[1], [0], [0], [1], [0, 0, 1, 1], [], []>} : vector<16x32xf32>, vector<32x16xf32>, vector<16x16xf32> -> vector<16x16xf32>
    %c1_236 = arith.constant 1 : index
    %c0_237 = arith.constant 0 : index
    %474 = vector.load %arg14[%c1_236, %c0_237] : memref<6x16xf32, #tpu.memory_space<vmem>>, vector<1x16xf32>
    %475 = vector.broadcast %474 : vector<1x16xf32> to vector<16x16xf32>
    %476 = arith.addf %473, %475 : vector<16x16xf32>
    %c2_238 = arith.constant 2 : index
    %c0_239 = arith.constant 0 : index
    %477 = vector.load %arg14[%c2_238, %c0_239] : memref<6x16xf32, #tpu.memory_space<vmem>>, vector<1x16xf32>
    %478 = vector.broadcast %477 : vector<1x16xf32> to vector<16x16xf32>
    %479 = arith.mulf %478, %476 : vector<16x16xf32>
    %480 = math.tanh %479 : vector<16x16xf32>
    %c3_240 = arith.constant 3 : index
    %c0_241 = arith.constant 0 : index
    %481 = vector.load %arg14[%c3_240, %c0_241] : memref<6x16xf32, #tpu.memory_space<vmem>>, vector<1x16xf32>
    %482 = vector.broadcast %481 : vector<1x16xf32> to vector<16x16xf32>
    %483 = arith.mulf %480, %482 : vector<16x16xf32>
    %c4_242 = arith.constant 4 : index
    %c0_243 = arith.constant 0 : index
    %484 = vector.load %arg14[%c4_242, %c0_243] : memref<6x16xf32, #tpu.memory_space<vmem>>, vector<1x16xf32>
    %485 = vector.broadcast %484 : vector<1x16xf32> to vector<16x16xf32>
    %486 = arith.addf %483, %485 : vector<16x16xf32>
    %487 = arith.addf %486, %3 : vector<16x16xf32>
    %488 = arith.mulf %487, %487 : vector<16x16xf32>
    %cst_244 = arith.constant dense<0.000000e+00> : vector<16xf32>
    %489 = vector.multi_reduction <add>, %488, %cst_244 [1] : vector<16x16xf32> to vector<16xf32>
    %490 = vector.shape_cast %489 : vector<16xf32> to vector<16x1xf32>
    %491 = math.sqrt %490 : vector<16x1xf32>
    %cst_245 = arith.constant 1.000000e-10 : f32
    %492 = vector.broadcast %cst_245 : f32 to vector<16x1xf32>
    %493 = arith.addf %491, %492 : vector<16x1xf32>
    %494 = tpu.reciprocal %493 {approx = true} : vector<16x1xf32> -> vector<16x1xf32>
    %495 = vector.broadcast %494 : vector<16x1xf32> to vector<16x16xf32>
    %496 = arith.mulf %487, %495 : vector<16x16xf32>
    %497 = tpu.iota {dimensions = array<i32: 1>} : vector<24x16xi32>
    %c0_246 = arith.constant 0 : index
    %c0_247 = arith.constant 0 : index
    %c0_248 = arith.constant 0 : index
    %498 = vector.load %arg4[%c0_246, %c0_247, %c0_248] : memref<1x24x1xi32, #tpu.memory_space<vmem>>, vector<1x24x1xi32>
    %499 = vector.shape_cast %498 : vector<1x24x1xi32> to vector<24x1xi32>
    %500 = vector.broadcast %499 : vector<24x1xi32> to vector<24x16xi32>
    %501 = arith.cmpi eq, %497, %500 : vector<24x16xi32>
    %502 = arith.extui %501 : vector<24x16xi1> to vector<24x16xi32>
    %503 = arith.sitofp %502 : vector<24x16xi32> to vector<24x16xf32>
    %c0_249 = arith.constant 0 : index
    %c0_250 = arith.constant 0 : index
    %c0_251 = arith.constant 0 : index
    %504 = vector.load %arg5[%c0_249, %c0_250, %c0_251] : memref<1x24x1xi32, #tpu.memory_space<vmem>>, vector<1x24x1xi32>
    %505 = vector.shape_cast %504 : vector<1x24x1xi32> to vector<24x1xi32>
    %506 = vector.broadcast %505 : vector<24x1xi32> to vector<24x16xi32>
    %507 = arith.cmpi eq, %497, %506 : vector<24x16xi32>
    %508 = arith.extui %507 : vector<24x16xi1> to vector<24x16xi32>
    %509 = arith.sitofp %508 : vector<24x16xi32> to vector<24x16xf32>
    %cst_252 = arith.constant dense<0.000000e+00> : vector<24x16xf32>
    %510 = tpu.matmul %503, %496, %cst_252 {dimension_numbers = #tpu.dot_dimension_numbers<[1], [0], [0], [1], [0, 0, 1, 1], [], []>} : vector<24x16xf32>, vector<16x16xf32>, vector<24x16xf32> -> vector<24x16xf32>
    %cst_253 = arith.constant dense<0.000000e+00> : vector<24x16xf32>
    %511 = tpu.matmul %509, %496, %cst_253 {dimension_numbers = #tpu.dot_dimension_numbers<[1], [0], [0], [1], [0, 0, 1, 1], [], []>} : vector<24x16xf32>, vector<16x16xf32>, vector<24x16xf32> -> vector<24x16xf32>
    %c6_254 = arith.constant 6 : index
    %c0_255 = arith.constant 0 : index
    %c0_256 = arith.constant 0 : index
    %512 = vector.load %arg6[%c6_254, %c0_255, %c0_256] : memref<8x16x32xf32, #tpu.memory_space<vmem>>, vector<1x16x32xf32>
    %513 = vector.shape_cast %512 : vector<1x16x32xf32> to vector<16x32xf32>
    %cst_257 = arith.constant dense<0.000000e+00> : vector<24x32xf32>
    %514 = tpu.matmul %510, %513, %cst_257 {dimension_numbers = #tpu.dot_dimension_numbers<[1], [0], [0], [1], [0, 0, 1, 1], [], []>} : vector<24x16xf32>, vector<16x32xf32>, vector<24x32xf32> -> vector<24x32xf32>
    %c7_258 = arith.constant 7 : index
    %c0_259 = arith.constant 0 : index
    %c0_260 = arith.constant 0 : index
    %515 = vector.load %arg6[%c7_258, %c0_259, %c0_260] : memref<8x16x32xf32, #tpu.memory_space<vmem>>, vector<1x16x32xf32>
    %516 = vector.shape_cast %515 : vector<1x16x32xf32> to vector<16x32xf32>
    %cst_261 = arith.constant dense<0.000000e+00> : vector<24x32xf32>
    %517 = tpu.matmul %511, %516, %cst_261 {dimension_numbers = #tpu.dot_dimension_numbers<[1], [0], [0], [1], [0, 0, 1, 1], [], []>} : vector<24x16xf32>, vector<16x32xf32>, vector<24x32xf32> -> vector<24x32xf32>
    %518 = arith.addf %514, %517 : vector<24x32xf32>
    %c37 = arith.constant 37 : index
    %c0_262 = arith.constant 0 : index
    %519 = vector.load %arg13[%c37, %c0_262] : memref<39x32xf32, #tpu.memory_space<vmem>>, vector<1x32xf32>
    %520 = vector.broadcast %519 : vector<1x32xf32> to vector<24x32xf32>
    %521 = arith.addf %518, %520 : vector<24x32xf32>
    %cst_263 = arith.constant 5.000000e-01 : f32
    %522 = vector.broadcast %cst_263 : f32 to vector<24x32xf32>
    %523 = arith.mulf %522, %521 : vector<24x32xf32>
    %cst_264 = arith.constant 0.707106769 : f32
    %524 = vector.broadcast %cst_264 : f32 to vector<24x32xf32>
    %525 = arith.mulf %521, %524 : vector<24x32xf32>
    %526 = math.erf %525 : vector<24x32xf32>
    %cst_265 = arith.constant 1.000000e+00 : f32
    %527 = vector.broadcast %cst_265 : f32 to vector<24x32xf32>
    %528 = arith.addf %527, %526 : vector<24x32xf32>
    %529 = arith.mulf %523, %528 : vector<24x32xf32>
    %c17_266 = arith.constant 17 : index
    %c0_267 = arith.constant 0 : index
    %c0_268 = arith.constant 0 : index
    %530 = vector.load %arg8[%c17_266, %c0_267, %c0_268] : memref<18x32x32xf32, #tpu.memory_space<vmem>>, vector<1x32x32xf32>
    %531 = vector.shape_cast %530 : vector<1x32x32xf32> to vector<32x32xf32>
    %cst_269 = arith.constant dense<0.000000e+00> : vector<24x32xf32>
    %532 = tpu.matmul %529, %531, %cst_269 {dimension_numbers = #tpu.dot_dimension_numbers<[1], [0], [0], [1], [0, 0, 1, 1], [], []>} : vector<24x32xf32>, vector<32x32xf32>, vector<24x32xf32> -> vector<24x32xf32>
    %c38 = arith.constant 38 : index
    %c0_270 = arith.constant 0 : index
    %533 = vector.load %arg13[%c38, %c0_270] : memref<39x32xf32, #tpu.memory_space<vmem>>, vector<1x32xf32>
    %534 = vector.broadcast %533 : vector<1x32xf32> to vector<24x32xf32>
    %535 = arith.addf %532, %534 : vector<24x32xf32>
    %cst_271 = arith.constant 5.000000e-01 : f32
    %536 = vector.broadcast %cst_271 : f32 to vector<24x32xf32>
    %537 = arith.mulf %536, %535 : vector<24x32xf32>
    %cst_272 = arith.constant 0.707106769 : f32
    %538 = vector.broadcast %cst_272 : f32 to vector<24x32xf32>
    %539 = arith.mulf %535, %538 : vector<24x32xf32>
    %540 = math.erf %539 : vector<24x32xf32>
    %cst_273 = arith.constant 1.000000e+00 : f32
    %541 = vector.broadcast %cst_273 : f32 to vector<24x32xf32>
    %542 = arith.addf %541, %540 : vector<24x32xf32>
    %543 = arith.mulf %537, %542 : vector<24x32xf32>
    %c0_274 = arith.constant 0 : index
    %c0_275 = arith.constant 0 : index
    %544 = vector.load %arg12[%c0_274, %c0_275] : memref<32x1xf32, #tpu.memory_space<vmem>>, vector<32x1xf32>
    %cst_276 = arith.constant dense<0.000000e+00> : vector<24x1xf32>
    %545 = tpu.matmul %543, %544, %cst_276 {dimension_numbers = #tpu.dot_dimension_numbers<[1], [0], [0], [1], [0, 0, 1, 1], [], []>} : vector<24x32xf32>, vector<32x1xf32>, vector<24x1xf32> -> vector<24x1xf32>
    %c5_277 = arith.constant 5 : index
    %c0_278 = arith.constant 0 : index
    %546 = vector.load %arg14[%c5_277, %c0_278] : memref<6x16xf32, #tpu.memory_space<vmem>>, vector<1x1xf32>
    %547 = vector.broadcast %546 : vector<1x1xf32> to vector<24x1xf32>
    %548 = arith.addf %545, %547 : vector<24x1xf32>
    %549 = arith.negf %548 : vector<24x1xf32>
    %550 = math.exp %549 : vector<24x1xf32>
    %cst_279 = arith.constant 1.000000e+00 : f32
    %551 = vector.broadcast %cst_279 : f32 to vector<24x1xf32>
    %552 = arith.addf %551, %550 : vector<24x1xf32>
    %553 = arith.divf %551, %552 : vector<24x1xf32>
    %c0_280 = arith.constant 0 : index
    %c0_281 = arith.constant 0 : index
    %c0_282 = arith.constant 0 : index
    %554 = vector.load %arg18[%c0_280, %c0_281, %c0_282] : memref<1x24x1xf32, #tpu.memory_space<vmem>>, vector<1x24x1xf32>
    %555 = vector.shape_cast %554 : vector<1x24x1xf32> to vector<24x1xf32>
    %556 = vector.shape_cast %553 : vector<24x1xf32> to vector<1x24x1xf32>
    tpu.vector_store %arg18[%c0_280, %c0_281, %c0_282], %556 {strides = array<i32>} : memref<1x24x1xf32, #tpu.memory_space<vmem>>, vector<1x24x1xf32>,
    return
  }
  func.func @transform_0(%arg0: i32) -> (i32, i32, i32) {
    %c0_i32 = arith.constant 0 : i32
    %c0_i32_0 = arith.constant 0 : i32
    %c0_i32_1 = arith.constant 0 : i32
    return %arg0, %c0_i32, %c0_i32_0 : i32, i32, i32
  }
  func.func @transform_1(%arg0: i32) -> (i32, i32, i32) {
    %c0_i32 = arith.constant 0 : i32
    %c0_i32_0 = arith.constant 0 : i32
    %c0_i32_1 = arith.constant 0 : i32
    return %arg0, %c0_i32, %c0_i32_0 : i32, i32, i32
  }
  func.func @transform_2(%arg0: i32) -> (i32, i32, i32) {
    %c0_i32 = arith.constant 0 : i32
    %c0_i32_0 = arith.constant 0 : i32
    %c0_i32_1 = arith.constant 0 : i32
    return %arg0, %c0_i32, %c0_i32_0 : i32, i32, i32
  }
  func.func @transform_3(%arg0: i32) -> (i32, i32, i32) {
    %c0_i32 = arith.constant 0 : i32
    %c0_i32_0 = arith.constant 0 : i32
    %c0_i32_1 = arith.constant 0 : i32
    return %arg0, %c0_i32, %c0_i32_0 : i32, i32, i32
  }
  func.func @transform_4(%arg0: i32) -> (i32, i32, i32) {
    %c0_i32 = arith.constant 0 : i32
    %c0_i32_0 = arith.constant 0 : i32
    %c0_i32_1 = arith.constant 0 : i32
    return %arg0, %c0_i32, %c0_i32_0 : i32, i32, i32
  }
  func.func @transform_5(%arg0: i32) -> (i32, i32, i32) {
    %c0_i32 = arith.constant 0 : i32
    %c0_i32_0 = arith.constant 0 : i32
    %c0_i32_1 = arith.constant 0 : i32
    %c0_i32_2 = arith.constant 0 : i32
    return %c0_i32, %c0_i32_0, %c0_i32_1 : i32, i32, i32
  }
  func.func @transform_6(%arg0: i32) -> (i32, i32, i32) {
    %c0_i32 = arith.constant 0 : i32
    %c0_i32_0 = arith.constant 0 : i32
    %c0_i32_1 = arith.constant 0 : i32
    %c0_i32_2 = arith.constant 0 : i32
    return %c0_i32, %c0_i32_0, %c0_i32_1 : i32, i32, i32
  }
  func.func @transform_7(%arg0: i32) -> (i32, i32, i32) {
    %c0_i32 = arith.constant 0 : i32
    %c0_i32_0 = arith.constant 0 : i32
    %c0_i32_1 = arith.constant 0 : i32
    %c0_i32_2 = arith.constant 0 : i32
    return %c0_i32, %c0_i32_0, %c0_i32_1 : i32, i32, i32
  }
  func.func @transform_8(%arg0: i32) -> (i32, i32, i32) {
    %c0_i32 = arith.constant 0 : i32
    %c0_i32_0 = arith.constant 0 : i32
    %c0_i32_1 = arith.constant 0 : i32
    %c0_i32_2 = arith.constant 0 : i32
    return %c0_i32, %c0_i32_0, %c0_i32_1 : i32, i32, i32
  }
  func.func @transform_9(%arg0: i32) -> (i32, i32) {
    %c0_i32 = arith.constant 0 : i32
    %c0_i32_0 = arith.constant 0 : i32
    %c0_i32_1 = arith.constant 0 : i32
    return %c0_i32, %c0_i32_0 : i32, i32
  }
  func.func @transform_10(%arg0: i32) -> (i32, i32) {
    %c0_i32 = arith.constant 0 : i32
    %c0_i32_0 = arith.constant 0 : i32
    %c0_i32_1 = arith.constant 0 : i32
    return %c0_i32, %c0_i32_0 : i32, i32
  }
  func.func @transform_11(%arg0: i32) -> (i32, i32) {
    %c0_i32 = arith.constant 0 : i32
    %c0_i32_0 = arith.constant 0 : i32
    %c0_i32_1 = arith.constant 0 : i32
    return %c0_i32, %c0_i32_0 : i32, i32
  }
  func.func @transform_12(%arg0: i32) -> (i32, i32) {
    %c0_i32 = arith.constant 0 : i32
    %c0_i32_0 = arith.constant 0 : i32
    %c0_i32_1 = arith.constant 0 : i32
    return %c0_i32, %c0_i32_0 : i32, i32
  }
  func.func @transform_13(%arg0: i32) -> (i32, i32) {
    %c0_i32 = arith.constant 0 : i32
    %c0_i32_0 = arith.constant 0 : i32
    %c0_i32_1 = arith.constant 0 : i32
    return %c0_i32, %c0_i32_0 : i32, i32
  }
  func.func @transform_14(%arg0: i32) -> (i32, i32) {
    %c0_i32 = arith.constant 0 : i32
    %c0_i32_0 = arith.constant 0 : i32
    %c0_i32_1 = arith.constant 0 : i32
    return %c0_i32, %c0_i32_0 : i32, i32
  }
  func.func @transform_15(%arg0: i32) -> (i32, i32) {
    %c0_i32 = arith.constant 0 : i32
    %c0_i32_0 = arith.constant 0 : i32
    %c0_i32_1 = arith.constant 0 : i32
    return %c0_i32, %c0_i32_0 : i32, i32
  }
  func.func @transform_16(%arg0: i32) -> (i32, i32, i32) {
    %c0_i32 = arith.constant 0 : i32
    %c0_i32_0 = arith.constant 0 : i32
    %c0_i32_1 = arith.constant 0 : i32
    return %arg0, %c0_i32, %c0_i32_0 : i32, i32, i32
  }
  func.func @transform_17(%arg0: i32) -> (i32, i32, i32) {
    %c0_i32 = arith.constant 0 : i32
    %c0_i32_0 = arith.constant 0 : i32
    %c0_i32_1 = arith.constant 0 : i32
    return %arg0, %c0_i32, %c0_i32_0 : i32, i32, i32
  }
}

</mosaic_0001>

<llo_original>
// kernel: multi_mono_decoder_forward.1
$region0: #{multi_mono_decoder_forward.1}
  #allocation0 [shape = 'u32[]', space=smem, size = 0x4, offset = 0x4, fixed_abs, tag = 'smem constant byte address 0x4 - core index']
  #allocation1 [shape = 'u32[144,128]{1,0:T(1,128)}', space=vmem, size = 0x12000, scoped, tag = 'internal scratch']
  %s0 = inlined_call_operand.vmem [shape: f32[2,16,16], index: 0, kind: input, shape index: {}]
  %s1 = inlined_call_operand.vmem [shape: f32[2,16,16], index: 1, kind: input, shape index: {}]
  %s2 = inlined_call_operand.vmem [shape: f32[2,16,256], index: 2, kind: input, shape index: {}]
  %s3 = inlined_call_operand.vmem [shape: s32[2,24,1], index: 3, kind: input, shape index: {}]
  %s4 = inlined_call_operand.vmem [shape: s32[2,24,1], index: 4, kind: input, shape index: {}]
  %s5 = inlined_call_operand.vmem [shape: f32[8,16,32], index: 5, kind: input, shape index: {}]
  %s6 = inlined_call_operand.vmem [shape: f32[4,256,32], index: 6, kind: input, shape index: {}]
  %s7 = inlined_call_operand.vmem [shape: f32[18,32,32], index: 7, kind: input, shape index: {}]
  %s8 = inlined_call_operand.vmem [shape: f32[2,32,16], index: 8, kind: input, shape index: {}]
  %s9 = inlined_call_operand.vmem [shape: f32[32,256], index: 9, kind: input, shape index: {}]
  %s10 = inlined_call_operand.vmem [shape: f32[32,20], index: 10, kind: input, shape index: {}]
  %s11 = inlined_call_operand.vmem [shape: f32[32,1], index: 11, kind: input, shape index: {}]
  %s12 = inlined_call_operand.vmem [shape: f32[39,32], index: 12, kind: input, shape index: {}]
  %s13 = inlined_call_operand.vmem [shape: f32[6,16], index: 13, kind: input, shape index: {}]
  %s14 = inlined_call_operand.vmem [shape: f32[1,256], index: 14, kind: input, shape index: {}]
  %s15 = inlined_call_operand.vmem [shape: f32[1,20], index: 15, kind: input, shape index: {}]
  %s16 = inlined_call_operand.hbm [shape: f32[2,16,20], index: 16, kind: output, shape index: {0}]
  %s17 = inlined_call_operand.vmem [shape: f32[2,24,1], index: 17, kind: output, shape index: {1}]
  %18 = xla_tuple %s16, %s17
  %s19 = sld [smem:[#allocation0]]
  $region105: #{multi_mono_decoder_forward.1} parent=0
    _
  %s21 = ssub.s32 1, %s19
  %s22 = scalar_select 0, %s21, %s19
  $region1: #{multi_mono_decoder_forward.1} parent=0
    #allocation2 [shape = 'u8[16384]{0}', space=vmem, size = 0x4000, scoped, tag = 'output window, operand 0']
    #allocation3 [shape = 's32[2]{0}', space=sflag, size = 0x8, scoped, tag = 'scoped memory for multi_mono_decoder_forward.1']
    %23 = vsyncpa [#allocation3], 0
    %s24 = scalar_lea.sflag [#allocation3], 1
    %25 = vsyncpa %s24, 0
    loop: start=0, step=1, limit=4
    $region2: #{multi_mono_decoder_forward.1} parent=1 // loop_pre_header
      _
    $region3: #{multi_mono_decoder_forward.1} parent=1 // loop_header
      %s27 = sphi 0, %s31
      %p28 = scmp.ge.s32.totalorder %s27, 4
      %s37 = sphi 0, %s39
      %s40 = sphi 0, %s37
      %s41 = sphi 0, %s40
      %s57 = sphi 0, %s41
      %s63 = sphi 0, %s65
      %s66 = sphi 0, %s63
      %s67 = sphi 0, %s66
      %s83 = sphi 0, %s67
      %s89 = sphi 0, %s91
      %s92 = sphi 0, %s89
      %s93 = sphi 0, %s92
      %s109 = sphi 0, %s93
      %s115 = sphi 0, %s117
      %s118 = sphi 0, %s115
      %s119 = sphi 0, %s118
      %s135 = sphi 0, %s119
      %s141 = sphi 0, %s143
      %s144 = sphi 0, %s141
      %s145 = sphi 0, %s144
      %s161 = sphi 0, %s145
      %s165 = sphi 0, %s165
      %s167 = sphi 0, %s165
      %s168 = sphi 0, %s167
      %s182 = sphi 0, %s168
      %s186 = sphi 0, %s186
      %s188 = sphi 0, %s186
      %s189 = sphi 0, %s188
      %s203 = sphi 0, %s189
      %s207 = sphi 0, %s207
      %s209 = sphi 0, %s207
      %s210 = sphi 0, %s209
      %s224 = sphi 0, %s210
      %s228 = sphi 0, %s228
      %s230 = sphi 0, %s228
      %s231 = sphi 0, %s230
      %s245 = sphi 0, %s231
      %s249 = sphi 0, %s249
      %s251 = sphi 0, %s249
      %s252 = sphi 0, %s251
      %s266 = sphi 0, %s252
      %s270 = sphi 0, %s270
      %s272 = sphi 0, %s270
      %s273 = sphi 0, %s272
      %s287 = sphi 0, %s273
      %s291 = sphi 0, %s291
      %s293 = sphi 0, %s291
      %s294 = sphi 0, %s293
      %s308 = sphi 0, %s294
      %s312 = sphi 0, %s312
      %s314 = sphi 0, %s312
      %s315 = sphi 0, %s314
      %s329 = sphi 0, %s315
      %s333 = sphi 0, %s333
      %s335 = sphi 0, %s333
      %s336 = sphi 0, %s335
      %s350 = sphi 0, %s336
      %s354 = sphi 0, %s354
      %s356 = sphi 0, %s354
      %s357 = sphi 0, %s356
      %s371 = sphi 0, %s357
      %s375 = sphi 0, %s375
      %s377 = sphi 0, %s375
      %s378 = sphi 0, %s377
      %s392 = sphi 0, %s378
      %s398 = sphi 0, %s400
      %s401 = sphi 0, %s398
      %s402 = sphi 0, %s401
      %s418 = sphi 0, %s402
      %s424 = sphi 0, %s426
      %s427 = sphi 0, %s424
      %s428 = sphi 0, %s427
      %s444 = sphi 0, %s428
    $region4: #{multi_mono_decoder_forward.1} parent=1 // loop_header_branch
      %30 = sbr.rel (%p28) target = $region8
    $region5: #{multi_mono_decoder_forward.1} parent=1 // loop_body
      %s32 = ssub.s32 %s27, 1
      %s33 = ssub.s32 %s27, 2
      %s34 = sadd.s32 %s27, 1
      %s35 = ssub.s32 %s27, %s34
      %p36 = scmp.eq.s32.totalorder %s35, 0
      %s38 = sadd.s32 %s37, 1
      %s39 = scalar_select %p36, %s37, %s38
      %p42 = pneg %p36
      %p43 = scmp.eq.s32.totalorder %s27, 1
      %p44 = por %p42, %p43
      %p45 = scmp.ne.s32.totalorder %s37, %s40
      %p46 = scmp.eq.s32.totalorder %s27, 0
      %p47 = por %p45, %p46
      %p48 = scmp.ne.s32.totalorder %s37, %s40
      %p49 = scmp.eq.s32.totalorder %s32, 1
      %p50 = por %p48, %p49
      %p51 = scmp.ne.s32.totalorder %s40, %s41
      %p52 = scmp.eq.s32.totalorder %s32, 0
      %p53 = por %p51, %p52
      %p54 = scmp.ne.s32.totalorder %s40, %s41
      %p55 = scmp.eq.s32.totalorder %s33, 1
      %p56 = por %p54, %p55
      %p58 = scmp.ne.s32.totalorder %s41, %s57
      %p59 = scmp.eq.s32.totalorder %s33, 0
      %p60 = por %p58, %p59
      %s61 = ssub.s32 %s27, %s34
      %p62 = scmp.eq.s32.totalorder %s61, 0
      %s64 = sadd.s32 %s63, 1
      %s65 = scalar_select %p62, %s63, %s64
      %p68 = pneg %p62
      %p69 = scmp.eq.s32.totalorder %s27, 1
      %p70 = por %p68, %p69
      %p71 = scmp.ne.s32.totalorder %s63, %s66
      %p72 = scmp.eq.s32.totalorder %s27, 0
      %p73 = por %p71, %p72
      %p74 = scmp.ne.s32.totalorder %s63, %s66
      %p75 = scmp.eq.s32.totalorder %s32, 1
      %p76 = por %p74, %p75
      %p77 = scmp.ne.s32.totalorder %s66, %s67
      %p78 = scmp.eq.s32.totalorder %s32, 0
      %p79 = por %p77, %p78
      %p80 = scmp.ne.s32.totalorder %s66, %s67
      %p81 = scmp.eq.s32.totalorder %s33, 1
      %p82 = por %p80, %p81
      %p84 = scmp.ne.s32.totalorder %s67, %s83
      %p85 = scmp.eq.s32.totalorder %s33, 0
      %p86 = por %p84, %p85
      %s87 = ssub.s32 %s27, %s34
      %p88 = scmp.eq.s32.totalorder %s87, 0
      %s90 = sadd.s32 %s89, 1
      %s91 = scalar_select %p88, %s89, %s90
      %p94 = pneg %p88
      %p95 = scmp.eq.s32.totalorder %s27, 1
      %p96 = por %p94, %p95
      %p97 = scmp.ne.s32.totalorder %s89, %s92
      %p98 = scmp.eq.s32.totalorder %s27, 0
      %p99 = por %p97, %p98
      %p100 = scmp.ne.s32.totalorder %s89, %s92
      %p101 = scmp.eq.s32.totalorder %s32, 1
      %p102 = por %p100, %p101
      %p103 = scmp.ne.s32.totalorder %s92, %s93
      %p104 = scmp.eq.s32.totalorder %s32, 0
      %p105 = por %p103, %p104
      %p106 = scmp.ne.s32.totalorder %s92, %s93
      %p107 = scmp.eq.s32.totalorder %s33, 1
      %p108 = por %p106, %p107
      %p110 = scmp.ne.s32.totalorder %s93, %s109
      %p111 = scmp.eq.s32.totalorder %s33, 0
      %p112 = por %p110, %p111
      %s113 = ssub.s32 %s27, %s34
      %p114 = scmp.eq.s32.totalorder %s113, 0
      %s116 = sadd.s32 %s115, 1
      %s117 = scalar_select %p114, %s115, %s116
      %p120 = pneg %p114
      %p121 = scmp.eq.s32.totalorder %s27, 1
      %p122 = por %p120, %p121
      %p123 = scmp.ne.s32.totalorder %s115, %s118
      %p124 = scmp.eq.s32.totalorder %s27, 0
      %p125 = por %p123, %p124
      %p126 = scmp.ne.s32.totalorder %s115, %s118
      %p127 = scmp.eq.s32.totalorder %s32, 1
      %p128 = por %p126, %p127
      %p129 = scmp.ne.s32.totalorder %s118, %s119
      %p130 = scmp.eq.s32.totalorder %s32, 0
      %p131 = por %p129, %p130
      %p132 = scmp.ne.s32.totalorder %s118, %s119
      %p133 = scmp.eq.s32.totalorder %s33, 1
      %p134 = por %p132, %p133
      %p136 = scmp.ne.s32.totalorder %s119, %s135
      %p137 = scmp.eq.s32.totalorder %s33, 0
      %p138 = por %p136, %p137
      %s139 = ssub.s32 %s27, %s34
      %p140 = scmp.eq.s32.totalorder %s139, 0
      %s142 = sadd.s32 %s141, 1
      %s143 = scalar_select %p140, %s141, %s142
      %p146 = pneg %p140
      %p147 = scmp.eq.s32.totalorder %s27, 1
      %p148 = por %p146, %p147
      %p149 = scmp.ne.s32.totalorder %s141, %s144
      %p150 = scmp.eq.s32.totalorder %s27, 0
      %p151 = por %p149, %p150
      %p152 = scmp.ne.s32.totalorder %s141, %s144
      %p153 = scmp.eq.s32.totalorder %s32, 1
      %p154 = por %p152, %p153
      %p155 = scmp.ne.s32.totalorder %s144, %s145
      %p156 = scmp.eq.s32.totalorder %s32, 0
      %p157 = por %p155, %p156
      %p158 = scmp.ne.s32.totalorder %s144, %s145
      %p159 = scmp.eq.s32.totalorder %s33, 1
      %p160 = por %p158, %p159
      %p162 = scmp.ne.s32.totalorder %s145, %s161
      %p163 = scmp.eq.s32.totalorder %s33, 0
      %p164 = por %p162, %p163
      %s166 = sadd.s32 %s165, 1
      %p169 = scmp.eq.s32.totalorder %s27, 1
      %p170 = scmp.ne.s32.totalorder %s165, %s167
      %p171 = scmp.eq.s32.totalorder %s27, 0
      %p172 = por %p170, %p171
      %p173 = scmp.ne.s32.totalorder %s165, %s167
      %p174 = scmp.eq.s32.totalorder %s32, 1
      %p175 = por %p173, %p174
      %p176 = scmp.ne.s32.totalorder %s167, %s168
      %p177 = scmp.eq.s32.totalorder %s32, 0
      %p178 = por %p176, %p177
      %p179 = scmp.ne.s32.totalorder %s167, %s168
      %p180 = scmp.eq.s32.totalorder %s33, 1
      %p181 = por %p179, %p180
      %p183 = scmp.ne.s32.totalorder %s168, %s182
      %p184 = scmp.eq.s32.totalorder %s33, 0
      %p185 = por %p183, %p184
      %s187 = sadd.s32 %s186, 1
      %p190 = scmp.eq.s32.totalorder %s27, 1
      %p191 = scmp.ne.s32.totalorder %s186, %s188
      %p192 = scmp.eq.s32.totalorder %s27, 0
      %p193 = por %p191, %p192
      %p194 = scmp.ne.s32.totalorder %s186, %s188
      %p195 = scmp.eq.s32.totalorder %s32, 1
      %p196 = por %p194, %p195
      %p197 = scmp.ne.s32.totalorder %s188, %s189
      %p198 = scmp.eq.s32.totalorder %s32, 0
      %p199 = por %p197, %p198
      %p200 = scmp.ne.s32.totalorder %s188, %s189
      %p201 = scmp.eq.s32.totalorder %s33, 1
      %p202 = por %p200, %p201
      %p204 = scmp.ne.s32.totalorder %s189, %s203
      %p205 = scmp.eq.s32.totalorder %s33, 0
      %p206 = por %p204, %p205
      %s208 = sadd.s32 %s207, 1
      %p211 = scmp.eq.s32.totalorder %s27, 1
      %p212 = scmp.ne.s32.totalorder %s207, %s209
      %p213 = scmp.eq.s32.totalorder %s27, 0
      %p214 = por %p212, %p213
      %p215 = scmp.ne.s32.totalorder %s207, %s209
      %p216 = scmp.eq.s32.totalorder %s32, 1
      %p217 = por %p215, %p216
      %p218 = scmp.ne.s32.totalorder %s209, %s210
      %p219 = scmp.eq.s32.totalorder %s32, 0
      %p220 = por %p218, %p219
      %p221 = scmp.ne.s32.totalorder %s209, %s210
      %p222 = scmp.eq.s32.totalorder %s33, 1
      %p223 = por %p221, %p222
      %p225 = scmp.ne.s32.totalorder %s210, %s224
      %p226 = scmp.eq.s32.totalorder %s33, 0
      %p227 = por %p225, %p226
      %s229 = sadd.s32 %s228, 1
      %p232 = scmp.eq.s32.totalorder %s27, 1
      %p233 = scmp.ne.s32.totalorder %s228, %s230
      %p234 = scmp.eq.s32.totalorder %s27, 0
      %p235 = por %p233, %p234
      %p236 = scmp.ne.s32.totalorder %s228, %s230
      %p237 = scmp.eq.s32.totalorder %s32, 1
      %p238 = por %p236, %p237
      %p239 = scmp.ne.s32.totalorder %s230, %s231
      %p240 = scmp.eq.s32.totalorder %s32, 0
      %p241 = por %p239, %p240
      %p242 = scmp.ne.s32.totalorder %s230, %s231
      %p243 = scmp.eq.s32.totalorder %s33, 1
      %p244 = por %p242, %p243
      %p246 = scmp.ne.s32.totalorder %s231, %s245
      %p247 = scmp.eq.s32.totalorder %s33, 0
      %p248 = por %p246, %p247
      %s250 = sadd.s32 %s249, 1
      %p253 = scmp.eq.s32.totalorder %s27, 1
      %p254 = scmp.ne.s32.totalorder %s249, %s251
      %p255 = scmp.eq.s32.totalorder %s27, 0
      %p256 = por %p254, %p255
      %p257 = scmp.ne.s32.totalorder %s249, %s251
      %p258 = scmp.eq.s32.totalorder %s32, 1
      %p259 = por %p257, %p258
      %p260 = scmp.ne.s32.totalorder %s251, %s252
      %p261 = scmp.eq.s32.totalorder %s32, 0
      %p262 = por %p260, %p261
      %p263 = scmp.ne.s32.totalorder %s251, %s252
      %p264 = scmp.eq.s32.totalorder %s33, 1
      %p265 = por %p263, %p264
      %p267 = scmp.ne.s32.totalorder %s252, %s266
      %p268 = scmp.eq.s32.totalorder %s33, 0
      %p269 = por %p267, %p268
      %s271 = sadd.s32 %s270, 1
      %p274 = scmp.eq.s32.totalorder %s27, 1
      %p275 = scmp.ne.s32.totalorder %s270, %s272
      %p276 = scmp.eq.s32.totalorder %s27, 0
      %p277 = por %p275, %p276
      %p278 = scmp.ne.s32.totalorder %s270, %s272
      %p279 = scmp.eq.s32.totalorder %s32, 1
      %p280 = por %p278, %p279
      %p281 = scmp.ne.s32.totalorder %s272, %s273
      %p282 = scmp.eq.s32.totalorder %s32, 0
      %p283 = por %p281, %p282
      %p284 = scmp.ne.s32.totalorder %s272, %s273
      %p285 = scmp.eq.s32.totalorder %s33, 1
      %p286 = por %p284, %p285
      %p288 = scmp.ne.s32.totalorder %s273, %s287
      %p289 = scmp.eq.s32.totalorder %s33, 0
      %p290 = por %p288, %p289
      %s292 = sadd.s32 %s291, 1
      %p295 = scmp.eq.s32.totalorder %s27, 1
      %p296 = scmp.ne.s32.totalorder %s291, %s293
      %p297 = scmp.eq.s32.totalorder %s27, 0
      %p298 = por %p296, %p297
      %p299 = scmp.ne.s32.totalorder %s291, %s293
      %p300 = scmp.eq.s32.totalorder %s32, 1
      %p301 = por %p299, %p300
      %p302 = scmp.ne.s32.totalorder %s293, %s294
      %p303 = scmp.eq.s32.totalorder %s32, 0
      %p304 = por %p302, %p303
      %p305 = scmp.ne.s32.totalorder %s293, %s294
      %p306 = scmp.eq.s32.totalorder %s33, 1
      %p307 = por %p305, %p306
      %p309 = scmp.ne.s32.totalorder %s294, %s308
      %p310 = scmp.eq.s32.totalorder %s33, 0
      %p311 = por %p309, %p310
      %s313 = sadd.s32 %s312, 1
      %p316 = scmp.eq.s32.totalorder %s27, 1
      %p317 = scmp.ne.s32.totalorder %s312, %s314
      %p318 = scmp.eq.s32.totalorder %s27, 0
      %p319 = por %p317, %p318
      %p320 = scmp.ne.s32.totalorder %s312, %s314
      %p321 = scmp.eq.s32.totalorder %s32, 1
      %p322 = por %p320, %p321
      %p323 = scmp.ne.s32.totalorder %s314, %s315
      %p324 = scmp.eq.s32.totalorder %s32, 0
      %p325 = por %p323, %p324
      %p326 = scmp.ne.s32.totalorder %s314, %s315
      %p327 = scmp.eq.s32.totalorder %s33, 1
      %p328 = por %p326, %p327
      %p330 = scmp.ne.s32.totalorder %s315, %s329
      %p331 = scmp.eq.s32.totalorder %s33, 0
      %p332 = por %p330, %p331
      %s334 = sadd.s32 %s333, 1
      %p337 = scmp.eq.s32.totalorder %s27, 1
      %p338 = scmp.ne.s32.totalorder %s333, %s335
      %p339 = scmp.eq.s32.totalorder %s27, 0
      %p340 = por %p338, %p339
      %p341 = scmp.ne.s32.totalorder %s333, %s335
      %p342 = scmp.eq.s32.totalorder %s32, 1
      %p343 = por %p341, %p342
      %p344 = scmp.ne.s32.totalorder %s335, %s336
      %p345 = scmp.eq.s32.totalorder %s32, 0
      %p346 = por %p344, %p345
      %p347 = scmp.ne.s32.totalorder %s335, %s336
      %p348 = scmp.eq.s32.totalorder %s33, 1
      %p349 = por %p347, %p348
      %p351 = scmp.ne.s32.totalorder %s336, %s350
      %p352 = scmp.eq.s32.totalorder %s33, 0
      %p353 = por %p351, %p352
      %s355 = sadd.s32 %s354, 1
      %p358 = scmp.eq.s32.totalorder %s27, 1
      %p359 = scmp.ne.s32.totalorder %s354, %s356
      %p360 = scmp.eq.s32.totalorder %s27, 0
      %p361 = por %p359, %p360
      %p362 = scmp.ne.s32.totalorder %s354, %s356
      %p363 = scmp.eq.s32.totalorder %s32, 1
      %p364 = por %p362, %p363
      %p365 = scmp.ne.s32.totalorder %s356, %s357
      %p366 = scmp.eq.s32.totalorder %s32, 0
      %p367 = por %p365, %p366
      %p368 = scmp.ne.s32.totalorder %s356, %s357
      %p369 = scmp.eq.s32.totalorder %s33, 1
      %p370 = por %p368, %p369
      %p372 = scmp.ne.s32.totalorder %s357, %s371
      %p373 = scmp.eq.s32.totalorder %s33, 0
      %p374 = por %p372, %p373
      %s376 = sadd.s32 %s375, 1
      %p379 = scmp.eq.s32.totalorder %s27, 1
      %p380 = scmp.ne.s32.totalorder %s375, %s377
      %p381 = scmp.eq.s32.totalorder %s27, 0
      %p382 = por %p380, %p381
      %p383 = scmp.ne.s32.totalorder %s375, %s377
      %p384 = scmp.eq.s32.totalorder %s32, 1
      %p385 = por %p383, %p384
      %p386 = scmp.ne.s32.totalorder %s377, %s378
      %p387 = scmp.eq.s32.totalorder %s32, 0
      %p388 = por %p386, %p387
      %p389 = scmp.ne.s32.totalorder %s377, %s378
      %p390 = scmp.eq.s32.totalorder %s33, 1
      %p391 = por %p389, %p390
      %p393 = scmp.ne.s32.totalorder %s378, %s392
      %p394 = scmp.eq.s32.totalorder %s33, 0
      %p395 = por %p393, %p394
      %s396 = ssub.s32 %s27, %s34
      %p397 = scmp.eq.s32.totalorder %s396, 0
      %s399 = sadd.s32 %s398, 1
      %s400 = scalar_select %p397, %s398, %s399
      %p403 = pneg %p397
      %p404 = scmp.eq.s32.totalorder %s27, 1
      %p405 = por %p403, %p404
      %p406 = scmp.ne.s32.totalorder %s398, %s401
      %p407 = scmp.eq.s32.totalorder %s27, 0
      %p408 = por %p406, %p407
      %p409 = scmp.ne.s32.totalorder %s398, %s401
      %p410 = scmp.eq.s32.totalorder %s32, 1
      %p411 = por %p409, %p410
      %p412 = scmp.ne.s32.totalorder %s401, %s402
      %p413 = scmp.eq.s32.totalorder %s32, 0
      %p414 = por %p412, %p413
      %p415 = scmp.ne.s32.totalorder %s401, %s402
      %p416 = scmp.eq.s32.totalorder %s33, 1
      %p417 = por %p415, %p416
      %p419 = scmp.ne.s32.totalorder %s402, %s418
      %p420 = scmp.eq.s32.totalorder %s33, 0
      %p421 = por %p419, %p420
      %s422 = ssub.s32 %s27, %s34
      %p423 = scmp.eq.s32.totalorder %s422, 0
      %s425 = sadd.s32 %s424, 1
      %s426 = scalar_select %p423, %s424, %s425
      %p429 = pneg %p423
      %p430 = scmp.eq.s32.totalorder %s27, 1
      %p431 = por %p429, %p430
      %p432 = scmp.ne.s32.totalorder %s424, %s427
      %p433 = scmp.eq.s32.totalorder %s27, 0
      %p434 = por %p432, %p433
      %p435 = scmp.ne.s32.totalorder %s424, %s427
      %p436 = scmp.eq.s32.totalorder %s32, 1
      %p437 = por %p435, %p436
      %p438 = scmp.ne.s32.totalorder %s427, %s428
      %p439 = scmp.eq.s32.totalorder %s32, 0
      %p440 = por %p438, %p439
      %p441 = scmp.ne.s32.totalorder %s427, %s428
      %p442 = scmp.eq.s32.totalorder %s33, 1
      %p443 = por %p441, %p442
      %p445 = scmp.ne.s32.totalorder %s428, %s444
      %p446 = scmp.eq.s32.totalorder %s33, 0
      %p447 = por %p445, %p446
      %p448 = scmp.le.s32.totalorder 1, %s27
      %p449 = scmp.lt.s32.totalorder %s27, 3
      %p450 = pnand %p448, %p449
      %p451 = pneg %p450
      // Predicated region
      $region9: #{multi_mono_decoder_forward.1} parent=5 // pred_check
        _
      $region10: #{multi_mono_decoder_forward.1} parent=5 // pred_check_branch
        %453 = sbr.rel (%p450) target = $region12
      $region11: #{multi_mono_decoder_forward.1} parent=5 // pred_region
        %s454 = ssub.s32 %s27, 1
        // Predicated region
        $region13: #{multi_mono_decoder_forward.1} parent=11 // pred_check
          %p455 = pneg %p178
        $region14: #{multi_mono_decoder_forward.1} parent=11 // pred_check_branch
          %457 = sbr.rel (%p455) target = $region16
        $region15: #{multi_mono_decoder_forward.1} parent=11 // pred_region
          _
        $region16: #{multi_mono_decoder_forward.1} parent=11 // pred_fallthru
          _
        // Predicated region
        $region17: #{multi_mono_decoder_forward.1} parent=11 // pred_check
          %p458 = pneg %p199
        $region18: #{multi_mono_decoder_forward.1} parent=11 // pred_check_branch
          %460 = sbr.rel (%p458) target = $region20
        $region19: #{multi_mono_decoder_forward.1} parent=11 // pred_region
          _
        $region20: #{multi_mono_decoder_forward.1} parent=11 // pred_fallthru
          _
        // Predicated region
        $region21: #{multi_mono_decoder_forward.1} parent=11 // pred_check
          %p461 = pneg %p220
        $region22: #{multi_mono_decoder_forward.1} parent=11 // pred_check_branch
          %463 = sbr.rel (%p461) target = $region24
        $region23: #{multi_mono_decoder_forward.1} parent=11 // pred_region
          _
        $region24: #{multi_mono_decoder_forward.1} parent=11 // pred_fallthru
          _
        // Predicated region
        $region25: #{multi_mono_decoder_forward.1} parent=11 // pred_check
          %p464 = pneg %p241
        $region26: #{multi_mono_decoder_forward.1} parent=11 // pred_check_branch
          %466 = sbr.rel (%p464) target = $region28
        $region27: #{multi_mono_decoder_forward.1} parent=11 // pred_region
          _
        $region28: #{multi_mono_decoder_forward.1} parent=11 // pred_fallthru
          _
        // Predicated region
        $region29: #{multi_mono_decoder_forward.1} parent=11 // pred_check
          %p467 = pneg %p262
        $region30: #{multi_mono_decoder_forward.1} parent=11 // pred_check_branch
          %469 = sbr.rel (%p467) target = $region32
        $region31: #{multi_mono_decoder_forward.1} parent=11 // pred_region
          _
        $region32: #{multi_mono_decoder_forward.1} parent=11 // pred_fallthru
          _
        // Predicated region
        $region33: #{multi_mono_decoder_forward.1} parent=11 // pred_check
          %p470 = pneg %p283
        $region34: #{multi_mono_decoder_forward.1} parent=11 // pred_check_branch
          %472 = sbr.rel (%p470) target = $region36
        $region35: #{multi_mono_decoder_forward.1} parent=11 // pred_region
          _
        $region36: #{multi_mono_decoder_forward.1} parent=11 // pred_fallthru
          _
        // Predicated region
        $region37: #{multi_mono_decoder_forward.1} parent=11 // pred_check
          %p473 = pneg %p304
        $region38: #{multi_mono_decoder_forward.1} parent=11 // pred_check_branch
          %475 = sbr.rel (%p473) target = $region40
        $region39: #{multi_mono_decoder_forward.1} parent=11 // pred_region
          _
        $region40: #{multi_mono_decoder_forward.1} parent=11 // pred_fallthru
          _
        // Predicated region
        $region41: #{multi_mono_decoder_forward.1} parent=11 // pred_check
          %p476 = pneg %p325
        $region42: #{multi_mono_decoder_forward.1} parent=11 // pred_check_branch
          %478 = sbr.rel (%p476) target = $region44
        $region43: #{multi_mono_decoder_forward.1} parent=11 // pred_region
          _
        $region44: #{multi_mono_decoder_forward.1} parent=11 // pred_fallthru
          _
        // Predicated region
        $region45: #{multi_mono_decoder_forward.1} parent=11 // pred_check
          %p479 = pneg %p346
        $region46: #{multi_mono_decoder_forward.1} parent=11 // pred_check_branch
          %481 = sbr.rel (%p479) target = $region48
        $region47: #{multi_mono_decoder_forward.1} parent=11 // pred_region
          _
        $region48: #{multi_mono_decoder_forward.1} parent=11 // pred_fallthru
          _
        // Predicated region
        $region49: #{multi_mono_decoder_forward.1} parent=11 // pred_check
          %p482 = pneg %p367
        $region50: #{multi_mono_decoder_forward.1} parent=11 // pred_check_branch
          %484 = sbr.rel (%p482) target = $region52
        $region51: #{multi_mono_decoder_forward.1} parent=11 // pred_region
          _
        $region52: #{multi_mono_decoder_forward.1} parent=11 // pred_fallthru
          _
        // Predicated region
        $region53: #{multi_mono_decoder_forward.1} parent=11 // pred_check
          %p485 = pneg %p388
        $region54: #{multi_mono_decoder_forward.1} parent=11 // pred_check_branch
          %487 = sbr.rel (%p485) target = $region56
        $region55: #{multi_mono_decoder_forward.1} parent=11 // pred_region
          _
        $region56: #{multi_mono_decoder_forward.1} parent=11 // pred_fallthru
          _
      $region12: #{multi_mono_decoder_forward.1} parent=5 // pred_fallthru
        _
      %p488 = scmp.lt.s32.totalorder %s27, 2
      // Predicated region
      $region57: #{multi_mono_decoder_forward.1} parent=5 // pred_check
        %p489 = pneg %p488
      $region58: #{multi_mono_decoder_forward.1} parent=5 // pred_check_branch
        %491 = sbr.rel (%p489) target = $region60
      $region59: #{multi_mono_decoder_forward.1} parent=5 // pred_region
        // Predicated region
        $region61: #{multi_mono_decoder_forward.1} parent=59 // pred_check
          %p492 = pneg %p47
        $region62: #{multi_mono_decoder_forward.1} parent=59 // pred_check_branch
          %494 = sbr.rel (%p492) target = $region64
        $region63: #{multi_mono_decoder_forward.1} parent=59 // pred_region
          %p495 = scmp.lt.s32.totalorder %s27, 1
          %s496 = scalar_select %p495, %s27, 1
          %s497 = smul.addr %s496, 2
          %s498 = smul.addr %s497, 8
          %s499 = scalar_lea.vmem %s0, %s498
        $region64: #{multi_mono_decoder_forward.1} parent=59 // pred_fallthru
          _
        // Predicated region
        $region65: #{multi_mono_decoder_forward.1} parent=59 // pred_check
          %p500 = pneg %p73
        $region66: #{multi_mono_decoder_forward.1} parent=59 // pred_check_branch
          %502 = sbr.rel (%p500) target = $region68
        $region67: #{multi_mono_decoder_forward.1} parent=59 // pred_region
          %p503 = scmp.lt.s32.totalorder %s27, 1
          %s504 = scalar_select %p503, %s27, 1
          %s505 = smul.addr %s504, 2
          %s506 = smul.addr %s505, 8
          %s507 = scalar_lea.vmem %s1, %s506
        $region68: #{multi_mono_decoder_forward.1} parent=59 // pred_fallthru
          _
        // Predicated region
        $region69: #{multi_mono_decoder_forward.1} parent=59 // pred_check
          %p508 = pneg %p99
        $region70: #{multi_mono_decoder_forward.1} parent=59 // pred_check_branch
          %510 = sbr.rel (%p508) target = $region72
        $region71: #{multi_mono_decoder_forward.1} parent=59 // pred_region
          %p511 = scmp.lt.s32.totalorder %s27, 1
          %s512 = scalar_select %p511, %s27, 1
          %s513 = smul.addr %s512, 4
          %s514 = smul.addr %s513, 8
          %s515 = scalar_lea.vmem %s2, %s514
        $region72: #{multi_mono_decoder_forward.1} parent=59 // pred_fallthru
          _
        // Predicated region
        $region73: #{multi_mono_decoder_forward.1} parent=59 // pred_check
          %p516 = pneg %p125
        $region74: #{multi_mono_decoder_forward.1} parent=59 // pred_check_branch
          %518 = sbr.rel (%p516) target = $region76
        $region75: #{multi_mono_decoder_forward.1} parent=59 // pred_region
          %p519 = scmp.lt.s32.totalorder %s27, 1
          %s520 = scalar_select %p519, %s27, 1
          %s521 = smul.addr %s520, 3
          %s522 = smul.addr %s521, 8
          %s523 = scalar_lea.vmem %s3, %s522
        $region76: #{multi_mono_decoder_forward.1} parent=59 // pred_fallthru
          _
        // Predicated region
        $region77: #{multi_mono_decoder_forward.1} parent=59 // pred_check
          %p524 = pneg %p151
        $region78: #{multi_mono_decoder_forward.1} parent=59 // pred_check_branch
          %526 = sbr.rel (%p524) target = $region80
        $region79: #{multi_mono_decoder_forward.1} parent=59 // pred_region
          %p527 = scmp.lt.s32.totalorder %s27, 1
          %s528 = scalar_select %p527, %s27, 1
          %s529 = smul.addr %s528, 3
          %s530 = smul.addr %s529, 8
          %s531 = scalar_lea.vmem %s4, %s530
        $region80: #{multi_mono_decoder_forward.1} parent=59 // pred_fallthru
          _
      $region60: #{multi_mono_decoder_forward.1} parent=5 // pred_fallthru
        _
      %p532 = scmp.le.s32.totalorder 1, %s27
      %p533 = scmp.lt.s32.totalorder %s27, 3
      %p534 = pnand %p532, %p533
      %p535 = pneg %p534
      // Predicated region
      $region81: #{multi_mono_decoder_forward.1} parent=5 // pred_check
        _
      $region82: #{multi_mono_decoder_forward.1} parent=5 // pred_check_branch
        %537 = sbr.rel (%p534) target = $region84
      $region83: #{multi_mono_decoder_forward.1} parent=5 // pred_region
        %s538 = ssub.s32 %s27, 1
        %p539 = scmp.lt.s32.totalorder %s32, 1
        %s540 = scalar_select %p539, %s32, 1
        %s541 = smul.addr %s540, 2
        %s542 = smul.addr %s541, 8
        %s543 = scalar_lea.vmem %s0, %s542
        %p544 = pneg %p53
        %p545 = pneg %p50
        %p546 = scmp.lt.s32.totalorder %s32, 1
        %s547 = scalar_select %p546, %s32, 1
        %s548 = smul.addr %s547, 2
        %s549 = smul.addr %s548, 8
        %s550 = scalar_lea.vmem %s1, %s549
        %p551 = pneg %p79
        %p552 = pneg %p76
        %p553 = scmp.lt.s32.totalorder %s32, 1
        %s554 = scalar_select %p553, %s32, 1
        %s555 = smul.addr %s554, 4
        %s556 = smul.addr %s555, 8
        %s557 = scalar_lea.vmem %s2, %s556
        %p558 = pneg %p105
        %p559 = pneg %p102
        %p560 = scmp.lt.s32.totalorder %s32, 1
        %s561 = scalar_select %p560, %s32, 1
        %s562 = smul.addr %s561, 3
        %s563 = smul.addr %s562, 8
        %s564 = scalar_lea.vmem %s3, %s563
        %p565 = pneg %p131
        %p566 = pneg %p128
        %p567 = scmp.lt.s32.totalorder %s32, 1
        %s568 = scalar_select %p567, %s32, 1
        %s569 = smul.addr %s568, 3
        %s570 = smul.addr %s569, 8
        %s571 = scalar_lea.vmem %s4, %s570
        %p572 = pneg %p157
        %p573 = pneg %p154
        %p574 = pneg %p178
        %p575 = pneg %p175
        %p576 = pneg %p199
        %p577 = pneg %p196
        %p578 = pneg %p220
        %p579 = pneg %p217
        %p580 = pneg %p241
        %p581 = pneg %p238
        %p582 = pneg %p262
        %p583 = pneg %p259
        %p584 = pneg %p283
        %p585 = pneg %p280
        %p586 = pneg %p304
        %p587 = pneg %p301
        %p588 = pneg %p325
        %p589 = pneg %p322
        %p590 = pneg %p346
        %p591 = pneg %p343
        %p592 = pneg %p367
        %p593 = pneg %p364
        %p594 = pneg %p388
        %p595 = pneg %p385
        %p596 = pneg %p414
        %p597 = pneg %p411
        %s598 = sand.u32 %s401, 1
        %s599 = scalar_lea.sflag [#allocation3], %s598
        %s600 = sand.u32 %s401, 1
        %s601 = smul.addr %s600, 16
        %s602 = scalar_lea.vmem [#allocation2], %s601
        %p603 = pneg %p440
        %p604 = pneg %p437
        %p605 = scmp.lt.s32.totalorder %s32, 1
        %s606 = scalar_select %p605, %s32, 1
        %s607 = smul.addr %s606, 3
        %s608 = smul.addr %s607, 8
        %s609 = scalar_lea.vmem %s17, %s608
        %p610 = scmp.lt.s32.totalorder %s32, 1
        %s611 = scalar_select %p610, %s32, 1
        %s612 = smul.addr %s611, 2
        %s613 = smul.addr %s612, 8
        %s614 = scalar_lea.vmem %s0, %s613
        %p615 = scmp.lt.s32.totalorder %s32, 1
        %s616 = scalar_select %p615, %s32, 1
        %s617 = smul.addr %s616, 2
        %s618 = smul.addr %s617, 8
        %s619 = scalar_lea.vmem %s1, %s618
        %p620 = scmp.lt.s32.totalorder %s32, 1
        %s621 = scalar_select %p620, %s32, 1
        %s622 = smul.addr %s621, 4
        %s623 = smul.addr %s622, 8
        %s624 = scalar_lea.vmem %s2, %s623
        %p625 = scmp.lt.s32.totalorder %s32, 1
        %s626 = scalar_select %p625, %s32, 1
        %s627 = smul.addr %s626, 3
        %s628 = smul.addr %s627, 8
        %s629 = scalar_lea.vmem %s3, %s628
        %p630 = scmp.lt.s32.totalorder %s32, 1
        %s631 = scalar_select %p630, %s32, 1
        %s632 = smul.addr %s631, 3
        %s633 = smul.addr %s632, 8
        %s634 = scalar_lea.vmem %s4, %s633
        %p635 = scmp.lt.s32.totalorder %s32, 1
        %s636 = scalar_select %p635, %s32, 1
        %s637 = smul.addr %s636, 3
        %s638 = smul.addr %s637, 8
        %s639 = scalar_lea.vmem %s17, %s638
        %v640 = vld [vmem:[%s614] sm:$0xff]
        %v641 = vld [vmem:[%s614 + $0x8] sm:$0xff]
        %v642 = vld [vmem:[%s619] sm:$0xff]
        %v643 = vld [vmem:[%s619 + $0x8] sm:$0xff]
        %v644 = vld [vmem:[%s624] sm:$0xff]
        %v645 = vld [vmem:[%s624 + $0x8] sm:$0xff]
        %v646 = vld [vmem:[%s624 + $0x10] sm:$0xff]
        %v647 = vld [vmem:[%s624 + $0x18] sm:$0xff]
        %vm648 = vcmask 130048
        %v650 = vsel %vm648, %v640, 0
        %v653 = vsel %vm648, %v641, 0
        %655 = vmatprep.subr.mxu0 0.0
        %656 = vmatpush1.msra.mxu0 %v642
        %657 = vmatprep.subr.mxu0 0.0
        %658 = vmatpush1.msra.mxu0 %v643
        %659 = vmatprep.subr.mxu0 0.0
        %660 = vmatpush1.msra.mxu0 0.0
        %661 = vmatprep.subr.mxu0 0.0
        %662 = vmatpush1.msra.mxu0 0.0
        %663 = vmatprep.subr.mxu0 0.0
        %664 = vmatpush1.msra.mxu0 0.0
        %665 = vmatprep.subr.mxu0 0.0
        %666 = vmatpush1.msra.mxu0 0.0
        %667 = vmatprep.subr.mxu0 0.0
        %668 = vmatpush1.msra.mxu0 0.0
        %669 = vmatprep.subr.mxu0 0.0
        %670 = vmatpush1.msra.mxu0 0.0
        %671 = vmatprep.subr.mxu0 0.0
        %672 = vmatpush1.msra.mxu0 0.0
        %673 = vmatprep.subr.mxu0 0.0
        %674 = vmatpush1.msra.mxu0 0.0
        %675 = vmatprep.subr.mxu0 0.0
        %676 = vmatpush1.msra.mxu0 0.0
        %677 = vmatprep.subr.mxu0 0.0
        %678 = vmatpush1.msra.mxu0 0.0
        %679 = vmatprep.subr.mxu0 0.0
        %680 = vmatpush1.msra.mxu0 0.0
        %681 = vmatprep.subr.mxu0 0.0
        %682 = vmatpush1.msra.mxu0 0.0
        %683 = vmatprep.subr.mxu0 0.0
        %684 = vmatpush1.msra.mxu0 0.0
        %685 = vmatprep.subr.mxu0 0.0
        %686 = vmatpush1.msra.mxu0 0.0
        %687 = vmatprep.subr.mxu0 0.0
        %688 = vmatpush1.msra.mxu0 0.0
        %689 = vmatprep.subr.mxu0 0.0
        %690 = vmatpush1.msra.mxu0 0.0
        %691 = vmatprep.subr.mxu0 0.0
        %692 = vmatpush1.msra.mxu0 0.0
        %693 = vmatprep.subr.mxu0 0.0
        %694 = vmatpush1.msra.mxu0 0.0
        %695 = vmatprep.subr.mxu0 0.0
        %696 = vmatpush1.msra.mxu0 0.0
        %697 = vmatprep.subr.mxu0 0.0
        %698 = vmatpush1.msra.mxu0 0.0
        %699 = vmatprep.subr.mxu0 0.0
        %700 = vmatpush1.msra.mxu0 0.0
        %701 = vmatprep.subr.mxu0 0.0
        %702 = vmatpush1.msra.mxu0 0.0
        %703 = vmatprep.subr.mxu0 0.0
        %704 = vmatpush1.msra.mxu0 0.0
        %705 = vmatprep.subr.mxu0 0.0
        %706 = vmatpush1.msra.mxu0 0.0
        %707 = vmatprep.subr.mxu0 0.0
        %708 = vmatpush1.msra.mxu0 0.0
        %709 = vmatprep.subr.mxu0 0.0
        %710 = vmatpush1.msra.mxu0 0.0
        %711 = vmatprep.subr.mxu0 0.0
        %712 = vmatpush1.msra.mxu0 0.0
        %713 = vmatprep.subr.mxu0 0.0
        %714 = vmatpush1.msra.mxu0 0.0
        %715 = vmatprep.subr.mxu0 0.0
        %716 = vmatpush1.msra.mxu0 0.0
        %717 = vmatprep.subr.mxu0 0.0
        %718 = vmatpush1.msra.mxu0 0.0
        %719 = vmatprep.mubr.f32.mxu0 0.0
        %720 = vmatmul.mubr.f32.gmra.mrb[0].mxu0 %v650
        %v721 = vpop.f32.mrb[0].mxu0
        %v722 = vadd.f32 0.0, %v721
        %v723 = vpop.f32.mrb[0].mxu0
        %724 = vmatprep.mubr.f32.mxu0 0.0
        %725 = vmatmul.mubr.f32.gmra.mrb[0].mxu0 %v653
        %v726 = vpop.f32.mrb[0].mxu0
        %v727 = vadd.f32 0.0, %v726
        %v728 = vpop.f32.mrb[0].mxu0
        %729 = vdwg.mxu0
        %730 = vmatprep.subr.mxu0 %v645
        %731 = vmatpush1.msra.mxu0 %v644
        %732 = vmatprep.subr.mxu0 %v647
        %733 = vmatpush1.msra.mxu0 %v646
        %734 = vmatprep.subr.mxu0 0.0
        %735 = vmatpush1.msra.mxu0 0.0
        %736 = vmatprep.subr.mxu0 0.0
        %737 = vmatpush1.msra.mxu0 0.0
        %738 = vmatprep.subr.mxu0 0.0
        %739 = vmatpush1.msra.mxu0 0.0
        %740 = vmatprep.subr.mxu0 0.0
        %741 = vmatpush1.msra.mxu0 0.0
        %742 = vmatprep.subr.mxu0 0.0
        %743 = vmatpush1.msra.mxu0 0.0
        %744 = vmatprep.subr.mxu0 0.0
        %745 = vmatpush1.msra.mxu0 0.0
        %746 = vmatprep.subr.mxu0 0.0
        %747 = vmatpush1.msra.mxu0 0.0
        %748 = vmatprep.subr.mxu0 0.0
        %749 = vmatpush1.msra.mxu0 0.0
        %750 = vmatprep.subr.mxu0 0.0
        %751 = vmatpush1.msra.mxu0 0.0
        %752 = vmatprep.subr.mxu0 0.0
        %753 = vmatpush1.msra.mxu0 0.0
        %754 = vmatprep.subr.mxu0 0.0
        %755 = vmatpush1.msra.mxu0 0.0
        %756 = vmatprep.subr.mxu0 0.0
        %757 = vmatpush1.msra.mxu0 0.0
        %758 = vmatprep.subr.mxu0 0.0
        %759 = vmatpush1.msra.mxu0 0.0
        %760 = vmatprep.subr.mxu0 0.0
        %761 = vmatpush1.msra.mxu0 0.0
        %762 = vmatprep.subr.mxu0 0.0
        %763 = vmatpush1.msra.mxu0 0.0
        %764 = vmatprep.subr.mxu0 0.0
        %765 = vmatpush1.msra.mxu0 0.0
        %766 = vmatprep.subr.mxu0 0.0
        %767 = vmatpush1.msra.mxu0 0.0
        %768 = vmatprep.subr.mxu0 0.0
        %769 = vmatpush1.msra.mxu0 0.0
        %770 = vmatprep.subr.mxu0 0.0
        %771 = vmatpush1.msra.mxu0 0.0
        %772 = vmatprep.subr.mxu0 0.0
        %773 = vmatpush1.msra.mxu0 0.0
        %774 = vmatprep.subr.mxu0 0.0
        %775 = vmatpush1.msra.mxu0 0.0
        %776 = vmatprep.subr.mxu0 0.0
        %777 = vmatpush1.msra.mxu0 0.0
        %778 = vmatprep.subr.mxu0 0.0
        %779 = vmatpush1.msra.mxu0 0.0
        %780 = vmatprep.subr.mxu0 0.0
        %781 = vmatpush1.msra.mxu0 0.0
        %782 = vmatprep.subr.mxu0 0.0
        %783 = vmatpush1.msra.mxu0 0.0
        %784 = vmatprep.subr.mxu0 0.0
        %785 = vmatpush1.msra.mxu0 0.0
        %786 = vmatprep.subr.mxu0 0.0
        %787 = vmatpush1.msra.mxu0 0.0
        %788 = vmatprep.subr.mxu0 0.0
        %789 = vmatpush1.msra.mxu0 0.0
        %790 = vmatprep.subr.mxu0 0.0
        %791 = vmatpush1.msra.mxu0 0.0
        %792 = vmatprep.subr.mxu0 0.0
        %793 = vmatpush1.msra.mxu0 0.0
        %794 = vmatprep.mubr.f32.mxu0 0.0
        %795 = vmatmul.mubr.f32.gmra.mrb[0].mxu0 %v650
        %v796 = vpop.f32.mrb[0].mxu0
        %v797 = vadd.f32 0.0, %v796
        %v798 = vpop.f32.mrb[0].mxu0
        %v799 = vadd.f32 0.0, %v798
        %800 = vmatprep.mubr.f32.mxu0 0.0
        %801 = vmatmul.mubr.f32.gmra.mrb[0].mxu0 %v653
        %v802 = vpop.f32.mrb[0].mxu0
        %v803 = vadd.f32 0.0, %v802
        %v804 = vpop.f32.mrb[0].mxu0
        %v805 = vadd.f32 0.0, %v804
        %806 = vdwg.mxu0
        %v807 = vld [vmem:[%s5] sm:$0xff]
        %v808 = vld [vmem:[%s5 + $0x8] sm:$0xff]
        %v809 = vld [vmem:[%s6] sm:$0xff]
        %v810 = vld [vmem:[%s6 + $0x8] sm:$0xff]
        %v811 = vld [vmem:[%s6 + $0x10] sm:$0xff]
        %v812 = vld [vmem:[%s6 + $0x18] sm:$0xff]
        %v813 = vld [vmem:[%s6 + $0x20] sm:$0xff]
        %v814 = vld [vmem:[%s6 + $0x28] sm:$0xff]
        %v815 = vld [vmem:[%s6 + $0x30] sm:$0xff]
        %v816 = vld [vmem:[%s6 + $0x38] sm:$0xff]
        %v817 = vld [vmem:[%s6 + $0x40] sm:$0xff]
        %v818 = vld [vmem:[%s6 + $0x48] sm:$0xff]
        %v819 = vld [vmem:[%s6 + $0x50] sm:$0xff]
        %v820 = vld [vmem:[%s6 + $0x58] sm:$0xff]
        %v821 = vld [vmem:[%s6 + $0x60] sm:$0xff]
        %v822 = vld [vmem:[%s6 + $0x68] sm:$0xff]
        %v823 = vld [vmem:[%s6 + $0x70] sm:$0xff]
        %v824 = vld [vmem:[%s6 + $0x78] sm:$0xff]
        %v825 = vld [vmem:[%s6 + $0x80] sm:$0xff]
        %v826 = vld [vmem:[%s6 + $0x88] sm:$0xff]
        %v827 = vld [vmem:[%s6 + $0x90] sm:$0xff]
        %v828 = vld [vmem:[%s6 + $0x98] sm:$0xff]
        %v829 = vld [vmem:[%s6 + $0xa0] sm:$0xff]
        %v830 = vld [vmem:[%s6 + $0xa8] sm:$0xff]
        %v831 = vld [vmem:[%s6 + $0xb0] sm:$0xff]
        %v832 = vld [vmem:[%s6 + $0xb8] sm:$0xff]
        %v833 = vld [vmem:[%s6 + $0xc0] sm:$0xff]
        %v834 = vld [vmem:[%s6 + $0xc8] sm:$0xff]
        %v835 = vld [vmem:[%s6 + $0xd0] sm:$0xff]
        %v836 = vld [vmem:[%s6 + $0xd8] sm:$0xff]
        %v837 = vld [vmem:[%s6 + $0xe0] sm:$0xff]
        %v838 = vld [vmem:[%s6 + $0xe8] sm:$0xff]
        %v839 = vld [vmem:[%s6 + $0xf0] sm:$0xff]
        %v840 = vld [vmem:[%s6 + $0xf8] sm:$0xff]
        %841 = vmatprep.subr.mxu0 0.0
        %842 = vmatpush1.msra.mxu0 %v809
        %843 = vmatprep.subr.mxu0 0.0
        %844 = vmatpush1.msra.mxu0 %v810
        %845 = vmatprep.subr.mxu0 0.0
        %846 = vmatpush1.msra.mxu0 %v811
        %847 = vmatprep.subr.mxu0 0.0
        %848 = vmatpush1.msra.mxu0 %v812
        %849 = vmatprep.subr.mxu0 0.0
        %850 = vmatpush1.msra.mxu0 %v813
        %851 = vmatprep.subr.mxu0 0.0
        %852 = vmatpush1.msra.mxu0 %v814
        %853 = vmatprep.subr.mxu0 0.0
        %854 = vmatpush1.msra.mxu0 %v815
        %855 = vmatprep.subr.mxu0 0.0
        %856 = vmatpush1.msra.mxu0 %v816
        %857 = vmatprep.subr.mxu0 0.0
        %858 = vmatpush1.msra.mxu0 %v817
        %859 = vmatprep.subr.mxu0 0.0
        %860 = vmatpush1.msra.mxu0 %v818
        %861 = vmatprep.subr.mxu0 0.0
        %862 = vmatpush1.msra.mxu0 %v819
        %863 = vmatprep.subr.mxu0 0.0
        %864 = vmatpush1.msra.mxu0 %v820
        %865 = vmatprep.subr.mxu0 0.0
        %866 = vmatpush1.msra.mxu0 %v821
        %867 = vmatprep.subr.mxu0 0.0
        %868 = vmatpush1.msra.mxu0 %v822
        %869 = vmatprep.subr.mxu0 0.0
        %870 = vmatpush1.msra.mxu0 %v823
        %871 = vmatprep.subr.mxu0 0.0
        %872 = vmatpush1.msra.mxu0 %v824
        %873 = vmatprep.subr.mxu0 0.0
        %874 = vmatpush1.msra.mxu0 %v825
        %875 = vmatprep.subr.mxu0 0.0
        %876 = vmatpush1.msra.mxu0 %v826
        %877 = vmatprep.subr.mxu0 0.0
        %878 = vmatpush1.msra.mxu0 %v827
        %879 = vmatprep.subr.mxu0 0.0
        %880 = vmatpush1.msra.mxu0 %v828
        %881 = vmatprep.subr.mxu0 0.0
        %882 = vmatpush1.msra.mxu0 %v829
        %883 = vmatprep.subr.mxu0 0.0
        %884 = vmatpush1.msra.mxu0 %v830
        %885 = vmatprep.subr.mxu0 0.0
        %886 = vmatpush1.msra.mxu0 %v831
        %887 = vmatprep.subr.mxu0 0.0
        %888 = vmatpush1.msra.mxu0 %v832
        %889 = vmatprep.subr.mxu0 0.0
        %890 = vmatpush1.msra.mxu0 %v833
        %891 = vmatprep.subr.mxu0 0.0
        %892 = vmatpush1.msra.mxu0 %v834
        %893 = vmatprep.subr.mxu0 0.0
        %894 = vmatpush1.msra.mxu0 %v835
        %895 = vmatprep.subr.mxu0 0.0
        %896 = vmatpush1.msra.mxu0 %v836
        %897 = vmatprep.subr.mxu0 0.0
        %898 = vmatpush1.msra.mxu0 %v837
        %899 = vmatprep.subr.mxu0 0.0
        %900 = vmatpush1.msra.mxu0 %v838
        %901 = vmatprep.subr.mxu0 0.0
        %902 = vmatpush1.msra.mxu0 %v839
        %903 = vmatprep.subr.mxu0 0.0
        %904 = vmatpush1.msra.mxu0 %v840
        %905 = vmatprep.mubr.f32.mxu0 %v799
        %906 = vmatmul.mubr.f32.gmra.mrb[0].mxu0 %v797
        %v907 = vpop.f32.mrb[0].mxu0
        %v908 = vadd.f32 0.0, %v907
        %v909 = vpop.f32.mrb[0].mxu0
        %910 = vmatprep.mubr.f32.mxu0 %v805
        %911 = vmatmul.mubr.f32.gmra.mrb[0].mxu0 %v803
        %v912 = vpop.f32.mrb[0].mxu0
        %v913 = vadd.f32 0.0, %v912
        %v914 = vpop.f32.mrb[0].mxu0
        %915 = vdwg.mxu0
        %v917 = vsel %vm648, %v722, 0
        %v920 = vsel %vm648, %v727, 0
        %922 = vmatprep.subr.mxu0 0.0
        %923 = vmatpush1.msra.mxu0 %v807
        %924 = vmatprep.subr.mxu0 0.0
        %925 = vmatpush1.msra.mxu0 %v808
        %926 = vmatprep.subr.mxu0 0.0
        %927 = vmatpush1.msra.mxu0 0.0
        %928 = vmatprep.subr.mxu0 0.0
        %929 = vmatpush1.msra.mxu0 0.0
        %930 = vmatprep.subr.mxu0 0.0
        %931 = vmatpush1.msra.mxu0 0.0
        %932 = vmatprep.subr.mxu0 0.0
        %933 = vmatpush1.msra.mxu0 0.0
        %934 = vmatprep.subr.mxu0 0.0
        %935 = vmatpush1.msra.mxu0 0.0
        %936 = vmatprep.subr.mxu0 0.0
        %937 = vmatpush1.msra.mxu0 0.0
        %938 = vmatprep.subr.mxu0 0.0
        %939 = vmatpush1.msra.mxu0 0.0
        %940 = vmatprep.subr.mxu0 0.0
        %941 = vmatpush1.msra.mxu0 0.0
        %942 = vmatprep.subr.mxu0 0.0
        %943 = vmatpush1.msra.mxu0 0.0
        %944 = vmatprep.subr.mxu0 0.0
        %945 = vmatpush1.msra.mxu0 0.0
        %946 = vmatprep.subr.mxu0 0.0
        %947 = vmatpush1.msra.mxu0 0.0
        %948 = vmatprep.subr.mxu0 0.0
        %949 = vmatpush1.msra.mxu0 0.0
        %950 = vmatprep.subr.mxu0 0.0
        %951 = vmatpush1.msra.mxu0 0.0
        %952 = vmatprep.subr.mxu0 0.0
        %953 = vmatpush1.msra.mxu0 0.0
        %954 = vmatprep.subr.mxu0 0.0
        %955 = vmatpush1.msra.mxu0 0.0
        %956 = vmatprep.subr.mxu0 0.0
        %957 = vmatpush1.msra.mxu0 0.0
        %958 = vmatprep.subr.mxu0 0.0
        %959 = vmatpush1.msra.mxu0 0.0
        %960 = vmatprep.subr.mxu0 0.0
        %961 = vmatpush1.msra.mxu0 0.0
        %962 = vmatprep.subr.mxu0 0.0
        %963 = vmatpush1.msra.mxu0 0.0
        %964 = vmatprep.subr.mxu0 0.0
        %965 = vmatpush1.msra.mxu0 0.0
        %966 = vmatprep.subr.mxu0 0.0
        %967 = vmatpush1.msra.mxu0 0.0
        %968 = vmatprep.subr.mxu0 0.0
        %969 = vmatpush1.msra.mxu0 0.0
        %970 = vmatprep.subr.mxu0 0.0
        %971 = vmatpush1.msra.mxu0 0.0
        %972 = vmatprep.subr.mxu0 0.0
        %973 = vmatpush1.msra.mxu0 0.0
        %974 = vmatprep.subr.mxu0 0.0
        %975 = vmatpush1.msra.mxu0 0.0
        %976 = vmatprep.subr.mxu0 0.0
        %977 = vmatpush1.msra.mxu0 0.0
        %978 = vmatprep.subr.mxu0 0.0
        %979 = vmatpush1.msra.mxu0 0.0
        %980 = vmatprep.subr.mxu0 0.0
        %981 = vmatpush1.msra.mxu0 0.0
        %982 = vmatprep.subr.mxu0 0.0
        %983 = vmatpush1.msra.mxu0 0.0
        %984 = vmatprep.subr.mxu0 0.0
        %985 = vmatpush1.msra.mxu0 0.0
        %986 = vmatprep.mubr.f32.mxu0 0.0
        %987 = vmatmul.mubr.f32.gmra.mrb[0].mxu0 %v917
        %v988 = vpop.f32.mrb[0].mxu0
        %v989 = vadd.f32 %v908, %v988
        %v990 = vpop.f32.mrb[0].mxu0
        %991 = vmatprep.mubr.f32.mxu0 0.0
        %992 = vmatmul.mubr.f32.gmra.mrb[0].mxu0 %v920
        %v993 = vpop.f32.mrb[0].mxu0
        %v994 = vadd.f32 %v913, %v993
        %v995 = vpop.f32.mrb[0].mxu0
        %996 = vdwg.mxu0
        %s997 = scalar_lea.vmem %s5, 16
        %v998 = vld [vmem:[%s997] sm:$0xff]
        %v999 = vld [vmem:[%s997 + $0x8] sm:$0xff]
        %v1001 = vsel %vm648, %v642, 0
        %v1004 = vsel %vm648, %v643, 0
        %1006 = vmatprep.subr.mxu0 0.0
        %1007 = vmatpush1.msra.mxu0 %v998
        %1008 = vmatprep.subr.mxu0 0.0
        %1009 = vmatpush1.msra.mxu0 %v999
        %1010 = vmatprep.subr.mxu0 0.0
        %1011 = vmatpush1.msra.mxu0 0.0
        %1012 = vmatprep.subr.mxu0 0.0
        %1013 = vmatpush1.msra.mxu0 0.0
        %1014 = vmatprep.subr.mxu0 0.0
        %1015 = vmatpush1.msra.mxu0 0.0
        %1016 = vmatprep.subr.mxu0 0.0
        %1017 = vmatpush1.msra.mxu0 0.0
        %1018 = vmatprep.subr.mxu0 0.0
        %1019 = vmatpush1.msra.mxu0 0.0
        %1020 = vmatprep.subr.mxu0 0.0
        %1021 = vmatpush1.msra.mxu0 0.0
        %1022 = vmatprep.subr.mxu0 0.0
        %1023 = vmatpush1.msra.mxu0 0.0
        %1024 = vmatprep.subr.mxu0 0.0
        %1025 = vmatpush1.msra.mxu0 0.0
        %1026 = vmatprep.subr.mxu0 0.0
        %1027 = vmatpush1.msra.mxu0 0.0
        %1028 = vmatprep.subr.mxu0 0.0
        %1029 = vmatpush1.msra.mxu0 0.0
        %1030 = vmatprep.subr.mxu0 0.0
        %1031 = vmatpush1.msra.mxu0 0.0
        %1032 = vmatprep.subr.mxu0 0.0
        %1033 = vmatpush1.msra.mxu0 0.0
        %1034 = vmatprep.subr.mxu0 0.0
        %1035 = vmatpush1.msra.mxu0 0.0
        %1036 = vmatprep.subr.mxu0 0.0
        %1037 = vmatpush1.msra.mxu0 0.0
        %1038 = vmatprep.subr.mxu0 0.0
        %1039 = vmatpush1.msra.mxu0 0.0
        %1040 = vmatprep.subr.mxu0 0.0
        %1041 = vmatpush1.msra.mxu0 0.0
        %1042 = vmatprep.subr.mxu0 0.0
        %1043 = vmatpush1.msra.mxu0 0.0
        %1044 = vmatprep.subr.mxu0 0.0
        %1045 = vmatpush1.msra.mxu0 0.0
        %1046 = vmatprep.subr.mxu0 0.0
        %1047 = vmatpush1.msra.mxu0 0.0
        %1048 = vmatprep.subr.mxu0 0.0
        %1049 = vmatpush1.msra.mxu0 0.0
        %1050 = vmatprep.subr.mxu0 0.0
        %1051 = vmatpush1.msra.mxu0 0.0
        %1052 = vmatprep.subr.mxu0 0.0
        %1053 = vmatpush1.msra.mxu0 0.0
        %1054 = vmatprep.subr.mxu0 0.0
        %1055 = vmatpush1.msra.mxu0 0.0
        %1056 = vmatprep.subr.mxu0 0.0
        %1057 = vmatpush1.msra.mxu0 0.0
        %1058 = vmatprep.subr.mxu0 0.0
        %1059 = vmatpush1.msra.mxu0 0.0
        %1060 = vmatprep.subr.mxu0 0.0
        %1061 = vmatpush1.msra.mxu0 0.0
        %1062 = vmatprep.subr.mxu0 0.0
        %1063 = vmatpush1.msra.mxu0 0.0
        %1064 = vmatprep.subr.mxu0 0.0
        %1065 = vmatpush1.msra.mxu0 0.0
        %1066 = vmatprep.subr.mxu0 0.0
        %1067 = vmatpush1.msra.mxu0 0.0
        %1068 = vmatprep.subr.mxu0 0.0
        %1069 = vmatpush1.msra.mxu0 0.0
        %1070 = vmatprep.mubr.f32.mxu0 0.0
        %1071 = vmatmul.mubr.f32.gmra.mrb[0].mxu0 %v1001
        %v1072 = vpop.f32.mrb[0].mxu0
        %v1073 = vadd.f32 0.0, %v1072
        %v1074 = vpop.f32.mrb[0].mxu0
        %1075 = vmatprep.mubr.f32.mxu0 0.0
        %1076 = vmatmul.mubr.f32.gmra.mrb[0].mxu0 %v1004
        %v1077 = vpop.f32.mrb[0].mxu0
        %v1078 = vadd.f32 0.0, %v1077
        %v1079 = vpop.f32.mrb[0].mxu0
        %1080 = vdwg.mxu0
        %v1081 = vadd.f32 %v989, %v1073
        %v1082 = vadd.f32 %v994, %v1078
        %s1083 = scalar_lea.vmem %s6, 256
        %v1084 = vld [vmem:[%s1083] sm:$0xff]
        %v1085 = vld [vmem:[%s1083 + $0x8] sm:$0xff]
        %v1086 = vld [vmem:[%s1083 + $0x10] sm:$0xff]
        %v1087 = vld [vmem:[%s1083 + $0x18] sm:$0xff]
        %v1088 = vld [vmem:[%s1083 + $0x20] sm:$0xff]
        %v1089 = vld [vmem:[%s1083 + $0x28] sm:$0xff]
        %v1090 = vld [vmem:[%s1083 + $0x30] sm:$0xff]
        %v1091 = vld [vmem:[%s1083 + $0x38] sm:$0xff]
        %v1092 = vld [vmem:[%s1083 + $0x40] sm:$0xff]
        %v1093 = vld [vmem:[%s1083 + $0x48] sm:$0xff]
        %v1094 = vld [vmem:[%s1083 + $0x50] sm:$0xff]
        %v1095 = vld [vmem:[%s1083 + $0x58] sm:$0xff]
        %v1096 = vld [vmem:[%s1083 + $0x60] sm:$0xff]
        %v1097 = vld [vmem:[%s1083 + $0x68] sm:$0xff]
        %v1098 = vld [vmem:[%s1083 + $0x70] sm:$0xff]
        %v1099 = vld [vmem:[%s1083 + $0x78] sm:$0xff]
        %v1100 = vld [vmem:[%s1083 + $0x80] sm:$0xff]
        %v1101 = vld [vmem:[%s1083 + $0x88] sm:$0xff]
        %v1102 = vld [vmem:[%s1083 + $0x90] sm:$0xff]
        %v1103 = vld [vmem:[%s1083 + $0x98] sm:$0xff]
        %v1104 = vld [vmem:[%s1083 + $0xa0] sm:$0xff]
        %v1105 = vld [vmem:[%s1083 + $0xa8] sm:$0xff]
        %v1106 = vld [vmem:[%s1083 + $0xb0] sm:$0xff]
        %v1107 = vld [vmem:[%s1083 + $0xb8] sm:$0xff]
        %v1108 = vld [vmem:[%s1083 + $0xc0] sm:$0xff]
        %v1109 = vld [vmem:[%s1083 + $0xc8] sm:$0xff]
        %v1110 = vld [vmem:[%s1083 + $0xd0] sm:$0xff]
        %v1111 = vld [vmem:[%s1083 + $0xd8] sm:$0xff]
        %v1112 = vld [vmem:[%s1083 + $0xe0] sm:$0xff]
        %v1113 = vld [vmem:[%s1083 + $0xe8] sm:$0xff]
        %v1114 = vld [vmem:[%s1083 + $0xf0] sm:$0xff]
        %v1115 = vld [vmem:[%s1083 + $0xf8] sm:$0xff]
        %1116 = vmatprep.subr.mxu0 0.0
        %1117 = vmatpush1.msra.mxu0 %v1084
        %1118 = vmatprep.subr.mxu0 0.0
        %1119 = vmatpush1.msra.mxu0 %v1085
        %1120 = vmatprep.subr.mxu0 0.0
        %1121 = vmatpush1.msra.mxu0 %v1086
        %1122 = vmatprep.subr.mxu0 0.0
        %1123 = vmatpush1.msra.mxu0 %v1087
        %1124 = vmatprep.subr.mxu0 0.0
        %1125 = vmatpush1.msra.mxu0 %v1088
        %1126 = vmatprep.subr.mxu0 0.0
        %1127 = vmatpush1.msra.mxu0 %v1089
        %1128 = vmatprep.subr.mxu0 0.0
        %1129 = vmatpush1.msra.mxu0 %v1090
        %1130 = vmatprep.subr.mxu0 0.0
        %1131 = vmatpush1.msra.mxu0 %v1091
        %1132 = vmatprep.subr.mxu0 0.0
        %1133 = vmatpush1.msra.mxu0 %v1092
        %1134 = vmatprep.subr.mxu0 0.0
        %1135 = vmatpush1.msra.mxu0 %v1093
        %1136 = vmatprep.subr.mxu0 0.0
        %1137 = vmatpush1.msra.mxu0 %v1094
        %1138 = vmatprep.subr.mxu0 0.0
        %1139 = vmatpush1.msra.mxu0 %v1095
        %1140 = vmatprep.subr.mxu0 0.0
        %1141 = vmatpush1.msra.mxu0 %v1096
        %1142 = vmatprep.subr.mxu0 0.0
        %1143 = vmatpush1.msra.mxu0 %v1097
        %1144 = vmatprep.subr.mxu0 0.0
        %1145 = vmatpush1.msra.mxu0 %v1098
        %1146 = vmatprep.subr.mxu0 0.0
        %1147 = vmatpush1.msra.mxu0 %v1099
        %1148 = vmatprep.subr.mxu0 0.0
        %1149 = vmatpush1.msra.mxu0 %v1100
        %1150 = vmatprep.subr.mxu0 0.0
        %1151 = vmatpush1.msra.mxu0 %v1101
        %1152 = vmatprep.subr.mxu0 0.0
        %1153 = vmatpush1.msra.mxu0 %v1102
        %1154 = vmatprep.subr.mxu0 0.0
        %1155 = vmatpush1.msra.mxu0 %v1103
        %1156 = vmatprep.subr.mxu0 0.0
        %1157 = vmatpush1.msra.mxu0 %v1104
        %1158 = vmatprep.subr.mxu0 0.0
        %1159 = vmatpush1.msra.mxu0 %v1105
        %1160 = vmatprep.subr.mxu0 0.0
        %1161 = vmatpush1.msra.mxu0 %v1106
        %1162 = vmatprep.subr.mxu0 0.0
        %1163 = vmatpush1.msra.mxu0 %v1107
        %1164 = vmatprep.subr.mxu0 0.0
        %1165 = vmatpush1.msra.mxu0 %v1108
        %1166 = vmatprep.subr.mxu0 0.0
        %1167 = vmatpush1.msra.mxu0 %v1109
        %1168 = vmatprep.subr.mxu0 0.0
        %1169 = vmatpush1.msra.mxu0 %v1110
        %1170 = vmatprep.subr.mxu0 0.0
        %1171 = vmatpush1.msra.mxu0 %v1111
        %1172 = vmatprep.subr.mxu0 0.0
        %1173 = vmatpush1.msra.mxu0 %v1112
        %1174 = vmatprep.subr.mxu0 0.0
        %1175 = vmatpush1.msra.mxu0 %v1113
        %1176 = vmatprep.subr.mxu0 0.0
        %1177 = vmatpush1.msra.mxu0 %v1114
        %1178 = vmatprep.subr.mxu0 0.0
        %1179 = vmatpush1.msra.mxu0 %v1115
        %1180 = vmatprep.mubr.f32.mxu0 %v645
        %1181 = vmatmul.mubr.f32.gmra.mrb[0].mxu0 %v644
        %v1182 = vpop.f32.mrb[0].mxu0
        %v1183 = vadd.f32 0.0, %v1182
        %v1184 = vpop.f32.mrb[0].mxu0
        %1185 = vmatprep.mubr.f32.mxu0 %v647
        %1186 = vmatmul.mubr.f32.gmra.mrb[0].mxu0 %v646
        %v1187 = vpop.f32.mrb[0].mxu0
        %v1188 = vadd.f32 0.0, %v1187
        %v1189 = vpop.f32.mrb[0].mxu0
        %1190 = vdwg.mxu0
        %v1191 = vadd.f32 %v1081, %v1183
        %v1192 = vadd.f32 %v1082, %v1188
        %v1193 = vld [vmem:[%s12] sm:$0x1]
        %v1194 = vlaneseq
        %v1195 = vshrl.u32 %v1194, 7
        %v1196 = vsub.s32 0, %v1195
        %v1197 = vrot.slane %v1193, %v1196
        %v1198 = vadd.f32 %v1191, %v1197
        %v1199 = vadd.f32 %v1192, %v1197
        %v1200 = vmul.f32 %v1198, 0.5
        %v1201 = vmul.f32 %v1199, 0.5
        %v1202 = vmul.f32 %v1198, 0.70710677
        %v1203 = vmul.f32 %v1199, 0.70710677
        %v1204 = verf.f32.pop %v1202
        %v1205 = verf.f32.pop %v1203
        %v1206 = vadd.f32 %v1204, 1.0
        %v1207 = vadd.f32 %v1205, 1.0
        %v1208 = vmul.f32 %v1200, %v1206
        %v1209 = vmul.f32 %v1201, %v1207
        %v1210 = vld [vmem:[%s12 + $0x1] sm:$0x7]
        %vm1211 = vcmask 261120
        %v1212 = vsel %vm1211, %v1208, 0.0
        %v1213 = vsel %vm1211, %v1209, 0.0
        %v1214 = vadd.f32 %v1212, %v1213
        %v1215 = vrot.slane %v1214, 4
        %v1216 = vadd.f32 %v1214, %v1215
        %v1217 = vrot.slane %v1216, 2
        %v1218 = vadd.f32 %v1216, %v1217
        %v1219 = vrot.slane %v1218, 1
        %v1220 = vadd.f32 %v1218, %v1219
        %v1221 = vrcp.pop 16.0
        %v1222 = vmul.f32 %v1220, %v1221
        %v1223 = vmul.f32 %v1222, %v1210
        %v1224 = vlaneseq
        %v1225 = vshrl.u32 %v1224, 7
        %v1226 = vsub.s32 2, %v1225
        %v1227 = vrot.slane %v1223, %v1226
        %v1228 = vsub.f32 %v1208, %v1227
        %v1229 = vsub.f32 %v1209, %v1227
        %v1230 = vmul.f32 %v1228, %v1228
        %v1231 = vmul.f32 %v1229, %v1229
        %v1232 = vsel %vm1211, %v1230, 0.0
        %v1233 = vsel %vm1211, %v1231, 0.0
        %v1234 = vadd.f32 %v1232, %v1233
        %v1235 = vrot.slane %v1234, 4
        %v1236 = vadd.f32 %v1234, %v1235
        %v1237 = vrot.slane %v1236, 2
        %v1238 = vadd.f32 %v1236, %v1237
        %v1239 = vrot.slane %v1238, 1
        %v1240 = vadd.f32 %v1238, %v1239
        %v1241 = vmul.f32 %v1240, %v1221
        %v1242 = vlaneseq
        %v1243 = vshrl.u32 %v1242, 7
        %v1244 = vsub.s32 0, %v1243
        %v1245 = vrot.slane %v1210, %v1244
        %v1246 = vmul.f32 %v1245, %v1228
        %v1247 = vmul.f32 %v1245, %v1229
        %v1248 = vadd.f32 %v1241, 1e-05
        %v1249 = vrsqrt.pop %v1248
        %v1250 = vmul.f32 %v1246, %v1249
        %v1251 = vmul.f32 %v1247, %v1249
        %v1252 = vlaneseq
        %v1253 = vshrl.u32 %v1252, 7
        %v1254 = vsub.s32 1, %v1253
        %v1255 = vrot.slane %v1210, %v1254
        %v1256 = vadd.f32 %v1250, %v1255
        %v1257 = vadd.f32 %v1251, %v1255
        %v1258 = vld [vmem:[%s7] sm:$0xff]
        %v1259 = vld [vmem:[%s7 + $0x8] sm:$0xff]
        %v1260 = vld [vmem:[%s7 + $0x10] sm:$0xff]
        %v1261 = vld [vmem:[%s7 + $0x18] sm:$0xff]
        %v1262 = vld [vmem:[%s12 + $0x4] sm:$0x1]
        %s1263 = scalar_lea.vmem %s7, 32
        %v1264 = vld [vmem:[%s1263] sm:$0xff]
        %v1265 = vld [vmem:[%s1263 + $0x8] sm:$0xff]
        %v1266 = vld [vmem:[%s1263 + $0x10] sm:$0xff]
        %v1267 = vld [vmem:[%s1263 + $0x18] sm:$0xff]
        %1268 = vmatprep.subr.mxu0 0.0
        %1269 = vmatpush1.msra.mxu0 %v1256
        %1270 = vmatprep.subr.mxu0 0.0
        %1271 = vmatpush1.msra.mxu0 %v1257
        %1272 = vmatprep.subr.mxu0 0.0
        %1273 = vmatpush1.msra.mxu0 0.0
        %1274 = vmatprep.subr.mxu0 0.0
        %1275 = vmatpush1.msra.mxu0 0.0
        %1276 = vmatprep.subr.mxu0 0.0
        %1277 = vmatpush1.msra.mxu0 0.0
        %1278 = vmatprep.subr.mxu0 0.0
        %1279 = vmatpush1.msra.mxu0 0.0
        %1280 = vmatprep.subr.mxu0 0.0
        %1281 = vmatpush1.msra.mxu0 0.0
        %1282 = vmatprep.subr.mxu0 0.0
        %1283 = vmatpush1.msra.mxu0 0.0
        %1284 = vmatprep.subr.mxu0 0.0
        %1285 = vmatpush1.msra.mxu0 0.0
        %1286 = vmatprep.subr.mxu0 0.0
        %1287 = vmatpush1.msra.mxu0 0.0
        %1288 = vmatprep.subr.mxu0 0.0
        %1289 = vmatpush1.msra.mxu0 0.0
        %1290 = vmatprep.subr.mxu0 0.0
        %1291 = vmatpush1.msra.mxu0 0.0
        %1292 = vmatprep.subr.mxu0 0.0
        %1293 = vmatpush1.msra.mxu0 0.0
        %1294 = vmatprep.subr.mxu0 0.0
        %1295 = vmatpush1.msra.mxu0 0.0
        %1296 = vmatprep.subr.mxu0 0.0
        %1297 = vmatpush1.msra.mxu0 0.0
        %1298 = vmatprep.subr.mxu0 0.0
        %1299 = vmatpush1.msra.mxu0 0.0
        %1300 = vmatprep.subr.mxu0 0.0
        %1301 = vmatpush1.msra.mxu0 0.0
        %1302 = vmatprep.subr.mxu0 0.0
        %1303 = vmatpush1.msra.mxu0 0.0
        %1304 = vmatprep.subr.mxu0 0.0
        %1305 = vmatpush1.msra.mxu0 0.0
        %1306 = vmatprep.subr.mxu0 0.0
        %1307 = vmatpush1.msra.mxu0 0.0
        %1308 = vmatprep.subr.mxu0 0.0
        %1309 = vmatpush1.msra.mxu0 0.0
        %1310 = vmatprep.subr.mxu0 0.0
        %1311 = vmatpush1.msra.mxu0 0.0
        %1312 = vmatprep.subr.mxu0 0.0
        %1313 = vmatpush1.msra.mxu0 0.0
        %1314 = vmatprep.subr.mxu0 0.0
        %1315 = vmatpush1.msra.mxu0 0.0
        %1316 = vmatprep.subr.mxu0 0.0
        %1317 = vmatpush1.msra.mxu0 0.0
        %1318 = vmatprep.subr.mxu0 0.0
        %1319 = vmatpush1.msra.mxu0 0.0
        %1320 = vmatprep.subr.mxu0 0.0
        %1321 = vmatpush1.msra.mxu0 0.0
        %1322 = vmatprep.subr.mxu0 0.0
        %1323 = vmatpush1.msra.mxu0 0.0
        %1324 = vmatprep.subr.mxu0 0.0
        %1325 = vmatpush1.msra.mxu0 0.0
        %1326 = vmatprep.subr.mxu0 0.0
        %1327 = vmatpush1.msra.mxu0 0.0
        %1328 = vmatprep.subr.mxu0 0.0
        %1329 = vmatpush1.msra.mxu0 0.0
        %1330 = vmatprep.subr.mxu0 0.0
        %1331 = vmatpush1.msra.mxu0 0.0
        %1332 = vmatprep.mubr.f32.mxu0 0.0
        %1333 = vmatmul.mubr.f32.gmra.mrb[0].mxu0 %v650
        %v1334 = vpop.f32.mrb[0].mxu0
        %v1335 = vadd.f32 0.0, %v1334
        %v1336 = vpop.f32.mrb[0].mxu0
        %1337 = vmatprep.mubr.f32.mxu0 0.0
        %1338 = vmatmul.mubr.f32.gmra.mrb[0].mxu0 %v653
        %v1339 = vpop.f32.mrb[0].mxu0
        %v1340 = vadd.f32 0.0, %v1339
        %v1341 = vpop.f32.mrb[0].mxu0
        %1342 = vdwg.mxu0
        %v1343 = vlaneseq
        %v1344 = vshrl.u32 %v1343, 7
        %v1345 = vsub.s32 0, %v1344
        %v1346 = vrot.slane %v1262, %v1345
        %v1348 = vsel %vm1211, %v1335, 0
        %v1351 = vsel %vm1211, %v1340, 0
        %1353 = vmatprep.subr.mxu0 0.0
        %1354 = vmatpush1.msra.mxu0 %v1258
        %1355 = vmatprep.subr.mxu0 0.0
        %1356 = vmatpush1.msra.mxu0 %v1259
        %1357 = vmatprep.subr.mxu0 0.0
        %1358 = vmatpush1.msra.mxu0 %v1260
        %1359 = vmatprep.subr.mxu0 0.0
        %1360 = vmatpush1.msra.mxu0 %v1261
        %1361 = vmatprep.subr.mxu0 0.0
        %1362 = vmatpush1.msra.mxu0 0.0
        %1363 = vmatprep.subr.mxu0 0.0
        %1364 = vmatpush1.msra.mxu0 0.0
        %1365 = vmatprep.subr.mxu0 0.0
        %1366 = vmatpush1.msra.mxu0 0.0
        %1367 = vmatprep.subr.mxu0 0.0
        %1368 = vmatpush1.msra.mxu0 0.0
        %1369 = vmatprep.subr.mxu0 0.0
        %1370 = vmatpush1.msra.mxu0 0.0
        %1371 = vmatprep.subr.mxu0 0.0
        %1372 = vmatpush1.msra.mxu0 0.0
        %1373 = vmatprep.subr.mxu0 0.0
        %1374 = vmatpush1.msra.mxu0 0.0
        %1375 = vmatprep.subr.mxu0 0.0
        %1376 = vmatpush1.msra.mxu0 0.0
        %1377 = vmatprep.subr.mxu0 0.0
        %1378 = vmatpush1.msra.mxu0 0.0
        %1379 = vmatprep.subr.mxu0 0.0
        %1380 = vmatpush1.msra.mxu0 0.0
        %1381 = vmatprep.subr.mxu0 0.0
        %1382 = vmatpush1.msra.mxu0 0.0
        %1383 = vmatprep.subr.mxu0 0.0
        %1384 = vmatpush1.msra.mxu0 0.0
        %1385 = vmatprep.subr.mxu0 0.0
        %1386 = vmatpush1.msra.mxu0 0.0
        %1387 = vmatprep.subr.mxu0 0.0
        %1388 = vmatpush1.msra.mxu0 0.0
        %1389 = vmatprep.subr.mxu0 0.0
        %1390 = vmatpush1.msra.mxu0 0.0
        %1391 = vmatprep.subr.mxu0 0.0
        %1392 = vmatpush1.msra.mxu0 0.0
        %1393 = vmatprep.subr.mxu0 0.0
        %1394 = vmatpush1.msra.mxu0 0.0
        %1395 = vmatprep.subr.mxu0 0.0
        %1396 = vmatpush1.msra.mxu0 0.0
        %1397 = vmatprep.subr.mxu0 0.0
        %1398 = vmatpush1.msra.mxu0 0.0
        %1399 = vmatprep.subr.mxu0 0.0
        %1400 = vmatpush1.msra.mxu0 0.0
        %1401 = vmatprep.subr.mxu0 0.0
        %1402 = vmatpush1.msra.mxu0 0.0
        %1403 = vmatprep.subr.mxu0 0.0
        %1404 = vmatpush1.msra.mxu0 0.0
        %1405 = vmatprep.subr.mxu0 0.0
        %1406 = vmatpush1.msra.mxu0 0.0
        %1407 = vmatprep.subr.mxu0 0.0
        %1408 = vmatpush1.msra.mxu0 0.0
        %1409 = vmatprep.subr.mxu0 0.0
        %1410 = vmatpush1.msra.mxu0 0.0
        %1411 = vmatprep.subr.mxu0 0.0
        %1412 = vmatpush1.msra.mxu0 0.0
        %1413 = vmatprep.subr.mxu0 0.0
        %1414 = vmatpush1.msra.mxu0 0.0
        %1415 = vmatprep.subr.mxu0 0.0
        %1416 = vmatpush1.msra.mxu0 0.0
        %1417 = vmatprep.mubr.f32.mxu0 0.0
        %1418 = vmatmul.mubr.f32.gmra.mrb[0].mxu0 %v1348
        %v1419 = vpop.f32.mrb[0].mxu0
        %v1420 = vadd.f32 %v1346, %v1419
        %v1421 = vpop.f32.mrb[0].mxu0
        %1422 = vmatprep.mubr.f32.mxu0 0.0
        %1423 = vmatmul.mubr.f32.gmra.mrb[0].mxu0 %v1351
        %v1424 = vpop.f32.mrb[0].mxu0
        %v1425 = vadd.f32 %v1346, %v1424
        %v1426 = vpop.f32.mrb[0].mxu0
        %1427 = vdwg.mxu0
        %v1429 = vsel %vm1211, %v1256, 0
        %v1432 = vsel %vm1211, %v1257, 0
        %1434 = vmatprep.subr.mxu0 0.0
        %1435 = vmatpush1.msra.mxu0 %v1264
        %1436 = vmatprep.subr.mxu0 0.0
        %1437 = vmatpush1.msra.mxu0 %v1265
        %1438 = vmatprep.subr.mxu0 0.0
        %1439 = vmatpush1.msra.mxu0 %v1266
        %1440 = vmatprep.subr.mxu0 0.0
        %1441 = vmatpush1.msra.mxu0 %v1267
        %1442 = vmatprep.subr.mxu0 0.0
        %1443 = vmatpush1.msra.mxu0 0.0
        %1444 = vmatprep.subr.mxu0 0.0
        %1445 = vmatpush1.msra.mxu0 0.0
        %1446 = vmatprep.subr.mxu0 0.0
        %1447 = vmatpush1.msra.mxu0 0.0
        %1448 = vmatprep.subr.mxu0 0.0
        %1449 = vmatpush1.msra.mxu0 0.0
        %1450 = vmatprep.subr.mxu0 0.0
        %1451 = vmatpush1.msra.mxu0 0.0
        %1452 = vmatprep.subr.mxu0 0.0
        %1453 = vmatpush1.msra.mxu0 0.0
        %1454 = vmatprep.subr.mxu0 0.0
        %1455 = vmatpush1.msra.mxu0 0.0
        %1456 = vmatprep.subr.mxu0 0.0
        %1457 = vmatpush1.msra.mxu0 0.0
        %1458 = vmatprep.subr.mxu0 0.0
        %1459 = vmatpush1.msra.mxu0 0.0
        %1460 = vmatprep.subr.mxu0 0.0
        %1461 = vmatpush1.msra.mxu0 0.0
        %1462 = vmatprep.subr.mxu0 0.0
        %1463 = vmatpush1.msra.mxu0 0.0
        %1464 = vmatprep.subr.mxu0 0.0
        %1465 = vmatpush1.msra.mxu0 0.0
        %1466 = vmatprep.subr.mxu0 0.0
        %1467 = vmatpush1.msra.mxu0 0.0
        %1468 = vmatprep.subr.mxu0 0.0
        %1469 = vmatpush1.msra.mxu0 0.0
        %1470 = vmatprep.subr.mxu0 0.0
        %1471 = vmatpush1.msra.mxu0 0.0
        %1472 = vmatprep.subr.mxu0 0.0
        %1473 = vmatpush1.msra.mxu0 0.0
        %1474 = vmatprep.subr.mxu0 0.0
        %1475 = vmatpush1.msra.mxu0 0.0
        %1476 = vmatprep.subr.mxu0 0.0
        %1477 = vmatpush1.msra.mxu0 0.0
        %1478 = vmatprep.subr.mxu0 0.0
        %1479 = vmatpush1.msra.mxu0 0.0
        %1480 = vmatprep.subr.mxu0 0.0
        %1481 = vmatpush1.msra.mxu0 0.0
        %1482 = vmatprep.subr.mxu0 0.0
        %1483 = vmatpush1.msra.mxu0 0.0
        %1484 = vmatprep.subr.mxu0 0.0
        %1485 = vmatpush1.msra.mxu0 0.0
        %1486 = vmatprep.subr.mxu0 0.0
        %1487 = vmatpush1.msra.mxu0 0.0
        %1488 = vmatprep.subr.mxu0 0.0
        %1489 = vmatpush1.msra.mxu0 0.0
        %1490 = vmatprep.subr.mxu0 0.0
        %1491 = vmatpush1.msra.mxu0 0.0
        %1492 = vmatprep.subr.mxu0 0.0
        %1493 = vmatpush1.msra.mxu0 0.0
        %1494 = vmatprep.subr.mxu0 0.0
        %1495 = vmatpush1.msra.mxu0 0.0
        %1496 = vmatprep.subr.mxu0 0.0
        %1497 = vmatpush1.msra.mxu0 0.0
        %1498 = vmatprep.mubr.f32.mxu0 0.0
        %1499 = vmatmul.mubr.f32.gmra.mrb[0].mxu0 %v1429
        %v1500 = vpop.f32.mrb[0].mxu0
        %v1501 = vadd.f32 0.0, %v1500
        %v1502 = vpop.f32.mrb[0].mxu0
        %1503 = vmatprep.mubr.f32.mxu0 0.0
        %1504 = vmatmul.mubr.f32.gmra.mrb[0].mxu0 %v1432
        %v1505 = vpop.f32.mrb[0].mxu0
        %v1506 = vadd.f32 0.0, %v1505
        %v1507 = vpop.f32.mrb[0].mxu0
        %1508 = vdwg.mxu0
        %v1509 = vadd.f32 %v1420, %v1501
        %v1510 = vadd.f32 %v1425, %v1506
        %v1511 = vmul.f32 %v1509, 0.5
        %v1512 = vmul.f32 %v1510, 0.5
        %v1513 = vmul.f32 %v1509, 0.70710677
        %v1514 = vmul.f32 %v1510, 0.70710677
        %v1515 = verf.f32.pop %v1513
        %v1516 = verf.f32.pop %v1514
        %v1517 = vadd.f32 %v1515, 1.0
        %v1518 = vadd.f32 %v1516, 1.0
        %v1519 = vmul.f32 %v1511, %v1517
        %v1520 = vmul.f32 %v1512, %v1518
        %v1521 = vld [vmem:[%s12 + $0x5] sm:$0x7]
        %v1522 = vsel %vm1211, %v1519, 0.0
        %v1523 = vsel %vm1211, %v1520, 0.0
        %v1524 = vadd.f32 %v1522, %v1523
        %v1525 = vrot.slane %v1524, 4
        %v1526 = vadd.f32 %v1524, %v1525
        %v1527 = vrot.slane %v1526, 2
        %v1528 = vadd.f32 %v1526, %v1527
        %v1529 = vrot.slane %v1528, 1
        %v1530 = vadd.f32 %v1528, %v1529
        %v1531 = vmul.f32 %v1530, %v1221
        %v1532 = vmul.f32 %v1531, %v1521
        %v1533 = vlaneseq
        %v1534 = vshrl.u32 %v1533, 7
        %v1535 = vsub.s32 2, %v1534
        %v1536 = vrot.slane %v1532, %v1535
        %v1537 = vsub.f32 %v1519, %v1536
        %v1538 = vsub.f32 %v1520, %v1536
        %v1539 = vmul.f32 %v1537, %v1537
        %v1540 = vmul.f32 %v1538, %v1538
        %v1541 = vsel %vm1211, %v1539, 0.0
        %v1542 = vsel %vm1211, %v1540, 0.0
        %v1543 = vadd.f32 %v1541, %v1542
        %v1544 = vrot.slane %v1543, 4
        %v1545 = vadd.f32 %v1543, %v1544
        %v1546 = vrot.slane %v1545, 2
        %v1547 = vadd.f32 %v1545, %v1546
        %v1548 = vrot.slane %v1547, 1
        %v1549 = vadd.f32 %v1547, %v1548
        %v1550 = vmul.f32 %v1549, %v1221
        %v1551 = vlaneseq
        %v1552 = vshrl.u32 %v1551, 7
        %v1553 = vsub.s32 0, %v1552
        %v1554 = vrot.slane %v1521, %v1553
        %v1555 = vmul.f32 %v1554, %v1537
        %v1556 = vmul.f32 %v1554, %v1538
        %v1557 = vadd.f32 %v1550, 1e-05
        %v1558 = vrsqrt.pop %v1557
        %v1559 = vmul.f32 %v1555, %v1558
        %v1560 = vmul.f32 %v1556, %v1558
        %v1561 = vlaneseq
        %v1562 = vshrl.u32 %v1561, 7
        %v1563 = vsub.s32 1, %v1562
        %v1564 = vrot.slane %v1521, %v1563
        %v1565 = vadd.f32 %v1559, %v1564
        %v1566 = vadd.f32 %v1560, %v1564
        %v1567 = vadd.f32 %v1565, %v1256
        %v1568 = vadd.f32 %v1566, %v1257
        %s1569 = scalar_lea.vmem %s7, 64
        %v1570 = vld [vmem:[%s1569] sm:$0xff]
        %v1571 = vld [vmem:[%s1569 + $0x8] sm:$0xff]
        %v1572 = vld [vmem:[%s1569 + $0x10] sm:$0xff]
        %v1573 = vld [vmem:[%s1569 + $0x18] sm:$0xff]
        %v1574 = vld [vmem:[%s12 + $0x8] sm:$0x1]
        %s1575 = scalar_lea.vmem %s7, 96
        %v1576 = vld [vmem:[%s1575] sm:$0xff]
        %v1577 = vld [vmem:[%s1575 + $0x8] sm:$0xff]
        %v1578 = vld [vmem:[%s1575 + $0x10] sm:$0xff]
        %v1579 = vld [vmem:[%s1575 + $0x18] sm:$0xff]
        %1580 = vmatprep.subr.mxu0 0.0
        %1581 = vmatpush1.msra.mxu0 %v1567
        %1582 = vmatprep.subr.mxu0 0.0
        %1583 = vmatpush1.msra.mxu0 %v1568
        %1584 = vmatprep.subr.mxu0 0.0
        %1585 = vmatpush1.msra.mxu0 0.0
        %1586 = vmatprep.subr.mxu0 0.0
        %1587 = vmatpush1.msra.mxu0 0.0
        %1588 = vmatprep.subr.mxu0 0.0
        %1589 = vmatpush1.msra.mxu0 0.0
        %1590 = vmatprep.subr.mxu0 0.0
        %1591 = vmatpush1.msra.mxu0 0.0
        %1592 = vmatprep.subr.mxu0 0.0
        %1593 = vmatpush1.msra.mxu0 0.0
        %1594 = vmatprep.subr.mxu0 0.0
        %1595 = vmatpush1.msra.mxu0 0.0
        %1596 = vmatprep.subr.mxu0 0.0
        %1597 = vmatpush1.msra.mxu0 0.0
        %1598 = vmatprep.subr.mxu0 0.0
        %1599 = vmatpush1.msra.mxu0 0.0
        %1600 = vmatprep.subr.mxu0 0.0
        %1601 = vmatpush1.msra.mxu0 0.0
        %1602 = vmatprep.subr.mxu0 0.0
        %1603 = vmatpush1.msra.mxu0 0.0
        %1604 = vmatprep.subr.mxu0 0.0
        %1605 = vmatpush1.msra.mxu0 0.0
        %1606 = vmatprep.subr.mxu0 0.0
        %1607 = vmatpush1.msra.mxu0 0.0
        %1608 = vmatprep.subr.mxu0 0.0
        %1609 = vmatpush1.msra.mxu0 0.0
        %1610 = vmatprep.subr.mxu0 0.0
        %1611 = vmatpush1.msra.mxu0 0.0
        %1612 = vmatprep.subr.mxu0 0.0
        %1613 = vmatpush1.msra.mxu0 0.0
        %1614 = vmatprep.subr.mxu0 0.0
        %1615 = vmatpush1.msra.mxu0 0.0
        %1616 = vmatprep.subr.mxu0 0.0
        %1617 = vmatpush1.msra.mxu0 0.0
        %1618 = vmatprep.subr.mxu0 0.0
        %1619 = vmatpush1.msra.mxu0 0.0
        %1620 = vmatprep.subr.mxu0 0.0
        %1621 = vmatpush1.msra.mxu0 0.0
        %1622 = vmatprep.subr.mxu0 0.0
        %1623 = vmatpush1.msra.mxu0 0.0
        %1624 = vmatprep.subr.mxu0 0.0
        %1625 = vmatpush1.msra.mxu0 0.0
        %1626 = vmatprep.subr.mxu0 0.0
        %1627 = vmatpush1.msra.mxu0 0.0
        %1628 = vmatprep.subr.mxu0 0.0
        %1629 = vmatpush1.msra.mxu0 0.0
        %1630 = vmatprep.subr.mxu0 0.0
        %1631 = vmatpush1.msra.mxu0 0.0
        %1632 = vmatprep.subr.mxu0 0.0
        %1633 = vmatpush1.msra.mxu0 0.0
        %1634 = vmatprep.subr.mxu0 0.0
        %1635 = vmatpush1.msra.mxu0 0.0
        %1636 = vmatprep.subr.mxu0 0.0
        %1637 = vmatpush1.msra.mxu0 0.0
        %1638 = vmatprep.subr.mxu0 0.0
        %1639 = vmatpush1.msra.mxu0 0.0
        %1640 = vmatprep.subr.mxu0 0.0
        %1641 = vmatpush1.msra.mxu0 0.0
        %1642 = vmatprep.subr.mxu0 0.0
        %1643 = vmatpush1.msra.mxu0 0.0
        %1644 = vmatprep.mubr.f32.mxu0 0.0
        %1645 = vmatmul.mubr.f32.gmra.mrb[0].mxu0 %v650
        %v1646 = vpop.f32.mrb[0].mxu0
        %v1647 = vadd.f32 0.0, %v1646
        %v1648 = vpop.f32.mrb[0].mxu0
        %1649 = vmatprep.mubr.f32.mxu0 0.0
        %1650 = vmatmul.mubr.f32.gmra.mrb[0].mxu0 %v653
        %v1651 = vpop.f32.mrb[0].mxu0
        %v1652 = vadd.f32 0.0, %v1651
        %v1653 = vpop.f32.mrb[0].mxu0
        %1654 = vdwg.mxu0
        %v1655 = vlaneseq
        %v1656 = vshrl.u32 %v1655, 7
        %v1657 = vsub.s32 0, %v1656
        %v1658 = vrot.slane %v1574, %v1657
        %v1660 = vsel %vm1211, %v1647, 0
        %v1663 = vsel %vm1211, %v1652, 0
        %1665 = vmatprep.subr.mxu0 0.0
        %1666 = vmatpush1.msra.mxu0 %v1570
        %1667 = vmatprep.subr.mxu0 0.0
        %1668 = vmatpush1.msra.mxu0 %v1571
        %1669 = vmatprep.subr.mxu0 0.0
        %1670 = vmatpush1.msra.mxu0 %v1572
        %1671 = vmatprep.subr.mxu0 0.0
        %1672 = vmatpush1.msra.mxu0 %v1573
        %1673 = vmatprep.subr.mxu0 0.0
        %1674 = vmatpush1.msra.mxu0 0.0
        %1675 = vmatprep.subr.mxu0 0.0
        %1676 = vmatpush1.msra.mxu0 0.0
        %1677 = vmatprep.subr.mxu0 0.0
        %1678 = vmatpush1.msra.mxu0 0.0
        %1679 = vmatprep.subr.mxu0 0.0
        %1680 = vmatpush1.msra.mxu0 0.0
        %1681 = vmatprep.subr.mxu0 0.0
        %1682 = vmatpush1.msra.mxu0 0.0
        %1683 = vmatprep.subr.mxu0 0.0
        %1684 = vmatpush1.msra.mxu0 0.0
        %1685 = vmatprep.subr.mxu0 0.0
        %1686 = vmatpush1.msra.mxu0 0.0
        %1687 = vmatprep.subr.mxu0 0.0
        %1688 = vmatpush1.msra.mxu0 0.0
        %1689 = vmatprep.subr.mxu0 0.0
        %1690 = vmatpush1.msra.mxu0 0.0
        %1691 = vmatprep.subr.mxu0 0.0
        %1692 = vmatpush1.msra.mxu0 0.0
        %1693 = vmatprep.subr.mxu0 0.0
        %1694 = vmatpush1.msra.mxu0 0.0
        %1695 = vmatprep.subr.mxu0 0.0
        %1696 = vmatpush1.msra.mxu0 0.0
        %1697 = vmatprep.subr.mxu0 0.0
        %1698 = vmatpush1.msra.mxu0 0.0
        %1699 = vmatprep.subr.mxu0 0.0
        %1700 = vmatpush1.msra.mxu0 0.0
        %1701 = vmatprep.subr.mxu0 0.0
        %1702 = vmatpush1.msra.mxu0 0.0
        %1703 = vmatprep.subr.mxu0 0.0
        %1704 = vmatpush1.msra.mxu0 0.0
        %1705 = vmatprep.subr.mxu0 0.0
        %1706 = vmatpush1.msra.mxu0 0.0
        %1707 = vmatprep.subr.mxu0 0.0
        %1708 = vmatpush1.msra.mxu0 0.0
        %1709 = vmatprep.subr.mxu0 0.0
        %1710 = vmatpush1.msra.mxu0 0.0
        %1711 = vmatprep.subr.mxu0 0.0
        %1712 = vmatpush1.msra.mxu0 0.0
        %1713 = vmatprep.subr.mxu0 0.0
        %1714 = vmatpush1.msra.mxu0 0.0
        %1715 = vmatprep.subr.mxu0 0.0
        %1716 = vmatpush1.msra.mxu0 0.0
        %1717 = vmatprep.subr.mxu0 0.0
        %1718 = vmatpush1.msra.mxu0 0.0
        %1719 = vmatprep.subr.mxu0 0.0
        %1720 = vmatpush1.msra.mxu0 0.0
        %1721 = vmatprep.subr.mxu0 0.0
        %1722 = vmatpush1.msra.mxu0 0.0
        %1723 = vmatprep.subr.mxu0 0.0
        %1724 = vmatpush1.msra.mxu0 0.0
        %1725 = vmatprep.subr.mxu0 0.0
        %1726 = vmatpush1.msra.mxu0 0.0
        %1727 = vmatprep.subr.mxu0 0.0
        %1728 = vmatpush1.msra.mxu0 0.0
        %1729 = vmatprep.mubr.f32.mxu0 0.0
        %1730 = vmatmul.mubr.f32.gmra.mrb[0].mxu0 %v1660
        %v1731 = vpop.f32.mrb[0].mxu0
        %v1732 = vadd.f32 %v1658, %v1731
        %v1733 = vpop.f32.mrb[0].mxu0
        %1734 = vmatprep.mubr.f32.mxu0 0.0
        %1735 = vmatmul.mubr.f32.gmra.mrb[0].mxu0 %v1663
        %v1736 = vpop.f32.mrb[0].mxu0
        %v1737 = vadd.f32 %v1658, %v1736
        %v1738 = vpop.f32.mrb[0].mxu0
        %1739 = vdwg.mxu0
        %v1741 = vsel %vm1211, %v1567, 0
        %v1744 = vsel %vm1211, %v1568, 0
        %1746 = vmatprep.subr.mxu0 0.0
        %1747 = vmatpush1.msra.mxu0 %v1576
        %1748 = vmatprep.subr.mxu0 0.0
        %1749 = vmatpush1.msra.mxu0 %v1577
        %1750 = vmatprep.subr.mxu0 0.0
        %1751 = vmatpush1.msra.mxu0 %v1578
        %1752 = vmatprep.subr.mxu0 0.0
        %1753 = vmatpush1.msra.mxu0 %v1579
        %1754 = vmatprep.subr.mxu0 0.0
        %1755 = vmatpush1.msra.mxu0 0.0
        %1756 = vmatprep.subr.mxu0 0.0
        %1757 = vmatpush1.msra.mxu0 0.0
        %1758 = vmatprep.subr.mxu0 0.0
        %1759 = vmatpush1.msra.mxu0 0.0
        %1760 = vmatprep.subr.mxu0 0.0
        %1761 = vmatpush1.msra.mxu0 0.0
        %1762 = vmatprep.subr.mxu0 0.0
        %1763 = vmatpush1.msra.mxu0 0.0
        %1764 = vmatprep.subr.mxu0 0.0
        %1765 = vmatpush1.msra.mxu0 0.0
        %1766 = vmatprep.subr.mxu0 0.0
        %1767 = vmatpush1.msra.mxu0 0.0
        %1768 = vmatprep.subr.mxu0 0.0
        %1769 = vmatpush1.msra.mxu0 0.0
        %1770 = vmatprep.subr.mxu0 0.0
        %1771 = vmatpush1.msra.mxu0 0.0
        %1772 = vmatprep.subr.mxu0 0.0
        %1773 = vmatpush1.msra.mxu0 0.0
        %1774 = vmatprep.subr.mxu0 0.0
        %1775 = vmatpush1.msra.mxu0 0.0
        %1776 = vmatprep.subr.mxu0 0.0
        %1777 = vmatpush1.msra.mxu0 0.0
        %1778 = vmatprep.subr.mxu0 0.0
        %1779 = vmatpush1.msra.mxu0 0.0
        %1780 = vmatprep.subr.mxu0 0.0
        %1781 = vmatpush1.msra.mxu0 0.0
        %1782 = vmatprep.subr.mxu0 0.0
        %1783 = vmatpush1.msra.mxu0 0.0
        %1784 = vmatprep.subr.mxu0 0.0
        %1785 = vmatpush1.msra.mxu0 0.0
        %1786 = vmatprep.subr.mxu0 0.0
        %1787 = vmatpush1.msra.mxu0 0.0
        %1788 = vmatprep.subr.mxu0 0.0
        %1789 = vmatpush1.msra.mxu0 0.0
        %1790 = vmatprep.subr.mxu0 0.0
        %1791 = vmatpush1.msra.mxu0 0.0
        %1792 = vmatprep.subr.mxu0 0.0
        %1793 = vmatpush1.msra.mxu0 0.0
        %1794 = vmatprep.subr.mxu0 0.0
        %1795 = vmatpush1.msra.mxu0 0.0
        %1796 = vmatprep.subr.mxu0 0.0
        %1797 = vmatpush1.msra.mxu0 0.0
        %1798 = vmatprep.subr.mxu0 0.0
        %1799 = vmatpush1.msra.mxu0 0.0
        %1800 = vmatprep.subr.mxu0 0.0
        %1801 = vmatpush1.msra.mxu0 0.0
        %1802 = vmatprep.subr.mxu0 0.0
        %1803 = vmatpush1.msra.mxu0 0.0
        %1804 = vmatprep.subr.mxu0 0.0
        %1805 = vmatpush1.msra.mxu0 0.0
        %1806 = vmatprep.subr.mxu0 0.0
        %1807 = vmatpush1.msra.mxu0 0.0
        %1808 = vmatprep.subr.mxu0 0.0
        %1809 = vmatpush1.msra.mxu0 0.0
        %1810 = vmatprep.mubr.f32.mxu0 0.0
        %1811 = vmatmul.mubr.f32.gmra.mrb[0].mxu0 %v1741
        %v1812 = vpop.f32.mrb[0].mxu0
        %v1813 = vadd.f32 0.0, %v1812
        %v1814 = vpop.f32.mrb[0].mxu0
        %1815 = vmatprep.mubr.f32.mxu0 0.0
        %1816 = vmatmul.mubr.f32.gmra.mrb[0].mxu0 %v1744
        %v1817 = vpop.f32.mrb[0].mxu0
        %v1818 = vadd.f32 0.0, %v1817
        %v1819 = vpop.f32.mrb[0].mxu0
        %1820 = vdwg.mxu0
        %v1821 = vadd.f32 %v1732, %v1813
        %v1822 = vadd.f32 %v1737, %v1818
        %v1823 = vmul.f32 %v1821, 0.5
        %v1824 = vmul.f32 %v1822, 0.5
        %v1825 = vmul.f32 %v1821, 0.70710677
        %v1826 = vmul.f32 %v1822, 0.70710677
        %v1827 = verf.f32.pop %v1825
        %v1828 = verf.f32.pop %v1826
        %v1829 = vadd.f32 %v1827, 1.0
        %v1830 = vadd.f32 %v1828, 1.0
        %v1831 = vmul.f32 %v1823, %v1829
        %v1832 = vmul.f32 %v1824, %v1830
        %v1833 = vld [vmem:[%s12 + $0x9] sm:$0x7]
        %v1834 = vsel %vm1211, %v1831, 0.0
        %v1835 = vsel %vm1211, %v1832, 0.0
        %v1836 = vadd.f32 %v1834, %v1835
        %v1837 = vrot.slane %v1836, 4
        %v1838 = vadd.f32 %v1836, %v1837
        %v1839 = vrot.slane %v1838, 2
        %v1840 = vadd.f32 %v1838, %v1839
        %v1841 = vrot.slane %v1840, 1
        %v1842 = vadd.f32 %v1840, %v1841
        %v1843 = vmul.f32 %v1842, %v1221
        %v1844 = vmul.f32 %v1843, %v1833
        %v1845 = vlaneseq
        %v1846 = vshrl.u32 %v1845, 7
        %v1847 = vsub.s32 2, %v1846
        %v1848 = vrot.slane %v1844, %v1847
        %v1849 = vsub.f32 %v1831, %v1848
        %v1850 = vsub.f32 %v1832, %v1848
        %v1851 = vmul.f32 %v1849, %v1849
        %v1852 = vmul.f32 %v1850, %v1850
        %v1853 = vsel %vm1211, %v1851, 0.0
        %v1854 = vsel %vm1211, %v1852, 0.0
        %v1855 = vadd.f32 %v1853, %v1854
        %v1856 = vrot.slane %v1855, 4
        %v1857 = vadd.f32 %v1855, %v1856
        %v1858 = vrot.slane %v1857, 2
        %v1859 = vadd.f32 %v1857, %v1858
        %v1860 = vrot.slane %v1859, 1
        %v1861 = vadd.f32 %v1859, %v1860
        %v1862 = vmul.f32 %v1861, %v1221
        %v1863 = vlaneseq
        %v1864 = vshrl.u32 %v1863, 7
        %v1865 = vsub.s32 0, %v1864
        %v1866 = vrot.slane %v1833, %v1865
        %v1867 = vmul.f32 %v1866, %v1849
        %v1868 = vmul.f32 %v1866, %v1850
        %v1869 = vadd.f32 %v1862, 1e-05
        %v1870 = vrsqrt.pop %v1869
        %v1871 = vmul.f32 %v1867, %v1870
        %v1872 = vmul.f32 %v1868, %v1870
        %v1873 = vlaneseq
        %v1874 = vshrl.u32 %v1873, 7
        %v1875 = vsub.s32 1, %v1874
        %v1876 = vrot.slane %v1833, %v1875
        %v1877 = vadd.f32 %v1871, %v1876
        %v1878 = vadd.f32 %v1872, %v1876
        %v1879 = vadd.f32 %v1877, %v1567
        %v1880 = vadd.f32 %v1878, %v1568
        %s1881 = scalar_lea.vmem %s7, 128
        %v1882 = vld [vmem:[%s1881] sm:$0xff]
        %v1883 = vld [vmem:[%s1881 + $0x8] sm:$0xff]
        %v1884 = vld [vmem:[%s1881 + $0x10] sm:$0xff]
        %v1885 = vld [vmem:[%s1881 + $0x18] sm:$0xff]
        %s1886 = scalar_lea.vmem %s7, 160
        %v1887 = vld [vmem:[%s1886] sm:$0xff]
        %v1888 = vld [vmem:[%s1886 + $0x8] sm:$0xff]
        %v1889 = vld [vmem:[%s1886 + $0x10] sm:$0xff]
        %v1890 = vld [vmem:[%s1886 + $0x18] sm:$0xff]
        %1891 = vmatprep.subr.mxu0 0.0
        %1892 = vmatpush1.msra.mxu0 %v1887
        %1893 = vmatprep.subr.mxu0 0.0
        %1894 = vmatpush1.msra.mxu0 %v1888
        %1895 = vmatprep.subr.mxu0 0.0
        %1896 = vmatpush1.msra.mxu0 %v1889
        %1897 = vmatprep.subr.mxu0 0.0
        %1898 = vmatpush1.msra.mxu0 %v1890
        %1899 = vmatprep.subr.mxu0 0.0
        %1900 = vmatpush1.msra.mxu0 0.0
        %1901 = vmatprep.subr.mxu0 0.0
        %1902 = vmatpush1.msra.mxu0 0.0
        %1903 = vmatprep.subr.mxu0 0.0
        %1904 = vmatpush1.msra.mxu0 0.0
        %1905 = vmatprep.subr.mxu0 0.0
        %1906 = vmatpush1.msra.mxu0 0.0
        %1907 = vmatprep.subr.mxu0 0.0
        %1908 = vmatpush1.msra.mxu0 0.0
        %1909 = vmatprep.subr.mxu0 0.0
        %1910 = vmatpush1.msra.mxu0 0.0
        %1911 = vmatprep.subr.mxu0 0.0
        %1912 = vmatpush1.msra.mxu0 0.0
        %1913 = vmatprep.subr.mxu0 0.0
        %1914 = vmatpush1.msra.mxu0 0.0
        %1915 = vmatprep.subr.mxu0 0.0
        %1916 = vmatpush1.msra.mxu0 0.0
        %1917 = vmatprep.subr.mxu0 0.0
        %1918 = vmatpush1.msra.mxu0 0.0
        %1919 = vmatprep.subr.mxu0 0.0
        %1920 = vmatpush1.msra.mxu0 0.0
        %1921 = vmatprep.subr.mxu0 0.0
        %1922 = vmatpush1.msra.mxu0 0.0
        %1923 = vmatprep.subr.mxu0 0.0
        %1924 = vmatpush1.msra.mxu0 0.0
        %1925 = vmatprep.subr.mxu0 0.0
        %1926 = vmatpush1.msra.mxu0 0.0
        %1927 = vmatprep.subr.mxu0 0.0
        %1928 = vmatpush1.msra.mxu0 0.0
        %1929 = vmatprep.subr.mxu0 0.0
        %1930 = vmatpush1.msra.mxu0 0.0
        %1931 = vmatprep.subr.mxu0 0.0
        %1932 = vmatpush1.msra.mxu0 0.0
        %1933 = vmatprep.subr.mxu0 0.0
        %1934 = vmatpush1.msra.mxu0 0.0
        %1935 = vmatprep.subr.mxu0 0.0
        %1936 = vmatpush1.msra.mxu0 0.0
        %1937 = vmatprep.subr.mxu0 0.0
        %1938 = vmatpush1.msra.mxu0 0.0
        %1939 = vmatprep.subr.mxu0 0.0
        %1940 = vmatpush1.msra.mxu0 0.0
        %1941 = vmatprep.subr.mxu0 0.0
        %1942 = vmatpush1.msra.mxu0 0.0
        %1943 = vmatprep.subr.mxu0 0.0
        %1944 = vmatpush1.msra.mxu0 0.0
        %1945 = vmatprep.subr.mxu0 0.0
        %1946 = vmatpush1.msra.mxu0 0.0
        %1947 = vmatprep.subr.mxu0 0.0
        %1948 = vmatpush1.msra.mxu0 0.0
        %1949 = vmatprep.subr.mxu0 0.0
        %1950 = vmatpush1.msra.mxu0 0.0
        %1951 = vmatprep.subr.mxu0 0.0
        %1952 = vmatpush1.msra.mxu0 0.0
        %1953 = vmatprep.subr.mxu0 0.0
        %1954 = vmatpush1.msra.mxu0 0.0
        %1955 = vmatprep.mubr.f32.mxu0 0.0
        %1956 = vmatmul.mubr.f32.gmra.mrb[0].mxu0 %v1741
        %v1957 = vpop.f32.mrb[0].mxu0
        %v1958 = vadd.f32 0.0, %v1957
        %v1959 = vpop.f32.mrb[0].mxu0
        %1960 = vmatprep.mubr.f32.mxu0 0.0
        %1961 = vmatmul.mubr.f32.gmra.mrb[0].mxu0 %v1744
        %v1962 = vpop.f32.mrb[0].mxu0
        %v1963 = vadd.f32 0.0, %v1962
        %v1964 = vpop.f32.mrb[0].mxu0
        %1965 = vdwg.mxu0
        %1966 = vmatprep.subr.mxu0 0.0
        %1967 = vmatpush1.msra.mxu0 %v1882
        %1968 = vmatprep.subr.mxu0 0.0
        %1969 = vmatpush1.msra.mxu0 %v1883
        %1970 = vmatprep.subr.mxu0 0.0
        %1971 = vmatpush1.msra.mxu0 %v1884
        %1972 = vmatprep.subr.mxu0 0.0
        %1973 = vmatpush1.msra.mxu0 %v1885
        %1974 = vmatprep.subr.mxu0 0.0
        %1975 = vmatpush1.msra.mxu0 0.0
        %1976 = vmatprep.subr.mxu0 0.0
        %1977 = vmatpush1.msra.mxu0 0.0
        %1978 = vmatprep.subr.mxu0 0.0
        %1979 = vmatpush1.msra.mxu0 0.0
        %1980 = vmatprep.subr.mxu0 0.0
        %1981 = vmatpush1.msra.mxu0 0.0
        %1982 = vmatprep.subr.mxu0 0.0
        %1983 = vmatpush1.msra.mxu0 0.0
        %1984 = vmatprep.subr.mxu0 0.0
        %1985 = vmatpush1.msra.mxu0 0.0
        %1986 = vmatprep.subr.mxu0 0.0
        %1987 = vmatpush1.msra.mxu0 0.0
        %1988 = vmatprep.subr.mxu0 0.0
        %1989 = vmatpush1.msra.mxu0 0.0
        %1990 = vmatprep.subr.mxu0 0.0
        %1991 = vmatpush1.msra.mxu0 0.0
        %1992 = vmatprep.subr.mxu0 0.0
        %1993 = vmatpush1.msra.mxu0 0.0
        %1994 = vmatprep.subr.mxu0 0.0
        %1995 = vmatpush1.msra.mxu0 0.0
        %1996 = vmatprep.subr.mxu0 0.0
        %1997 = vmatpush1.msra.mxu0 0.0
        %1998 = vmatprep.subr.mxu0 0.0
        %1999 = vmatpush1.msra.mxu0 0.0
        %2000 = vmatprep.subr.mxu0 0.0
        %2001 = vmatpush1.msra.mxu0 0.0
        %2002 = vmatprep.subr.mxu0 0.0
        %2003 = vmatpush1.msra.mxu0 0.0
        %2004 = vmatprep.subr.mxu0 0.0
        %2005 = vmatpush1.msra.mxu0 0.0
        %2006 = vmatprep.subr.mxu0 0.0
        %2007 = vmatpush1.msra.mxu0 0.0
        %2008 = vmatprep.subr.mxu0 0.0
        %2009 = vmatpush1.msra.mxu0 0.0
        %2010 = vmatprep.subr.mxu0 0.0
        %2011 = vmatpush1.msra.mxu0 0.0
        %2012 = vmatprep.subr.mxu0 0.0
        %2013 = vmatpush1.msra.mxu0 0.0
        %2014 = vmatprep.subr.mxu0 0.0
        %2015 = vmatpush1.msra.mxu0 0.0
        %2016 = vmatprep.subr.mxu0 0.0
        %2017 = vmatpush1.msra.mxu0 0.0
        %2018 = vmatprep.subr.mxu0 0.0
        %2019 = vmatpush1.msra.mxu0 0.0
        %2020 = vmatprep.subr.mxu0 0.0
        %2021 = vmatpush1.msra.mxu0 0.0
        %2022 = vmatprep.subr.mxu0 0.0
        %2023 = vmatpush1.msra.mxu0 0.0
        %2024 = vmatprep.subr.mxu0 0.0
        %2025 = vmatpush1.msra.mxu0 0.0
        %2026 = vmatprep.subr.mxu0 0.0
        %2027 = vmatpush1.msra.mxu0 0.0
        %2028 = vmatprep.subr.mxu0 0.0
        %2029 = vmatpush1.msra.mxu0 0.0
        %2030 = vmatprep.mubr.f32.mxu0 0.0
        %2031 = vmatmul.mubr.f32.gmra.mrb[0].mxu0 %v1429
        %v2032 = vpop.f32.mrb[0].mxu0
        %v2033 = vadd.f32 %v1958, %v2032
        %v2034 = vpop.f32.mrb[0].mxu0
        %2035 = vmatprep.mubr.f32.mxu0 0.0
        %2036 = vmatmul.mubr.f32.gmra.mrb[0].mxu0 %v1432
        %v2037 = vpop.f32.mrb[0].mxu0
        %v2038 = vadd.f32 %v1963, %v2037
        %v2039 = vpop.f32.mrb[0].mxu0
        %2040 = vdwg.mxu0
        %s2041 = scalar_lea.vmem %s7, 192
        %v2042 = vld [vmem:[%s2041] sm:$0xff]
        %v2043 = vld [vmem:[%s2041 + $0x8] sm:$0xff]
        %v2044 = vld [vmem:[%s2041 + $0x10] sm:$0xff]
        %v2045 = vld [vmem:[%s2041 + $0x18] sm:$0xff]
        %v2047 = vsel %vm1211, %v1879, 0
        %v2050 = vsel %vm1211, %v1880, 0
        %2052 = vmatprep.subr.mxu0 0.0
        %2053 = vmatpush1.msra.mxu0 %v2042
        %2054 = vmatprep.subr.mxu0 0.0
        %2055 = vmatpush1.msra.mxu0 %v2043
        %2056 = vmatprep.subr.mxu0 0.0
        %2057 = vmatpush1.msra.mxu0 %v2044
        %2058 = vmatprep.subr.mxu0 0.0
        %2059 = vmatpush1.msra.mxu0 %v2045
        %2060 = vmatprep.subr.mxu0 0.0
        %2061 = vmatpush1.msra.mxu0 0.0
        %2062 = vmatprep.subr.mxu0 0.0
        %2063 = vmatpush1.msra.mxu0 0.0
        %2064 = vmatprep.subr.mxu0 0.0
        %2065 = vmatpush1.msra.mxu0 0.0
        %2066 = vmatprep.subr.mxu0 0.0
        %2067 = vmatpush1.msra.mxu0 0.0
        %2068 = vmatprep.subr.mxu0 0.0
        %2069 = vmatpush1.msra.mxu0 0.0
        %2070 = vmatprep.subr.mxu0 0.0
        %2071 = vmatpush1.msra.mxu0 0.0
        %2072 = vmatprep.subr.mxu0 0.0
        %2073 = vmatpush1.msra.mxu0 0.0
        %2074 = vmatprep.subr.mxu0 0.0
        %2075 = vmatpush1.msra.mxu0 0.0
        %2076 = vmatprep.subr.mxu0 0.0
        %2077 = vmatpush1.msra.mxu0 0.0
        %2078 = vmatprep.subr.mxu0 0.0
        %2079 = vmatpush1.msra.mxu0 0.0
        %2080 = vmatprep.subr.mxu0 0.0
        %2081 = vmatpush1.msra.mxu0 0.0
        %2082 = vmatprep.subr.mxu0 0.0
        %2083 = vmatpush1.msra.mxu0 0.0
        %2084 = vmatprep.subr.mxu0 0.0
        %2085 = vmatpush1.msra.mxu0 0.0
        %2086 = vmatprep.subr.mxu0 0.0
        %2087 = vmatpush1.msra.mxu0 0.0
        %2088 = vmatprep.subr.mxu0 0.0
        %2089 = vmatpush1.msra.mxu0 0.0
        %2090 = vmatprep.subr.mxu0 0.0
        %2091 = vmatpush1.msra.mxu0 0.0
        %2092 = vmatprep.subr.mxu0 0.0
        %2093 = vmatpush1.msra.mxu0 0.0
        %2094 = vmatprep.subr.mxu0 0.0
        %2095 = vmatpush1.msra.mxu0 0.0
        %2096 = vmatprep.subr.mxu0 0.0
        %2097 = vmatpush1.msra.mxu0 0.0
        %2098 = vmatprep.subr.mxu0 0.0
        %2099 = vmatpush1.msra.mxu0 0.0
        %2100 = vmatprep.subr.mxu0 0.0
        %2101 = vmatpush1.msra.mxu0 0.0
        %2102 = vmatprep.subr.mxu0 0.0
        %2103 = vmatpush1.msra.mxu0 0.0
        %2104 = vmatprep.subr.mxu0 0.0
        %2105 = vmatpush1.msra.mxu0 0.0
        %2106 = vmatprep.subr.mxu0 0.0
        %2107 = vmatpush1.msra.mxu0 0.0
        %2108 = vmatprep.subr.mxu0 0.0
        %2109 = vmatpush1.msra.mxu0 0.0
        %2110 = vmatprep.subr.mxu0 0.0
        %2111 = vmatpush1.msra.mxu0 0.0
        %2112 = vmatprep.subr.mxu0 0.0
        %2113 = vmatpush1.msra.mxu0 0.0
        %2114 = vmatprep.subr.mxu0 0.0
        %2115 = vmatpush1.msra.mxu0 0.0
        %2116 = vmatprep.mubr.f32.mxu0 0.0
        %2117 = vmatmul.mubr.f32.gmra.mrb[0].mxu0 %v2047
        %v2118 = vpop.f32.mrb[0].mxu0
        %v2119 = vadd.f32 0.0, %v2118
        %v2120 = vpop.f32.mrb[0].mxu0
        %2121 = vmatprep.mubr.f32.mxu0 0.0
        %2122 = vmatmul.mubr.f32.gmra.mrb[0].mxu0 %v2050
        %v2123 = vpop.f32.mrb[0].mxu0
        %v2124 = vadd.f32 0.0, %v2123
        %v2125 = vpop.f32.mrb[0].mxu0
        %2126 = vdwg.mxu0
        %v2127 = vadd.f32 %v2033, %v2119
        %v2128 = vadd.f32 %v2038, %v2124
        %v2129 = vld [vmem:[%s12 + $0xc] sm:$0x1]
        %v2130 = vlaneseq
        %v2131 = vshrl.u32 %v2130, 7
        %v2132 = vsub.s32 0, %v2131
        %v2133 = vrot.slane %v2129, %v2132
        %v2134 = vadd.f32 %v2127, %v2133
        %v2135 = vadd.f32 %v2128, %v2133
        %v2136 = vmul.f32 %v2134, 0.5
        %v2137 = vmul.f32 %v2135, 0.5
        %v2138 = vmul.f32 %v2134, 0.70710677
        %v2139 = vmul.f32 %v2135, 0.70710677
        %v2140 = verf.f32.pop %v2138
        %v2141 = verf.f32.pop %v2139
        %v2142 = vadd.f32 %v2140, 1.0
        %v2143 = vadd.f32 %v2141, 1.0
        %v2144 = vmul.f32 %v2136, %v2142
        %v2145 = vmul.f32 %v2137, %v2143
        %s2146 = scalar_lea.vmem %s7, 224
        %v2147 = vld [vmem:[%s2146] sm:$0xff]
        %v2148 = vld [vmem:[%s2146 + $0x8] sm:$0xff]
        %v2149 = vld [vmem:[%s2146 + $0x10] sm:$0xff]
        %v2150 = vld [vmem:[%s2146 + $0x18] sm:$0xff]
        %v2151 = vld [vmem:[%s12 + $0xd] sm:$0x1]
        %v2152 = vlaneseq
        %v2153 = vshrl.u32 %v2152, 7
        %v2154 = vsub.s32 0, %v2153
        %v2155 = vrot.slane %v2151, %v2154
        %v2157 = vsel %vm1211, %v2144, 0
        %v2160 = vsel %vm1211, %v2145, 0
        %2162 = vmatprep.subr.mxu0 0.0
        %2163 = vmatpush1.msra.mxu0 %v2147
        %2164 = vmatprep.subr.mxu0 0.0
        %2165 = vmatpush1.msra.mxu0 %v2148
        %2166 = vmatprep.subr.mxu0 0.0
        %2167 = vmatpush1.msra.mxu0 %v2149
        %2168 = vmatprep.subr.mxu0 0.0
        %2169 = vmatpush1.msra.mxu0 %v2150
        %2170 = vmatprep.subr.mxu0 0.0
        %2171 = vmatpush1.msra.mxu0 0.0
        %2172 = vmatprep.subr.mxu0 0.0
        %2173 = vmatpush1.msra.mxu0 0.0
        %2174 = vmatprep.subr.mxu0 0.0
        %2175 = vmatpush1.msra.mxu0 0.0
        %2176 = vmatprep.subr.mxu0 0.0
        %2177 = vmatpush1.msra.mxu0 0.0
        %2178 = vmatprep.subr.mxu0 0.0
        %2179 = vmatpush1.msra.mxu0 0.0
        %2180 = vmatprep.subr.mxu0 0.0
        %2181 = vmatpush1.msra.mxu0 0.0
        %2182 = vmatprep.subr.mxu0 0.0
        %2183 = vmatpush1.msra.mxu0 0.0
        %2184 = vmatprep.subr.mxu0 0.0
        %2185 = vmatpush1.msra.mxu0 0.0
        %2186 = vmatprep.subr.mxu0 0.0
        %2187 = vmatpush1.msra.mxu0 0.0
        %2188 = vmatprep.subr.mxu0 0.0
        %2189 = vmatpush1.msra.mxu0 0.0
        %2190 = vmatprep.subr.mxu0 0.0
        %2191 = vmatpush1.msra.mxu0 0.0
        %2192 = vmatprep.subr.mxu0 0.0
        %2193 = vmatpush1.msra.mxu0 0.0
        %2194 = vmatprep.subr.mxu0 0.0
        %2195 = vmatpush1.msra.mxu0 0.0
        %2196 = vmatprep.subr.mxu0 0.0
        %2197 = vmatpush1.msra.mxu0 0.0
        %2198 = vmatprep.subr.mxu0 0.0
        %2199 = vmatpush1.msra.mxu0 0.0
        %2200 = vmatprep.subr.mxu0 0.0
        %2201 = vmatpush1.msra.mxu0 0.0
        %2202 = vmatprep.subr.mxu0 0.0
        %2203 = vmatpush1.msra.mxu0 0.0
        %2204 = vmatprep.subr.mxu0 0.0
        %2205 = vmatpush1.msra.mxu0 0.0
        %2206 = vmatprep.subr.mxu0 0.0
        %2207 = vmatpush1.msra.mxu0 0.0
        %2208 = vmatprep.subr.mxu0 0.0
        %2209 = vmatpush1.msra.mxu0 0.0
        %2210 = vmatprep.subr.mxu0 0.0
        %2211 = vmatpush1.msra.mxu0 0.0
        %2212 = vmatprep.subr.mxu0 0.0
        %2213 = vmatpush1.msra.mxu0 0.0
        %2214 = vmatprep.subr.mxu0 0.0
        %2215 = vmatpush1.msra.mxu0 0.0
        %2216 = vmatprep.subr.mxu0 0.0
        %2217 = vmatpush1.msra.mxu0 0.0
        %2218 = vmatprep.subr.mxu0 0.0
        %2219 = vmatpush1.msra.mxu0 0.0
        %2220 = vmatprep.subr.mxu0 0.0
        %2221 = vmatpush1.msra.mxu0 0.0
        %2222 = vmatprep.subr.mxu0 0.0
        %2223 = vmatpush1.msra.mxu0 0.0
        %2224 = vmatprep.subr.mxu0 0.0
        %2225 = vmatpush1.msra.mxu0 0.0
        %2226 = vmatprep.mubr.f32.mxu0 0.0
        %2227 = vmatmul.mubr.f32.gmra.mrb[0].mxu0 %v2157
        %v2228 = vpop.f32.mrb[0].mxu0
        %v2229 = vadd.f32 %v2155, %v2228
        %v2230 = vpop.f32.mrb[0].mxu0
        %2231 = vmatprep.mubr.f32.mxu0 0.0
        %2232 = vmatmul.mubr.f32.gmra.mrb[0].mxu0 %v2160
        %v2233 = vpop.f32.mrb[0].mxu0
        %v2234 = vadd.f32 %v2155, %v2233
        %v2235 = vpop.f32.mrb[0].mxu0
        %2236 = vdwg.mxu0
        %v2237 = vmul.f32 %v2229, 0.5
        %v2238 = vmul.f32 %v2234, 0.5
        %v2239 = vmul.f32 %v2229, 0.70710677
        %v2240 = vmul.f32 %v2234, 0.70710677
        %v2241 = verf.f32.pop %v2239
        %v2242 = verf.f32.pop %v2240
        %v2243 = vadd.f32 %v2241, 1.0
        %v2244 = vadd.f32 %v2242, 1.0
        %v2245 = vmul.f32 %v2237, %v2243
        %v2246 = vmul.f32 %v2238, %v2244
        %v2247 = vld [vmem:[%s8] sm:$0xff]
        %v2248 = vld [vmem:[%s8 + $0x8] sm:$0xff]
        %v2249 = vld [vmem:[%s8 + $0x10] sm:$0xff]
        %v2250 = vld [vmem:[%s8 + $0x18] sm:$0xff]
        %v2251 = vld [vmem:[%s13] sm:$0x1]
        %v2252 = vlaneseq
        %v2253 = vshrl.u32 %v2252, 7
        %v2254 = vsub.s32 0, %v2253
        %v2255 = vrot.slane %v2251, %v2254
        %v2257 = vsel %vm1211, %v2245, 0
        %v2260 = vsel %vm1211, %v2246, 0
        %2262 = vmatprep.subr.mxu0 0.0
        %2263 = vmatpush1.msra.mxu0 %v2247
        %2264 = vmatprep.subr.mxu0 0.0
        %2265 = vmatpush1.msra.mxu0 %v2248
        %2266 = vmatprep.subr.mxu0 0.0
        %2267 = vmatpush1.msra.mxu0 %v2249
        %2268 = vmatprep.subr.mxu0 0.0
        %2269 = vmatpush1.msra.mxu0 %v2250
        %2270 = vmatprep.subr.mxu0 0.0
        %2271 = vmatpush1.msra.mxu0 0.0
        %2272 = vmatprep.subr.mxu0 0.0
        %2273 = vmatpush1.msra.mxu0 0.0
        %2274 = vmatprep.subr.mxu0 0.0
        %2275 = vmatpush1.msra.mxu0 0.0
        %2276 = vmatprep.subr.mxu0 0.0
        %2277 = vmatpush1.msra.mxu0 0.0
        %2278 = vmatprep.subr.mxu0 0.0
        %2279 = vmatpush1.msra.mxu0 0.0
        %2280 = vmatprep.subr.mxu0 0.0
        %2281 = vmatpush1.msra.mxu0 0.0
        %2282 = vmatprep.subr.mxu0 0.0
        %2283 = vmatpush1.msra.mxu0 0.0
        %2284 = vmatprep.subr.mxu0 0.0
        %2285 = vmatpush1.msra.mxu0 0.0
        %2286 = vmatprep.subr.mxu0 0.0
        %2287 = vmatpush1.msra.mxu0 0.0
        %2288 = vmatprep.subr.mxu0 0.0
        %2289 = vmatpush1.msra.mxu0 0.0
        %2290 = vmatprep.subr.mxu0 0.0
        %2291 = vmatpush1.msra.mxu0 0.0
        %2292 = vmatprep.subr.mxu0 0.0
        %2293 = vmatpush1.msra.mxu0 0.0
        %2294 = vmatprep.subr.mxu0 0.0
        %2295 = vmatpush1.msra.mxu0 0.0
        %2296 = vmatprep.subr.mxu0 0.0
        %2297 = vmatpush1.msra.mxu0 0.0
        %2298 = vmatprep.subr.mxu0 0.0
        %2299 = vmatpush1.msra.mxu0 0.0
        %2300 = vmatprep.subr.mxu0 0.0
        %2301 = vmatpush1.msra.mxu0 0.0
        %2302 = vmatprep.subr.mxu0 0.0
        %2303 = vmatpush1.msra.mxu0 0.0
        %2304 = vmatprep.subr.mxu0 0.0
        %2305 = vmatpush1.msra.mxu0 0.0
        %2306 = vmatprep.subr.mxu0 0.0
        %2307 = vmatpush1.msra.mxu0 0.0
        %2308 = vmatprep.subr.mxu0 0.0
        %2309 = vmatpush1.msra.mxu0 0.0
        %2310 = vmatprep.subr.mxu0 0.0
        %2311 = vmatpush1.msra.mxu0 0.0
        %2312 = vmatprep.subr.mxu0 0.0
        %2313 = vmatpush1.msra.mxu0 0.0
        %2314 = vmatprep.subr.mxu0 0.0
        %2315 = vmatpush1.msra.mxu0 0.0
        %2316 = vmatprep.subr.mxu0 0.0
        %2317 = vmatpush1.msra.mxu0 0.0
        %2318 = vmatprep.subr.mxu0 0.0
        %2319 = vmatpush1.msra.mxu0 0.0
        %2320 = vmatprep.subr.mxu0 0.0
        %2321 = vmatpush1.msra.mxu0 0.0
        %2322 = vmatprep.subr.mxu0 0.0
        %2323 = vmatpush1.msra.mxu0 0.0
        %2324 = vmatprep.subr.mxu0 0.0
        %2325 = vmatpush1.msra.mxu0 0.0
        %2326 = vmatprep.mubr.f32.mxu0 0.0
        %2327 = vmatmul.mubr.f32.gmra.mrb[0].mxu0 %v2257
        %v2328 = vpop.f32.mrb[0].mxu0
        %v2329 = vadd.f32 %v2255, %v2328
        %v2330 = vpop.f32.mrb[0].mxu0
        %2331 = vmatprep.mubr.f32.mxu0 0.0
        %2332 = vmatmul.mubr.f32.gmra.mrb[0].mxu0 %v2260
        %v2333 = vpop.f32.mrb[0].mxu0
        %v2334 = vadd.f32 %v2255, %v2333
        %v2335 = vpop.f32.mrb[0].mxu0
        %2336 = vdwg.mxu0
        %v2337 = vtanh.pop %v2329
        %v2338 = vtanh.pop %v2334
        %v2339 = vld [vmem:[%s9] sm:$0xff]
        %v2340 = vld [vmem:[%s9 + $0x8] sm:$0xff]
        %v2341 = vld [vmem:[%s9 + $0x10] sm:$0xff]
        %v2342 = vld [vmem:[%s9 + $0x18] sm:$0xff]
        %v2343 = vld [vmem:[%s9 + $0x20] sm:$0xff]
        %v2344 = vld [vmem:[%s9 + $0x28] sm:$0xff]
        %v2345 = vld [vmem:[%s9 + $0x30] sm:$0xff]
        %v2346 = vld [vmem:[%s9 + $0x38] sm:$0xff]
        %v2347 = vld [vmem:[%s14] sm:$0x3]
        %v2349 = vlaneseq
        %v2350 = vshrl.u32 %v2349, 7
        %v2351 = vsub.s32 0, %v2350
        %v2352 = vrot.slane %v2347, %v2351
        %v2353 = vlaneseq
        %v2354 = vshrl.u32 %v2353, 7
        %v2355 = vsub.s32 1, %v2354
        %v2356 = vrot.slane %v2347, %v2355
        %2359 = vmatprep.subr.mxu0 %v2340
        %2360 = vmatpush1.msra.mxu0 %v2339
        %2361 = vmatprep.subr.mxu0 %v2342
        %2362 = vmatpush1.msra.mxu0 %v2341
        %2363 = vmatprep.subr.mxu0 %v2344
        %2364 = vmatpush1.msra.mxu0 %v2343
        %2365 = vmatprep.subr.mxu0 %v2346
        %2366 = vmatpush1.msra.mxu0 %v2345
        %2367 = vmatprep.subr.mxu0 0.0
        %2368 = vmatpush1.msra.mxu0 0.0
        %2369 = vmatprep.subr.mxu0 0.0
        %2370 = vmatpush1.msra.mxu0 0.0
        %2371 = vmatprep.subr.mxu0 0.0
        %2372 = vmatpush1.msra.mxu0 0.0
        %2373 = vmatprep.subr.mxu0 0.0
        %2374 = vmatpush1.msra.mxu0 0.0
        %2375 = vmatprep.subr.mxu0 0.0
        %2376 = vmatpush1.msra.mxu0 0.0
        %2377 = vmatprep.subr.mxu0 0.0
        %2378 = vmatpush1.msra.mxu0 0.0
        %2379 = vmatprep.subr.mxu0 0.0
        %2380 = vmatpush1.msra.mxu0 0.0
        %2381 = vmatprep.subr.mxu0 0.0
        %2382 = vmatpush1.msra.mxu0 0.0
        %2383 = vmatprep.subr.mxu0 0.0
        %2384 = vmatpush1.msra.mxu0 0.0
        %2385 = vmatprep.subr.mxu0 0.0
        %2386 = vmatpush1.msra.mxu0 0.0
        %2387 = vmatprep.subr.mxu0 0.0
        %2388 = vmatpush1.msra.mxu0 0.0
        %2389 = vmatprep.subr.mxu0 0.0
        %2390 = vmatpush1.msra.mxu0 0.0
        %2391 = vmatprep.subr.mxu0 0.0
        %2392 = vmatpush1.msra.mxu0 0.0
        %2393 = vmatprep.subr.mxu0 0.0
        %2394 = vmatpush1.msra.mxu0 0.0
        %2395 = vmatprep.subr.mxu0 0.0
        %2396 = vmatpush1.msra.mxu0 0.0
        %2397 = vmatprep.subr.mxu0 0.0
        %2398 = vmatpush1.msra.mxu0 0.0
        %2399 = vmatprep.subr.mxu0 0.0
        %2400 = vmatpush1.msra.mxu0 0.0
        %2401 = vmatprep.subr.mxu0 0.0
        %2402 = vmatpush1.msra.mxu0 0.0
        %2403 = vmatprep.subr.mxu0 0.0
        %2404 = vmatpush1.msra.mxu0 0.0
        %2405 = vmatprep.subr.mxu0 0.0
        %2406 = vmatpush1.msra.mxu0 0.0
        %2407 = vmatprep.subr.mxu0 0.0
        %2408 = vmatpush1.msra.mxu0 0.0
        %2409 = vmatprep.subr.mxu0 0.0
        %2410 = vmatpush1.msra.mxu0 0.0
        %2411 = vmatprep.subr.mxu0 0.0
        %2412 = vmatpush1.msra.mxu0 0.0
        %2413 = vmatprep.subr.mxu0 0.0
        %2414 = vmatpush1.msra.mxu0 0.0
        %2415 = vmatprep.subr.mxu0 0.0
        %2416 = vmatpush1.msra.mxu0 0.0
        %2417 = vmatprep.subr.mxu0 0.0
        %2418 = vmatpush1.msra.mxu0 0.0
        %2419 = vmatprep.subr.mxu0 0.0
        %2420 = vmatpush1.msra.mxu0 0.0
        %2421 = vmatprep.subr.mxu0 0.0
        %2422 = vmatpush1.msra.mxu0 0.0
        %2423 = vmatprep.mubr.f32.mxu0 0.0
        %2424 = vmatmul.mubr.f32.gmra.mrb[0].mxu0 %v2257
        %v2425 = vpop.f32.mrb[0].mxu0
        %v2426 = vadd.f32 %v2352, %v2425
        %v2427 = vpop.f32.mrb[0].mxu0
        %v2428 = vadd.f32 %v2356, %v2427
        %2429 = vmatprep.mubr.f32.mxu0 0.0
        %2430 = vmatmul.mubr.f32.gmra.mrb[0].mxu0 %v2260
        %v2431 = vpop.f32.mrb[0].mxu0
        %v2432 = vadd.f32 %v2352, %v2431
        %v2433 = vpop.f32.mrb[0].mxu0
        %v2434 = vadd.f32 %v2356, %v2433
        %2435 = vdwg.mxu0
        %v2436 = vtanh.pop %v2426
        %v2437 = vtanh.pop %v2428
        %v2438 = vtanh.pop %v2432
        %v2439 = vtanh.pop %v2434
        %v2440 = vadd.f32 %v2337, %v642
        %v2441 = vadd.f32 %v2338, %v643
        %v2442 = vadd.f32 %v2436, %v644
        %v2443 = vadd.f32 %v2437, %v645
        %v2444 = vadd.f32 %v2438, %v646
        %v2445 = vadd.f32 %v2439, %v647
        %v2446 = vmul.f32 %v2440, %v2440
        %v2447 = vmul.f32 %v2441, %v2441
        %v2448 = vsel %vm648, %v2446, 0.0
        %2449 = vadd.xlane.f32.xlu0 %v2448
        %v2450 = vpop.xlane.xlu0 %2449
        %v2451 = vsel %vm648, %v2447, 0.0
        %2452 = vadd.xlane.f32.xlu0 %v2451
        %v2453 = vpop.xlane.xlu0 %2452
        %v2454 = vmul.f32 %v2442, %v2442
        %v2455 = vmul.f32 %v2443, %v2443
        %v2456 = vmul.f32 %v2444, %v2444
        %v2457 = vmul.f32 %v2445, %v2445
        %v2458 = vadd.f32 %v2454, %v2455
        %2459 = vadd.xlane.f32.xlu0 %v2458
        %v2460 = vpop.xlane.xlu0 %2459
        %v2461 = vadd.f32 %v2456, %v2457
        %2462 = vadd.xlane.f32.xlu0 %v2461
        %v2463 = vpop.xlane.xlu0 %2462
        %v2464 = vadd.f32 %v2450, %v2460
        %v2465 = vadd.f32 %v2453, %v2463
        %v2466 = vrsqrt.pop %v2464
        %v2467 = vmul.f32 %v2464, %v2466
        %vm2468 = vcmp.eq.f32.partialorder %v2464, inf
        %v2469 = vsel %vm2468, %v2464, %v2467
        %vm2470 = vcmp.eq.f32.partialorder %v2464, 0.0
        %v2471 = vand.u32 %v2464, 2147483648
        %v2472 = vsel %vm2470, %v2471, %v2469
        %v2473 = vrsqrt.pop %v2465
        %v2474 = vmul.f32 %v2465, %v2473
        %vm2475 = vcmp.eq.f32.partialorder %v2465, inf
        %v2476 = vsel %vm2475, %v2465, %v2474
        %vm2477 = vcmp.eq.f32.partialorder %v2465, 0.0
        %v2478 = vand.u32 %v2465, 2147483648
        %v2479 = vsel %vm2477, %v2478, %v2476
        %v2480 = vadd.f32 %v2472, 1e-10
        %v2481 = vadd.f32 %v2479, 1e-10
        %v2482 = vrcp.pop %v2480
        %v2483 = vrcp.pop %v2481
        %v2484 = vmul.f32 %v2440, %v2482
        %v2485 = vmul.f32 %v2441, %v2483
        %v2486 = vmul.f32 %v2442, %v2482
        %v2487 = vmul.f32 %v2443, %v2482
        %v2488 = vmul.f32 %v2444, %v2483
        %v2489 = vmul.f32 %v2445, %v2483
        %s2490 = scalar_lea.vmem %s5, 32
        %v2491 = vld [vmem:[%s2490] sm:$0xff]
        %v2492 = vld [vmem:[%s2490 + $0x8] sm:$0xff]
        %s2493 = scalar_lea.vmem %s6, 512
        %v2494 = vld [vmem:[%s2493] sm:$0xff]
        %v2495 = vld [vmem:[%s2493 + $0x8] sm:$0xff]
        %v2496 = vld [vmem:[%s2493 + $0x10] sm:$0xff]
        %v2497 = vld [vmem:[%s2493 + $0x18] sm:$0xff]
        %v2498 = vld [vmem:[%s2493 + $0x20] sm:$0xff]
        %v2499 = vld [vmem:[%s2493 + $0x28] sm:$0xff]
        %v2500 = vld [vmem:[%s2493 + $0x30] sm:$0xff]
        %v2501 = vld [vmem:[%s2493 + $0x38] sm:$0xff]
        %v2502 = vld [vmem:[%s2493 + $0x40] sm:$0xff]
        %v2503 = vld [vmem:[%s2493 + $0x48] sm:$0xff]
        %v2504 = vld [vmem:[%s2493 + $0x50] sm:$0xff]
        %v2505 = vld [vmem:[%s2493 + $0x58] sm:$0xff]
        %v2506 = vld [vmem:[%s2493 + $0x60] sm:$0xff]
        %v2507 = vld [vmem:[%s2493 + $0x68] sm:$0xff]
        %v2508 = vld [vmem:[%s2493 + $0x70] sm:$0xff]
        %v2509 = vld [vmem:[%s2493 + $0x78] sm:$0xff]
        %v2510 = vld [vmem:[%s2493 + $0x80] sm:$0xff]
        %v2511 = vld [vmem:[%s2493 + $0x88] sm:$0xff]
        %v2512 = vld [vmem:[%s2493 + $0x90] sm:$0xff]
        %v2513 = vld [vmem:[%s2493 + $0x98] sm:$0xff]
        %v2514 = vld [vmem:[%s2493 + $0xa0] sm:$0xff]
        %v2515 = vld [vmem:[%s2493 + $0xa8] sm:$0xff]
        %v2516 = vld [vmem:[%s2493 + $0xb0] sm:$0xff]
        %v2517 = vld [vmem:[%s2493 + $0xb8] sm:$0xff]
        %v2518 = vld [vmem:[%s2493 + $0xc0] sm:$0xff]
        %v2519 = vld [vmem:[%s2493 + $0xc8] sm:$0xff]
        %v2520 = vld [vmem:[%s2493 + $0xd0] sm:$0xff]
        %v2521 = vld [vmem:[%s2493 + $0xd8] sm:$0xff]
        %v2522 = vld [vmem:[%s2493 + $0xe0] sm:$0xff]
        %v2523 = vld [vmem:[%s2493 + $0xe8] sm:$0xff]
        %v2524 = vld [vmem:[%s2493 + $0xf0] sm:$0xff]
        %v2525 = vld [vmem:[%s2493 + $0xf8] sm:$0xff]
        %2526 = vmatprep.subr.mxu0 0.0
        %2527 = vmatpush1.msra.mxu0 %v2494
        %2528 = vmatprep.subr.mxu0 0.0
        %2529 = vmatpush1.msra.mxu0 %v2495
        %2530 = vmatprep.subr.mxu0 0.0
        %2531 = vmatpush1.msra.mxu0 %v2496
        %2532 = vmatprep.subr.mxu0 0.0
        %2533 = vmatpush1.msra.mxu0 %v2497
        %2534 = vmatprep.subr.mxu0 0.0
        %2535 = vmatpush1.msra.mxu0 %v2498
        %2536 = vmatprep.subr.mxu0 0.0
        %2537 = vmatpush1.msra.mxu0 %v2499
        %2538 = vmatprep.subr.mxu0 0.0
        %2539 = vmatpush1.msra.mxu0 %v2500
        %2540 = vmatprep.subr.mxu0 0.0
        %2541 = vmatpush1.msra.mxu0 %v2501
        %2542 = vmatprep.subr.mxu0 0.0
        %2543 = vmatpush1.msra.mxu0 %v2502
        %2544 = vmatprep.subr.mxu0 0.0
        %2545 = vmatpush1.msra.mxu0 %v2503
        %2546 = vmatprep.subr.mxu0 0.0
        %2547 = vmatpush1.msra.mxu0 %v2504
        %2548 = vmatprep.subr.mxu0 0.0
        %2549 = vmatpush1.msra.mxu0 %v2505
        %2550 = vmatprep.subr.mxu0 0.0
        %2551 = vmatpush1.msra.mxu0 %v2506
        %2552 = vmatprep.subr.mxu0 0.0
        %2553 = vmatpush1.msra.mxu0 %v2507
        %2554 = vmatprep.subr.mxu0 0.0
        %2555 = vmatpush1.msra.mxu0 %v2508
        %2556 = vmatprep.subr.mxu0 0.0
        %2557 = vmatpush1.msra.mxu0 %v2509
        %2558 = vmatprep.subr.mxu0 0.0
        %2559 = vmatpush1.msra.mxu0 %v2510
        %2560 = vmatprep.subr.mxu0 0.0
        %2561 = vmatpush1.msra.mxu0 %v2511
        %2562 = vmatprep.subr.mxu0 0.0
        %2563 = vmatpush1.msra.mxu0 %v2512
        %2564 = vmatprep.subr.mxu0 0.0
        %2565 = vmatpush1.msra.mxu0 %v2513
        %2566 = vmatprep.subr.mxu0 0.0
        %2567 = vmatpush1.msra.mxu0 %v2514
        %2568 = vmatprep.subr.mxu0 0.0
        %2569 = vmatpush1.msra.mxu0 %v2515
        %2570 = vmatprep.subr.mxu0 0.0
        %2571 = vmatpush1.msra.mxu0 %v2516
        %2572 = vmatprep.subr.mxu0 0.0
        %2573 = vmatpush1.msra.mxu0 %v2517
        %2574 = vmatprep.subr.mxu0 0.0
        %2575 = vmatpush1.msra.mxu0 %v2518
        %2576 = vmatprep.subr.mxu0 0.0
        %2577 = vmatpush1.msra.mxu0 %v2519
        %2578 = vmatprep.subr.mxu0 0.0
        %2579 = vmatpush1.msra.mxu0 %v2520
        %2580 = vmatprep.subr.mxu0 0.0
        %2581 = vmatpush1.msra.mxu0 %v2521
        %2582 = vmatprep.subr.mxu0 0.0
        %2583 = vmatpush1.msra.mxu0 %v2522
        %2584 = vmatprep.subr.mxu0 0.0
        %2585 = vmatpush1.msra.mxu0 %v2523
        %2586 = vmatprep.subr.mxu0 0.0
        %2587 = vmatpush1.msra.mxu0 %v2524
        %2588 = vmatprep.subr.mxu0 0.0
        %2589 = vmatpush1.msra.mxu0 %v2525
        %2590 = vmatprep.mubr.f32.mxu0 %v645
        %2591 = vmatmul.mubr.f32.gmra.mrb[0].mxu0 %v644
        %v2592 = vpop.f32.mrb[0].mxu0
        %v2593 = vadd.f32 0.0, %v2592
        %v2594 = vpop.f32.mrb[0].mxu0
        %2595 = vmatprep.mubr.f32.mxu0 %v647
        %2596 = vmatmul.mubr.f32.gmra.mrb[0].mxu0 %v646
        %v2597 = vpop.f32.mrb[0].mxu0
        %v2598 = vadd.f32 0.0, %v2597
        %v2599 = vpop.f32.mrb[0].mxu0
        %2600 = vdwg.mxu0
        %2601 = vmatprep.subr.mxu0 0.0
        %2602 = vmatpush1.msra.mxu0 %v2491
        %2603 = vmatprep.subr.mxu0 0.0
        %2604 = vmatpush1.msra.mxu0 %v2492
        %2605 = vmatprep.subr.mxu0 0.0
        %2606 = vmatpush1.msra.mxu0 0.0
        %2607 = vmatprep.subr.mxu0 0.0
        %2608 = vmatpush1.msra.mxu0 0.0
        %2609 = vmatprep.subr.mxu0 0.0
        %2610 = vmatpush1.msra.mxu0 0.0
        %2611 = vmatprep.subr.mxu0 0.0
        %2612 = vmatpush1.msra.mxu0 0.0
        %2613 = vmatprep.subr.mxu0 0.0
        %2614 = vmatpush1.msra.mxu0 0.0
        %2615 = vmatprep.subr.mxu0 0.0
        %2616 = vmatpush1.msra.mxu0 0.0
        %2617 = vmatprep.subr.mxu0 0.0
        %2618 = vmatpush1.msra.mxu0 0.0
        %2619 = vmatprep.subr.mxu0 0.0
        %2620 = vmatpush1.msra.mxu0 0.0
        %2621 = vmatprep.subr.mxu0 0.0
        %2622 = vmatpush1.msra.mxu0 0.0
        %2623 = vmatprep.subr.mxu0 0.0
        %2624 = vmatpush1.msra.mxu0 0.0
        %2625 = vmatprep.subr.mxu0 0.0
        %2626 = vmatpush1.msra.mxu0 0.0
        %2627 = vmatprep.subr.mxu0 0.0
        %2628 = vmatpush1.msra.mxu0 0.0
        %2629 = vmatprep.subr.mxu0 0.0
        %2630 = vmatpush1.msra.mxu0 0.0
        %2631 = vmatprep.subr.mxu0 0.0
        %2632 = vmatpush1.msra.mxu0 0.0
        %2633 = vmatprep.subr.mxu0 0.0
        %2634 = vmatpush1.msra.mxu0 0.0
        %2635 = vmatprep.subr.mxu0 0.0
        %2636 = vmatpush1.msra.mxu0 0.0
        %2637 = vmatprep.subr.mxu0 0.0
        %2638 = vmatpush1.msra.mxu0 0.0
        %2639 = vmatprep.subr.mxu0 0.0
        %2640 = vmatpush1.msra.mxu0 0.0
        %2641 = vmatprep.subr.mxu0 0.0
        %2642 = vmatpush1.msra.mxu0 0.0
        %2643 = vmatprep.subr.mxu0 0.0
        %2644 = vmatpush1.msra.mxu0 0.0
        %2645 = vmatprep.subr.mxu0 0.0
        %2646 = vmatpush1.msra.mxu0 0.0
        %2647 = vmatprep.subr.mxu0 0.0
        %2648 = vmatpush1.msra.mxu0 0.0
        %2649 = vmatprep.subr.mxu0 0.0
        %2650 = vmatpush1.msra.mxu0 0.0
        %2651 = vmatprep.subr.mxu0 0.0
        %2652 = vmatpush1.msra.mxu0 0.0
        %2653 = vmatprep.subr.mxu0 0.0
        %2654 = vmatpush1.msra.mxu0 0.0
        %2655 = vmatprep.subr.mxu0 0.0
        %2656 = vmatpush1.msra.mxu0 0.0
        %2657 = vmatprep.subr.mxu0 0.0
        %2658 = vmatpush1.msra.mxu0 0.0
        %2659 = vmatprep.subr.mxu0 0.0
        %2660 = vmatpush1.msra.mxu0 0.0
        %2661 = vmatprep.subr.mxu0 0.0
        %2662 = vmatpush1.msra.mxu0 0.0
        %2663 = vmatprep.subr.mxu0 0.0
        %2664 = vmatpush1.msra.mxu0 0.0
        %2665 = vmatprep.mubr.f32.mxu0 0.0
        %2666 = vmatmul.mubr.f32.gmra.mrb[0].mxu0 %v1001
        %v2667 = vpop.f32.mrb[0].mxu0
        %v2668 = vadd.f32 %v2593, %v2667
        %v2669 = vpop.f32.mrb[0].mxu0
        %2670 = vmatprep.mubr.f32.mxu0 0.0
        %2671 = vmatmul.mubr.f32.gmra.mrb[0].mxu0 %v1004
        %v2672 = vpop.f32.mrb[0].mxu0
        %v2673 = vadd.f32 %v2598, %v2672
        %v2674 = vpop.f32.mrb[0].mxu0
        %2675 = vdwg.mxu0
        %s2676 = scalar_lea.vmem %s5, 48
        %v2677 = vld [vmem:[%s2676] sm:$0xff]
        %v2678 = vld [vmem:[%s2676 + $0x8] sm:$0xff]
        %v2680 = vsel %vm648, %v2484, 0
        %v2683 = vsel %vm648, %v2485, 0
        %2685 = vmatprep.subr.mxu0 0.0
        %2686 = vmatpush1.msra.mxu0 %v2677
        %2687 = vmatprep.subr.mxu0 0.0
        %2688 = vmatpush1.msra.mxu0 %v2678
        %2689 = vmatprep.subr.mxu0 0.0
        %2690 = vmatpush1.msra.mxu0 0.0
        %2691 = vmatprep.subr.mxu0 0.0
        %2692 = vmatpush1.msra.mxu0 0.0
        %2693 = vmatprep.subr.mxu0 0.0
        %2694 = vmatpush1.msra.mxu0 0.0
        %2695 = vmatprep.subr.mxu0 0.0
        %2696 = vmatpush1.msra.mxu0 0.0
        %2697 = vmatprep.subr.mxu0 0.0
        %2698 = vmatpush1.msra.mxu0 0.0
        %2699 = vmatprep.subr.mxu0 0.0
        %2700 = vmatpush1.msra.mxu0 0.0
        %2701 = vmatprep.subr.mxu0 0.0
        %2702 = vmatpush1.msra.mxu0 0.0
        %2703 = vmatprep.subr.mxu0 0.0
        %2704 = vmatpush1.msra.mxu0 0.0
        %2705 = vmatprep.subr.mxu0 0.0
        %2706 = vmatpush1.msra.mxu0 0.0
        %2707 = vmatprep.subr.mxu0 0.0
        %2708 = vmatpush1.msra.mxu0 0.0
        %2709 = vmatprep.subr.mxu0 0.0
        %2710 = vmatpush1.msra.mxu0 0.0
        %2711 = vmatprep.subr.mxu0 0.0
        %2712 = vmatpush1.msra.mxu0 0.0
        %2713 = vmatprep.subr.mxu0 0.0
        %2714 = vmatpush1.msra.mxu0 0.0
        %2715 = vmatprep.subr.mxu0 0.0
        %2716 = vmatpush1.msra.mxu0 0.0
        %2717 = vmatprep.subr.mxu0 0.0
        %2718 = vmatpush1.msra.mxu0 0.0
        %2719 = vmatprep.subr.mxu0 0.0
        %2720 = vmatpush1.msra.mxu0 0.0
        %2721 = vmatprep.subr.mxu0 0.0
        %2722 = vmatpush1.msra.mxu0 0.0
        %2723 = vmatprep.subr.mxu0 0.0
        %2724 = vmatpush1.msra.mxu0 0.0
        %2725 = vmatprep.subr.mxu0 0.0
        %2726 = vmatpush1.msra.mxu0 0.0
        %2727 = vmatprep.subr.mxu0 0.0
        %2728 = vmatpush1.msra.mxu0 0.0
        %2729 = vmatprep.subr.mxu0 0.0
        %2730 = vmatpush1.msra.mxu0 0.0
        %2731 = vmatprep.subr.mxu0 0.0
        %2732 = vmatpush1.msra.mxu0 0.0
        %2733 = vmatprep.subr.mxu0 0.0
        %2734 = vmatpush1.msra.mxu0 0.0
        %2735 = vmatprep.subr.mxu0 0.0
        %2736 = vmatpush1.msra.mxu0 0.0
        %2737 = vmatprep.subr.mxu0 0.0
        %2738 = vmatpush1.msra.mxu0 0.0
        %2739 = vmatprep.subr.mxu0 0.0
        %2740 = vmatpush1.msra.mxu0 0.0
        %2741 = vmatprep.subr.mxu0 0.0
        %2742 = vmatpush1.msra.mxu0 0.0
        %2743 = vmatprep.subr.mxu0 0.0
        %2744 = vmatpush1.msra.mxu0 0.0
        %2745 = vmatprep.subr.mxu0 0.0
        %2746 = vmatpush1.msra.mxu0 0.0
        %2747 = vmatprep.subr.mxu0 0.0
        %2748 = vmatpush1.msra.mxu0 0.0
        %2749 = vmatprep.mubr.f32.mxu0 0.0
        %2750 = vmatmul.mubr.f32.gmra.mrb[0].mxu0 %v2680
        %v2751 = vpop.f32.mrb[0].mxu0
        %v2752 = vadd.f32 0.0, %v2751
        %v2753 = vpop.f32.mrb[0].mxu0
        %2754 = vmatprep.mubr.f32.mxu0 0.0
        %2755 = vmatmul.mubr.f32.gmra.mrb[0].mxu0 %v2683
        %v2756 = vpop.f32.mrb[0].mxu0
        %v2757 = vadd.f32 0.0, %v2756
        %v2758 = vpop.f32.mrb[0].mxu0
        %2759 = vdwg.mxu0
        %v2760 = vadd.f32 %v2668, %v2752
        %v2761 = vadd.f32 %v2673, %v2757
        %s2762 = scalar_lea.vmem %s6, 768
        %v2763 = vld [vmem:[%s2762] sm:$0xff]
        %v2764 = vld [vmem:[%s2762 + $0x8] sm:$0xff]
        %v2765 = vld [vmem:[%s2762 + $0x10] sm:$0xff]
        %v2766 = vld [vmem:[%s2762 + $0x18] sm:$0xff]
        %v2767 = vld [vmem:[%s2762 + $0x20] sm:$0xff]
        %v2768 = vld [vmem:[%s2762 + $0x28] sm:$0xff]
        %v2769 = vld [vmem:[%s2762 + $0x30] sm:$0xff]
        %v2770 = vld [vmem:[%s2762 + $0x38] sm:$0xff]
        %v2771 = vld [vmem:[%s2762 + $0x40] sm:$0xff]
        %v2772 = vld [vmem:[%s2762 + $0x48] sm:$0xff]
        %v2773 = vld [vmem:[%s2762 + $0x50] sm:$0xff]
        %v2774 = vld [vmem:[%s2762 + $0x58] sm:$0xff]
        %v2775 = vld [vmem:[%s2762 + $0x60] sm:$0xff]
        %v2776 = vld [vmem:[%s2762 + $0x68] sm:$0xff]
        %v2777 = vld [vmem:[%s2762 + $0x70] sm:$0xff]
        %v2778 = vld [vmem:[%s2762 + $0x78] sm:$0xff]
        %v2779 = vld [vmem:[%s2762 + $0x80] sm:$0xff]
        %v2780 = vld [vmem:[%s2762 + $0x88] sm:$0xff]
        %v2781 = vld [vmem:[%s2762 + $0x90] sm:$0xff]
        %v2782 = vld [vmem:[%s2762 + $0x98] sm:$0xff]
        %v2783 = vld [vmem:[%s2762 + $0xa0] sm:$0xff]
        %v2784 = vld [vmem:[%s2762 + $0xa8] sm:$0xff]
        %v2785 = vld [vmem:[%s2762 + $0xb0] sm:$0xff]
        %v2786 = vld [vmem:[%s2762 + $0xb8] sm:$0xff]
        %v2787 = vld [vmem:[%s2762 + $0xc0] sm:$0xff]
        %v2788 = vld [vmem:[%s2762 + $0xc8] sm:$0xff]
        %v2789 = vld [vmem:[%s2762 + $0xd0] sm:$0xff]
        %v2790 = vld [vmem:[%s2762 + $0xd8] sm:$0xff]
        %v2791 = vld [vmem:[%s2762 + $0xe0] sm:$0xff]
        %v2792 = vld [vmem:[%s2762 + $0xe8] sm:$0xff]
        %v2793 = vld [vmem:[%s2762 + $0xf0] sm:$0xff]
        %v2794 = vld [vmem:[%s2762 + $0xf8] sm:$0xff]
        %2795 = vmatprep.subr.mxu0 0.0
        %2796 = vmatpush1.msra.mxu0 %v2763
        %2797 = vmatprep.subr.mxu0 0.0
        %2798 = vmatpush1.msra.mxu0 %v2764
        %2799 = vmatprep.subr.mxu0 0.0
        %2800 = vmatpush1.msra.mxu0 %v2765
        %2801 = vmatprep.subr.mxu0 0.0
        %2802 = vmatpush1.msra.mxu0 %v2766
        %2803 = vmatprep.subr.mxu0 0.0
        %2804 = vmatpush1.msra.mxu0 %v2767
        %2805 = vmatprep.subr.mxu0 0.0
        %2806 = vmatpush1.msra.mxu0 %v2768
        %2807 = vmatprep.subr.mxu0 0.0
        %2808 = vmatpush1.msra.mxu0 %v2769
        %2809 = vmatprep.subr.mxu0 0.0
        %2810 = vmatpush1.msra.mxu0 %v2770
        %2811 = vmatprep.subr.mxu0 0.0
        %2812 = vmatpush1.msra.mxu0 %v2771
        %2813 = vmatprep.subr.mxu0 0.0
        %2814 = vmatpush1.msra.mxu0 %v2772
        %2815 = vmatprep.subr.mxu0 0.0
        %2816 = vmatpush1.msra.mxu0 %v2773
        %2817 = vmatprep.subr.mxu0 0.0
        %2818 = vmatpush1.msra.mxu0 %v2774
        %2819 = vmatprep.subr.mxu0 0.0
        %2820 = vmatpush1.msra.mxu0 %v2775
        %2821 = vmatprep.subr.mxu0 0.0
        %2822 = vmatpush1.msra.mxu0 %v2776
        %2823 = vmatprep.subr.mxu0 0.0
        %2824 = vmatpush1.msra.mxu0 %v2777
        %2825 = vmatprep.subr.mxu0 0.0
        %2826 = vmatpush1.msra.mxu0 %v2778
        %2827 = vmatprep.subr.mxu0 0.0
        %2828 = vmatpush1.msra.mxu0 %v2779
        %2829 = vmatprep.subr.mxu0 0.0
        %2830 = vmatpush1.msra.mxu0 %v2780
        %2831 = vmatprep.subr.mxu0 0.0
        %2832 = vmatpush1.msra.mxu0 %v2781
        %2833 = vmatprep.subr.mxu0 0.0
        %2834 = vmatpush1.msra.mxu0 %v2782
        %2835 = vmatprep.subr.mxu0 0.0
        %2836 = vmatpush1.msra.mxu0 %v2783
        %2837 = vmatprep.subr.mxu0 0.0
        %2838 = vmatpush1.msra.mxu0 %v2784
        %2839 = vmatprep.subr.mxu0 0.0
        %2840 = vmatpush1.msra.mxu0 %v2785
        %2841 = vmatprep.subr.mxu0 0.0
        %2842 = vmatpush1.msra.mxu0 %v2786
        %2843 = vmatprep.subr.mxu0 0.0
        %2844 = vmatpush1.msra.mxu0 %v2787
        %2845 = vmatprep.subr.mxu0 0.0
        %2846 = vmatpush1.msra.mxu0 %v2788
        %2847 = vmatprep.subr.mxu0 0.0
        %2848 = vmatpush1.msra.mxu0 %v2789
        %2849 = vmatprep.subr.mxu0 0.0
        %2850 = vmatpush1.msra.mxu0 %v2790
        %2851 = vmatprep.subr.mxu0 0.0
        %2852 = vmatpush1.msra.mxu0 %v2791
        %2853 = vmatprep.subr.mxu0 0.0
        %2854 = vmatpush1.msra.mxu0 %v2792
        %2855 = vmatprep.subr.mxu0 0.0
        %2856 = vmatpush1.msra.mxu0 %v2793
        %2857 = vmatprep.subr.mxu0 0.0
        %2858 = vmatpush1.msra.mxu0 %v2794
        %2859 = vmatprep.mubr.f32.mxu0 %v2487
        %2860 = vmatmul.mubr.f32.gmra.mrb[0].mxu0 %v2486
        %v2861 = vpop.f32.mrb[0].mxu0
        %v2862 = vadd.f32 0.0, %v2861
        %v2863 = vpop.f32.mrb[0].mxu0
        %2864 = vmatprep.mubr.f32.mxu0 %v2489
        %2865 = vmatmul.mubr.f32.gmra.mrb[0].mxu0 %v2488
        %v2866 = vpop.f32.mrb[0].mxu0
        %v2867 = vadd.f32 0.0, %v2866
        %v2868 = vpop.f32.mrb[0].mxu0
        %2869 = vdwg.mxu0
        %v2870 = vadd.f32 %v2760, %v2862
        %v2871 = vadd.f32 %v2761, %v2867
        %v2872 = vld [vmem:[%s12 + $0xe] sm:$0x1]
        %v2873 = vlaneseq
        %v2874 = vshrl.u32 %v2873, 7
        %v2875 = vsub.s32 0, %v2874
        %v2876 = vrot.slane %v2872, %v2875
        %v2877 = vadd.f32 %v2870, %v2876
        %v2878 = vadd.f32 %v2871, %v2876
        %v2879 = vmul.f32 %v2877, 0.5
        %v2880 = vmul.f32 %v2878, 0.5
        %v2881 = vmul.f32 %v2877, 0.70710677
        %v2882 = vmul.f32 %v2878, 0.70710677
        %v2883 = verf.f32.pop %v2881
        %v2884 = verf.f32.pop %v2882
        %v2885 = vadd.f32 %v2883, 1.0
        %v2886 = vadd.f32 %v2884, 1.0
        %v2887 = vmul.f32 %v2879, %v2885
        %v2888 = vmul.f32 %v2880, %v2886
        %s2889 = scalar_lea.vmem %s7, 256
        %v2890 = vld [vmem:[%s2889] sm:$0xff]
        %v2891 = vld [vmem:[%s2889 + $0x8] sm:$0xff]
        %v2892 = vld [vmem:[%s2889 + $0x10] sm:$0xff]
        %v2893 = vld [vmem:[%s2889 + $0x18] sm:$0xff]
        %v2894 = vld [vmem:[%s12 + $0xf] sm:$0x1]
        %v2895 = vlaneseq
        %v2896 = vshrl.u32 %v2895, 7
        %v2897 = vsub.s32 0, %v2896
        %v2898 = vrot.slane %v2894, %v2897
        %v2900 = vsel %vm1211, %v2887, 0
        %v2903 = vsel %vm1211, %v2888, 0
        %2905 = vmatprep.subr.mxu0 0.0
        %2906 = vmatpush1.msra.mxu0 %v2890
        %2907 = vmatprep.subr.mxu0 0.0
        %2908 = vmatpush1.msra.mxu0 %v2891
        %2909 = vmatprep.subr.mxu0 0.0
        %2910 = vmatpush1.msra.mxu0 %v2892
        %2911 = vmatprep.subr.mxu0 0.0
        %2912 = vmatpush1.msra.mxu0 %v2893
        %2913 = vmatprep.subr.mxu0 0.0
        %2914 = vmatpush1.msra.mxu0 0.0
        %2915 = vmatprep.subr.mxu0 0.0
        %2916 = vmatpush1.msra.mxu0 0.0
        %2917 = vmatprep.subr.mxu0 0.0
        %2918 = vmatpush1.msra.mxu0 0.0
        %2919 = vmatprep.subr.mxu0 0.0
        %2920 = vmatpush1.msra.mxu0 0.0
        %2921 = vmatprep.subr.mxu0 0.0
        %2922 = vmatpush1.msra.mxu0 0.0
        %2923 = vmatprep.subr.mxu0 0.0
        %2924 = vmatpush1.msra.mxu0 0.0
        %2925 = vmatprep.subr.mxu0 0.0
        %2926 = vmatpush1.msra.mxu0 0.0
        %2927 = vmatprep.subr.mxu0 0.0
        %2928 = vmatpush1.msra.mxu0 0.0
        %2929 = vmatprep.subr.mxu0 0.0
        %2930 = vmatpush1.msra.mxu0 0.0
        %2931 = vmatprep.subr.mxu0 0.0
        %2932 = vmatpush1.msra.mxu0 0.0
        %2933 = vmatprep.subr.mxu0 0.0
        %2934 = vmatpush1.msra.mxu0 0.0
        %2935 = vmatprep.subr.mxu0 0.0
        %2936 = vmatpush1.msra.mxu0 0.0
        %2937 = vmatprep.subr.mxu0 0.0
        %2938 = vmatpush1.msra.mxu0 0.0
        %2939 = vmatprep.subr.mxu0 0.0
        %2940 = vmatpush1.msra.mxu0 0.0
        %2941 = vmatprep.subr.mxu0 0.0
        %2942 = vmatpush1.msra.mxu0 0.0
        %2943 = vmatprep.subr.mxu0 0.0
        %2944 = vmatpush1.msra.mxu0 0.0
        %2945 = vmatprep.subr.mxu0 0.0
        %2946 = vmatpush1.msra.mxu0 0.0
        %2947 = vmatprep.subr.mxu0 0.0
        %2948 = vmatpush1.msra.mxu0 0.0
        %2949 = vmatprep.subr.mxu0 0.0
        %2950 = vmatpush1.msra.mxu0 0.0
        %2951 = vmatprep.subr.mxu0 0.0
        %2952 = vmatpush1.msra.mxu0 0.0
        %2953 = vmatprep.subr.mxu0 0.0
        %2954 = vmatpush1.msra.mxu0 0.0
        %2955 = vmatprep.subr.mxu0 0.0
        %2956 = vmatpush1.msra.mxu0 0.0
        %2957 = vmatprep.subr.mxu0 0.0
        %2958 = vmatpush1.msra.mxu0 0.0
        %2959 = vmatprep.subr.mxu0 0.0
        %2960 = vmatpush1.msra.mxu0 0.0
        %2961 = vmatprep.subr.mxu0 0.0
        %2962 = vmatpush1.msra.mxu0 0.0
        %2963 = vmatprep.subr.mxu0 0.0
        %2964 = vmatpush1.msra.mxu0 0.0
        %2965 = vmatprep.subr.mxu0 0.0
        %2966 = vmatpush1.msra.mxu0 0.0
        %2967 = vmatprep.subr.mxu0 0.0
        %2968 = vmatpush1.msra.mxu0 0.0
        %2969 = vmatprep.mubr.f32.mxu0 0.0
        %2970 = vmatmul.mubr.f32.gmra.mrb[0].mxu0 %v2900
        %v2971 = vpop.f32.mrb[0].mxu0
        %v2972 = vadd.f32 %v2898, %v2971
        %v2973 = vpop.f32.mrb[0].mxu0
        %2974 = vmatprep.mubr.f32.mxu0 0.0
        %2975 = vmatmul.mubr.f32.gmra.mrb[0].mxu0 %v2903
        %v2976 = vpop.f32.mrb[0].mxu0
        %v2977 = vadd.f32 %v2898, %v2976
        %v2978 = vpop.f32.mrb[0].mxu0
        %2979 = vdwg.mxu0
        %v2980 = vmul.f32 %v2972, 0.5
        %v2981 = vmul.f32 %v2977, 0.5
        %v2982 = vmul.f32 %v2972, 0.70710677
        %v2983 = vmul.f32 %v2977, 0.70710677
        %v2984 = verf.f32.pop %v2982
        %v2985 = verf.f32.pop %v2983
        %v2986 = vadd.f32 %v2984, 1.0
        %v2987 = vadd.f32 %v2985, 1.0
        %v2988 = vmul.f32 %v2980, %v2986
        %v2989 = vmul.f32 %v2981, %v2987
        %v2990 = vld [vmem:[%s10] sm:$0xff]
        %v2991 = vld [vmem:[%s10 + $0x8] sm:$0xff]
        %v2992 = vld [vmem:[%s10 + $0x10] sm:$0xff]
        %v2993 = vld [vmem:[%s10 + $0x18] sm:$0xff]
        %v2994 = vld [vmem:[%s15] sm:$0x1]
        %v2996 = vlaneseq
        %v2997 = vshrl.u32 %v2996, 7
        %v2998 = vsub.s32 0, %v2997
        %v2999 = vrot.slane %v2994, %v2998
        %v3002 = vsel %vm1211, %v2988, 0
        %v3005 = vsel %vm1211, %v2989, 0
        %3007 = vmatprep.subr.mxu0 0.0
        %3008 = vmatpush1.msra.mxu0 %v2990
        %3009 = vmatprep.subr.mxu0 0.0
        %3010 = vmatpush1.msra.mxu0 %v2991
        %3011 = vmatprep.subr.mxu0 0.0
        %3012 = vmatpush1.msra.mxu0 %v2992
        %3013 = vmatprep.subr.mxu0 0.0
        %3014 = vmatpush1.msra.mxu0 %v2993
        %3015 = vmatprep.subr.mxu0 0.0
        %3016 = vmatpush1.msra.mxu0 0.0
        %3017 = vmatprep.subr.mxu0 0.0
        %3018 = vmatpush1.msra.mxu0 0.0
        %3019 = vmatprep.subr.mxu0 0.0
        %3020 = vmatpush1.msra.mxu0 0.0
        %3021 = vmatprep.subr.mxu0 0.0
        %3022 = vmatpush1.msra.mxu0 0.0
        %3023 = vmatprep.subr.mxu0 0.0
        %3024 = vmatpush1.msra.mxu0 0.0
        %3025 = vmatprep.subr.mxu0 0.0
        %3026 = vmatpush1.msra.mxu0 0.0
        %3027 = vmatprep.subr.mxu0 0.0
        %3028 = vmatpush1.msra.mxu0 0.0
        %3029 = vmatprep.subr.mxu0 0.0
        %3030 = vmatpush1.msra.mxu0 0.0
        %3031 = vmatprep.subr.mxu0 0.0
        %3032 = vmatpush1.msra.mxu0 0.0
        %3033 = vmatprep.subr.mxu0 0.0
        %3034 = vmatpush1.msra.mxu0 0.0
        %3035 = vmatprep.subr.mxu0 0.0
        %3036 = vmatpush1.msra.mxu0 0.0
        %3037 = vmatprep.subr.mxu0 0.0
        %3038 = vmatpush1.msra.mxu0 0.0
        %3039 = vmatprep.subr.mxu0 0.0
        %3040 = vmatpush1.msra.mxu0 0.0
        %3041 = vmatprep.subr.mxu0 0.0
        %3042 = vmatpush1.msra.mxu0 0.0
        %3043 = vmatprep.subr.mxu0 0.0
        %3044 = vmatpush1.msra.mxu0 0.0
        %3045 = vmatprep.subr.mxu0 0.0
        %3046 = vmatpush1.msra.mxu0 0.0
        %3047 = vmatprep.subr.mxu0 0.0
        %3048 = vmatpush1.msra.mxu0 0.0
        %3049 = vmatprep.subr.mxu0 0.0
        %3050 = vmatpush1.msra.mxu0 0.0
        %3051 = vmatprep.subr.mxu0 0.0
        %3052 = vmatpush1.msra.mxu0 0.0
        %3053 = vmatprep.subr.mxu0 0.0
        %3054 = vmatpush1.msra.mxu0 0.0
        %3055 = vmatprep.subr.mxu0 0.0
        %3056 = vmatpush1.msra.mxu0 0.0
        %3057 = vmatprep.subr.mxu0 0.0
        %3058 = vmatpush1.msra.mxu0 0.0
        %3059 = vmatprep.subr.mxu0 0.0
        %3060 = vmatpush1.msra.mxu0 0.0
        %3061 = vmatprep.subr.mxu0 0.0
        %3062 = vmatpush1.msra.mxu0 0.0
        %3063 = vmatprep.subr.mxu0 0.0
        %3064 = vmatpush1.msra.mxu0 0.0
        %3065 = vmatprep.subr.mxu0 0.0
        %3066 = vmatpush1.msra.mxu0 0.0
        %3067 = vmatprep.subr.mxu0 0.0
        %3068 = vmatpush1.msra.mxu0 0.0
        %3069 = vmatprep.subr.mxu0 0.0
        %3070 = vmatpush1.msra.mxu0 0.0
        %3071 = vmatprep.mubr.f32.mxu0 0.0
        %3072 = vmatmul.mubr.f32.gmra.mrb[0].mxu0 %v3002
        %v3073 = vpop.f32.mrb[0].mxu0
        %v3074 = vadd.f32 %v2999, %v3073
        %v3075 = vpop.f32.mrb[0].mxu0
        %3076 = vmatprep.mubr.f32.mxu0 0.0
        %3077 = vmatmul.mubr.f32.gmra.mrb[0].mxu0 %v3005
        %v3078 = vpop.f32.mrb[0].mxu0
        %v3079 = vadd.f32 %v2999, %v3078
        %v3080 = vpop.f32.mrb[0].mxu0
        %3081 = vdwg.mxu0
        %vm3082 = vcmask 162816
        %v3083 = vsel %vm3082, %v3074, -inf
        %3084 = vmax.xlane.f32.xlu0 %v3083
        %v3085 = vpop.xlane.xlu0 %3084
        %v3086 = vsel %vm3082, %v3079, -inf
        %3087 = vmax.xlane.f32.xlu0 %v3086
        %v3088 = vpop.xlane.xlu0 %3087
        %v3089 = vsub.f32 %v3074, %v3085
        %v3090 = vsub.f32 %v3079, %v3088
        %v3091 = vmul.f32 %v3089, 1.442695
        %v3092 = vpow.pop %v3091
        %v3093 = vmul.f32 %v3090, 1.442695
        %v3094 = vpow.pop %v3093
        %v3095 = vsel %vm3082, %v3092, 0.0
        %3096 = vadd.xlane.f32.xlu0 %v3095
        %v3097 = vpop.xlane.xlu0 %3096
        %v3098 = vsel %vm3082, %v3094, 0.0
        %3099 = vadd.xlane.f32.xlu0 %v3098
        %v3100 = vpop.xlane.xlu0 %3099
        %v3101 = vlog2.pop %v3097
        %v3102 = vmul.f32 %v3101, 0.6931472
        %v3103 = vlog2.pop %v3100
        %v3104 = vmul.f32 %v3103, 0.6931472
        %v3105 = vsub.f32 %v3089, %v3102
        %v3106 = vsub.f32 %v3090, %v3104
        %3107 = vst.msk [vmem:[%s602] sm:$0xff] %vm3082, %v3105
        %3108 = vst.msk [vmem:[%s602 + $0x8] sm:$0xff] %vm3082, %v3106
        %s3109 = scalar_lea.vmem %s5, 64
        %v3110 = vld [vmem:[%s3109] sm:$0xff]
        %v3111 = vld [vmem:[%s3109 + $0x8] sm:$0xff]
        %v3112 = vld [vmem:[%s12 + $0x10] sm:$0x1]
        %s3113 = scalar_lea.vmem %s5, 80
        %v3114 = vld [vmem:[%s3113] sm:$0xff]
        %v3115 = vld [vmem:[%s3113 + $0x8] sm:$0xff]
        %v3116 = vlaneseq
        %v3117 = vshrl.u32 %v3116, 7
        %v3118 = vsub.s32 0, %v3117
        %v3119 = vrot.slane %v3112, %v3118
        %3120 = vmatprep.subr.mxu0 0.0
        %3121 = vmatpush1.msra.mxu0 %v3110
        %3122 = vmatprep.subr.mxu0 0.0
        %3123 = vmatpush1.msra.mxu0 %v3111
        %3124 = vmatprep.subr.mxu0 0.0
        %3125 = vmatpush1.msra.mxu0 0.0
        %3126 = vmatprep.subr.mxu0 0.0
        %3127 = vmatpush1.msra.mxu0 0.0
        %3128 = vmatprep.subr.mxu0 0.0
        %3129 = vmatpush1.msra.mxu0 0.0
        %3130 = vmatprep.subr.mxu0 0.0
        %3131 = vmatpush1.msra.mxu0 0.0
        %3132 = vmatprep.subr.mxu0 0.0
        %3133 = vmatpush1.msra.mxu0 0.0
        %3134 = vmatprep.subr.mxu0 0.0
        %3135 = vmatpush1.msra.mxu0 0.0
        %3136 = vmatprep.subr.mxu0 0.0
        %3137 = vmatpush1.msra.mxu0 0.0
        %3138 = vmatprep.subr.mxu0 0.0
        %3139 = vmatpush1.msra.mxu0 0.0
        %3140 = vmatprep.subr.mxu0 0.0
        %3141 = vmatpush1.msra.mxu0 0.0
        %3142 = vmatprep.subr.mxu0 0.0
        %3143 = vmatpush1.msra.mxu0 0.0
        %3144 = vmatprep.subr.mxu0 0.0
        %3145 = vmatpush1.msra.mxu0 0.0
        %3146 = vmatprep.subr.mxu0 0.0
        %3147 = vmatpush1.msra.mxu0 0.0
        %3148 = vmatprep.subr.mxu0 0.0
        %3149 = vmatpush1.msra.mxu0 0.0
        %3150 = vmatprep.subr.mxu0 0.0
        %3151 = vmatpush1.msra.mxu0 0.0
        %3152 = vmatprep.subr.mxu0 0.0
        %3153 = vmatpush1.msra.mxu0 0.0
        %3154 = vmatprep.subr.mxu0 0.0
        %3155 = vmatpush1.msra.mxu0 0.0
        %3156 = vmatprep.subr.mxu0 0.0
        %3157 = vmatpush1.msra.mxu0 0.0
        %3158 = vmatprep.subr.mxu0 0.0
        %3159 = vmatpush1.msra.mxu0 0.0
        %3160 = vmatprep.subr.mxu0 0.0
        %3161 = vmatpush1.msra.mxu0 0.0
        %3162 = vmatprep.subr.mxu0 0.0
        %3163 = vmatpush1.msra.mxu0 0.0
        %3164 = vmatprep.subr.mxu0 0.0
        %3165 = vmatpush1.msra.mxu0 0.0
        %3166 = vmatprep.subr.mxu0 0.0
        %3167 = vmatpush1.msra.mxu0 0.0
        %3168 = vmatprep.subr.mxu0 0.0
        %3169 = vmatpush1.msra.mxu0 0.0
        %3170 = vmatprep.subr.mxu0 0.0
        %3171 = vmatpush1.msra.mxu0 0.0
        %3172 = vmatprep.subr.mxu0 0.0
        %3173 = vmatpush1.msra.mxu0 0.0
        %3174 = vmatprep.subr.mxu0 0.0
        %3175 = vmatpush1.msra.mxu0 0.0
        %3176 = vmatprep.subr.mxu0 0.0
        %3177 = vmatpush1.msra.mxu0 0.0
        %3178 = vmatprep.subr.mxu0 0.0
        %3179 = vmatpush1.msra.mxu0 0.0
        %3180 = vmatprep.subr.mxu0 0.0
        %3181 = vmatpush1.msra.mxu0 0.0
        %3182 = vmatprep.subr.mxu0 0.0
        %3183 = vmatpush1.msra.mxu0 0.0
        %3184 = vmatprep.mubr.f32.mxu0 0.0
        %3185 = vmatmul.mubr.f32.gmra.mrb[0].mxu0 %v917
        %v3186 = vpop.f32.mrb[0].mxu0
        %v3187 = vadd.f32 %v3119, %v3186
        %v3188 = vpop.f32.mrb[0].mxu0
        %3189 = vmatprep.mubr.f32.mxu0 0.0
        %3190 = vmatmul.mubr.f32.gmra.mrb[0].mxu0 %v920
        %v3191 = vpop.f32.mrb[0].mxu0
        %v3192 = vadd.f32 %v3119, %v3191
        %v3193 = vpop.f32.mrb[0].mxu0
        %3194 = vdwg.mxu0
        %3195 = vmatprep.subr.mxu0 0.0
        %3196 = vmatpush1.msra.mxu0 %v3114
        %3197 = vmatprep.subr.mxu0 0.0
        %3198 = vmatpush1.msra.mxu0 %v3115
        %3199 = vmatprep.subr.mxu0 0.0
        %3200 = vmatpush1.msra.mxu0 0.0
        %3201 = vmatprep.subr.mxu0 0.0
        %3202 = vmatpush1.msra.mxu0 0.0
        %3203 = vmatprep.subr.mxu0 0.0
        %3204 = vmatpush1.msra.mxu0 0.0
        %3205 = vmatprep.subr.mxu0 0.0
        %3206 = vmatpush1.msra.mxu0 0.0
        %3207 = vmatprep.subr.mxu0 0.0
        %3208 = vmatpush1.msra.mxu0 0.0
        %3209 = vmatprep.subr.mxu0 0.0
        %3210 = vmatpush1.msra.mxu0 0.0
        %3211 = vmatprep.subr.mxu0 0.0
        %3212 = vmatpush1.msra.mxu0 0.0
        %3213 = vmatprep.subr.mxu0 0.0
        %3214 = vmatpush1.msra.mxu0 0.0
        %3215 = vmatprep.subr.mxu0 0.0
        %3216 = vmatpush1.msra.mxu0 0.0
        %3217 = vmatprep.subr.mxu0 0.0
        %3218 = vmatpush1.msra.mxu0 0.0
        %3219 = vmatprep.subr.mxu0 0.0
        %3220 = vmatpush1.msra.mxu0 0.0
        %3221 = vmatprep.subr.mxu0 0.0
        %3222 = vmatpush1.msra.mxu0 0.0
        %3223 = vmatprep.subr.mxu0 0.0
        %3224 = vmatpush1.msra.mxu0 0.0
        %3225 = vmatprep.subr.mxu0 0.0
        %3226 = vmatpush1.msra.mxu0 0.0
        %3227 = vmatprep.subr.mxu0 0.0
        %3228 = vmatpush1.msra.mxu0 0.0
        %3229 = vmatprep.subr.mxu0 0.0
        %3230 = vmatpush1.msra.mxu0 0.0
        %3231 = vmatprep.subr.mxu0 0.0
        %3232 = vmatpush1.msra.mxu0 0.0
        %3233 = vmatprep.subr.mxu0 0.0
        %3234 = vmatpush1.msra.mxu0 0.0
        %3235 = vmatprep.subr.mxu0 0.0
        %3236 = vmatpush1.msra.mxu0 0.0
        %3237 = vmatprep.subr.mxu0 0.0
        %3238 = vmatpush1.msra.mxu0 0.0
        %3239 = vmatprep.subr.mxu0 0.0
        %3240 = vmatpush1.msra.mxu0 0.0
        %3241 = vmatprep.subr.mxu0 0.0
        %3242 = vmatpush1.msra.mxu0 0.0
        %3243 = vmatprep.subr.mxu0 0.0
        %3244 = vmatpush1.msra.mxu0 0.0
        %3245 = vmatprep.subr.mxu0 0.0
        %3246 = vmatpush1.msra.mxu0 0.0
        %3247 = vmatprep.subr.mxu0 0.0
        %3248 = vmatpush1.msra.mxu0 0.0
        %3249 = vmatprep.subr.mxu0 0.0
        %3250 = vmatpush1.msra.mxu0 0.0
        %3251 = vmatprep.subr.mxu0 0.0
        %3252 = vmatpush1.msra.mxu0 0.0
        %3253 = vmatprep.subr.mxu0 0.0
        %3254 = vmatpush1.msra.mxu0 0.0
        %3255 = vmatprep.subr.mxu0 0.0
        %3256 = vmatpush1.msra.mxu0 0.0
        %3257 = vmatprep.subr.mxu0 0.0
        %3258 = vmatpush1.msra.mxu0 0.0
        %3259 = vmatprep.mubr.f32.mxu0 0.0
        %3260 = vmatmul.mubr.f32.gmra.mrb[0].mxu0 %v1001
        %v3261 = vpop.f32.mrb[0].mxu0
        %v3262 = vadd.f32 0.0, %v3261
        %v3263 = vpop.f32.mrb[0].mxu0
        %3264 = vmatprep.mubr.f32.mxu0 0.0
        %3265 = vmatmul.mubr.f32.gmra.mrb[0].mxu0 %v1004
        %v3266 = vpop.f32.mrb[0].mxu0
        %v3267 = vadd.f32 0.0, %v3266
        %v3268 = vpop.f32.mrb[0].mxu0
        %3269 = vdwg.mxu0
        %v3270 = vadd.f32 %v3187, %v3262
        %v3271 = vadd.f32 %v3192, %v3267
        %v3272 = vmul.f32 %v3270, 0.5
        %v3273 = vmul.f32 %v3271, 0.5
        %v3274 = vmul.f32 %v3270, 0.70710677
        %v3275 = vmul.f32 %v3271, 0.70710677
        %v3276 = verf.f32.pop %v3274
        %v3277 = verf.f32.pop %v3275
        %v3278 = vadd.f32 %v3276, 1.0
        %v3279 = vadd.f32 %v3277, 1.0
        %v3280 = vmul.f32 %v3272, %v3278
        %v3281 = vmul.f32 %v3273, %v3279
        %v3282 = vld [vmem:[%s12 + $0x11] sm:$0x7]
        %v3283 = vsel %vm1211, %v3280, 0.0
        %v3284 = vsel %vm1211, %v3281, 0.0
        %v3285 = vadd.f32 %v3283, %v3284
        %v3286 = vrot.slane %v3285, 4
        %v3287 = vadd.f32 %v3285, %v3286
        %v3288 = vrot.slane %v3287, 2
        %v3289 = vadd.f32 %v3287, %v3288
        %v3290 = vrot.slane %v3289, 1
        %v3291 = vadd.f32 %v3289, %v3290
        %v3292 = vmul.f32 %v3291, %v1221
        %v3293 = vmul.f32 %v3292, %v3282
        %v3294 = vlaneseq
        %v3295 = vshrl.u32 %v3294, 7
        %v3296 = vsub.s32 2, %v3295
        %v3297 = vrot.slane %v3293, %v3296
        %v3298 = vsub.f32 %v3280, %v3297
        %v3299 = vsub.f32 %v3281, %v3297
        %v3300 = vmul.f32 %v3298, %v3298
        %v3301 = vmul.f32 %v3299, %v3299
        %v3302 = vsel %vm1211, %v3300, 0.0
        %v3303 = vsel %vm1211, %v3301, 0.0
        %v3304 = vadd.f32 %v3302, %v3303
        %v3305 = vrot.slane %v3304, 4
        %v3306 = vadd.f32 %v3304, %v3305
        %v3307 = vrot.slane %v3306, 2
        %v3308 = vadd.f32 %v3306, %v3307
        %v3309 = vrot.slane %v3308, 1
        %v3310 = vadd.f32 %v3308, %v3309
        %v3311 = vmul.f32 %v3310, %v1221
        %v3312 = vlaneseq
        %v3313 = vshrl.u32 %v3312, 7
        %v3314 = vsub.s32 0, %v3313
        %v3315 = vrot.slane %v3282, %v3314
        %v3316 = vmul.f32 %v3315, %v3298
        %v3317 = vmul.f32 %v3315, %v3299
        %v3318 = vadd.f32 %v3311, 1e-05
        %v3319 = vrsqrt.pop %v3318
        %v3320 = vmul.f32 %v3316, %v3319
        %v3321 = vmul.f32 %v3317, %v3319
        %v3322 = vlaneseq
        %v3323 = vshrl.u32 %v3322, 7
        %v3324 = vsub.s32 1, %v3323
        %v3325 = vrot.slane %v3282, %v3324
        %v3326 = vadd.f32 %v3320, %v3325
        %v3327 = vadd.f32 %v3321, %v3325
        %s3328 = scalar_lea.vmem %s7, 288
        %v3329 = vld [vmem:[%s3328] sm:$0xff]
        %v3330 = vld [vmem:[%s3328 + $0x8] sm:$0xff]
        %v3331 = vld [vmem:[%s3328 + $0x10] sm:$0xff]
        %v3332 = vld [vmem:[%s3328 + $0x18] sm:$0xff]
        %v3333 = vld [vmem:[%s12 + $0x14] sm:$0x1]
        %s3334 = scalar_lea.vmem %s7, 320
        %v3335 = vld [vmem:[%s3334] sm:$0xff]
        %v3336 = vld [vmem:[%s3334 + $0x8] sm:$0xff]
        %v3337 = vld [vmem:[%s3334 + $0x10] sm:$0xff]
        %v3338 = vld [vmem:[%s3334 + $0x18] sm:$0xff]
        %3339 = vmatprep.subr.mxu0 0.0
        %3340 = vmatpush1.msra.mxu0 %v3326
        %3341 = vmatprep.subr.mxu0 0.0
        %3342 = vmatpush1.msra.mxu0 %v3327
        %3343 = vmatprep.subr.mxu0 0.0
        %3344 = vmatpush1.msra.mxu0 0.0
        %3345 = vmatprep.subr.mxu0 0.0
        %3346 = vmatpush1.msra.mxu0 0.0
        %3347 = vmatprep.subr.mxu0 0.0
        %3348 = vmatpush1.msra.mxu0 0.0
        %3349 = vmatprep.subr.mxu0 0.0
        %3350 = vmatpush1.msra.mxu0 0.0
        %3351 = vmatprep.subr.mxu0 0.0
        %3352 = vmatpush1.msra.mxu0 0.0
        %3353 = vmatprep.subr.mxu0 0.0
        %3354 = vmatpush1.msra.mxu0 0.0
        %3355 = vmatprep.subr.mxu0 0.0
        %3356 = vmatpush1.msra.mxu0 0.0
        %3357 = vmatprep.subr.mxu0 0.0
        %3358 = vmatpush1.msra.mxu0 0.0
        %3359 = vmatprep.subr.mxu0 0.0
        %3360 = vmatpush1.msra.mxu0 0.0
        %3361 = vmatprep.subr.mxu0 0.0
        %3362 = vmatpush1.msra.mxu0 0.0
        %3363 = vmatprep.subr.mxu0 0.0
        %3364 = vmatpush1.msra.mxu0 0.0
        %3365 = vmatprep.subr.mxu0 0.0
        %3366 = vmatpush1.msra.mxu0 0.0
        %3367 = vmatprep.subr.mxu0 0.0
        %3368 = vmatpush1.msra.mxu0 0.0
        %3369 = vmatprep.subr.mxu0 0.0
        %3370 = vmatpush1.msra.mxu0 0.0
        %3371 = vmatprep.subr.mxu0 0.0
        %3372 = vmatpush1.msra.mxu0 0.0
        %3373 = vmatprep.subr.mxu0 0.0
        %3374 = vmatpush1.msra.mxu0 0.0
        %3375 = vmatprep.subr.mxu0 0.0
        %3376 = vmatpush1.msra.mxu0 0.0
        %3377 = vmatprep.subr.mxu0 0.0
        %3378 = vmatpush1.msra.mxu0 0.0
        %3379 = vmatprep.subr.mxu0 0.0
        %3380 = vmatpush1.msra.mxu0 0.0
        %3381 = vmatprep.subr.mxu0 0.0
        %3382 = vmatpush1.msra.mxu0 0.0
        %3383 = vmatprep.subr.mxu0 0.0
        %3384 = vmatpush1.msra.mxu0 0.0
        %3385 = vmatprep.subr.mxu0 0.0
        %3386 = vmatpush1.msra.mxu0 0.0
        %3387 = vmatprep.subr.mxu0 0.0
        %3388 = vmatpush1.msra.mxu0 0.0
        %3389 = vmatprep.subr.mxu0 0.0
        %3390 = vmatpush1.msra.mxu0 0.0
        %3391 = vmatprep.subr.mxu0 0.0
        %3392 = vmatpush1.msra.mxu0 0.0
        %3393 = vmatprep.subr.mxu0 0.0
        %3394 = vmatpush1.msra.mxu0 0.0
        %3395 = vmatprep.subr.mxu0 0.0
        %3396 = vmatpush1.msra.mxu0 0.0
        %3397 = vmatprep.subr.mxu0 0.0
        %3398 = vmatpush1.msra.mxu0 0.0
        %3399 = vmatprep.subr.mxu0 0.0
        %3400 = vmatpush1.msra.mxu0 0.0
        %3401 = vmatprep.subr.mxu0 0.0
        %3402 = vmatpush1.msra.mxu0 0.0
        %3403 = vmatprep.mubr.f32.mxu0 0.0
        %3404 = vmatmul.mubr.f32.gmra.mrb[0].mxu0 %v650
        %v3405 = vpop.f32.mrb[0].mxu0
        %v3406 = vadd.f32 0.0, %v3405
        %v3407 = vpop.f32.mrb[0].mxu0
        %3408 = vmatprep.mubr.f32.mxu0 0.0
        %3409 = vmatmul.mubr.f32.gmra.mrb[0].mxu0 %v653
        %v3410 = vpop.f32.mrb[0].mxu0
        %v3411 = vadd.f32 0.0, %v3410
        %v3412 = vpop.f32.mrb[0].mxu0
        %3413 = vdwg.mxu0
        %v3414 = vlaneseq
        %v3415 = vshrl.u32 %v3414, 7
        %v3416 = vsub.s32 0, %v3415
        %v3417 = vrot.slane %v3333, %v3416
        %v3419 = vsel %vm1211, %v3406, 0
        %v3422 = vsel %vm1211, %v3411, 0
        %3424 = vmatprep.subr.mxu0 0.0
        %3425 = vmatpush1.msra.mxu0 %v3329
        %3426 = vmatprep.subr.mxu0 0.0
        %3427 = vmatpush1.msra.mxu0 %v3330
        %3428 = vmatprep.subr.mxu0 0.0
        %3429 = vmatpush1.msra.mxu0 %v3331
        %3430 = vmatprep.subr.mxu0 0.0
        %3431 = vmatpush1.msra.mxu0 %v3332
        %3432 = vmatprep.subr.mxu0 0.0
        %3433 = vmatpush1.msra.mxu0 0.0
        %3434 = vmatprep.subr.mxu0 0.0
        %3435 = vmatpush1.msra.mxu0 0.0
        %3436 = vmatprep.subr.mxu0 0.0
        %3437 = vmatpush1.msra.mxu0 0.0
        %3438 = vmatprep.subr.mxu0 0.0
        %3439 = vmatpush1.msra.mxu0 0.0
        %3440 = vmatprep.subr.mxu0 0.0
        %3441 = vmatpush1.msra.mxu0 0.0
        %3442 = vmatprep.subr.mxu0 0.0
        %3443 = vmatpush1.msra.mxu0 0.0
        %3444 = vmatprep.subr.mxu0 0.0
        %3445 = vmatpush1.msra.mxu0 0.0
        %3446 = vmatprep.subr.mxu0 0.0
        %3447 = vmatpush1.msra.mxu0 0.0
        %3448 = vmatprep.subr.mxu0 0.0
        %3449 = vmatpush1.msra.mxu0 0.0
        %3450 = vmatprep.subr.mxu0 0.0
        %3451 = vmatpush1.msra.mxu0 0.0
        %3452 = vmatprep.subr.mxu0 0.0
        %3453 = vmatpush1.msra.mxu0 0.0
        %3454 = vmatprep.subr.mxu0 0.0
        %3455 = vmatpush1.msra.mxu0 0.0
        %3456 = vmatprep.subr.mxu0 0.0
        %3457 = vmatpush1.msra.mxu0 0.0
        %3458 = vmatprep.subr.mxu0 0.0
        %3459 = vmatpush1.msra.mxu0 0.0
        %3460 = vmatprep.subr.mxu0 0.0
        %3461 = vmatpush1.msra.mxu0 0.0
        %3462 = vmatprep.subr.mxu0 0.0
        %3463 = vmatpush1.msra.mxu0 0.0
        %3464 = vmatprep.subr.mxu0 0.0
        %3465 = vmatpush1.msra.mxu0 0.0
        %3466 = vmatprep.subr.mxu0 0.0
        %3467 = vmatpush1.msra.mxu0 0.0
        %3468 = vmatprep.subr.mxu0 0.0
        %3469 = vmatpush1.msra.mxu0 0.0
        %3470 = vmatprep.subr.mxu0 0.0
        %3471 = vmatpush1.msra.mxu0 0.0
        %3472 = vmatprep.subr.mxu0 0.0
        %3473 = vmatpush1.msra.mxu0 0.0
        %3474 = vmatprep.subr.mxu0 0.0
        %3475 = vmatpush1.msra.mxu0 0.0
        %3476 = vmatprep.subr.mxu0 0.0
        %3477 = vmatpush1.msra.mxu0 0.0
        %3478 = vmatprep.subr.mxu0 0.0
        %3479 = vmatpush1.msra.mxu0 0.0
        %3480 = vmatprep.subr.mxu0 0.0
        %3481 = vmatpush1.msra.mxu0 0.0
        %3482 = vmatprep.subr.mxu0 0.0
        %3483 = vmatpush1.msra.mxu0 0.0
        %3484 = vmatprep.subr.mxu0 0.0
        %3485 = vmatpush1.msra.mxu0 0.0
        %3486 = vmatprep.subr.mxu0 0.0
        %3487 = vmatpush1.msra.mxu0 0.0
        %3488 = vmatprep.mubr.f32.mxu0 0.0
        %3489 = vmatmul.mubr.f32.gmra.mrb[0].mxu0 %v3419
        %v3490 = vpop.f32.mrb[0].mxu0
        %v3491 = vadd.f32 %v3417, %v3490
        %v3492 = vpop.f32.mrb[0].mxu0
        %3493 = vmatprep.mubr.f32.mxu0 0.0
        %3494 = vmatmul.mubr.f32.gmra.mrb[0].mxu0 %v3422
        %v3495 = vpop.f32.mrb[0].mxu0
        %v3496 = vadd.f32 %v3417, %v3495
        %v3497 = vpop.f32.mrb[0].mxu0
        %3498 = vdwg.mxu0
        %v3500 = vsel %vm1211, %v3326, 0
        %v3503 = vsel %vm1211, %v3327, 0
        %3505 = vmatprep.subr.mxu0 0.0
        %3506 = vmatpush1.msra.mxu0 %v3335
        %3507 = vmatprep.subr.mxu0 0.0
        %3508 = vmatpush1.msra.mxu0 %v3336
        %3509 = vmatprep.subr.mxu0 0.0
        %3510 = vmatpush1.msra.mxu0 %v3337
        %3511 = vmatprep.subr.mxu0 0.0
        %3512 = vmatpush1.msra.mxu0 %v3338
        %3513 = vmatprep.subr.mxu0 0.0
        %3514 = vmatpush1.msra.mxu0 0.0
        %3515 = vmatprep.subr.mxu0 0.0
        %3516 = vmatpush1.msra.mxu0 0.0
        %3517 = vmatprep.subr.mxu0 0.0
        %3518 = vmatpush1.msra.mxu0 0.0
        %3519 = vmatprep.subr.mxu0 0.0
        %3520 = vmatpush1.msra.mxu0 0.0
        %3521 = vmatprep.subr.mxu0 0.0
        %3522 = vmatpush1.msra.mxu0 0.0
        %3523 = vmatprep.subr.mxu0 0.0
        %3524 = vmatpush1.msra.mxu0 0.0
        %3525 = vmatprep.subr.mxu0 0.0
        %3526 = vmatpush1.msra.mxu0 0.0
        %3527 = vmatprep.subr.mxu0 0.0
        %3528 = vmatpush1.msra.mxu0 0.0
        %3529 = vmatprep.subr.mxu0 0.0
        %3530 = vmatpush1.msra.mxu0 0.0
        %3531 = vmatprep.subr.mxu0 0.0
        %3532 = vmatpush1.msra.mxu0 0.0
        %3533 = vmatprep.subr.mxu0 0.0
        %3534 = vmatpush1.msra.mxu0 0.0
        %3535 = vmatprep.subr.mxu0 0.0
        %3536 = vmatpush1.msra.mxu0 0.0
        %3537 = vmatprep.subr.mxu0 0.0
        %3538 = vmatpush1.msra.mxu0 0.0
        %3539 = vmatprep.subr.mxu0 0.0
        %3540 = vmatpush1.msra.mxu0 0.0
        %3541 = vmatprep.subr.mxu0 0.0
        %3542 = vmatpush1.msra.mxu0 0.0
        %3543 = vmatprep.subr.mxu0 0.0
        %3544 = vmatpush1.msra.mxu0 0.0
        %3545 = vmatprep.subr.mxu0 0.0
        %3546 = vmatpush1.msra.mxu0 0.0
        %3547 = vmatprep.subr.mxu0 0.0
        %3548 = vmatpush1.msra.mxu0 0.0
        %3549 = vmatprep.subr.mxu0 0.0
        %3550 = vmatpush1.msra.mxu0 0.0
        %3551 = vmatprep.subr.mxu0 0.0
        %3552 = vmatpush1.msra.mxu0 0.0
        %3553 = vmatprep.subr.mxu0 0.0
        %3554 = vmatpush1.msra.mxu0 0.0
        %3555 = vmatprep.subr.mxu0 0.0
        %3556 = vmatpush1.msra.mxu0 0.0
        %3557 = vmatprep.subr.mxu0 0.0
        %3558 = vmatpush1.msra.mxu0 0.0
        %3559 = vmatprep.subr.mxu0 0.0
        %3560 = vmatpush1.msra.mxu0 0.0
        %3561 = vmatprep.subr.mxu0 0.0
        %3562 = vmatpush1.msra.mxu0 0.0
        %3563 = vmatprep.subr.mxu0 0.0
        %3564 = vmatpush1.msra.mxu0 0.0
        %3565 = vmatprep.subr.mxu0 0.0
        %3566 = vmatpush1.msra.mxu0 0.0
        %3567 = vmatprep.subr.mxu0 0.0
        %3568 = vmatpush1.msra.mxu0 0.0
        %3569 = vmatprep.mubr.f32.mxu0 0.0
        %3570 = vmatmul.mubr.f32.gmra.mrb[0].mxu0 %v3500
        %v3571 = vpop.f32.mrb[0].mxu0
        %v3572 = vadd.f32 0.0, %v3571
        %v3573 = vpop.f32.mrb[0].mxu0
        %3574 = vmatprep.mubr.f32.mxu0 0.0
        %3575 = vmatmul.mubr.f32.gmra.mrb[0].mxu0 %v3503
        %v3576 = vpop.f32.mrb[0].mxu0
        %v3577 = vadd.f32 0.0, %v3576
        %v3578 = vpop.f32.mrb[0].mxu0
        %3579 = vdwg.mxu0
        %v3580 = vadd.f32 %v3491, %v3572
        %v3581 = vadd.f32 %v3496, %v3577
        %v3582 = vmul.f32 %v3580, 0.5
        %v3583 = vmul.f32 %v3581, 0.5
        %v3584 = vmul.f32 %v3580, 0.70710677
        %v3585 = vmul.f32 %v3581, 0.70710677
        %v3586 = verf.f32.pop %v3584
        %v3587 = verf.f32.pop %v3585
        %v3588 = vadd.f32 %v3586, 1.0
        %v3589 = vadd.f32 %v3587, 1.0
        %v3590 = vmul.f32 %v3582, %v3588
        %v3591 = vmul.f32 %v3583, %v3589
        %v3592 = vld [vmem:[%s12 + $0x15] sm:$0x7]
        %v3593 = vsel %vm1211, %v3590, 0.0
        %v3594 = vsel %vm1211, %v3591, 0.0
        %v3595 = vadd.f32 %v3593, %v3594
        %v3596 = vrot.slane %v3595, 4
        %v3597 = vadd.f32 %v3595, %v3596
        %v3598 = vrot.slane %v3597, 2
        %v3599 = vadd.f32 %v3597, %v3598
        %v3600 = vrot.slane %v3599, 1
        %v3601 = vadd.f32 %v3599, %v3600
        %v3602 = vmul.f32 %v3601, %v1221
        %v3603 = vmul.f32 %v3602, %v3592
        %v3604 = vlaneseq
        %v3605 = vshrl.u32 %v3604, 7
        %v3606 = vsub.s32 2, %v3605
        %v3607 = vrot.slane %v3603, %v3606
        %v3608 = vsub.f32 %v3590, %v3607
        %v3609 = vsub.f32 %v3591, %v3607
        %v3610 = vmul.f32 %v3608, %v3608
        %v3611 = vmul.f32 %v3609, %v3609
        %v3612 = vsel %vm1211, %v3610, 0.0
        %v3613 = vsel %vm1211, %v3611, 0.0
        %v3614 = vadd.f32 %v3612, %v3613
        %v3615 = vrot.slane %v3614, 4
        %v3616 = vadd.f32 %v3614, %v3615
        %v3617 = vrot.slane %v3616, 2
        %v3618 = vadd.f32 %v3616, %v3617
        %v3619 = vrot.slane %v3618, 1
        %v3620 = vadd.f32 %v3618, %v3619
        %v3621 = vmul.f32 %v3620, %v1221
        %v3622 = vlaneseq
        %v3623 = vshrl.u32 %v3622, 7
        %v3624 = vsub.s32 0, %v3623
        %v3625 = vrot.slane %v3592, %v3624
        %v3626 = vmul.f32 %v3625, %v3608
        %v3627 = vmul.f32 %v3625, %v3609
        %v3628 = vadd.f32 %v3621, 1e-05
        %v3629 = vrsqrt.pop %v3628
        %v3630 = vmul.f32 %v3626, %v3629
        %v3631 = vmul.f32 %v3627, %v3629
        %v3632 = vlaneseq
        %v3633 = vshrl.u32 %v3632, 7
        %v3634 = vsub.s32 1, %v3633
        %v3635 = vrot.slane %v3592, %v3634
        %v3636 = vadd.f32 %v3630, %v3635
        %v3637 = vadd.f32 %v3631, %v3635
        %v3638 = vadd.f32 %v3636, %v3326
        %v3639 = vadd.f32 %v3637, %v3327
        %s3640 = scalar_lea.vmem %s7, 352
        %v3641 = vld [vmem:[%s3640] sm:$0xff]
        %v3642 = vld [vmem:[%s3640 + $0x8] sm:$0xff]
        %v3643 = vld [vmem:[%s3640 + $0x10] sm:$0xff]
        %v3644 = vld [vmem:[%s3640 + $0x18] sm:$0xff]
        %v3645 = vld [vmem:[%s12 + $0x18] sm:$0x1]
        %s3646 = scalar_lea.vmem %s7, 384
        %v3647 = vld [vmem:[%s3646] sm:$0xff]
        %v3648 = vld [vmem:[%s3646 + $0x8] sm:$0xff]
        %v3649 = vld [vmem:[%s3646 + $0x10] sm:$0xff]
        %v3650 = vld [vmem:[%s3646 + $0x18] sm:$0xff]
        %3651 = vmatprep.subr.mxu0 0.0
        %3652 = vmatpush1.msra.mxu0 %v3638
        %3653 = vmatprep.subr.mxu0 0.0
        %3654 = vmatpush1.msra.mxu0 %v3639
        %3655 = vmatprep.subr.mxu0 0.0
        %3656 = vmatpush1.msra.mxu0 0.0
        %3657 = vmatprep.subr.mxu0 0.0
        %3658 = vmatpush1.msra.mxu0 0.0
        %3659 = vmatprep.subr.mxu0 0.0
        %3660 = vmatpush1.msra.mxu0 0.0
        %3661 = vmatprep.subr.mxu0 0.0
        %3662 = vmatpush1.msra.mxu0 0.0
        %3663 = vmatprep.subr.mxu0 0.0
        %3664 = vmatpush1.msra.mxu0 0.0
        %3665 = vmatprep.subr.mxu0 0.0
        %3666 = vmatpush1.msra.mxu0 0.0
        %3667 = vmatprep.subr.mxu0 0.0
        %3668 = vmatpush1.msra.mxu0 0.0
        %3669 = vmatprep.subr.mxu0 0.0
        %3670 = vmatpush1.msra.mxu0 0.0
        %3671 = vmatprep.subr.mxu0 0.0
        %3672 = vmatpush1.msra.mxu0 0.0
        %3673 = vmatprep.subr.mxu0 0.0
        %3674 = vmatpush1.msra.mxu0 0.0
        %3675 = vmatprep.subr.mxu0 0.0
        %3676 = vmatpush1.msra.mxu0 0.0
        %3677 = vmatprep.subr.mxu0 0.0
        %3678 = vmatpush1.msra.mxu0 0.0
        %3679 = vmatprep.subr.mxu0 0.0
        %3680 = vmatpush1.msra.mxu0 0.0
        %3681 = vmatprep.subr.mxu0 0.0
        %3682 = vmatpush1.msra.mxu0 0.0
        %3683 = vmatprep.subr.mxu0 0.0
        %3684 = vmatpush1.msra.mxu0 0.0
        %3685 = vmatprep.subr.mxu0 0.0
        %3686 = vmatpush1.msra.mxu0 0.0
        %3687 = vmatprep.subr.mxu0 0.0
        %3688 = vmatpush1.msra.mxu0 0.0
        %3689 = vmatprep.subr.mxu0 0.0
        %3690 = vmatpush1.msra.mxu0 0.0
        %3691 = vmatprep.subr.mxu0 0.0
        %3692 = vmatpush1.msra.mxu0 0.0
        %3693 = vmatprep.subr.mxu0 0.0
        %3694 = vmatpush1.msra.mxu0 0.0
        %3695 = vmatprep.subr.mxu0 0.0
        %3696 = vmatpush1.msra.mxu0 0.0
        %3697 = vmatprep.subr.mxu0 0.0
        %3698 = vmatpush1.msra.mxu0 0.0
        %3699 = vmatprep.subr.mxu0 0.0
        %3700 = vmatpush1.msra.mxu0 0.0
        %3701 = vmatprep.subr.mxu0 0.0
        %3702 = vmatpush1.msra.mxu0 0.0
        %3703 = vmatprep.subr.mxu0 0.0
        %3704 = vmatpush1.msra.mxu0 0.0
        %3705 = vmatprep.subr.mxu0 0.0
        %3706 = vmatpush1.msra.mxu0 0.0
        %3707 = vmatprep.subr.mxu0 0.0
        %3708 = vmatpush1.msra.mxu0 0.0
        %3709 = vmatprep.subr.mxu0 0.0
        %3710 = vmatpush1.msra.mxu0 0.0
        %3711 = vmatprep.subr.mxu0 0.0
        %3712 = vmatpush1.msra.mxu0 0.0
        %3713 = vmatprep.subr.mxu0 0.0
        %3714 = vmatpush1.msra.mxu0 0.0
        %3715 = vmatprep.mubr.f32.mxu0 0.0
        %3716 = vmatmul.mubr.f32.gmra.mrb[0].mxu0 %v650
        %v3717 = vpop.f32.mrb[0].mxu0
        %v3718 = vadd.f32 0.0, %v3717
        %v3719 = vpop.f32.mrb[0].mxu0
        %3720 = vmatprep.mubr.f32.mxu0 0.0
        %3721 = vmatmul.mubr.f32.gmra.mrb[0].mxu0 %v653
        %v3722 = vpop.f32.mrb[0].mxu0
        %v3723 = vadd.f32 0.0, %v3722
        %v3724 = vpop.f32.mrb[0].mxu0
        %3725 = vdwg.mxu0
        %v3726 = vlaneseq
        %v3727 = vshrl.u32 %v3726, 7
        %v3728 = vsub.s32 0, %v3727
        %v3729 = vrot.slane %v3645, %v3728
        %v3731 = vsel %vm1211, %v3718, 0
        %v3734 = vsel %vm1211, %v3723, 0
        %3736 = vmatprep.subr.mxu0 0.0
        %3737 = vmatpush1.msra.mxu0 %v3641
        %3738 = vmatprep.subr.mxu0 0.0
        %3739 = vmatpush1.msra.mxu0 %v3642
        %3740 = vmatprep.subr.mxu0 0.0
        %3741 = vmatpush1.msra.mxu0 %v3643
        %3742 = vmatprep.subr.mxu0 0.0
        %3743 = vmatpush1.msra.mxu0 %v3644
        %3744 = vmatprep.subr.mxu0 0.0
        %3745 = vmatpush1.msra.mxu0 0.0
        %3746 = vmatprep.subr.mxu0 0.0
        %3747 = vmatpush1.msra.mxu0 0.0
        %3748 = vmatprep.subr.mxu0 0.0
        %3749 = vmatpush1.msra.mxu0 0.0
        %3750 = vmatprep.subr.mxu0 0.0
        %3751 = vmatpush1.msra.mxu0 0.0
        %3752 = vmatprep.subr.mxu0 0.0
        %3753 = vmatpush1.msra.mxu0 0.0
        %3754 = vmatprep.subr.mxu0 0.0
        %3755 = vmatpush1.msra.mxu0 0.0
        %3756 = vmatprep.subr.mxu0 0.0
        %3757 = vmatpush1.msra.mxu0 0.0
        %3758 = vmatprep.subr.mxu0 0.0
        %3759 = vmatpush1.msra.mxu0 0.0
        %3760 = vmatprep.subr.mxu0 0.0
        %3761 = vmatpush1.msra.mxu0 0.0
        %3762 = vmatprep.subr.mxu0 0.0
        %3763 = vmatpush1.msra.mxu0 0.0
        %3764 = vmatprep.subr.mxu0 0.0
        %3765 = vmatpush1.msra.mxu0 0.0
        %3766 = vmatprep.subr.mxu0 0.0
        %3767 = vmatpush1.msra.mxu0 0.0
        %3768 = vmatprep.subr.mxu0 0.0
        %3769 = vmatpush1.msra.mxu0 0.0
        %3770 = vmatprep.subr.mxu0 0.0
        %3771 = vmatpush1.msra.mxu0 0.0
        %3772 = vmatprep.subr.mxu0 0.0
        %3773 = vmatpush1.msra.mxu0 0.0
        %3774 = vmatprep.subr.mxu0 0.0
        %3775 = vmatpush1.msra.mxu0 0.0
        %3776 = vmatprep.subr.mxu0 0.0
        %3777 = vmatpush1.msra.mxu0 0.0
        %3778 = vmatprep.subr.mxu0 0.0
        %3779 = vmatpush1.msra.mxu0 0.0
        %3780 = vmatprep.subr.mxu0 0.0
        %3781 = vmatpush1.msra.mxu0 0.0
        %3782 = vmatprep.subr.mxu0 0.0
        %3783 = vmatpush1.msra.mxu0 0.0
        %3784 = vmatprep.subr.mxu0 0.0
        %3785 = vmatpush1.msra.mxu0 0.0
        %3786 = vmatprep.subr.mxu0 0.0
        %3787 = vmatpush1.msra.mxu0 0.0
        %3788 = vmatprep.subr.mxu0 0.0
        %3789 = vmatpush1.msra.mxu0 0.0
        %3790 = vmatprep.subr.mxu0 0.0
        %3791 = vmatpush1.msra.mxu0 0.0
        %3792 = vmatprep.subr.mxu0 0.0
        %3793 = vmatpush1.msra.mxu0 0.0
        %3794 = vmatprep.subr.mxu0 0.0
        %3795 = vmatpush1.msra.mxu0 0.0
        %3796 = vmatprep.subr.mxu0 0.0
        %3797 = vmatpush1.msra.mxu0 0.0
        %3798 = vmatprep.subr.mxu0 0.0
        %3799 = vmatpush1.msra.mxu0 0.0
        %3800 = vmatprep.mubr.f32.mxu0 0.0
        %3801 = vmatmul.mubr.f32.gmra.mrb[0].mxu0 %v3731
        %v3802 = vpop.f32.mrb[0].mxu0
        %v3803 = vadd.f32 %v3729, %v3802
        %v3804 = vpop.f32.mrb[0].mxu0
        %3805 = vmatprep.mubr.f32.mxu0 0.0
        %3806 = vmatmul.mubr.f32.gmra.mrb[0].mxu0 %v3734
        %v3807 = vpop.f32.mrb[0].mxu0
        %v3808 = vadd.f32 %v3729, %v3807
        %v3809 = vpop.f32.mrb[0].mxu0
        %3810 = vdwg.mxu0
        %v3812 = vsel %vm1211, %v3638, 0
        %v3815 = vsel %vm1211, %v3639, 0
        %3817 = vmatprep.subr.mxu0 0.0
        %3818 = vmatpush1.msra.mxu0 %v3647
        %3819 = vmatprep.subr.mxu0 0.0
        %3820 = vmatpush1.msra.mxu0 %v3648
        %3821 = vmatprep.subr.mxu0 0.0
        %3822 = vmatpush1.msra.mxu0 %v3649
        %3823 = vmatprep.subr.mxu0 0.0
        %3824 = vmatpush1.msra.mxu0 %v3650
        %3825 = vmatprep.subr.mxu0 0.0
        %3826 = vmatpush1.msra.mxu0 0.0
        %3827 = vmatprep.subr.mxu0 0.0
        %3828 = vmatpush1.msra.mxu0 0.0
        %3829 = vmatprep.subr.mxu0 0.0
        %3830 = vmatpush1.msra.mxu0 0.0
        %3831 = vmatprep.subr.mxu0 0.0
        %3832 = vmatpush1.msra.mxu0 0.0
        %3833 = vmatprep.subr.mxu0 0.0
        %3834 = vmatpush1.msra.mxu0 0.0
        %3835 = vmatprep.subr.mxu0 0.0
        %3836 = vmatpush1.msra.mxu0 0.0
        %3837 = vmatprep.subr.mxu0 0.0
        %3838 = vmatpush1.msra.mxu0 0.0
        %3839 = vmatprep.subr.mxu0 0.0
        %3840 = vmatpush1.msra.mxu0 0.0
        %3841 = vmatprep.subr.mxu0 0.0
        %3842 = vmatpush1.msra.mxu0 0.0
        %3843 = vmatprep.subr.mxu0 0.0
        %3844 = vmatpush1.msra.mxu0 0.0
        %3845 = vmatprep.subr.mxu0 0.0
        %3846 = vmatpush1.msra.mxu0 0.0
        %3847 = vmatprep.subr.mxu0 0.0
        %3848 = vmatpush1.msra.mxu0 0.0
        %3849 = vmatprep.subr.mxu0 0.0
        %3850 = vmatpush1.msra.mxu0 0.0
        %3851 = vmatprep.subr.mxu0 0.0
        %3852 = vmatpush1.msra.mxu0 0.0
        %3853 = vmatprep.subr.mxu0 0.0
        %3854 = vmatpush1.msra.mxu0 0.0
        %3855 = vmatprep.subr.mxu0 0.0
        %3856 = vmatpush1.msra.mxu0 0.0
        %3857 = vmatprep.subr.mxu0 0.0
        %3858 = vmatpush1.msra.mxu0 0.0
        %3859 = vmatprep.subr.mxu0 0.0
        %3860 = vmatpush1.msra.mxu0 0.0
        %3861 = vmatprep.subr.mxu0 0.0
        %3862 = vmatpush1.msra.mxu0 0.0
        %3863 = vmatprep.subr.mxu0 0.0
        %3864 = vmatpush1.msra.mxu0 0.0
        %3865 = vmatprep.subr.mxu0 0.0
        %3866 = vmatpush1.msra.mxu0 0.0
        %3867 = vmatprep.subr.mxu0 0.0
        %3868 = vmatpush1.msra.mxu0 0.0
        %3869 = vmatprep.subr.mxu0 0.0
        %3870 = vmatpush1.msra.mxu0 0.0
        %3871 = vmatprep.subr.mxu0 0.0
        %3872 = vmatpush1.msra.mxu0 0.0
        %3873 = vmatprep.subr.mxu0 0.0
        %3874 = vmatpush1.msra.mxu0 0.0
        %3875 = vmatprep.subr.mxu0 0.0
        %3876 = vmatpush1.msra.mxu0 0.0
        %3877 = vmatprep.subr.mxu0 0.0
        %3878 = vmatpush1.msra.mxu0 0.0
        %3879 = vmatprep.subr.mxu0 0.0
        %3880 = vmatpush1.msra.mxu0 0.0
        %3881 = vmatprep.mubr.f32.mxu0 0.0
        %3882 = vmatmul.mubr.f32.gmra.mrb[0].mxu0 %v3812
        %v3883 = vpop.f32.mrb[0].mxu0
        %v3884 = vadd.f32 0.0, %v3883
        %v3885 = vpop.f32.mrb[0].mxu0
        %3886 = vmatprep.mubr.f32.mxu0 0.0
        %3887 = vmatmul.mubr.f32.gmra.mrb[0].mxu0 %v3815
        %v3888 = vpop.f32.mrb[0].mxu0
        %v3889 = vadd.f32 0.0, %v3888
        %v3890 = vpop.f32.mrb[0].mxu0
        %3891 = vdwg.mxu0
        %v3892 = vadd.f32 %v3803, %v3884
        %v3893 = vadd.f32 %v3808, %v3889
        %v3894 = vmul.f32 %v3892, 0.5
        %v3895 = vmul.f32 %v3893, 0.5
        %v3896 = vmul.f32 %v3892, 0.70710677
        %v3897 = vmul.f32 %v3893, 0.70710677
        %v3898 = verf.f32.pop %v3896
        %v3899 = verf.f32.pop %v3897
        %v3900 = vadd.f32 %v3898, 1.0
        %v3901 = vadd.f32 %v3899, 1.0
        %v3902 = vmul.f32 %v3894, %v3900
        %v3903 = vmul.f32 %v3895, %v3901
        %v3904 = vld [vmem:[%s12 + $0x19] sm:$0x7]
        %v3905 = vsel %vm1211, %v3902, 0.0
        %v3906 = vsel %vm1211, %v3903, 0.0
        %v3907 = vadd.f32 %v3905, %v3906
        %v3908 = vrot.slane %v3907, 4
        %v3909 = vadd.f32 %v3907, %v3908
        %v3910 = vrot.slane %v3909, 2
        %v3911 = vadd.f32 %v3909, %v3910
        %v3912 = vrot.slane %v3911, 1
        %v3913 = vadd.f32 %v3911, %v3912
        %v3914 = vmul.f32 %v3913, %v1221
        %v3915 = vmul.f32 %v3914, %v3904
        %v3916 = vlaneseq
        %v3917 = vshrl.u32 %v3916, 7
        %v3918 = vsub.s32 2, %v3917
        %v3919 = vrot.slane %v3915, %v3918
        %v3920 = vsub.f32 %v3902, %v3919
        %v3921 = vsub.f32 %v3903, %v3919
        %v3922 = vmul.f32 %v3920, %v3920
        %v3923 = vmul.f32 %v3921, %v3921
        %v3924 = vsel %vm1211, %v3922, 0.0
        %v3925 = vsel %vm1211, %v3923, 0.0
        %v3926 = vadd.f32 %v3924, %v3925
        %v3927 = vrot.slane %v3926, 4
        %v3928 = vadd.f32 %v3926, %v3927
        %v3929 = vrot.slane %v3928, 2
        %v3930 = vadd.f32 %v3928, %v3929
        %v3931 = vrot.slane %v3930, 1
        %v3932 = vadd.f32 %v3930, %v3931
        %v3933 = vmul.f32 %v3932, %v1221
        %v3934 = vlaneseq
        %v3935 = vshrl.u32 %v3934, 7
        %v3936 = vsub.s32 0, %v3935
        %v3937 = vrot.slane %v3904, %v3936
        %v3938 = vmul.f32 %v3937, %v3920
        %v3939 = vmul.f32 %v3937, %v3921
        %v3940 = vadd.f32 %v3933, 1e-05
        %v3941 = vrsqrt.pop %v3940
        %v3942 = vmul.f32 %v3938, %v3941
        %v3943 = vmul.f32 %v3939, %v3941
        %v3944 = vlaneseq
        %v3945 = vshrl.u32 %v3944, 7
        %v3946 = vsub.s32 1, %v3945
        %v3947 = vrot.slane %v3904, %v3946
        %v3948 = vadd.f32 %v3942, %v3947
        %v3949 = vadd.f32 %v3943, %v3947
        %v3950 = vadd.f32 %v3948, %v3638
        %v3951 = vadd.f32 %v3949, %v3639
        %v3952 = vld [vmem:[%s12 + $0x1c] sm:$0x1]
        %v3953 = vlaneseq
        %v3954 = vshrl.u32 %v3953, 7
        %v3955 = vsub.s32 0, %v3954
        %v3956 = vrot.slane %v3952, %v3955
        %v3957 = vmul.f32 %v3956, %v3326
        %v3958 = vmul.f32 %v3956, %v3327
        %v3959 = vtanh.pop %v3957
        %v3960 = vtanh.pop %v3958
        %v3961 = vld [vmem:[%s12 + $0x1d] sm:$0x1]
        %v3962 = vlaneseq
        %v3963 = vshrl.u32 %v3962, 7
        %v3964 = vsub.s32 0, %v3963
        %v3965 = vrot.slane %v3961, %v3964
        %v3966 = vmul.f32 %v3959, %v3965
        %v3967 = vmul.f32 %v3960, %v3965
        %v3968 = vld [vmem:[%s12 + $0x20] sm:$0x1]
        %v3969 = vlaneseq
        %v3970 = vshrl.u32 %v3969, 7
        %v3971 = vsub.s32 0, %v3970
        %v3972 = vrot.slane %v3968, %v3971
        %v3973 = vadd.f32 %v3966, %v3972
        %v3974 = vadd.f32 %v3967, %v3972
        %v3975 = vmul.f32 %v3956, %v3638
        %v3976 = vmul.f32 %v3956, %v3639
        %v3977 = vtanh.pop %v3975
        %v3978 = vtanh.pop %v3976
        %v3979 = vld [vmem:[%s12 + $0x1e] sm:$0x1]
        %v3980 = vlaneseq
        %v3981 = vshrl.u32 %v3980, 7
        %v3982 = vsub.s32 0, %v3981
        %v3983 = vrot.slane %v3979, %v3982
        %v3984 = vmul.f32 %v3977, %v3983
        %v3985 = vmul.f32 %v3978, %v3983
        %v3986 = vld [vmem:[%s12 + $0x21] sm:$0x1]
        %v3987 = vlaneseq
        %v3988 = vshrl.u32 %v3987, 7
        %v3989 = vsub.s32 0, %v3988
        %v3990 = vrot.slane %v3986, %v3989
        %v3991 = vadd.f32 %v3984, %v3990
        %v3992 = vadd.f32 %v3985, %v3990
        %v3993 = vmul.f32 %v3956, %v3950
        %v3994 = vmul.f32 %v3956, %v3951
        %v3995 = vtanh.pop %v3993
        %v3996 = vtanh.pop %v3994
        %v3997 = vld [vmem:[%s12 + $0x1f] sm:$0x1]
        %v3998 = vlaneseq
        %v3999 = vshrl.u32 %v3998, 7
        %v4000 = vsub.s32 0, %v3999
        %v4001 = vrot.slane %v3997, %v4000
        %v4002 = vmul.f32 %v3995, %v4001
        %v4003 = vmul.f32 %v3996, %v4001
        %v4004 = vld [vmem:[%s12 + $0x22] sm:$0x1]
        %v4005 = vlaneseq
        %v4006 = vshrl.u32 %v4005, 7
        %v4007 = vsub.s32 0, %v4006
        %v4008 = vrot.slane %v4004, %v4007
        %v4009 = vadd.f32 %v4002, %v4008
        %v4010 = vadd.f32 %v4003, %v4008
        %s4011 = scalar_lea.vmem %s7, 416
        %v4012 = vld [vmem:[%s4011] sm:$0xff]
        %v4013 = vld [vmem:[%s4011 + $0x8] sm:$0xff]
        %v4014 = vld [vmem:[%s4011 + $0x10] sm:$0xff]
        %v4015 = vld [vmem:[%s4011 + $0x18] sm:$0xff]
        %s4016 = scalar_lea.vmem %s7, 448
        %v4017 = vld [vmem:[%s4016] sm:$0xff]
        %v4018 = vld [vmem:[%s4016 + $0x8] sm:$0xff]
        %v4019 = vld [vmem:[%s4016 + $0x10] sm:$0xff]
        %v4020 = vld [vmem:[%s4016 + $0x18] sm:$0xff]
        %v4022 = vsel %vm1211, %v3991, 0
        %v4025 = vsel %vm1211, %v3992, 0
        %4027 = vmatprep.subr.mxu0 0.0
        %4028 = vmatpush1.msra.mxu0 %v4017
        %4029 = vmatprep.subr.mxu0 0.0
        %4030 = vmatpush1.msra.mxu0 %v4018
        %4031 = vmatprep.subr.mxu0 0.0
        %4032 = vmatpush1.msra.mxu0 %v4019
        %4033 = vmatprep.subr.mxu0 0.0
        %4034 = vmatpush1.msra.mxu0 %v4020
        %4035 = vmatprep.subr.mxu0 0.0
        %4036 = vmatpush1.msra.mxu0 0.0
        %4037 = vmatprep.subr.mxu0 0.0
        %4038 = vmatpush1.msra.mxu0 0.0
        %4039 = vmatprep.subr.mxu0 0.0
        %4040 = vmatpush1.msra.mxu0 0.0
        %4041 = vmatprep.subr.mxu0 0.0
        %4042 = vmatpush1.msra.mxu0 0.0
        %4043 = vmatprep.subr.mxu0 0.0
        %4044 = vmatpush1.msra.mxu0 0.0
        %4045 = vmatprep.subr.mxu0 0.0
        %4046 = vmatpush1.msra.mxu0 0.0
        %4047 = vmatprep.subr.mxu0 0.0
        %4048 = vmatpush1.msra.mxu0 0.0
        %4049 = vmatprep.subr.mxu0 0.0
        %4050 = vmatpush1.msra.mxu0 0.0
        %4051 = vmatprep.subr.mxu0 0.0
        %4052 = vmatpush1.msra.mxu0 0.0
        %4053 = vmatprep.subr.mxu0 0.0
        %4054 = vmatpush1.msra.mxu0 0.0
        %4055 = vmatprep.subr.mxu0 0.0
        %4056 = vmatpush1.msra.mxu0 0.0
        %4057 = vmatprep.subr.mxu0 0.0
        %4058 = vmatpush1.msra.mxu0 0.0
        %4059 = vmatprep.subr.mxu0 0.0
        %4060 = vmatpush1.msra.mxu0 0.0
        %4061 = vmatprep.subr.mxu0 0.0
        %4062 = vmatpush1.msra.mxu0 0.0
        %4063 = vmatprep.subr.mxu0 0.0
        %4064 = vmatpush1.msra.mxu0 0.0
        %4065 = vmatprep.subr.mxu0 0.0
        %4066 = vmatpush1.msra.mxu0 0.0
        %4067 = vmatprep.subr.mxu0 0.0
        %4068 = vmatpush1.msra.mxu0 0.0
        %4069 = vmatprep.subr.mxu0 0.0
        %4070 = vmatpush1.msra.mxu0 0.0
        %4071 = vmatprep.subr.mxu0 0.0
        %4072 = vmatpush1.msra.mxu0 0.0
        %4073 = vmatprep.subr.mxu0 0.0
        %4074 = vmatpush1.msra.mxu0 0.0
        %4075 = vmatprep.subr.mxu0 0.0
        %4076 = vmatpush1.msra.mxu0 0.0
        %4077 = vmatprep.subr.mxu0 0.0
        %4078 = vmatpush1.msra.mxu0 0.0
        %4079 = vmatprep.subr.mxu0 0.0
        %4080 = vmatpush1.msra.mxu0 0.0
        %4081 = vmatprep.subr.mxu0 0.0
        %4082 = vmatpush1.msra.mxu0 0.0
        %4083 = vmatprep.subr.mxu0 0.0
        %4084 = vmatpush1.msra.mxu0 0.0
        %4085 = vmatprep.subr.mxu0 0.0
        %4086 = vmatpush1.msra.mxu0 0.0
        %4087 = vmatprep.subr.mxu0 0.0
        %4088 = vmatpush1.msra.mxu0 0.0
        %4089 = vmatprep.subr.mxu0 0.0
        %4090 = vmatpush1.msra.mxu0 0.0
        %4091 = vmatprep.mubr.f32.mxu0 0.0
        %4092 = vmatmul.mubr.f32.gmra.mrb[0].mxu0 %v4022
        %v4093 = vpop.f32.mrb[0].mxu0
        %v4094 = vadd.f32 0.0, %v4093
        %v4095 = vpop.f32.mrb[0].mxu0
        %4096 = vmatprep.mubr.f32.mxu0 0.0
        %4097 = vmatmul.mubr.f32.gmra.mrb[0].mxu0 %v4025
        %v4098 = vpop.f32.mrb[0].mxu0
        %v4099 = vadd.f32 0.0, %v4098
        %v4100 = vpop.f32.mrb[0].mxu0
        %4101 = vdwg.mxu0
        %v4103 = vsel %vm1211, %v3973, 0
        %v4106 = vsel %vm1211, %v3974, 0
        %4108 = vmatprep.subr.mxu0 0.0
        %4109 = vmatpush1.msra.mxu0 %v4012
        %4110 = vmatprep.subr.mxu0 0.0
        %4111 = vmatpush1.msra.mxu0 %v4013
        %4112 = vmatprep.subr.mxu0 0.0
        %4113 = vmatpush1.msra.mxu0 %v4014
        %4114 = vmatprep.subr.mxu0 0.0
        %4115 = vmatpush1.msra.mxu0 %v4015
        %4116 = vmatprep.subr.mxu0 0.0
        %4117 = vmatpush1.msra.mxu0 0.0
        %4118 = vmatprep.subr.mxu0 0.0
        %4119 = vmatpush1.msra.mxu0 0.0
        %4120 = vmatprep.subr.mxu0 0.0
        %4121 = vmatpush1.msra.mxu0 0.0
        %4122 = vmatprep.subr.mxu0 0.0
        %4123 = vmatpush1.msra.mxu0 0.0
        %4124 = vmatprep.subr.mxu0 0.0
        %4125 = vmatpush1.msra.mxu0 0.0
        %4126 = vmatprep.subr.mxu0 0.0
        %4127 = vmatpush1.msra.mxu0 0.0
        %4128 = vmatprep.subr.mxu0 0.0
        %4129 = vmatpush1.msra.mxu0 0.0
        %4130 = vmatprep.subr.mxu0 0.0
        %4131 = vmatpush1.msra.mxu0 0.0
        %4132 = vmatprep.subr.mxu0 0.0
        %4133 = vmatpush1.msra.mxu0 0.0
        %4134 = vmatprep.subr.mxu0 0.0
        %4135 = vmatpush1.msra.mxu0 0.0
        %4136 = vmatprep.subr.mxu0 0.0
        %4137 = vmatpush1.msra.mxu0 0.0
        %4138 = vmatprep.subr.mxu0 0.0
        %4139 = vmatpush1.msra.mxu0 0.0
        %4140 = vmatprep.subr.mxu0 0.0
        %4141 = vmatpush1.msra.mxu0 0.0
        %4142 = vmatprep.subr.mxu0 0.0
        %4143 = vmatpush1.msra.mxu0 0.0
        %4144 = vmatprep.subr.mxu0 0.0
        %4145 = vmatpush1.msra.mxu0 0.0
        %4146 = vmatprep.subr.mxu0 0.0
        %4147 = vmatpush1.msra.mxu0 0.0
        %4148 = vmatprep.subr.mxu0 0.0
        %4149 = vmatpush1.msra.mxu0 0.0
        %4150 = vmatprep.subr.mxu0 0.0
        %4151 = vmatpush1.msra.mxu0 0.0
        %4152 = vmatprep.subr.mxu0 0.0
        %4153 = vmatpush1.msra.mxu0 0.0
        %4154 = vmatprep.subr.mxu0 0.0
        %4155 = vmatpush1.msra.mxu0 0.0
        %4156 = vmatprep.subr.mxu0 0.0
        %4157 = vmatpush1.msra.mxu0 0.0
        %4158 = vmatprep.subr.mxu0 0.0
        %4159 = vmatpush1.msra.mxu0 0.0
        %4160 = vmatprep.subr.mxu0 0.0
        %4161 = vmatpush1.msra.mxu0 0.0
        %4162 = vmatprep.subr.mxu0 0.0
        %4163 = vmatpush1.msra.mxu0 0.0
        %4164 = vmatprep.subr.mxu0 0.0
        %4165 = vmatpush1.msra.mxu0 0.0
        %4166 = vmatprep.subr.mxu0 0.0
        %4167 = vmatpush1.msra.mxu0 0.0
        %4168 = vmatprep.subr.mxu0 0.0
        %4169 = vmatpush1.msra.mxu0 0.0
        %4170 = vmatprep.subr.mxu0 0.0
        %4171 = vmatpush1.msra.mxu0 0.0
        %4172 = vmatprep.mubr.f32.mxu0 0.0
        %4173 = vmatmul.mubr.f32.gmra.mrb[0].mxu0 %v4103
        %v4174 = vpop.f32.mrb[0].mxu0
        %v4175 = vadd.f32 %v4094, %v4174
        %v4176 = vpop.f32.mrb[0].mxu0
        %4177 = vmatprep.mubr.f32.mxu0 0.0
        %4178 = vmatmul.mubr.f32.gmra.mrb[0].mxu0 %v4106
        %v4179 = vpop.f32.mrb[0].mxu0
        %v4180 = vadd.f32 %v4099, %v4179
        %v4181 = vpop.f32.mrb[0].mxu0
        %4182 = vdwg.mxu0
        %s4183 = scalar_lea.vmem %s7, 480
        %v4184 = vld [vmem:[%s4183] sm:$0xff]
        %v4185 = vld [vmem:[%s4183 + $0x8] sm:$0xff]
        %v4186 = vld [vmem:[%s4183 + $0x10] sm:$0xff]
        %v4187 = vld [vmem:[%s4183 + $0x18] sm:$0xff]
        %v4189 = vsel %vm1211, %v4009, 0
        %v4192 = vsel %vm1211, %v4010, 0
        %4194 = vmatprep.subr.mxu0 0.0
        %4195 = vmatpush1.msra.mxu0 %v4184
        %4196 = vmatprep.subr.mxu0 0.0
        %4197 = vmatpush1.msra.mxu0 %v4185
        %4198 = vmatprep.subr.mxu0 0.0
        %4199 = vmatpush1.msra.mxu0 %v4186
        %4200 = vmatprep.subr.mxu0 0.0
        %4201 = vmatpush1.msra.mxu0 %v4187
        %4202 = vmatprep.subr.mxu0 0.0
        %4203 = vmatpush1.msra.mxu0 0.0
        %4204 = vmatprep.subr.mxu0 0.0
        %4205 = vmatpush1.msra.mxu0 0.0
        %4206 = vmatprep.subr.mxu0 0.0
        %4207 = vmatpush1.msra.mxu0 0.0
        %4208 = vmatprep.subr.mxu0 0.0
        %4209 = vmatpush1.msra.mxu0 0.0
        %4210 = vmatprep.subr.mxu0 0.0
        %4211 = vmatpush1.msra.mxu0 0.0
        %4212 = vmatprep.subr.mxu0 0.0
        %4213 = vmatpush1.msra.mxu0 0.0
        %4214 = vmatprep.subr.mxu0 0.0
        %4215 = vmatpush1.msra.mxu0 0.0
        %4216 = vmatprep.subr.mxu0 0.0
        %4217 = vmatpush1.msra.mxu0 0.0
        %4218 = vmatprep.subr.mxu0 0.0
        %4219 = vmatpush1.msra.mxu0 0.0
        %4220 = vmatprep.subr.mxu0 0.0
        %4221 = vmatpush1.msra.mxu0 0.0
        %4222 = vmatprep.subr.mxu0 0.0
        %4223 = vmatpush1.msra.mxu0 0.0
        %4224 = vmatprep.subr.mxu0 0.0
        %4225 = vmatpush1.msra.mxu0 0.0
        %4226 = vmatprep.subr.mxu0 0.0
        %4227 = vmatpush1.msra.mxu0 0.0
        %4228 = vmatprep.subr.mxu0 0.0
        %4229 = vmatpush1.msra.mxu0 0.0
        %4230 = vmatprep.subr.mxu0 0.0
        %4231 = vmatpush1.msra.mxu0 0.0
        %4232 = vmatprep.subr.mxu0 0.0
        %4233 = vmatpush1.msra.mxu0 0.0
        %4234 = vmatprep.subr.mxu0 0.0
        %4235 = vmatpush1.msra.mxu0 0.0
        %4236 = vmatprep.subr.mxu0 0.0
        %4237 = vmatpush1.msra.mxu0 0.0
        %4238 = vmatprep.subr.mxu0 0.0
        %4239 = vmatpush1.msra.mxu0 0.0
        %4240 = vmatprep.subr.mxu0 0.0
        %4241 = vmatpush1.msra.mxu0 0.0
        %4242 = vmatprep.subr.mxu0 0.0
        %4243 = vmatpush1.msra.mxu0 0.0
        %4244 = vmatprep.subr.mxu0 0.0
        %4245 = vmatpush1.msra.mxu0 0.0
        %4246 = vmatprep.subr.mxu0 0.0
        %4247 = vmatpush1.msra.mxu0 0.0
        %4248 = vmatprep.subr.mxu0 0.0
        %4249 = vmatpush1.msra.mxu0 0.0
        %4250 = vmatprep.subr.mxu0 0.0
        %4251 = vmatpush1.msra.mxu0 0.0
        %4252 = vmatprep.subr.mxu0 0.0
        %4253 = vmatpush1.msra.mxu0 0.0
        %4254 = vmatprep.subr.mxu0 0.0
        %4255 = vmatpush1.msra.mxu0 0.0
        %4256 = vmatprep.subr.mxu0 0.0
        %4257 = vmatpush1.msra.mxu0 0.0
        %4258 = vmatprep.mubr.f32.mxu0 0.0
        %4259 = vmatmul.mubr.f32.gmra.mrb[0].mxu0 %v4189
        %v4260 = vpop.f32.mrb[0].mxu0
        %v4261 = vadd.f32 0.0, %v4260
        %v4262 = vpop.f32.mrb[0].mxu0
        %4263 = vmatprep.mubr.f32.mxu0 0.0
        %4264 = vmatmul.mubr.f32.gmra.mrb[0].mxu0 %v4192
        %v4265 = vpop.f32.mrb[0].mxu0
        %v4266 = vadd.f32 0.0, %v4265
        %v4267 = vpop.f32.mrb[0].mxu0
        %4268 = vdwg.mxu0
        %v4269 = vadd.f32 %v4175, %v4261
        %v4270 = vadd.f32 %v4180, %v4266
        %v4271 = vld [vmem:[%s12 + $0x23] sm:$0x1]
        %v4272 = vlaneseq
        %v4273 = vshrl.u32 %v4272, 7
        %v4274 = vsub.s32 0, %v4273
        %v4275 = vrot.slane %v4271, %v4274
        %v4276 = vadd.f32 %v4269, %v4275
        %v4277 = vadd.f32 %v4270, %v4275
        %v4278 = vmul.f32 %v4276, 0.5
        %v4279 = vmul.f32 %v4277, 0.5
        %v4280 = vmul.f32 %v4276, 0.70710677
        %v4281 = vmul.f32 %v4277, 0.70710677
        %v4282 = verf.f32.pop %v4280
        %v4283 = verf.f32.pop %v4281
        %v4284 = vadd.f32 %v4282, 1.0
        %v4285 = vadd.f32 %v4283, 1.0
        %v4286 = vmul.f32 %v4278, %v4284
        %v4287 = vmul.f32 %v4279, %v4285
        %s4288 = scalar_lea.vmem %s7, 512
        %v4289 = vld [vmem:[%s4288] sm:$0xff]
        %v4290 = vld [vmem:[%s4288 + $0x8] sm:$0xff]
        %v4291 = vld [vmem:[%s4288 + $0x10] sm:$0xff]
        %v4292 = vld [vmem:[%s4288 + $0x18] sm:$0xff]
        %v4293 = vld [vmem:[%s12 + $0x24] sm:$0x1]
        %v4294 = vlaneseq
        %v4295 = vshrl.u32 %v4294, 7
        %v4296 = vsub.s32 0, %v4295
        %v4297 = vrot.slane %v4293, %v4296
        %v4299 = vsel %vm1211, %v4286, 0
        %v4302 = vsel %vm1211, %v4287, 0
        %4304 = vmatprep.subr.mxu0 0.0
        %4305 = vmatpush1.msra.mxu0 %v4289
        %4306 = vmatprep.subr.mxu0 0.0
        %4307 = vmatpush1.msra.mxu0 %v4290
        %4308 = vmatprep.subr.mxu0 0.0
        %4309 = vmatpush1.msra.mxu0 %v4291
        %4310 = vmatprep.subr.mxu0 0.0
        %4311 = vmatpush1.msra.mxu0 %v4292
        %4312 = vmatprep.subr.mxu0 0.0
        %4313 = vmatpush1.msra.mxu0 0.0
        %4314 = vmatprep.subr.mxu0 0.0
        %4315 = vmatpush1.msra.mxu0 0.0
        %4316 = vmatprep.subr.mxu0 0.0
        %4317 = vmatpush1.msra.mxu0 0.0
        %4318 = vmatprep.subr.mxu0 0.0
        %4319 = vmatpush1.msra.mxu0 0.0
        %4320 = vmatprep.subr.mxu0 0.0
        %4321 = vmatpush1.msra.mxu0 0.0
        %4322 = vmatprep.subr.mxu0 0.0
        %4323 = vmatpush1.msra.mxu0 0.0
        %4324 = vmatprep.subr.mxu0 0.0
        %4325 = vmatpush1.msra.mxu0 0.0
        %4326 = vmatprep.subr.mxu0 0.0
        %4327 = vmatpush1.msra.mxu0 0.0
        %4328 = vmatprep.subr.mxu0 0.0
        %4329 = vmatpush1.msra.mxu0 0.0
        %4330 = vmatprep.subr.mxu0 0.0
        %4331 = vmatpush1.msra.mxu0 0.0
        %4332 = vmatprep.subr.mxu0 0.0
        %4333 = vmatpush1.msra.mxu0 0.0
        %4334 = vmatprep.subr.mxu0 0.0
        %4335 = vmatpush1.msra.mxu0 0.0
        %4336 = vmatprep.subr.mxu0 0.0
        %4337 = vmatpush1.msra.mxu0 0.0
        %4338 = vmatprep.subr.mxu0 0.0
        %4339 = vmatpush1.msra.mxu0 0.0
        %4340 = vmatprep.subr.mxu0 0.0
        %4341 = vmatpush1.msra.mxu0 0.0
        %4342 = vmatprep.subr.mxu0 0.0
        %4343 = vmatpush1.msra.mxu0 0.0
        %4344 = vmatprep.subr.mxu0 0.0
        %4345 = vmatpush1.msra.mxu0 0.0
        %4346 = vmatprep.subr.mxu0 0.0
        %4347 = vmatpush1.msra.mxu0 0.0
        %4348 = vmatprep.subr.mxu0 0.0
        %4349 = vmatpush1.msra.mxu0 0.0
        %4350 = vmatprep.subr.mxu0 0.0
        %4351 = vmatpush1.msra.mxu0 0.0
        %4352 = vmatprep.subr.mxu0 0.0
        %4353 = vmatpush1.msra.mxu0 0.0
        %4354 = vmatprep.subr.mxu0 0.0
        %4355 = vmatpush1.msra.mxu0 0.0
        %4356 = vmatprep.subr.mxu0 0.0
        %4357 = vmatpush1.msra.mxu0 0.0
        %4358 = vmatprep.subr.mxu0 0.0
        %4359 = vmatpush1.msra.mxu0 0.0
        %4360 = vmatprep.subr.mxu0 0.0
        %4361 = vmatpush1.msra.mxu0 0.0
        %4362 = vmatprep.subr.mxu0 0.0
        %4363 = vmatpush1.msra.mxu0 0.0
        %4364 = vmatprep.subr.mxu0 0.0
        %4365 = vmatpush1.msra.mxu0 0.0
        %4366 = vmatprep.subr.mxu0 0.0
        %4367 = vmatpush1.msra.mxu0 0.0
        %4368 = vmatprep.mubr.f32.mxu0 0.0
        %4369 = vmatmul.mubr.f32.gmra.mrb[0].mxu0 %v4299
        %v4370 = vpop.f32.mrb[0].mxu0
        %v4371 = vadd.f32 %v4297, %v4370
        %v4372 = vpop.f32.mrb[0].mxu0
        %4373 = vmatprep.mubr.f32.mxu0 0.0
        %4374 = vmatmul.mubr.f32.gmra.mrb[0].mxu0 %v4302
        %v4375 = vpop.f32.mrb[0].mxu0
        %v4376 = vadd.f32 %v4297, %v4375
        %v4377 = vpop.f32.mrb[0].mxu0
        %4378 = vdwg.mxu0
        %v4379 = vmul.f32 %v4371, 0.5
        %v4380 = vmul.f32 %v4376, 0.5
        %v4381 = vmul.f32 %v4371, 0.70710677
        %v4382 = vmul.f32 %v4376, 0.70710677
        %v4383 = verf.f32.pop %v4381
        %v4384 = verf.f32.pop %v4382
        %v4385 = vadd.f32 %v4383, 1.0
        %v4386 = vadd.f32 %v4384, 1.0
        %v4387 = vmul.f32 %v4379, %v4385
        %v4388 = vmul.f32 %v4380, %v4386
        %s4389 = scalar_lea.vmem %s8, 32
        %v4390 = vld [vmem:[%s4389] sm:$0xff]
        %v4391 = vld [vmem:[%s4389 + $0x8] sm:$0xff]
        %v4392 = vld [vmem:[%s4389 + $0x10] sm:$0xff]
        %v4393 = vld [vmem:[%s4389 + $0x18] sm:$0xff]
        %v4394 = vld [vmem:[%s13 + $0x1] sm:$0x1]
        %v4395 = vlaneseq
        %v4396 = vshrl.u32 %v4395, 7
        %v4397 = vsub.s32 0, %v4396
        %v4398 = vrot.slane %v4394, %v4397
        %v4400 = vsel %vm1211, %v4387, 0
        %v4403 = vsel %vm1211, %v4388, 0
        %4405 = vmatprep.subr.mxu0 0.0
        %4406 = vmatpush1.msra.mxu0 %v4390
        %4407 = vmatprep.subr.mxu0 0.0
        %4408 = vmatpush1.msra.mxu0 %v4391
        %4409 = vmatprep.subr.mxu0 0.0
        %4410 = vmatpush1.msra.mxu0 %v4392
        %4411 = vmatprep.subr.mxu0 0.0
        %4412 = vmatpush1.msra.mxu0 %v4393
        %4413 = vmatprep.subr.mxu0 0.0
        %4414 = vmatpush1.msra.mxu0 0.0
        %4415 = vmatprep.subr.mxu0 0.0
        %4416 = vmatpush1.msra.mxu0 0.0
        %4417 = vmatprep.subr.mxu0 0.0
        %4418 = vmatpush1.msra.mxu0 0.0
        %4419 = vmatprep.subr.mxu0 0.0
        %4420 = vmatpush1.msra.mxu0 0.0
        %4421 = vmatprep.subr.mxu0 0.0
        %4422 = vmatpush1.msra.mxu0 0.0
        %4423 = vmatprep.subr.mxu0 0.0
        %4424 = vmatpush1.msra.mxu0 0.0
        %4425 = vmatprep.subr.mxu0 0.0
        %4426 = vmatpush1.msra.mxu0 0.0
        %4427 = vmatprep.subr.mxu0 0.0
        %4428 = vmatpush1.msra.mxu0 0.0
        %4429 = vmatprep.subr.mxu0 0.0
        %4430 = vmatpush1.msra.mxu0 0.0
        %4431 = vmatprep.subr.mxu0 0.0
        %4432 = vmatpush1.msra.mxu0 0.0
        %4433 = vmatprep.subr.mxu0 0.0
        %4434 = vmatpush1.msra.mxu0 0.0
        %4435 = vmatprep.subr.mxu0 0.0
        %4436 = vmatpush1.msra.mxu0 0.0
        %4437 = vmatprep.subr.mxu0 0.0
        %4438 = vmatpush1.msra.mxu0 0.0
        %4439 = vmatprep.subr.mxu0 0.0
        %4440 = vmatpush1.msra.mxu0 0.0
        %4441 = vmatprep.subr.mxu0 0.0
        %4442 = vmatpush1.msra.mxu0 0.0
        %4443 = vmatprep.subr.mxu0 0.0
        %4444 = vmatpush1.msra.mxu0 0.0
        %4445 = vmatprep.subr.mxu0 0.0
        %4446 = vmatpush1.msra.mxu0 0.0
        %4447 = vmatprep.subr.mxu0 0.0
        %4448 = vmatpush1.msra.mxu0 0.0
        %4449 = vmatprep.subr.mxu0 0.0
        %4450 = vmatpush1.msra.mxu0 0.0
        %4451 = vmatprep.subr.mxu0 0.0
        %4452 = vmatpush1.msra.mxu0 0.0
        %4453 = vmatprep.subr.mxu0 0.0
        %4454 = vmatpush1.msra.mxu0 0.0
        %4455 = vmatprep.subr.mxu0 0.0
        %4456 = vmatpush1.msra.mxu0 0.0
        %4457 = vmatprep.subr.mxu0 0.0
        %4458 = vmatpush1.msra.mxu0 0.0
        %4459 = vmatprep.subr.mxu0 0.0
        %4460 = vmatpush1.msra.mxu0 0.0
        %4461 = vmatprep.subr.mxu0 0.0
        %4462 = vmatpush1.msra.mxu0 0.0
        %4463 = vmatprep.subr.mxu0 0.0
        %4464 = vmatpush1.msra.mxu0 0.0
        %4465 = vmatprep.subr.mxu0 0.0
        %4466 = vmatpush1.msra.mxu0 0.0
        %4467 = vmatprep.subr.mxu0 0.0
        %4468 = vmatpush1.msra.mxu0 0.0
        %4469 = vmatprep.mubr.f32.mxu0 0.0
        %4470 = vmatmul.mubr.f32.gmra.mrb[0].mxu0 %v4400
        %v4471 = vpop.f32.mrb[0].mxu0
        %v4472 = vadd.f32 %v4398, %v4471
        %v4473 = vpop.f32.mrb[0].mxu0
        %4474 = vmatprep.mubr.f32.mxu0 0.0
        %4475 = vmatmul.mubr.f32.gmra.mrb[0].mxu0 %v4403
        %v4476 = vpop.f32.mrb[0].mxu0
        %v4477 = vadd.f32 %v4398, %v4476
        %v4478 = vpop.f32.mrb[0].mxu0
        %4479 = vdwg.mxu0
        %v4480 = vld [vmem:[%s13 + $0x2] sm:$0x1]
        %v4481 = vlaneseq
        %v4482 = vshrl.u32 %v4481, 7
        %v4483 = vsub.s32 0, %v4482
        %v4484 = vrot.slane %v4480, %v4483
        %v4485 = vmul.f32 %v4484, %v4472
        %v4486 = vmul.f32 %v4484, %v4477
        %v4487 = vtanh.pop %v4485
        %v4488 = vtanh.pop %v4486
        %v4489 = vld [vmem:[%s13 + $0x3] sm:$0x1]
        %v4490 = vlaneseq
        %v4491 = vshrl.u32 %v4490, 7
        %v4492 = vsub.s32 0, %v4491
        %v4493 = vrot.slane %v4489, %v4492
        %v4494 = vmul.f32 %v4487, %v4493
        %v4495 = vmul.f32 %v4488, %v4493
        %v4496 = vld [vmem:[%s13 + $0x4] sm:$0x1]
        %v4497 = vlaneseq
        %v4498 = vshrl.u32 %v4497, 7
        %v4499 = vsub.s32 0, %v4498
        %v4500 = vrot.slane %v4496, %v4499
        %v4501 = vadd.f32 %v4494, %v4500
        %v4502 = vadd.f32 %v4495, %v4500
        %v4503 = vadd.f32 %v4501, %v642
        %v4504 = vadd.f32 %v4502, %v643
        %v4505 = vmul.f32 %v4503, %v4503
        %v4506 = vmul.f32 %v4504, %v4504
        %v4507 = vsel %vm648, %v4505, 0.0
        %4508 = vadd.xlane.f32.xlu0 %v4507
        %v4509 = vpop.xlane.xlu0 %4508
        %v4510 = vsel %vm648, %v4506, 0.0
        %4511 = vadd.xlane.f32.xlu0 %v4510
        %v4512 = vpop.xlane.xlu0 %4511
        %v4513 = vrsqrt.pop %v4509
        %v4514 = vmul.f32 %v4509, %v4513
        %vm4515 = vcmp.eq.f32.partialorder %v4509, inf
        %v4516 = vsel %vm4515, %v4509, %v4514
        %vm4517 = vcmp.eq.f32.partialorder %v4509, 0.0
        %v4518 = vand.u32 %v4509, 2147483648
        %v4519 = vsel %vm4517, %v4518, %v4516
        %v4520 = vrsqrt.pop %v4512
        %v4521 = vmul.f32 %v4512, %v4520
        %vm4522 = vcmp.eq.f32.partialorder %v4512, inf
        %v4523 = vsel %vm4522, %v4512, %v4521
        %vm4524 = vcmp.eq.f32.partialorder %v4512, 0.0
        %v4525 = vand.u32 %v4512, 2147483648
        %v4526 = vsel %vm4524, %v4525, %v4523
        %v4527 = vadd.f32 %v4519, 1e-10
        %v4528 = vadd.f32 %v4526, 1e-10
        %v4529 = vrcp.pop %v4527
        %v4530 = vrcp.pop %v4528
        %v4531 = vmul.f32 %v4503, %v4529
        %v4532 = vmul.f32 %v4504, %v4530
        %v4533 = vlaneseq
        %v4534 = vand.u32 %v4533, 127
        %v4535 = vld [vmem:[%s629] sm:$0xff]
        %v4536 = vld [vmem:[%s629 + $0x8] sm:$0xff]
        %v4537 = vld [vmem:[%s629 + $0x10] sm:$0xff]
        %4538 = vset.pattern.permute.xlu0 0
        %4539 = vperm.xlu0 %4538, %v4535
        %v4540 = vpop.permute.xlu0 %4539
        %4541 = vset.pattern.permute.xlu0 0
        %4542 = vperm.xlu0 %4541, %v4536
        %v4543 = vpop.permute.xlu0 %4542
        %4544 = vset.pattern.permute.xlu0 0
        %4545 = vperm.xlu0 %4544, %v4537
        %v4546 = vpop.permute.xlu0 %4545
        %vm4547 = vcmp.eq.s32.totalorder %v4534, %v4540
        %vm4548 = vcmp.eq.s32.totalorder %v4534, %v4543
        %vm4549 = vcmp.eq.s32.totalorder %v4534, %v4546
        %v4550 = vsel %vm4547, 1, 0
        %v4551 = vsel %vm4548, 1, 0
        %v4552 = vsel %vm4549, 1, 0
        %v4553 = vcvt.s32.f32 %v4550
        %v4554 = vcvt.s32.f32 %v4551
        %v4555 = vcvt.s32.f32 %v4552
        %v4556 = vld [vmem:[%s634] sm:$0xff]
        %v4557 = vld [vmem:[%s634 + $0x8] sm:$0xff]
        %v4558 = vld [vmem:[%s634 + $0x10] sm:$0xff]
        %4559 = vset.pattern.permute.xlu0 0
        %4560 = vperm.xlu0 %4559, %v4556
        %v4561 = vpop.permute.xlu0 %4560
        %4562 = vset.pattern.permute.xlu0 0
        %4563 = vperm.xlu0 %4562, %v4557
        %v4564 = vpop.permute.xlu0 %4563
        %4565 = vset.pattern.permute.xlu0 0
        %4566 = vperm.xlu0 %4565, %v4558
        %v4567 = vpop.permute.xlu0 %4566
        %vm4568 = vcmp.eq.s32.totalorder %v4534, %v4561
        %vm4569 = vcmp.eq.s32.totalorder %v4534, %v4564
        %vm4570 = vcmp.eq.s32.totalorder %v4534, %v4567
        %v4571 = vsel %vm4568, 1, 0
        %v4572 = vsel %vm4569, 1, 0
        %v4573 = vsel %vm4570, 1, 0
        %v4574 = vcvt.s32.f32 %v4571
        %v4575 = vcvt.s32.f32 %v4572
        %v4576 = vcvt.s32.f32 %v4573
        %v4578 = vsel %vm648, %v4553, 0
        %v4581 = vsel %vm648, %v4554, 0
        %v4584 = vsel %vm648, %v4555, 0
        %4586 = vmatprep.subr.mxu0 0.0
        %4587 = vmatpush1.msra.mxu0 %v4531
        %4588 = vmatprep.subr.mxu0 0.0
        %4589 = vmatpush1.msra.mxu0 %v4532
        %4590 = vmatprep.subr.mxu0 0.0
        %4591 = vmatpush1.msra.mxu0 0.0
        %4592 = vmatprep.subr.mxu0 0.0
        %4593 = vmatpush1.msra.mxu0 0.0
        %4594 = vmatprep.subr.mxu0 0.0
        %4595 = vmatpush1.msra.mxu0 0.0
        %4596 = vmatprep.subr.mxu0 0.0
        %4597 = vmatpush1.msra.mxu0 0.0
        %4598 = vmatprep.subr.mxu0 0.0
        %4599 = vmatpush1.msra.mxu0 0.0
        %4600 = vmatprep.subr.mxu0 0.0
        %4601 = vmatpush1.msra.mxu0 0.0
        %4602 = vmatprep.subr.mxu0 0.0
        %4603 = vmatpush1.msra.mxu0 0.0
        %4604 = vmatprep.subr.mxu0 0.0
        %4605 = vmatpush1.msra.mxu0 0.0
        %4606 = vmatprep.subr.mxu0 0.0
        %4607 = vmatpush1.msra.mxu0 0.0
        %4608 = vmatprep.subr.mxu0 0.0
        %4609 = vmatpush1.msra.mxu0 0.0
        %4610 = vmatprep.subr.mxu0 0.0
        %4611 = vmatpush1.msra.mxu0 0.0
        %4612 = vmatprep.subr.mxu0 0.0
        %4613 = vmatpush1.msra.mxu0 0.0
        %4614 = vmatprep.subr.mxu0 0.0
        %4615 = vmatpush1.msra.mxu0 0.0
        %4616 = vmatprep.subr.mxu0 0.0
        %4617 = vmatpush1.msra.mxu0 0.0
        %4618 = vmatprep.subr.mxu0 0.0
        %4619 = vmatpush1.msra.mxu0 0.0
        %4620 = vmatprep.subr.mxu0 0.0
        %4621 = vmatpush1.msra.mxu0 0.0
        %4622 = vmatprep.subr.mxu0 0.0
        %4623 = vmatpush1.msra.mxu0 0.0
        %4624 = vmatprep.subr.mxu0 0.0
        %4625 = vmatpush1.msra.mxu0 0.0
        %4626 = vmatprep.subr.mxu0 0.0
        %4627 = vmatpush1.msra.mxu0 0.0
        %4628 = vmatprep.subr.mxu0 0.0
        %4629 = vmatpush1.msra.mxu0 0.0
        %4630 = vmatprep.subr.mxu0 0.0
        %4631 = vmatpush1.msra.mxu0 0.0
        %4632 = vmatprep.subr.mxu0 0.0
        %4633 = vmatpush1.msra.mxu0 0.0
        %4634 = vmatprep.subr.mxu0 0.0
        %4635 = vmatpush1.msra.mxu0 0.0
        %4636 = vmatprep.subr.mxu0 0.0
        %4637 = vmatpush1.msra.mxu0 0.0
        %4638 = vmatprep.subr.mxu0 0.0
        %4639 = vmatpush1.msra.mxu0 0.0
        %4640 = vmatprep.subr.mxu0 0.0
        %4641 = vmatpush1.msra.mxu0 0.0
        %4642 = vmatprep.subr.mxu0 0.0
        %4643 = vmatpush1.msra.mxu0 0.0
        %4644 = vmatprep.subr.mxu0 0.0
        %4645 = vmatpush1.msra.mxu0 0.0
        %4646 = vmatprep.subr.mxu0 0.0
        %4647 = vmatpush1.msra.mxu0 0.0
        %4648 = vmatprep.subr.mxu0 0.0
        %4649 = vmatpush1.msra.mxu0 0.0
        %4650 = vmatprep.mubr.f32.mxu0 0.0
        %4651 = vmatmul.mubr.f32.gmra.mrb[0].mxu0 %v4578
        %v4652 = vpop.f32.mrb[0].mxu0
        %v4653 = vadd.f32 0.0, %v4652
        %v4654 = vpop.f32.mrb[0].mxu0
        %4655 = vmatprep.mubr.f32.mxu0 0.0
        %4656 = vmatmul.mubr.f32.gmra.mrb[0].mxu0 %v4581
        %v4657 = vpop.f32.mrb[0].mxu0
        %v4658 = vadd.f32 0.0, %v4657
        %v4659 = vpop.f32.mrb[0].mxu0
        %4660 = vmatprep.mubr.f32.mxu0 0.0
        %4661 = vmatmul.mubr.f32.gmra.mrb[0].mxu0 %v4584
        %v4662 = vpop.f32.mrb[0].mxu0
        %v4663 = vadd.f32 0.0, %v4662
        %v4664 = vpop.f32.mrb[0].mxu0
        %4665 = vdwg.mxu0
        %v4667 = vsel %vm648, %v4574, 0
        %v4670 = vsel %vm648, %v4575, 0
        %v4673 = vsel %vm648, %v4576, 0
        %4675 = vmatprep.subr.mxu0 0.0
        %4676 = vmatpush1.msra.mxu0 %v4531
        %4677 = vmatprep.subr.mxu0 0.0
        %4678 = vmatpush1.msra.mxu0 %v4532
        %4679 = vmatprep.subr.mxu0 0.0
        %4680 = vmatpush1.msra.mxu0 0.0
        %4681 = vmatprep.subr.mxu0 0.0
        %4682 = vmatpush1.msra.mxu0 0.0
        %4683 = vmatprep.subr.mxu0 0.0
        %4684 = vmatpush1.msra.mxu0 0.0
        %4685 = vmatprep.subr.mxu0 0.0
        %4686 = vmatpush1.msra.mxu0 0.0
        %4687 = vmatprep.subr.mxu0 0.0
        %4688 = vmatpush1.msra.mxu0 0.0
        %4689 = vmatprep.subr.mxu0 0.0
        %4690 = vmatpush1.msra.mxu0 0.0
        %4691 = vmatprep.subr.mxu0 0.0
        %4692 = vmatpush1.msra.mxu0 0.0
        %4693 = vmatprep.subr.mxu0 0.0
        %4694 = vmatpush1.msra.mxu0 0.0
        %4695 = vmatprep.subr.mxu0 0.0
        %4696 = vmatpush1.msra.mxu0 0.0
        %4697 = vmatprep.subr.mxu0 0.0
        %4698 = vmatpush1.msra.mxu0 0.0
        %4699 = vmatprep.subr.mxu0 0.0
        %4700 = vmatpush1.msra.mxu0 0.0
        %4701 = vmatprep.subr.mxu0 0.0
        %4702 = vmatpush1.msra.mxu0 0.0
        %4703 = vmatprep.subr.mxu0 0.0
        %4704 = vmatpush1.msra.mxu0 0.0
        %4705 = vmatprep.subr.mxu0 0.0
        %4706 = vmatpush1.msra.mxu0 0.0
        %4707 = vmatprep.subr.mxu0 0.0
        %4708 = vmatpush1.msra.mxu0 0.0
        %4709 = vmatprep.subr.mxu0 0.0
        %4710 = vmatpush1.msra.mxu0 0.0
        %4711 = vmatprep.subr.mxu0 0.0
        %4712 = vmatpush1.msra.mxu0 0.0
        %4713 = vmatprep.subr.mxu0 0.0
        %4714 = vmatpush1.msra.mxu0 0.0
        %4715 = vmatprep.subr.mxu0 0.0
        %4716 = vmatpush1.msra.mxu0 0.0
        %4717 = vmatprep.subr.mxu0 0.0
        %4718 = vmatpush1.msra.mxu0 0.0
        %4719 = vmatprep.subr.mxu0 0.0
        %4720 = vmatpush1.msra.mxu0 0.0
        %4721 = vmatprep.subr.mxu0 0.0
        %4722 = vmatpush1.msra.mxu0 0.0
        %4723 = vmatprep.subr.mxu0 0.0
        %4724 = vmatpush1.msra.mxu0 0.0
        %4725 = vmatprep.subr.mxu0 0.0
        %4726 = vmatpush1.msra.mxu0 0.0
        %4727 = vmatprep.subr.mxu0 0.0
        %4728 = vmatpush1.msra.mxu0 0.0
        %4729 = vmatprep.subr.mxu0 0.0
        %4730 = vmatpush1.msra.mxu0 0.0
        %4731 = vmatprep.subr.mxu0 0.0
        %4732 = vmatpush1.msra.mxu0 0.0
        %4733 = vmatprep.subr.mxu0 0.0
        %4734 = vmatpush1.msra.mxu0 0.0
        %4735 = vmatprep.subr.mxu0 0.0
        %4736 = vmatpush1.msra.mxu0 0.0
        %4737 = vmatprep.subr.mxu0 0.0
        %4738 = vmatpush1.msra.mxu0 0.0
        %4739 = vmatprep.mubr.f32.mxu0 0.0
        %4740 = vmatmul.mubr.f32.gmra.mrb[0].mxu0 %v4667
        %v4741 = vpop.f32.mrb[0].mxu0
        %v4742 = vadd.f32 0.0, %v4741
        %v4743 = vpop.f32.mrb[0].mxu0
        %4744 = vmatprep.mubr.f32.mxu0 0.0
        %4745 = vmatmul.mubr.f32.gmra.mrb[0].mxu0 %v4670
        %v4746 = vpop.f32.mrb[0].mxu0
        %v4747 = vadd.f32 0.0, %v4746
        %v4748 = vpop.f32.mrb[0].mxu0
        %4749 = vmatprep.mubr.f32.mxu0 0.0
        %4750 = vmatmul.mubr.f32.gmra.mrb[0].mxu0 %v4673
        %v4751 = vpop.f32.mrb[0].mxu0
        %v4752 = vadd.f32 0.0, %v4751
        %v4753 = vpop.f32.mrb[0].mxu0
        %4754 = vdwg.mxu0
        %s4755 = scalar_lea.vmem %s5, 96
        %v4756 = vld [vmem:[%s4755] sm:$0xff]
        %v4757 = vld [vmem:[%s4755 + $0x8] sm:$0xff]
        %s4758 = scalar_lea.vmem %s5, 112
        %v4759 = vld [vmem:[%s4758] sm:$0xff]
        %v4760 = vld [vmem:[%s4758 + $0x8] sm:$0xff]
        %v4762 = vsel %vm648, %v4742, 0
        %v4765 = vsel %vm648, %v4747, 0
        %v4768 = vsel %vm648, %v4752, 0
        %4770 = vmatprep.subr.mxu0 0.0
        %4771 = vmatpush1.msra.mxu0 %v4759
        %4772 = vmatprep.subr.mxu0 0.0
        %4773 = vmatpush1.msra.mxu0 %v4760
        %4774 = vmatprep.subr.mxu0 0.0
        %4775 = vmatpush1.msra.mxu0 0.0
        %4776 = vmatprep.subr.mxu0 0.0
        %4777 = vmatpush1.msra.mxu0 0.0
        %4778 = vmatprep.subr.mxu0 0.0
        %4779 = vmatpush1.msra.mxu0 0.0
        %4780 = vmatprep.subr.mxu0 0.0
        %4781 = vmatpush1.msra.mxu0 0.0
        %4782 = vmatprep.subr.mxu0 0.0
        %4783 = vmatpush1.msra.mxu0 0.0
        %4784 = vmatprep.subr.mxu0 0.0
        %4785 = vmatpush1.msra.mxu0 0.0
        %4786 = vmatprep.subr.mxu0 0.0
        %4787 = vmatpush1.msra.mxu0 0.0
        %4788 = vmatprep.subr.mxu0 0.0
        %4789 = vmatpush1.msra.mxu0 0.0
        %4790 = vmatprep.subr.mxu0 0.0
        %4791 = vmatpush1.msra.mxu0 0.0
        %4792 = vmatprep.subr.mxu0 0.0
        %4793 = vmatpush1.msra.mxu0 0.0
        %4794 = vmatprep.subr.mxu0 0.0
        %4795 = vmatpush1.msra.mxu0 0.0
        %4796 = vmatprep.subr.mxu0 0.0
        %4797 = vmatpush1.msra.mxu0 0.0
        %4798 = vmatprep.subr.mxu0 0.0
        %4799 = vmatpush1.msra.mxu0 0.0
        %4800 = vmatprep.subr.mxu0 0.0
        %4801 = vmatpush1.msra.mxu0 0.0
        %4802 = vmatprep.subr.mxu0 0.0
        %4803 = vmatpush1.msra.mxu0 0.0
        %4804 = vmatprep.subr.mxu0 0.0
        %4805 = vmatpush1.msra.mxu0 0.0
        %4806 = vmatprep.subr.mxu0 0.0
        %4807 = vmatpush1.msra.mxu0 0.0
        %4808 = vmatprep.subr.mxu0 0.0
        %4809 = vmatpush1.msra.mxu0 0.0
        %4810 = vmatprep.subr.mxu0 0.0
        %4811 = vmatpush1.msra.mxu0 0.0
        %4812 = vmatprep.subr.mxu0 0.0
        %4813 = vmatpush1.msra.mxu0 0.0
        %4814 = vmatprep.subr.mxu0 0.0
        %4815 = vmatpush1.msra.mxu0 0.0
        %4816 = vmatprep.subr.mxu0 0.0
        %4817 = vmatpush1.msra.mxu0 0.0
        %4818 = vmatprep.subr.mxu0 0.0
        %4819 = vmatpush1.msra.mxu0 0.0
        %4820 = vmatprep.subr.mxu0 0.0
        %4821 = vmatpush1.msra.mxu0 0.0
        %4822 = vmatprep.subr.mxu0 0.0
        %4823 = vmatpush1.msra.mxu0 0.0
        %4824 = vmatprep.subr.mxu0 0.0
        %4825 = vmatpush1.msra.mxu0 0.0
        %4826 = vmatprep.subr.mxu0 0.0
        %4827 = vmatpush1.msra.mxu0 0.0
        %4828 = vmatprep.subr.mxu0 0.0
        %4829 = vmatpush1.msra.mxu0 0.0
        %4830 = vmatprep.subr.mxu0 0.0
        %4831 = vmatpush1.msra.mxu0 0.0
        %4832 = vmatprep.subr.mxu0 0.0
        %4833 = vmatpush1.msra.mxu0 0.0
        %4834 = vmatprep.mubr.f32.mxu0 0.0
        %4835 = vmatmul.mubr.f32.gmra.mrb[0].mxu0 %v4762
        %v4836 = vpop.f32.mrb[0].mxu0
        %v4837 = vadd.f32 0.0, %v4836
        %v4838 = vpop.f32.mrb[0].mxu0
        %4839 = vmatprep.mubr.f32.mxu0 0.0
        %4840 = vmatmul.mubr.f32.gmra.mrb[0].mxu0 %v4765
        %v4841 = vpop.f32.mrb[0].mxu0
        %v4842 = vadd.f32 0.0, %v4841
        %v4843 = vpop.f32.mrb[0].mxu0
        %4844 = vmatprep.mubr.f32.mxu0 0.0
        %4845 = vmatmul.mubr.f32.gmra.mrb[0].mxu0 %v4768
        %v4846 = vpop.f32.mrb[0].mxu0
        %v4847 = vadd.f32 0.0, %v4846
        %v4848 = vpop.f32.mrb[0].mxu0
        %4849 = vdwg.mxu0
        %v4851 = vsel %vm648, %v4653, 0
        %v4854 = vsel %vm648, %v4658, 0
        %v4857 = vsel %vm648, %v4663, 0
        %4859 = vmatprep.subr.mxu0 0.0
        %4860 = vmatpush1.msra.mxu0 %v4756
        %4861 = vmatprep.subr.mxu0 0.0
        %4862 = vmatpush1.msra.mxu0 %v4757
        %4863 = vmatprep.subr.mxu0 0.0
        %4864 = vmatpush1.msra.mxu0 0.0
        %4865 = vmatprep.subr.mxu0 0.0
        %4866 = vmatpush1.msra.mxu0 0.0
        %4867 = vmatprep.subr.mxu0 0.0
        %4868 = vmatpush1.msra.mxu0 0.0
        %4869 = vmatprep.subr.mxu0 0.0
        %4870 = vmatpush1.msra.mxu0 0.0
        %4871 = vmatprep.subr.mxu0 0.0
        %4872 = vmatpush1.msra.mxu0 0.0
        %4873 = vmatprep.subr.mxu0 0.0
        %4874 = vmatpush1.msra.mxu0 0.0
        %4875 = vmatprep.subr.mxu0 0.0
        %4876 = vmatpush1.msra.mxu0 0.0
        %4877 = vmatprep.subr.mxu0 0.0
        %4878 = vmatpush1.msra.mxu0 0.0
        %4879 = vmatprep.subr.mxu0 0.0
        %4880 = vmatpush1.msra.mxu0 0.0
        %4881 = vmatprep.subr.mxu0 0.0
        %4882 = vmatpush1.msra.mxu0 0.0
        %4883 = vmatprep.subr.mxu0 0.0
        %4884 = vmatpush1.msra.mxu0 0.0
        %4885 = vmatprep.subr.mxu0 0.0
        %4886 = vmatpush1.msra.mxu0 0.0
        %4887 = vmatprep.subr.mxu0 0.0
        %4888 = vmatpush1.msra.mxu0 0.0
        %4889 = vmatprep.subr.mxu0 0.0
        %4890 = vmatpush1.msra.mxu0 0.0
        %4891 = vmatprep.subr.mxu0 0.0
        %4892 = vmatpush1.msra.mxu0 0.0
        %4893 = vmatprep.subr.mxu0 0.0
        %4894 = vmatpush1.msra.mxu0 0.0
        %4895 = vmatprep.subr.mxu0 0.0
        %4896 = vmatpush1.msra.mxu0 0.0
        %4897 = vmatprep.subr.mxu0 0.0
        %4898 = vmatpush1.msra.mxu0 0.0
        %4899 = vmatprep.subr.mxu0 0.0
        %4900 = vmatpush1.msra.mxu0 0.0
        %4901 = vmatprep.subr.mxu0 0.0
        %4902 = vmatpush1.msra.mxu0 0.0
        %4903 = vmatprep.subr.mxu0 0.0
        %4904 = vmatpush1.msra.mxu0 0.0
        %4905 = vmatprep.subr.mxu0 0.0
        %4906 = vmatpush1.msra.mxu0 0.0
        %4907 = vmatprep.subr.mxu0 0.0
        %4908 = vmatpush1.msra.mxu0 0.0
        %4909 = vmatprep.subr.mxu0 0.0
        %4910 = vmatpush1.msra.mxu0 0.0
        %4911 = vmatprep.subr.mxu0 0.0
        %4912 = vmatpush1.msra.mxu0 0.0
        %4913 = vmatprep.subr.mxu0 0.0
        %4914 = vmatpush1.msra.mxu0 0.0
        %4915 = vmatprep.subr.mxu0 0.0
        %4916 = vmatpush1.msra.mxu0 0.0
        %4917 = vmatprep.subr.mxu0 0.0
        %4918 = vmatpush1.msra.mxu0 0.0
        %4919 = vmatprep.subr.mxu0 0.0
        %4920 = vmatpush1.msra.mxu0 0.0
        %4921 = vmatprep.subr.mxu0 0.0
        %4922 = vmatpush1.msra.mxu0 0.0
        %4923 = vmatprep.mubr.f32.mxu0 0.0
        %4924 = vmatmul.mubr.f32.gmra.mrb[0].mxu0 %v4851
        %v4925 = vpop.f32.mrb[0].mxu0
        %v4926 = vadd.f32 %v4837, %v4925
        %v4927 = vpop.f32.mrb[0].mxu0
        %4928 = vmatprep.mubr.f32.mxu0 0.0
        %4929 = vmatmul.mubr.f32.gmra.mrb[0].mxu0 %v4854
        %v4930 = vpop.f32.mrb[0].mxu0
        %v4931 = vadd.f32 %v4842, %v4930
        %v4932 = vpop.f32.mrb[0].mxu0
        %4933 = vmatprep.mubr.f32.mxu0 0.0
        %4934 = vmatmul.mubr.f32.gmra.mrb[0].mxu0 %v4857
        %v4935 = vpop.f32.mrb[0].mxu0
        %v4936 = vadd.f32 %v4847, %v4935
        %v4937 = vpop.f32.mrb[0].mxu0
        %4938 = vdwg.mxu0
        %v4939 = vld [vmem:[%s12 + $0x25] sm:$0x1]
        %v4940 = vlaneseq
        %v4941 = vshrl.u32 %v4940, 7
        %v4942 = vsub.s32 0, %v4941
        %v4943 = vrot.slane %v4939, %v4942
        %v4944 = vadd.f32 %v4926, %v4943
        %v4945 = vadd.f32 %v4931, %v4943
        %v4946 = vadd.f32 %v4936, %v4943
        %v4947 = vmul.f32 %v4944, 0.5
        %v4948 = vmul.f32 %v4945, 0.5
        %v4949 = vmul.f32 %v4946, 0.5
        %v4950 = vmul.f32 %v4944, 0.70710677
        %v4951 = vmul.f32 %v4945, 0.70710677
        %v4952 = vmul.f32 %v4946, 0.70710677
        %v4953 = verf.f32.pop %v4950
        %v4954 = verf.f32.pop %v4951
        %v4955 = verf.f32.pop %v4952
        %v4956 = vadd.f32 %v4953, 1.0
        %v4957 = vadd.f32 %v4954, 1.0
        %v4958 = vadd.f32 %v4955, 1.0
        %v4959 = vmul.f32 %v4947, %v4956
        %v4960 = vmul.f32 %v4948, %v4957
        %v4961 = vmul.f32 %v4949, %v4958
        %s4962 = scalar_lea.vmem %s7, 544
        %v4963 = vld [vmem:[%s4962] sm:$0xff]
        %v4964 = vld [vmem:[%s4962 + $0x8] sm:$0xff]
        %v4965 = vld [vmem:[%s4962 + $0x10] sm:$0xff]
        %v4966 = vld [vmem:[%s4962 + $0x18] sm:$0xff]
        %v4967 = vld [vmem:[%s12 + $0x26] sm:$0x1]
        %v4968 = vlaneseq
        %v4969 = vshrl.u32 %v4968, 7
        %v4970 = vsub.s32 0, %v4969
        %v4971 = vrot.slane %v4967, %v4970
        %v4973 = vsel %vm1211, %v4959, 0
        %v4976 = vsel %vm1211, %v4960, 0
        %v4979 = vsel %vm1211, %v4961, 0
        %4981 = vmatprep.subr.mxu0 0.0
        %4982 = vmatpush1.msra.mxu0 %v4963
        %4983 = vmatprep.subr.mxu0 0.0
        %4984 = vmatpush1.msra.mxu0 %v4964
        %4985 = vmatprep.subr.mxu0 0.0
        %4986 = vmatpush1.msra.mxu0 %v4965
        %4987 = vmatprep.subr.mxu0 0.0
        %4988 = vmatpush1.msra.mxu0 %v4966
        %4989 = vmatprep.subr.mxu0 0.0
        %4990 = vmatpush1.msra.mxu0 0.0
        %4991 = vmatprep.subr.mxu0 0.0
        %4992 = vmatpush1.msra.mxu0 0.0
        %4993 = vmatprep.subr.mxu0 0.0
        %4994 = vmatpush1.msra.mxu0 0.0
        %4995 = vmatprep.subr.mxu0 0.0
        %4996 = vmatpush1.msra.mxu0 0.0
        %4997 = vmatprep.subr.mxu0 0.0
        %4998 = vmatpush1.msra.mxu0 0.0
        %4999 = vmatprep.subr.mxu0 0.0
        %5000 = vmatpush1.msra.mxu0 0.0
        %5001 = vmatprep.subr.mxu0 0.0
        %5002 = vmatpush1.msra.mxu0 0.0
        %5003 = vmatprep.subr.mxu0 0.0
        %5004 = vmatpush1.msra.mxu0 0.0
        %5005 = vmatprep.subr.mxu0 0.0
        %5006 = vmatpush1.msra.mxu0 0.0
        %5007 = vmatprep.subr.mxu0 0.0
        %5008 = vmatpush1.msra.mxu0 0.0
        %5009 = vmatprep.subr.mxu0 0.0
        %5010 = vmatpush1.msra.mxu0 0.0
        %5011 = vmatprep.subr.mxu0 0.0
        %5012 = vmatpush1.msra.mxu0 0.0
        %5013 = vmatprep.subr.mxu0 0.0
        %5014 = vmatpush1.msra.mxu0 0.0
        %5015 = vmatprep.subr.mxu0 0.0
        %5016 = vmatpush1.msra.mxu0 0.0
        %5017 = vmatprep.subr.mxu0 0.0
        %5018 = vmatpush1.msra.mxu0 0.0
        %5019 = vmatprep.subr.mxu0 0.0
        %5020 = vmatpush1.msra.mxu0 0.0
        %5021 = vmatprep.subr.mxu0 0.0
        %5022 = vmatpush1.msra.mxu0 0.0
        %5023 = vmatprep.subr.mxu0 0.0
        %5024 = vmatpush1.msra.mxu0 0.0
        %5025 = vmatprep.subr.mxu0 0.0
        %5026 = vmatpush1.msra.mxu0 0.0
        %5027 = vmatprep.subr.mxu0 0.0
        %5028 = vmatpush1.msra.mxu0 0.0
        %5029 = vmatprep.subr.mxu0 0.0
        %5030 = vmatpush1.msra.mxu0 0.0
        %5031 = vmatprep.subr.mxu0 0.0
        %5032 = vmatpush1.msra.mxu0 0.0
        %5033 = vmatprep.subr.mxu0 0.0
        %5034 = vmatpush1.msra.mxu0 0.0
        %5035 = vmatprep.subr.mxu0 0.0
        %5036 = vmatpush1.msra.mxu0 0.0
        %5037 = vmatprep.subr.mxu0 0.0
        %5038 = vmatpush1.msra.mxu0 0.0
        %5039 = vmatprep.subr.mxu0 0.0
        %5040 = vmatpush1.msra.mxu0 0.0
        %5041 = vmatprep.subr.mxu0 0.0
        %5042 = vmatpush1.msra.mxu0 0.0
        %5043 = vmatprep.subr.mxu0 0.0
        %5044 = vmatpush1.msra.mxu0 0.0
        %5045 = vmatprep.mubr.f32.mxu0 0.0
        %5046 = vmatmul.mubr.f32.gmra.mrb[0].mxu0 %v4973
        %v5047 = vpop.f32.mrb[0].mxu0
        %v5048 = vadd.f32 %v4971, %v5047
        %v5049 = vpop.f32.mrb[0].mxu0
        %5050 = vmatprep.mubr.f32.mxu0 0.0
        %5051 = vmatmul.mubr.f32.gmra.mrb[0].mxu0 %v4976
        %v5052 = vpop.f32.mrb[0].mxu0
        %v5053 = vadd.f32 %v4971, %v5052
        %v5054 = vpop.f32.mrb[0].mxu0
        %5055 = vmatprep.mubr.f32.mxu0 0.0
        %5056 = vmatmul.mubr.f32.gmra.mrb[0].mxu0 %v4979
        %v5057 = vpop.f32.mrb[0].mxu0
        %v5058 = vadd.f32 %v4971, %v5057
        %v5059 = vpop.f32.mrb[0].mxu0
        %5060 = vdwg.mxu0
        %v5061 = vmul.f32 %v5048, 0.5
        %v5062 = vmul.f32 %v5053, 0.5
        %v5063 = vmul.f32 %v5058, 0.5
        %v5064 = vmul.f32 %v5048, 0.70710677
        %v5065 = vmul.f32 %v5053, 0.70710677
        %v5066 = vmul.f32 %v5058, 0.70710677
        %v5067 = verf.f32.pop %v5064
        %v5068 = verf.f32.pop %v5065
        %v5069 = verf.f32.pop %v5066
        %v5070 = vadd.f32 %v5067, 1.0
        %v5071 = vadd.f32 %v5068, 1.0
        %v5072 = vadd.f32 %v5069, 1.0
        %v5073 = vmul.f32 %v5061, %v5070
        %v5074 = vmul.f32 %v5062, %v5071
        %v5075 = vmul.f32 %v5063, %v5072
        %v5076 = vld [vmem:[%s11] sm:$0xff]
        %v5077 = vld [vmem:[%s11 + $0x8] sm:$0xff]
        %v5078 = vld [vmem:[%s11 + $0x10] sm:$0xff]
        %v5079 = vld [vmem:[%s11 + $0x18] sm:$0xff]
        %v5080 = vld [vmem:[%s13 + $0x5] sm:$0x1]
        %v5081 = vlaneseq
        %v5082 = vshrl.u32 %v5081, 7
        %v5083 = vsub.s32 0, %v5082
        %v5084 = vrot.slane %v5080, %v5083
        %v5086 = vsel %vm1211, %v5073, 0
        %v5089 = vsel %vm1211, %v5074, 0
        %v5092 = vsel %vm1211, %v5075, 0
        %5094 = vmatprep.subr.mxu0 0.0
        %5095 = vmatpush1.msra.mxu0 %v5076
        %5096 = vmatprep.subr.mxu0 0.0
        %5097 = vmatpush1.msra.mxu0 %v5077
        %5098 = vmatprep.subr.mxu0 0.0
        %5099 = vmatpush1.msra.mxu0 %v5078
        %5100 = vmatprep.subr.mxu0 0.0
        %5101 = vmatpush1.msra.mxu0 %v5079
        %5102 = vmatprep.subr.mxu0 0.0
        %5103 = vmatpush1.msra.mxu0 0.0
        %5104 = vmatprep.subr.mxu0 0.0
        %5105 = vmatpush1.msra.mxu0 0.0
        %5106 = vmatprep.subr.mxu0 0.0
        %5107 = vmatpush1.msra.mxu0 0.0
        %5108 = vmatprep.subr.mxu0 0.0
        %5109 = vmatpush1.msra.mxu0 0.0
        %5110 = vmatprep.subr.mxu0 0.0
        %5111 = vmatpush1.msra.mxu0 0.0
        %5112 = vmatprep.subr.mxu0 0.0
        %5113 = vmatpush1.msra.mxu0 0.0
        %5114 = vmatprep.subr.mxu0 0.0
        %5115 = vmatpush1.msra.mxu0 0.0
        %5116 = vmatprep.subr.mxu0 0.0
        %5117 = vmatpush1.msra.mxu0 0.0
        %5118 = vmatprep.subr.mxu0 0.0
        %5119 = vmatpush1.msra.mxu0 0.0
        %5120 = vmatprep.subr.mxu0 0.0
        %5121 = vmatpush1.msra.mxu0 0.0
        %5122 = vmatprep.subr.mxu0 0.0
        %5123 = vmatpush1.msra.mxu0 0.0
        %5124 = vmatprep.subr.mxu0 0.0
        %5125 = vmatpush1.msra.mxu0 0.0
        %5126 = vmatprep.subr.mxu0 0.0
        %5127 = vmatpush1.msra.mxu0 0.0
        %5128 = vmatprep.subr.mxu0 0.0
        %5129 = vmatpush1.msra.mxu0 0.0
        %5130 = vmatprep.subr.mxu0 0.0
        %5131 = vmatpush1.msra.mxu0 0.0
        %5132 = vmatprep.subr.mxu0 0.0
        %5133 = vmatpush1.msra.mxu0 0.0
        %5134 = vmatprep.subr.mxu0 0.0
        %5135 = vmatpush1.msra.mxu0 0.0
        %5136 = vmatprep.subr.mxu0 0.0
        %5137 = vmatpush1.msra.mxu0 0.0
        %5138 = vmatprep.subr.mxu0 0.0
        %5139 = vmatpush1.msra.mxu0 0.0
        %5140 = vmatprep.subr.mxu0 0.0
        %5141 = vmatpush1.msra.mxu0 0.0
        %5142 = vmatprep.subr.mxu0 0.0
        %5143 = vmatpush1.msra.mxu0 0.0
        %5144 = vmatprep.subr.mxu0 0.0
        %5145 = vmatpush1.msra.mxu0 0.0
        %5146 = vmatprep.subr.mxu0 0.0
        %5147 = vmatpush1.msra.mxu0 0.0
        %5148 = vmatprep.subr.mxu0 0.0
        %5149 = vmatpush1.msra.mxu0 0.0
        %5150 = vmatprep.subr.mxu0 0.0
        %5151 = vmatpush1.msra.mxu0 0.0
        %5152 = vmatprep.subr.mxu0 0.0
        %5153 = vmatpush1.msra.mxu0 0.0
        %5154 = vmatprep.subr.mxu0 0.0
        %5155 = vmatpush1.msra.mxu0 0.0
        %5156 = vmatprep.subr.mxu0 0.0
        %5157 = vmatpush1.msra.mxu0 0.0
        %5158 = vmatprep.mubr.f32.mxu0 0.0
        %5159 = vmatmul.mubr.f32.gmra.mrb[0].mxu0 %v5086
        %v5160 = vpop.f32.mrb[0].mxu0
        %v5161 = vadd.f32 %v5084, %v5160
        %v5162 = vpop.f32.mrb[0].mxu0
        %5163 = vmatprep.mubr.f32.mxu0 0.0
        %5164 = vmatmul.mubr.f32.gmra.mrb[0].mxu0 %v5089
        %v5165 = vpop.f32.mrb[0].mxu0
        %v5166 = vadd.f32 %v5084, %v5165
        %v5167 = vpop.f32.mrb[0].mxu0
        %5168 = vmatprep.mubr.f32.mxu0 0.0
        %5169 = vmatmul.mubr.f32.gmra.mrb[0].mxu0 %v5092
        %v5170 = vpop.f32.mrb[0].mxu0
        %v5171 = vadd.f32 %v5084, %v5170
        %v5172 = vpop.f32.mrb[0].mxu0
        %5173 = vdwg.mxu0
        %v5174 = vxor.u32 %v5161, 2147483648
        %v5175 = vxor.u32 %v5166, 2147483648
        %v5176 = vxor.u32 %v5171, 2147483648
        %v5177 = vmul.f32 %v5174, 1.442695
        %v5178 = vpow.pop %v5177
        %v5179 = vmul.f32 %v5175, 1.442695
        %v5180 = vpow.pop %v5179
        %v5181 = vmul.f32 %v5176, 1.442695
        %v5182 = vpow.pop %v5181
        %v5183 = vadd.f32 %v5178, 1.0
        %v5184 = vadd.f32 %v5180, 1.0
        %v5185 = vadd.f32 %v5182, 1.0
        %v5186 = vrcp.pop %v5183
        %v5187 = vmul.f32 1.0, %v5186
        %v5188 = vrcp.pop %v5184
        %v5189 = vmul.f32 1.0, %v5188
        %v5190 = vrcp.pop %v5185
        %v5191 = vmul.f32 1.0, %v5190
        %vm5192 = vcmask 7168
        %5193 = vst.msk [vmem:[%s639] sm:$0xff] %vm5192, %v5187
        %5194 = vst.msk [vmem:[%s639 + $0x8] sm:$0xff] %vm5192, %v5189
        %5195 = vst.msk [vmem:[%s639 + $0x10] sm:$0xff] %vm5192, %v5191
        %s5196 = sand.u32 %s401, 1
        %s5197 = scalar_lea.sflag [#allocation3], %s5196
        %s5198 = sand.u32 %s401, 1
        %s5199 = smul.addr %s5198, 16
        %s5200 = scalar_lea.vmem [#allocation2], %s5199
        %p5201 = scmp.lt.s32.totalorder %s32, 1
        %s5202 = scalar_select %p5201, %s32, 1
        %s5203 = smul.addr %s5202, 3
        %s5204 = smul.addr %s5203, 8
        %s5205 = scalar_lea.vmem %s17, %s5204
        // Predicated region
        $region85: #{multi_mono_decoder_forward.1} parent=83 // pred_check
          %p5206 = pneg %p411
        $region86: #{multi_mono_decoder_forward.1} parent=83 // pred_check_branch
          %5208 = sbr.rel (%p5206) target = $region88
        $region87: #{multi_mono_decoder_forward.1} parent=83 // pred_region
          %s5210 = ssub.s32 256, 256
          %5211 = vsyncadd %s5197, %s5210
          %s5212 = smul.addr %s32, 2
          %s5213 = smul.addr %s5212, 128
          %s5214 = scalar_lea.hbm %s16, %s5213
          %s5215 = sshll.u32 %s5200, 4
          %s5216 = int_to_ptr.vmem [resolvable:$true] %s5215
          %5221 = dma.vmem_to_hbm [thread:$0]  %s5216, 256, %s5214, %s5197, 128, 128, 8
        $region88: #{multi_mono_decoder_forward.1} parent=83 // pred_fallthru
          _
        // Predicated region
        $region89: #{multi_mono_decoder_forward.1} parent=83 // pred_check
          %p5222 = pneg %p437
        $region90: #{multi_mono_decoder_forward.1} parent=83 // pred_check_branch
          %5224 = sbr.rel (%p5222) target = $region92
        $region91: #{multi_mono_decoder_forward.1} parent=83 // pred_region
          _
        $region92: #{multi_mono_decoder_forward.1} parent=83 // pred_fallthru
          _
      $region84: #{multi_mono_decoder_forward.1} parent=5 // pred_fallthru
        _
      %p5225 = scmp.le.s32.totalorder 2, %s27
      // Predicated region
      $region93: #{multi_mono_decoder_forward.1} parent=5 // pred_check
        %p5226 = pneg %p5225
      $region94: #{multi_mono_decoder_forward.1} parent=5 // pred_check_branch
        %5228 = sbr.rel (%p5226) target = $region96
      $region95: #{multi_mono_decoder_forward.1} parent=5 // pred_region
        %s5229 = ssub.s32 %s27, 2
        // Predicated region
        $region97: #{multi_mono_decoder_forward.1} parent=95 // pred_check
          %p5230 = pneg %p417
        $region98: #{multi_mono_decoder_forward.1} parent=95 // pred_check_branch
          %5232 = sbr.rel (%p5230) target = $region100
        $region99: #{multi_mono_decoder_forward.1} parent=95 // pred_region
          %s5233 = sand.u32 %s402, 1
          %s5234 = scalar_lea.sflag [#allocation3], %s5233
          %s5235 = sand.u32 %s402, 1
          %s5236 = smul.addr %s5235, 16
          %s5237 = scalar_lea.vmem [#allocation2], %s5236
          %5238 = dma.done %s5234, 256
        $region100: #{multi_mono_decoder_forward.1} parent=95 // pred_fallthru
          _
        // Predicated region
        $region101: #{multi_mono_decoder_forward.1} parent=95 // pred_check
          %p5239 = pneg %p443
        $region102: #{multi_mono_decoder_forward.1} parent=95 // pred_check_branch
          %5241 = sbr.rel (%p5239) target = $region104
        $region103: #{multi_mono_decoder_forward.1} parent=95 // pred_region
          %p5242 = scmp.lt.s32.totalorder %s33, 1
          %s5243 = scalar_select %p5242, %s33, 1
          %s5244 = smul.addr %s5243, 3
          %s5245 = smul.addr %s5244, 8
          %s5246 = scalar_lea.vmem %s17, %s5245
        $region104: #{multi_mono_decoder_forward.1} parent=95 // pred_fallthru
          _
      $region96: #{multi_mono_decoder_forward.1} parent=5 // pred_fallthru
        _
    $region6: #{multi_mono_decoder_forward.1} parent=1 // loop_footer
      %s31 = sadd.s32 1, %s27
    $region7: #{multi_mono_decoder_forward.1} parent=1 // loop_footer_branch
      %26 = sbr.rel target = $region3
    $region8: #{multi_mono_decoder_forward.1} parent=1 // loop_exit
      _
    %5247 = vsyncpa [#allocation3], 1
    %s5248 = scalar_lea.sflag [#allocation3], 1
    %5249 = vsyncpa %s5248, 1

</llo_original>
